<compile_context>
chip_gen: v6e
topology: v6e:2x2x1
jax: 0.10.0
libtpu: 0.0.40
codegen_flags: <defaults>
</compile_context>

<pallas_src>
import jax
import jax.numpy as jnp
from jax.experimental import pallas as pl
from jax.experimental.pallas import tpu as pltpu


# ----------------------------- Pallas kernels ------------------------------

def _pick_tm(m):
    """m is a multiple of 8.  Prefer >=2 sublane-aligned row tiles (v7x has
    two TensorCores sharded over 'parallel' grid axes)."""
    if m <= 256:
        return m
    for t in (1024, 512, 256, 128):
        if m % t == 0 and m // t >= 2:
            return t
    return m


def _matmul_rows(x, w):
    """(M, K) bf16 @ (K, C) bf16 -> (M, C) f32, tiled over rows on the MXU."""
    M, K = x.shape
    Kw, C = w.shape
    assert K == Kw
    m_pad = -(-M // 8) * 8                      # sublane-align the row count
    if m_pad != M:
        x = jnp.pad(x, ((0, m_pad - M), (0, 0)))
    tm = _pick_tm(m_pad)

    def kernel(x_ref, w_ref, o_ref):
        o_ref[...] = jnp.dot(x_ref[...], w_ref[...],
                             preferred_element_type=jnp.float32)

    out = pl.pallas_call(
        kernel,
        out_shape=jax.ShapeDtypeStruct((m_pad, C), jnp.float32),
        grid=(m_pad // tm,),
        in_specs=[pl.BlockSpec((tm, K), lambda i: (i, 0)),
                  pl.BlockSpec((K, C), lambda i: (0, 0))],   # weight stays resident
        out_specs=pl.BlockSpec((tm, C), lambda i: (i, 0)),
        compiler_params=pltpu.CompilerParams(
            dimension_semantics=("parallel",)),
    )(x, w)
    return out[:M] if m_pad != M else out


def _bn_relu(x, gamma, beta, eps=1e-5):
    """Training-mode BatchNorm2d (batch stats over N*H*W, biased var) + ReLU.

    x: (M, C) f32 channels-last rows.  Stats need all M rows, so this runs as
    one fused block (largest instance here is (2048, 16) = 128 KB).  Output is
    bf16 because it feeds the next layer's bf16 matmul directly.
    """
    M, C = x.shape
    inv_m = 1.0 / M

    def kernel(x_ref, g_ref, b_ref, o_ref):
        xv = x_ref[...]
        mean = jnp.sum(xv, axis=0, keepdims=True) * inv_m
        xc = xv - mean
        var = jnp.sum(xc * xc, axis=0, keepdims=True) * inv_m
        scale = jax.lax.rsqrt(var + eps) * g_ref[...]
        y = xc * scale + b_ref[...]                     # all-f32 epilogue (v5e-safe)
        o_ref[...] = jnp.maximum(y, 0.0).astype(o_ref.dtype)

    return pl.pallas_call(
        kernel,
        out_shape=jax.ShapeDtypeStruct((M, C), jnp.bfloat16),
        grid=(1,),
        in_specs=[pl.BlockSpec((M, C), lambda i: (0, 0)),
                  pl.BlockSpec((1, C), lambda i: (0, 0)),
                  pl.BlockSpec((1, C), lambda i: (0, 0))],
        out_specs=pl.BlockSpec((M, C), lambda i: (0, 0)),
        compiler_params=pltpu.CompilerParams(
            dimension_semantics=("arbitrary",)),
    )(x, gamma, beta)


def _tanh2d(x):
    """Elementwise tanh on a lane-dense 2-D view of the final activation."""
    M, C = x.shape
    tm = M // 2 if (M % 2 == 0 and (M // 2) % 8 == 0) else M  # 2 steps for v7x

    def kernel(x_ref, o_ref):
        o_ref[...] = jnp.tanh(x_ref[...])

    return pl.pallas_call(
        kernel,
        out_shape=jax.ShapeDtypeStruct((M, C), jnp.float32),
        grid=(M // tm,),
        in_specs=[pl.BlockSpec((tm, C), lambda i: (i, 0))],
        out_specs=pl.BlockSpec((tm, C), lambda i: (i, 0)),
        compiler_params=pltpu.CompilerParams(
            dimension_semantics=("parallel",)),
    )(x)


# ------------------------- col2im (overlap-add) glue ------------------------

def _col2im_stride2_pad1(contrib, n, h, w, c):
    """Overlap-add for ConvTranspose2d(K=4, stride=2, pad=1) using only dense
    pads / adds / interleaving reshapes (no scatter, no dilated zeros).

    contrib: (n*h*w, 16*c) f32 laid out as (ky, kx, co) in the last dim.
    Returns (n, 2h, 2w, c).

    Output pixel oy = 2*iy + ky - 1.  With ky = py + 2*sy (py in {0,1}) the
    contribution lands at even/odd phase py of spatial index iy + sy, so each
    phase image is a sum of 4 shifted taps; interleaving the 2x2 phases and
    cropping one border row/col (padding=1) gives the transposed-conv output.
    """
    t = contrib.reshape(n, h, w, 4, 4, c)

    def shifted(ky, kx, dy, dx):
        # place t[:, iy, ix, ky, kx, :] at phase-grid index (iy+dy, ix+dx)
        return jnp.pad(t[:, :, :, ky, kx, :],
                       ((0, 0), (dy, 1 - dy), (dx, 1 - dx), (0, 0)))

    phases = []
    for py in range(2):
        row = []
        for px in range(2):
            row.append(shifted(py, px, 0, 0)
                       + shifted(py + 2, px, 1, 0)
                       + shifted(py, px + 2, 0, 1)
                       + shifted(py + 2, px + 2, 1, 1))
        phases.append(jnp.stack(row, axis=3))          # (n, h+1, w+1, 2, c)
    full = jnp.stack(phases, axis=2)                   # (n, h+1, 2, w+1, 2, c)
    full = full.reshape(n, 2 * (h + 1), 2 * (w + 1), c)
    return full[:, 1:1 + 2 * h, 1:1 + 2 * w, :]        # crop padding=1


# ------------------------------- Generator ---------------------------------

def init_params(key, nz, ngf):
    """xavier_normal_ init; weight matrices pre-transposed/padded to bf16."""
    chans = [nz, ngf * 8, ngf * 4, ngf * 2, ngf, 3]
    params = []
    for li in range(5):
        cin, cout = chans[li], chans[li + 1]
        key, sub = jax.random.split(key)
        # xavier_normal_: std = sqrt(2/(fan_in+fan_out)); for a (Cin,Cout,4,4)
        # tensor PyTorch uses fan_in = Cout*16, fan_out = Cin*16.
        std = (2.0 / ((cin + cout) * 16)) ** 0.5
        w = std * jax.random.normal(sub, (cin, cout, 4, 4), jnp.float32)
        cp = cout if li < 4 else 8        # pad final Cout=3 -> 8 (128 lanes)
        wt = jnp.transpose(w, (0, 2, 3, 1))               # (cin, ky, kx, cout)
        if cp != cout:
            wt = jnp.pad(wt, ((0, 0), (0, 0), (0, 0), (0, cp - cout)))
        layer = {"w": w,                                   # f32, reference only
                 "wmat": wt.reshape(cin, 16 * cp).astype(jnp.bfloat16)}
        if li < 4:                                         # BatchNorm defaults
            layer["gamma"] = jnp.ones((1, cout), jnp.float32)
            layer["beta"] = jnp.zeros((1, cout), jnp.float32)
        params.append(layer)
    return params


@jax.jit
def generator_forward(x_nchw, params):
    """x_nchw: (N, nz, 1, 1) -> (N, 3, 64, 64) image in [-1, 1]."""
    x = jnp.transpose(x_nchw, (0, 2, 3, 1)).astype(jnp.bfloat16)   # NHWC
    for li in range(5):
        n, h, w, cin = x.shape
        wmat = params[li]["wmat"]
        cp = wmat.shape[1] // 16
        contrib = _matmul_rows(x.reshape(n * h * w, cin), wmat)    # (M,16*cp)
        if li == 0:
            # stride=1, pad=0 on a 1x1 latent: overlap-add is a plain reshape
            assert h == 1 and w == 1
            y = contrib.reshape(n, 4, 4, cp)
        else:
            y = _col2im_stride2_pad1(contrib, n, h, w, cp)
        ho, wo = y.shape[1], y.shape[2]
        if li < 4:
            x = _bn_relu(y.reshape(n * ho * wo, cp),
                         params[li]["gamma"], params[li]["beta"]
                         ).reshape(n, ho, wo, cp)
        else:
            y = _tanh2d(y.reshape(n * ho, wo * cp)).reshape(n, ho, wo, cp)
            x = y[..., :3]                                # drop padded channels
    return jnp.transpose(x, (0, 3, 1, 2)).astype(jnp.float32)      # NCHW


# --------------------------- pure-JAX reference -----------------------------

@jax.jit
def _reference_forward(x_nchw, params):
    """f32 XLA reference (ConvTranspose via dilated conv + BN + ReLU + tanh)."""
    x = x_nchw.astype(jnp.float32)
    cfgs = [(1, 0), (2, 1), (2, 1), (2, 1), (2, 1)]       # (stride, padding)
    for li, (s, p) in enumerate(cfgs):
        w = params[li]["w"].astype(jnp.bfloat16).astype(jnp.float32)
        wf = jnp.transpose(w[:, :, ::-1, ::-1], (1, 0, 2, 3))   # OIHW, flipped
        x = jax.lax.conv_general_dilated(
            x, wf, window_strides=(1, 1),
            padding=[(3 - p, 3 - p)] * 2, lhs_dilation=(s, s),
            dimension_numbers=("NCHW", "OIHW", "NCHW"))
        if li < 4:
            mean = jnp.mean(x, axis=(0, 2, 3), keepdims=True)
            var = jnp.mean((x - mean) ** 2, axis=(0, 2, 3), keepdims=True)
            g = params[li]["gamma"].reshape(1, -1, 1, 1)
            b = params[li]["beta"].reshape(1, -1, 1, 1)
            x = jnp.maximum((x - mean) * jax.lax.rsqrt(var + 1e-5) * g + b, 0.0)
        else:
            x = jnp.tanh(x)
    return x


if __name__ == "__main__":
    nz, ngf, batch = 32, 16, 2
    key = jax.random.PRNGKey(0)
    pkey, xkey = jax.random.split(key)

    params = init_params(pkey, nz, ngf)
    x = jax.random.normal(xkey, (batch, nz, 1, 1), jnp.float32)

    out = generator_forward(x, params)
    jax.block_until_ready(out)

    assert out.shape == (batch, 3, 64, 64), out.shape
    assert bool(jnp.all(jnp.isfinite(out)))
    assert bool(jnp.all(jnp.abs(out) <= 1.0 + 1e-6))      # tanh range

    ref = _reference_forward(x, params)
    err = float(jnp.max(jnp.abs(out - ref)))
    assert err < 0.15, f"max abs diff vs reference = {err}"
    print("KERNEL_OK")
</pallas_src>

<mosaic_0001>
module attributes {stable_mosaic.version = 11 : i64} {
  func.func @kernel(%arg0: i32, %arg1: memref<8x32xbf16, #tpu.memory_space<vmem>>, %arg2: memref<32x2048xbf16, #tpu.memory_space<vmem>>, %arg3: memref<8x2048xf32, #tpu.memory_space<vmem>>) attributes {dimension_semantics = [#tpu.dimension_semantics<parallel>], iteration_bounds = array<i64: 1>, scalar_prefetch = 0 : i64, scratch_operands = 0 : i64, tpu.core_type = #tpu.core_type<tc>, window_params = [{transform_indices = @transform_0, window_bounds = array<i64: 8, 32>}, {pipeline_mode = #tpu.pipeline_mode<synchronous>, transform_indices = @transform_1, window_bounds = array<i64: 32, 2048>}, {transform_indices = @transform_2, window_bounds = array<i64: 8, 2048>}]} {
    %c0 = arith.constant 0 : index
    %c0_0 = arith.constant 0 : index
    %0 = vector.load %arg1[%c0, %c0_0] : memref<8x32xbf16, #tpu.memory_space<vmem>>, vector<8x32xbf16>
    %c0_1 = arith.constant 0 : index
    %c0_2 = arith.constant 0 : index
    %1 = vector.load %arg2[%c0_1, %c0_2] : memref<32x2048xbf16, #tpu.memory_space<vmem>>, vector<32x2048xbf16>
    %cst = arith.constant dense<0.000000e+00> : vector<8x2048xf32>
    %2 = tpu.matmul %0, %1, %cst {dimension_numbers = #tpu.dot_dimension_numbers<[1], [0], [0], [1], [0, 0, 1, 1], [], []>} : vector<8x32xbf16>, vector<32x2048xbf16>, vector<8x2048xf32> -> vector<8x2048xf32>
    %c0_3 = arith.constant 0 : index
    %c0_4 = arith.constant 0 : index
    %3 = vector.load %arg3[%c0_3, %c0_4] : memref<8x2048xf32, #tpu.memory_space<vmem>>, vector<8x2048xf32>
    tpu.vector_store %arg3[%c0_3, %c0_4], %2 {strides = array<i32>} : memref<8x2048xf32, #tpu.memory_space<vmem>>, vector<8x2048xf32>,
    return
  }
  func.func @transform_0(%arg0: i32) -> (i32, i32) {
    %c0_i32 = arith.constant 0 : i32
    %c0_i32_0 = arith.constant 0 : i32
    return %arg0, %c0_i32 : i32, i32
  }
  func.func @transform_1(%arg0: i32) -> (i32, i32) {
    %c0_i32 = arith.constant 0 : i32
    %c0_i32_0 = arith.constant 0 : i32
    %c0_i32_1 = arith.constant 0 : i32
    return %c0_i32, %c0_i32_0 : i32, i32
  }
  func.func @transform_2(%arg0: i32) -> (i32, i32) {
    %c0_i32 = arith.constant 0 : i32
    %c0_i32_0 = arith.constant 0 : i32
    return %arg0, %c0_i32 : i32, i32
  }
}

module attributes {stable_mosaic.version = 11 : i64} {
  func.func @kernel(%arg0: i32, %arg1: memref<32x128xf32, #tpu.memory_space<vmem>>, %arg2: memref<1x128xf32, #tpu.memory_space<vmem>>, %arg3: memref<1x128xf32, #tpu.memory_space<vmem>>, %arg4: memref<32x128xbf16, #tpu.memory_space<vmem>>) attributes {dimension_semantics = [#tpu.dimension_semantics<arbitrary>], iteration_bounds = array<i64: 1>, scalar_prefetch = 0 : i64, scratch_operands = 0 : i64, tpu.core_type = #tpu.core_type<tc>, window_params = [{pipeline_mode = #tpu.pipeline_mode<synchronous>, transform_indices = @transform_0, window_bounds = array<i64: 32, 128>}, {pipeline_mode = #tpu.pipeline_mode<synchronous>, transform_indices = @transform_1, window_bounds = array<i64: 1, 128>}, {pipeline_mode = #tpu.pipeline_mode<synchronous>, transform_indices = @transform_2, window_bounds = array<i64: 1, 128>}, {pipeline_mode = #tpu.pipeline_mode<synchronous>, transform_indices = @transform_3, window_bounds = array<i64: 32, 128>}]} {
    %c0 = arith.constant 0 : index
    %c0_0 = arith.constant 0 : index
    %0 = vector.load %arg1[%c0, %c0_0] : memref<32x128xf32, #tpu.memory_space<vmem>>, vector<32x128xf32>
    %cst = arith.constant dense<0.000000e+00> : vector<128xf32>
    %1 = vector.multi_reduction <add>, %0, %cst [0] : vector<32x128xf32> to vector<128xf32>
    %2 = vector.shape_cast %1 : vector<128xf32> to vector<1x128xf32>
    %cst_1 = arith.constant 3.125000e-02 : f32
    %3 = vector.broadcast %cst_1 : f32 to vector<1x128xf32>
    %4 = arith.mulf %2, %3 : vector<1x128xf32>
    %5 = vector.broadcast %4 : vector<1x128xf32> to vector<32x128xf32>
    %6 = arith.subf %0, %5 : vector<32x128xf32>
    %7 = arith.mulf %6, %6 : vector<32x128xf32>
    %cst_2 = arith.constant dense<0.000000e+00> : vector<128xf32>
    %8 = vector.multi_reduction <add>, %7, %cst_2 [0] : vector<32x128xf32> to vector<128xf32>
    %9 = vector.shape_cast %8 : vector<128xf32> to vector<1x128xf32>
    %cst_3 = arith.constant 3.125000e-02 : f32
    %10 = vector.broadcast %cst_3 : f32 to vector<1x128xf32>
    %11 = arith.mulf %9, %10 : vector<1x128xf32>
    %cst_4 = arith.constant 9.99999974E-6 : f32
    %12 = vector.broadcast %cst_4 : f32 to vector<1x128xf32>
    %13 = arith.addf %11, %12 : vector<1x128xf32>
    %14 = math.rsqrt %13 : vector<1x128xf32>
    %c0_5 = arith.constant 0 : index
    %c0_6 = arith.constant 0 : index
    %15 = vector.load %arg2[%c0_5, %c0_6] : memref<1x128xf32, #tpu.memory_space<vmem>>, vector<1x128xf32>
    %16 = arith.mulf %14, %15 : vector<1x128xf32>
    %17 = vector.broadcast %16 : vector<1x128xf32> to vector<32x128xf32>
    %18 = arith.mulf %6, %17 : vector<32x128xf32>
    %c0_7 = arith.constant 0 : index
    %c0_8 = arith.constant 0 : index
    %19 = vector.load %arg3[%c0_7, %c0_8] : memref<1x128xf32, #tpu.memory_space<vmem>>, vector<1x128xf32>
    %20 = vector.broadcast %19 : vector<1x128xf32> to vector<32x128xf32>
    %21 = arith.addf %18, %20 : vector<32x128xf32>
    %cst_9 = arith.constant 0.000000e+00 : f32
    %22 = vector.broadcast %cst_9 : f32 to vector<32x128xf32>
    %23 = arith.maximumf %21, %22 : vector<32x128xf32>
    %24 = arith.truncf %23 : vector<32x128xf32> to vector<32x128xbf16>
    %c0_10 = arith.constant 0 : index
    %c0_11 = arith.constant 0 : index
    %25 = vector.load %arg4[%c0_10, %c0_11] : memref<32x128xbf16, #tpu.memory_space<vmem>>, vector<32x128xbf16>
    tpu.vector_store %arg4[%c0_10, %c0_11], %24 {strides = array<i32>} : memref<32x128xbf16, #tpu.memory_space<vmem>>, vector<32x128xbf16>,
    return
  }
  func.func @transform_0(%arg0: i32) -> (i32, i32) {
    %c0_i32 = arith.constant 0 : i32
    %c0_i32_0 = arith.constant 0 : i32
    %c0_i32_1 = arith.constant 0 : i32
    return %c0_i32, %c0_i32_0 : i32, i32
  }
  func.func @transform_1(%arg0: i32) -> (i32, i32) {
    %c0_i32 = arith.constant 0 : i32
    %c0_i32_0 = arith.constant 0 : i32
    %c0_i32_1 = arith.constant 0 : i32
    return %c0_i32, %c0_i32_0 : i32, i32
  }
  func.func @transform_2(%arg0: i32) -> (i32, i32) {
    %c0_i32 = arith.constant 0 : i32
    %c0_i32_0 = arith.constant 0 : i32
    %c0_i32_1 = arith.constant 0 : i32
    return %c0_i32, %c0_i32_0 : i32, i32
  }
  func.func @transform_3(%arg0: i32) -> (i32, i32) {
    %c0_i32 = arith.constant 0 : i32
    %c0_i32_0 = arith.constant 0 : i32
    %c0_i32_1 = arith.constant 0 : i32
    return %c0_i32, %c0_i32_0 : i32, i32
  }
}

module attributes {stable_mosaic.version = 11 : i64} {
  func.func @kernel(%arg0: i32, %arg1: memref<32x128xbf16, #tpu.memory_space<vmem>>, %arg2: memref<128x1024xbf16, #tpu.memory_space<vmem>>, %arg3: memref<32x1024xf32, #tpu.memory_space<vmem>>) attributes {dimension_semantics = [#tpu.dimension_semantics<parallel>], iteration_bounds = array<i64: 1>, scalar_prefetch = 0 : i64, scratch_operands = 0 : i64, tpu.core_type = #tpu.core_type<tc>, window_params = [{transform_indices = @transform_0, window_bounds = array<i64: 32, 128>}, {pipeline_mode = #tpu.pipeline_mode<synchronous>, transform_indices = @transform_1, window_bounds = array<i64: 128, 1024>}, {transform_indices = @transform_2, window_bounds = array<i64: 32, 1024>}]} {
    %c0 = arith.constant 0 : index
    %c0_0 = arith.constant 0 : index
    %0 = vector.load %arg1[%c0, %c0_0] : memref<32x128xbf16, #tpu.memory_space<vmem>>, vector<32x128xbf16>
    %c0_1 = arith.constant 0 : index
    %c0_2 = arith.constant 0 : index
    %1 = vector.load %arg2[%c0_1, %c0_2] : memref<128x1024xbf16, #tpu.memory_space<vmem>>, vector<128x1024xbf16>
    %cst = arith.constant dense<0.000000e+00> : vector<32x1024xf32>
    %2 = tpu.matmul %0, %1, %cst {dimension_numbers = #tpu.dot_dimension_numbers<[1], [0], [0], [1], [0, 0, 1, 1], [], []>} : vector<32x128xbf16>, vector<128x1024xbf16>, vector<32x1024xf32> -> vector<32x1024xf32>
    %c0_3 = arith.constant 0 : index
    %c0_4 = arith.constant 0 : index
    %3 = vector.load %arg3[%c0_3, %c0_4] : memref<32x1024xf32, #tpu.memory_space<vmem>>, vector<32x1024xf32>
    tpu.vector_store %arg3[%c0_3, %c0_4], %2 {strides = array<i32>} : memref<32x1024xf32, #tpu.memory_space<vmem>>, vector<32x1024xf32>,
    return
  }
  func.func @transform_0(%arg0: i32) -> (i32, i32) {
    %c0_i32 = arith.constant 0 : i32
    %c0_i32_0 = arith.constant 0 : i32
    return %arg0, %c0_i32 : i32, i32
  }
  func.func @transform_1(%arg0: i32) -> (i32, i32) {
    %c0_i32 = arith.constant 0 : i32
    %c0_i32_0 = arith.constant 0 : i32
    %c0_i32_1 = arith.constant 0 : i32
    return %c0_i32, %c0_i32_0 : i32, i32
  }
  func.func @transform_2(%arg0: i32) -> (i32, i32) {
    %c0_i32 = arith.constant 0 : i32
    %c0_i32_0 = arith.constant 0 : i32
    return %arg0, %c0_i32 : i32, i32
  }
}

module attributes {stable_mosaic.version = 11 : i64} {
  func.func @kernel(%arg0: i32, %arg1: memref<128x64xf32, #tpu.memory_space<vmem>>, %arg2: memref<1x64xf32, #tpu.memory_space<vmem>>, %arg3: memref<1x64xf32, #tpu.memory_space<vmem>>, %arg4: memref<128x64xbf16, #tpu.memory_space<vmem>>) attributes {dimension_semantics = [#tpu.dimension_semantics<arbitrary>], iteration_bounds = array<i64: 1>, scalar_prefetch = 0 : i64, scratch_operands = 0 : i64, tpu.core_type = #tpu.core_type<tc>, window_params = [{pipeline_mode = #tpu.pipeline_mode<synchronous>, transform_indices = @transform_0, window_bounds = array<i64: 128, 64>}, {pipeline_mode = #tpu.pipeline_mode<synchronous>, transform_indices = @transform_1, window_bounds = array<i64: 1, 64>}, {pipeline_mode = #tpu.pipeline_mode<synchronous>, transform_indices = @transform_2, window_bounds = array<i64: 1, 64>}, {pipeline_mode = #tpu.pipeline_mode<synchronous>, transform_indices = @transform_3, window_bounds = array<i64: 128, 64>}]} {
    %c0 = arith.constant 0 : index
    %c0_0 = arith.constant 0 : index
    %0 = vector.load %arg1[%c0, %c0_0] : memref<128x64xf32, #tpu.memory_space<vmem>>, vector<128x64xf32>
    %cst = arith.constant dense<0.000000e+00> : vector<64xf32>
    %1 = vector.multi_reduction <add>, %0, %cst [0] : vector<128x64xf32> to vector<64xf32>
    %2 = vector.shape_cast %1 : vector<64xf32> to vector<1x64xf32>
    %cst_1 = arith.constant 7.812500e-03 : f32
    %3 = vector.broadcast %cst_1 : f32 to vector<1x64xf32>
    %4 = arith.mulf %2, %3 : vector<1x64xf32>
    %5 = vector.broadcast %4 : vector<1x64xf32> to vector<128x64xf32>
    %6 = arith.subf %0, %5 : vector<128x64xf32>
    %7 = arith.mulf %6, %6 : vector<128x64xf32>
    %cst_2 = arith.constant dense<0.000000e+00> : vector<64xf32>
    %8 = vector.multi_reduction <add>, %7, %cst_2 [0] : vector<128x64xf32> to vector<64xf32>
    %9 = vector.shape_cast %8 : vector<64xf32> to vector<1x64xf32>
    %cst_3 = arith.constant 7.812500e-03 : f32
    %10 = vector.broadcast %cst_3 : f32 to vector<1x64xf32>
    %11 = arith.mulf %9, %10 : vector<1x64xf32>
    %cst_4 = arith.constant 9.99999974E-6 : f32
    %12 = vector.broadcast %cst_4 : f32 to vector<1x64xf32>
    %13 = arith.addf %11, %12 : vector<1x64xf32>
    %14 = math.rsqrt %13 : vector<1x64xf32>
    %c0_5 = arith.constant 0 : index
    %c0_6 = arith.constant 0 : index
    %15 = vector.load %arg2[%c0_5, %c0_6] : memref<1x64xf32, #tpu.memory_space<vmem>>, vector<1x64xf32>
    %16 = arith.mulf %14, %15 : vector<1x64xf32>
    %17 = vector.broadcast %16 : vector<1x64xf32> to vector<128x64xf32>
    %18 = arith.mulf %6, %17 : vector<128x64xf32>
    %c0_7 = arith.constant 0 : index
    %c0_8 = arith.constant 0 : index
    %19 = vector.load %arg3[%c0_7, %c0_8] : memref<1x64xf32, #tpu.memory_space<vmem>>, vector<1x64xf32>
    %20 = vector.broadcast %19 : vector<1x64xf32> to vector<128x64xf32>
    %21 = arith.addf %18, %20 : vector<128x64xf32>
    %cst_9 = arith.constant 0.000000e+00 : f32
    %22 = vector.broadcast %cst_9 : f32 to vector<128x64xf32>
    %23 = arith.maximumf %21, %22 : vector<128x64xf32>
    %24 = arith.truncf %23 : vector<128x64xf32> to vector<128x64xbf16>
    %c0_10 = arith.constant 0 : index
    %c0_11 = arith.constant 0 : index
    %25 = vector.load %arg4[%c0_10, %c0_11] : memref<128x64xbf16, #tpu.memory_space<vmem>>, vector<128x64xbf16>
    tpu.vector_store %arg4[%c0_10, %c0_11], %24 {strides = array<i32>} : memref<128x64xbf16, #tpu.memory_space<vmem>>, vector<128x64xbf16>,
    return
  }
  func.func @transform_0(%arg0: i32) -> (i32, i32) {
    %c0_i32 = arith.constant 0 : i32
    %c0_i32_0 = arith.constant 0 : i32
    %c0_i32_1 = arith.constant 0 : i32
    return %c0_i32, %c0_i32_0 : i32, i32
  }
  func.func @transform_1(%arg0: i32) -> (i32, i32) {
    %c0_i32 = arith.constant 0 : i32
    %c0_i32_0 = arith.constant 0 : i32
    %c0_i32_1 = arith.constant 0 : i32
    return %c0_i32, %c0_i32_0 : i32, i32
  }
  func.func @transform_2(%arg0: i32) -> (i32, i32) {
    %c0_i32 = arith.constant 0 : i32
    %c0_i32_0 = arith.constant 0 : i32
    %c0_i32_1 = arith.constant 0 : i32
    return %c0_i32, %c0_i32_0 : i32, i32
  }
  func.func @transform_3(%arg0: i32) -> (i32, i32) {
    %c0_i32 = arith.constant 0 : i32
    %c0_i32_0 = arith.constant 0 : i32
    %c0_i32_1 = arith.constant 0 : i32
    return %c0_i32, %c0_i32_0 : i32, i32
  }
}

module attributes {stable_mosaic.version = 11 : i64} {
  func.func @kernel(%arg0: i32, %arg1: memref<128x64xbf16, #tpu.memory_space<vmem>>, %arg2: memref<64x512xbf16, #tpu.memory_space<vmem>>, %arg3: memref<128x512xf32, #tpu.memory_space<vmem>>) attributes {dimension_semantics = [#tpu.dimension_semantics<parallel>], iteration_bounds = array<i64: 1>, scalar_prefetch = 0 : i64, scratch_operands = 0 : i64, tpu.core_type = #tpu.core_type<tc>, window_params = [{transform_indices = @transform_0, window_bounds = array<i64: 128, 64>}, {pipeline_mode = #tpu.pipeline_mode<synchronous>, transform_indices = @transform_1, window_bounds = array<i64: 64, 512>}, {transform_indices = @transform_2, window_bounds = array<i64: 128, 512>}]} {
    %c0 = arith.constant 0 : index
    %c0_0 = arith.constant 0 : index
    %0 = vector.load %arg1[%c0, %c0_0] : memref<128x64xbf16, #tpu.memory_space<vmem>>, vector<128x64xbf16>
    %c0_1 = arith.constant 0 : index
    %c0_2 = arith.constant 0 : index
    %1 = vector.load %arg2[%c0_1, %c0_2] : memref<64x512xbf16, #tpu.memory_space<vmem>>, vector<64x512xbf16>
    %cst = arith.constant dense<0.000000e+00> : vector<128x512xf32>
    %2 = tpu.matmul %0, %1, %cst {dimension_numbers = #tpu.dot_dimension_numbers<[1], [0], [0], [1], [0, 0, 1, 1], [], []>} : vector<128x64xbf16>, vector<64x512xbf16>, vector<128x512xf32> -> vector<128x512xf32>
    %c0_3 = arith.constant 0 : index
    %c0_4 = arith.constant 0 : index
    %3 = vector.load %arg3[%c0_3, %c0_4] : memref<128x512xf32, #tpu.memory_space<vmem>>, vector<128x512xf32>
    tpu.vector_store %arg3[%c0_3, %c0_4], %2 {strides = array<i32>} : memref<128x512xf32, #tpu.memory_space<vmem>>, vector<128x512xf32>,
    return
  }
  func.func @transform_0(%arg0: i32) -> (i32, i32) {
    %c0_i32 = arith.constant 0 : i32
    %c0_i32_0 = arith.constant 0 : i32
    return %arg0, %c0_i32 : i32, i32
  }
  func.func @transform_1(%arg0: i32) -> (i32, i32) {
    %c0_i32 = arith.constant 0 : i32
    %c0_i32_0 = arith.constant 0 : i32
    %c0_i32_1 = arith.constant 0 : i32
    return %c0_i32, %c0_i32_0 : i32, i32
  }
  func.func @transform_2(%arg0: i32) -> (i32, i32) {
    %c0_i32 = arith.constant 0 : i32
    %c0_i32_0 = arith.constant 0 : i32
    return %arg0, %c0_i32 : i32, i32
  }
}

module attributes {stable_mosaic.version = 11 : i64} {
  func.func @kernel(%arg0: i32, %arg1: memref<512x32xf32, #tpu.memory_space<vmem>>, %arg2: memref<1x32xf32, #tpu.memory_space<vmem>>, %arg3: memref<1x32xf32, #tpu.memory_space<vmem>>, %arg4: memref<512x32xbf16, #tpu.memory_space<vmem>>) attributes {dimension_semantics = [#tpu.dimension_semantics<arbitrary>], iteration_bounds = array<i64: 1>, scalar_prefetch = 0 : i64, scratch_operands = 0 : i64, tpu.core_type = #tpu.core_type<tc>, window_params = [{pipeline_mode = #tpu.pipeline_mode<synchronous>, transform_indices = @transform_0, window_bounds = array<i64: 512, 32>}, {pipeline_mode = #tpu.pipeline_mode<synchronous>, transform_indices = @transform_1, window_bounds = array<i64: 1, 32>}, {pipeline_mode = #tpu.pipeline_mode<synchronous>, transform_indices = @transform_2, window_bounds = array<i64: 1, 32>}, {pipeline_mode = #tpu.pipeline_mode<synchronous>, transform_indices = @transform_3, window_bounds = array<i64: 512, 32>}]} {
    %c0 = arith.constant 0 : index
    %c0_0 = arith.constant 0 : index
    %0 = vector.load %arg1[%c0, %c0_0] : memref<512x32xf32, #tpu.memory_space<vmem>>, vector<512x32xf32>
    %cst = arith.constant dense<0.000000e+00> : vector<32xf32>
    %1 = vector.multi_reduction <add>, %0, %cst [0] : vector<512x32xf32> to vector<32xf32>
    %2 = vector.shape_cast %1 : vector<32xf32> to vector<1x32xf32>
    %cst_1 = arith.constant 0.001953125 : f32
    %3 = vector.broadcast %cst_1 : f32 to vector<1x32xf32>
    %4 = arith.mulf %2, %3 : vector<1x32xf32>
    %5 = vector.broadcast %4 : vector<1x32xf32> to vector<512x32xf32>
    %6 = arith.subf %0, %5 : vector<512x32xf32>
    %7 = arith.mulf %6, %6 : vector<512x32xf32>
    %cst_2 = arith.constant dense<0.000000e+00> : vector<32xf32>
    %8 = vector.multi_reduction <add>, %7, %cst_2 [0] : vector<512x32xf32> to vector<32xf32>
    %9 = vector.shape_cast %8 : vector<32xf32> to vector<1x32xf32>
    %cst_3 = arith.constant 0.001953125 : f32
    %10 = vector.broadcast %cst_3 : f32 to vector<1x32xf32>
    %11 = arith.mulf %9, %10 : vector<1x32xf32>
    %cst_4 = arith.constant 9.99999974E-6 : f32
    %12 = vector.broadcast %cst_4 : f32 to vector<1x32xf32>
    %13 = arith.addf %11, %12 : vector<1x32xf32>
    %14 = math.rsqrt %13 : vector<1x32xf32>
    %c0_5 = arith.constant 0 : index
    %c0_6 = arith.constant 0 : index
    %15 = vector.load %arg2[%c0_5, %c0_6] : memref<1x32xf32, #tpu.memory_space<vmem>>, vector<1x32xf32>
    %16 = arith.mulf %14, %15 : vector<1x32xf32>
    %17 = vector.broadcast %16 : vector<1x32xf32> to vector<512x32xf32>
    %18 = arith.mulf %6, %17 : vector<512x32xf32>
    %c0_7 = arith.constant 0 : index
    %c0_8 = arith.constant 0 : index
    %19 = vector.load %arg3[%c0_7, %c0_8] : memref<1x32xf32, #tpu.memory_space<vmem>>, vector<1x32xf32>
    %20 = vector.broadcast %19 : vector<1x32xf32> to vector<512x32xf32>
    %21 = arith.addf %18, %20 : vector<512x32xf32>
    %cst_9 = arith.constant 0.000000e+00 : f32
    %22 = vector.broadcast %cst_9 : f32 to vector<512x32xf32>
    %23 = arith.maximumf %21, %22 : vector<512x32xf32>
    %24 = arith.truncf %23 : vector<512x32xf32> to vector<512x32xbf16>
    %c0_10 = arith.constant 0 : index
    %c0_11 = arith.constant 0 : index
    %25 = vector.load %arg4[%c0_10, %c0_11] : memref<512x32xbf16, #tpu.memory_space<vmem>>, vector<512x32xbf16>
    tpu.vector_store %arg4[%c0_10, %c0_11], %24 {strides = array<i32>} : memref<512x32xbf16, #tpu.memory_space<vmem>>, vector<512x32xbf16>,
    return
  }
  func.func @transform_0(%arg0: i32) -> (i32, i32) {
    %c0_i32 = arith.constant 0 : i32
    %c0_i32_0 = arith.constant 0 : i32
    %c0_i32_1 = arith.constant 0 : i32
    return %c0_i32, %c0_i32_0 : i32, i32
  }
  func.func @transform_1(%arg0: i32) -> (i32, i32) {
    %c0_i32 = arith.constant 0 : i32
    %c0_i32_0 = arith.constant 0 : i32
    %c0_i32_1 = arith.constant 0 : i32
    return %c0_i32, %c0_i32_0 : i32, i32
  }
  func.func @transform_2(%arg0: i32) -> (i32, i32) {
    %c0_i32 = arith.constant 0 : i32
    %c0_i32_0 = arith.constant 0 : i32
    %c0_i32_1 = arith.constant 0 : i32
    return %c0_i32, %c0_i32_0 : i32, i32
  }
  func.func @transform_3(%arg0: i32) -> (i32, i32) {
    %c0_i32 = arith.constant 0 : i32
    %c0_i32_0 = arith.constant 0 : i32
    %c0_i32_1 = arith.constant 0 : i32
    return %c0_i32, %c0_i32_0 : i32, i32
  }
}

module attributes {stable_mosaic.version = 11 : i64} {
  func.func @kernel(%arg0: i32, %arg1: memref<256x32xbf16, #tpu.memory_space<vmem>>, %arg2: memref<32x256xbf16, #tpu.memory_space<vmem>>, %arg3: memref<256x256xf32, #tpu.memory_space<vmem>>) attributes {dimension_semantics = [#tpu.dimension_semantics<parallel>], iteration_bounds = array<i64: 2>, scalar_prefetch = 0 : i64, scratch_operands = 0 : i64, tpu.core_type = #tpu.core_type<tc>, window_params = [{transform_indices = @transform_0, window_bounds = array<i64: 256, 32>}, {pipeline_mode = #tpu.pipeline_mode<synchronous>, transform_indices = @transform_1, window_bounds = array<i64: 32, 256>}, {transform_indices = @transform_2, window_bounds = array<i64: 256, 256>}]} {
    %c0 = arith.constant 0 : index
    %c0_0 = arith.constant 0 : index
    %0 = vector.load %arg1[%c0, %c0_0] : memref<256x32xbf16, #tpu.memory_space<vmem>>, vector<256x32xbf16>
    %c0_1 = arith.constant 0 : index
    %c0_2 = arith.constant 0 : index
    %1 = vector.load %arg2[%c0_1, %c0_2] : memref<32x256xbf16, #tpu.memory_space<vmem>>, vector<32x256xbf16>
    %cst = arith.constant dense<0.000000e+00> : vector<256x256xf32>
    %2 = tpu.matmul %0, %1, %cst {dimension_numbers = #tpu.dot_dimension_numbers<[1], [0], [0], [1], [0, 0, 1, 1], [], []>} : vector<256x32xbf16>, vector<32x256xbf16>, vector<256x256xf32> -> vector<256x256xf32>
    %c0_3 = arith.constant 0 : index
    %c0_4 = arith.constant 0 : index
    %3 = vector.load %arg3[%c0_3, %c0_4] : memref<256x256xf32, #tpu.memory_space<vmem>>, vector<256x256xf32>
    tpu.vector_store %arg3[%c0_3, %c0_4], %2 {strides = array<i32>} : memref<256x256xf32, #tpu.memory_space<vmem>>, vector<256x256xf32>,
    return
  }
  func.func @transform_0(%arg0: i32) -> (i32, i32) {
    %c0_i32 = arith.constant 0 : i32
    %c0_i32_0 = arith.constant 0 : i32
    return %arg0, %c0_i32 : i32, i32
  }
  func.func @transform_1(%arg0: i32) -> (i32, i32) {
    %c0_i32 = arith.constant 0 : i32
    %c0_i32_0 = arith.constant 0 : i32
    %c0_i32_1 = arith.constant 0 : i32
    return %c0_i32, %c0_i32_0 : i32, i32
  }
  func.func @transform_2(%arg0: i32) -> (i32, i32) {
    %c0_i32 = arith.constant 0 : i32
    %c0_i32_0 = arith.constant 0 : i32
    return %arg0, %c0_i32 : i32, i32
  }
}

module attributes {stable_mosaic.version = 11 : i64} {
  func.func @kernel(%arg0: i32, %arg1: memref<2048x16xf32, #tpu.memory_space<vmem>>, %arg2: memref<1x16xf32, #tpu.memory_space<vmem>>, %arg3: memref<1x16xf32, #tpu.memory_space<vmem>>, %arg4: memref<2048x16xbf16, #tpu.memory_space<vmem>>) attributes {dimension_semantics = [#tpu.dimension_semantics<arbitrary>], iteration_bounds = array<i64: 1>, scalar_prefetch = 0 : i64, scratch_operands = 0 : i64, tpu.core_type = #tpu.core_type<tc>, window_params = [{pipeline_mode = #tpu.pipeline_mode<synchronous>, transform_indices = @transform_0, window_bounds = array<i64: 2048, 16>}, {pipeline_mode = #tpu.pipeline_mode<synchronous>, transform_indices = @transform_1, window_bounds = array<i64: 1, 16>}, {pipeline_mode = #tpu.pipeline_mode<synchronous>, transform_indices = @transform_2, window_bounds = array<i64: 1, 16>}, {pipeline_mode = #tpu.pipeline_mode<synchronous>, transform_indices = @transform_3, window_bounds = array<i64: 2048, 16>}]} {
    %c0 = arith.constant 0 : index
    %c0_0 = arith.constant 0 : index
    %0 = vector.load %arg1[%c0, %c0_0] : memref<2048x16xf32, #tpu.memory_space<vmem>>, vector<2048x16xf32>
    %cst = arith.constant dense<0.000000e+00> : vector<16xf32>
    %1 = vector.multi_reduction <add>, %0, %cst [0] : vector<2048x16xf32> to vector<16xf32>
    %2 = vector.shape_cast %1 : vector<16xf32> to vector<1x16xf32>
    %cst_1 = arith.constant 4.8828125E-4 : f32
    %3 = vector.broadcast %cst_1 : f32 to vector<1x16xf32>
    %4 = arith.mulf %2, %3 : vector<1x16xf32>
    %5 = vector.broadcast %4 : vector<1x16xf32> to vector<2048x16xf32>
    %6 = arith.subf %0, %5 : vector<2048x16xf32>
    %7 = arith.mulf %6, %6 : vector<2048x16xf32>
    %cst_2 = arith.constant dense<0.000000e+00> : vector<16xf32>
    %8 = vector.multi_reduction <add>, %7, %cst_2 [0] : vector<2048x16xf32> to vector<16xf32>
    %9 = vector.shape_cast %8 : vector<16xf32> to vector<1x16xf32>
    %cst_3 = arith.constant 4.8828125E-4 : f32
    %10 = vector.broadcast %cst_3 : f32 to vector<1x16xf32>
    %11 = arith.mulf %9, %10 : vector<1x16xf32>
    %cst_4 = arith.constant 9.99999974E-6 : f32
    %12 = vector.broadcast %cst_4 : f32 to vector<1x16xf32>
    %13 = arith.addf %11, %12 : vector<1x16xf32>
    %14 = math.rsqrt %13 : vector<1x16xf32>
    %c0_5 = arith.constant 0 : index
    %c0_6 = arith.constant 0 : index
    %15 = vector.load %arg2[%c0_5, %c0_6] : memref<1x16xf32, #tpu.memory_space<vmem>>, vector<1x16xf32>
    %16 = arith.mulf %14, %15 : vector<1x16xf32>
    %17 = vector.broadcast %16 : vector<1x16xf32> to vector<2048x16xf32>
    %18 = arith.mulf %6, %17 : vector<2048x16xf32>
    %c0_7 = arith.constant 0 : index
    %c0_8 = arith.constant 0 : index
    %19 = vector.load %arg3[%c0_7, %c0_8] : memref<1x16xf32, #tpu.memory_space<vmem>>, vector<1x16xf32>
    %20 = vector.broadcast %19 : vector<1x16xf32> to vector<2048x16xf32>
    %21 = arith.addf %18, %20 : vector<2048x16xf32>
    %cst_9 = arith.constant 0.000000e+00 : f32
    %22 = vector.broadcast %cst_9 : f32 to vector<2048x16xf32>
    %23 = arith.maximumf %21, %22 : vector<2048x16xf32>
    %24 = arith.truncf %23 : vector<2048x16xf32> to vector<2048x16xbf16>
    %c0_10 = arith.constant 0 : index
    %c0_11 = arith.constant 0 : index
    %25 = vector.load %arg4[%c0_10, %c0_11] : memref<2048x16xbf16, #tpu.memory_space<vmem>>, vector<2048x16xbf16>
    tpu.vector_store %arg4[%c0_10, %c0_11], %24 {strides = array<i32>} : memref<2048x16xbf16, #tpu.memory_space<vmem>>, vector<2048x16xbf16>,
    return
  }
  func.func @transform_0(%arg0: i32) -> (i32, i32) {
    %c0_i32 = arith.constant 0 : i32
    %c0_i32_0 = arith.constant 0 : i32
    %c0_i32_1 = arith.constant 0 : i32
    return %c0_i32, %c0_i32_0 : i32, i32
  }
  func.func @transform_1(%arg0: i32) -> (i32, i32) {
    %c0_i32 = arith.constant 0 : i32
    %c0_i32_0 = arith.constant 0 : i32
    %c0_i32_1 = arith.constant 0 : i32
    return %c0_i32, %c0_i32_0 : i32, i32
  }
  func.func @transform_2(%arg0: i32) -> (i32, i32) {
    %c0_i32 = arith.constant 0 : i32
    %c0_i32_0 = arith.constant 0 : i32
    %c0_i32_1 = arith.constant 0 : i32
    return %c0_i32, %c0_i32_0 : i32, i32
  }
  func.func @transform_3(%arg0: i32) -> (i32, i32) {
    %c0_i32 = arith.constant 0 : i32
    %c0_i32_0 = arith.constant 0 : i32
    %c0_i32_1 = arith.constant 0 : i32
    return %c0_i32, %c0_i32_0 : i32, i32
  }
}

module attributes {stable_mosaic.version = 11 : i64} {
  func.func @kernel(%arg0: i32, %arg1: memref<1024x16xbf16, #tpu.memory_space<vmem>>, %arg2: memref<16x128xbf16, #tpu.memory_space<vmem>>, %arg3: memref<1024x128xf32, #tpu.memory_space<vmem>>) attributes {dimension_semantics = [#tpu.dimension_semantics<parallel>], iteration_bounds = array<i64: 2>, scalar_prefetch = 0 : i64, scratch_operands = 0 : i64, tpu.core_type = #tpu.core_type<tc>, window_params = [{transform_indices = @transform_0, window_bounds = array<i64: 1024, 16>}, {pipeline_mode = #tpu.pipeline_mode<synchronous>, transform_indices = @transform_1, window_bounds = array<i64: 16, 128>}, {transform_indices = @transform_2, window_bounds = array<i64: 1024, 128>}]} {
    %c0 = arith.constant 0 : index
    %c0_0 = arith.constant 0 : index
    %0 = vector.load %arg1[%c0, %c0_0] : memref<1024x16xbf16, #tpu.memory_space<vmem>>, vector<1024x16xbf16>
    %c0_1 = arith.constant 0 : index
    %c0_2 = arith.constant 0 : index
    %1 = vector.load %arg2[%c0_1, %c0_2] : memref<16x128xbf16, #tpu.memory_space<vmem>>, vector<16x128xbf16>
    %cst = arith.constant dense<0.000000e+00> : vector<1024x128xf32>
    %2 = tpu.matmul %0, %1, %cst {dimension_numbers = #tpu.dot_dimension_numbers<[1], [0], [0], [1], [0, 0, 1, 1], [], []>} : vector<1024x16xbf16>, vector<16x128xbf16>, vector<1024x128xf32> -> vector<1024x128xf32>
    %c0_3 = arith.constant 0 : index
    %c0_4 = arith.constant 0 : index
    %3 = vector.load %arg3[%c0_3, %c0_4] : memref<1024x128xf32, #tpu.memory_space<vmem>>, vector<1024x128xf32>
    tpu.vector_store %arg3[%c0_3, %c0_4], %2 {strides = array<i32>} : memref<1024x128xf32, #tpu.memory_space<vmem>>, vector<1024x128xf32>,
    return
  }
  func.func @transform_0(%arg0: i32) -> (i32, i32) {
    %c0_i32 = arith.constant 0 : i32
    %c0_i32_0 = arith.constant 0 : i32
    return %arg0, %c0_i32 : i32, i32
  }
  func.func @transform_1(%arg0: i32) -> (i32, i32) {
    %c0_i32 = arith.constant 0 : i32
    %c0_i32_0 = arith.constant 0 : i32
    %c0_i32_1 = arith.constant 0 : i32
    return %c0_i32, %c0_i32_0 : i32, i32
  }
  func.func @transform_2(%arg0: i32) -> (i32, i32) {
    %c0_i32 = arith.constant 0 : i32
    %c0_i32_0 = arith.constant 0 : i32
    return %arg0, %c0_i32 : i32, i32
  }
}

module attributes {stable_mosaic.version = 11 : i64} {
  func.func @kernel(%arg0: i32, %arg1: memref<64x512xf32, #tpu.memory_space<vmem>>, %arg2: memref<64x512xf32, #tpu.memory_space<vmem>>) attributes {dimension_semantics = [#tpu.dimension_semantics<parallel>], iteration_bounds = array<i64: 2>, scalar_prefetch = 0 : i64, scratch_operands = 0 : i64, tpu.core_type = #tpu.core_type<tc>, window_params = [{transform_indices = @transform_0, window_bounds = array<i64: 64, 512>}, {transform_indices = @transform_1, window_bounds = array<i64: 64, 512>}]} {
    %c0 = arith.constant 0 : index
    %c0_0 = arith.constant 0 : index
    %0 = vector.load %arg1[%c0, %c0_0] : memref<64x512xf32, #tpu.memory_space<vmem>>, vector<64x512xf32>
    %1 = math.tanh %0 : vector<64x512xf32>
    %c0_1 = arith.constant 0 : index
    %c0_2 = arith.constant 0 : index
    %2 = vector.load %arg2[%c0_1, %c0_2] : memref<64x512xf32, #tpu.memory_space<vmem>>, vector<64x512xf32>
    tpu.vector_store %arg2[%c0_1, %c0_2], %1 {strides = array<i32>} : memref<64x512xf32, #tpu.memory_space<vmem>>, vector<64x512xf32>,
    return
  }
  func.func @transform_0(%arg0: i32) -> (i32, i32) {
    %c0_i32 = arith.constant 0 : i32
    %c0_i32_0 = arith.constant 0 : i32
    return %arg0, %c0_i32 : i32, i32
  }
  func.func @transform_1(%arg0: i32) -> (i32, i32) {
    %c0_i32 = arith.constant 0 : i32
    %c0_i32_0 = arith.constant 0 : i32
    return %arg0, %c0_i32 : i32, i32
  }
}

</mosaic_0001>

<llo_original>
// kernel: generator_forward.11
$region0: #{generator_forward.11}
  #allocation0 [shape = 'u32[]', space=smem, size = 0x4, offset = 0x4, fixed_abs, tag = 'smem constant byte address 0x4 - core index']
  #allocation1 [shape = 'u32[144,128]{1,0:T(1,128)}', space=vmem, size = 0x12000, scoped, tag = 'internal scratch']
  %s0 = inlined_call_operand.vmem [shape: f32[32,128], index: 0, kind: input, shape index: {}]
  %s1 = inlined_call_operand.hbm [shape: f32[1,128], index: 1, kind: input, shape index: {}]
  %s2 = inlined_call_operand.hbm [shape: f32[1,128], index: 2, kind: input, shape index: {}]
  %s3 = inlined_call_operand.vmem [shape: bf16[32,128], index: 3, kind: output, shape index: {}]
  %s4 = sld [smem:[#allocation0]]
  $region30: #{generator_forward.11} parent=0
    _
  %s6 = ssub.s32 1, %s4
  %s7 = scalar_select 0, %s6, %s4
  $region1: #{generator_forward.11} parent=0
    #allocation2 [shape = 'u8[512]{0}', space=vmem, size = 0x400, scoped, tag = 'input window, operand 1, single buffered']
    #allocation3 [shape = 's32[1]{0}', space=sflag, size = 0x4, scoped, tag = 'scoped memory for generator_forward.11']
    #allocation4 [shape = 'u8[512]{0}', space=vmem, size = 0x400, scoped, tag = 'input window, operand 2, single buffered']
    #allocation5 [shape = 's32[1]{0}', space=sflag, size = 0x4, scoped, tag = 'scoped memory for generator_forward.11']
    %8 = vsyncpa [#allocation3], 0
    %9 = vsyncpa [#allocation5], 0
    // Predicated region
    $region2: #{generator_forward.11} parent=1 // pred_check
      _
    $region3: #{generator_forward.11} parent=1 // pred_check_branch
      %11 = sbr.rel (0) target = $region5
    $region4: #{generator_forward.11} parent=1 // pred_region
      _
    $region5: #{generator_forward.11} parent=1 // pred_fallthru
      _
    // Predicated region
    $region6: #{generator_forward.11} parent=1 // pred_check
      _
    $region7: #{generator_forward.11} parent=1 // pred_check_branch
      %13 = sbr.rel (0) target = $region9
    $region8: #{generator_forward.11} parent=1 // pred_region
      %s15 = ssub.s32 16, 16
      %16 = vsyncadd [#allocation3], %s15
      %s18 = sshll.u32 [#allocation2], 4
      %s19 = int_to_ptr.vmem [resolvable:$true] %s18
      %21 = dma.hbm_to_vmem [thread:$0]  %s1, 16, %s19, [#allocation3]
    $region9: #{generator_forward.11} parent=1 // pred_fallthru
      _
    // Predicated region
    $region10: #{generator_forward.11} parent=1 // pred_check
      _
    $region11: #{generator_forward.11} parent=1 // pred_check_branch
      %23 = sbr.rel (0) target = $region13
    $region12: #{generator_forward.11} parent=1 // pred_region
      %s25 = ssub.s32 16, 16
      %26 = vsyncadd [#allocation5], %s25
      %s28 = sshll.u32 [#allocation4], 4
      %s29 = int_to_ptr.vmem [resolvable:$true] %s28
      %31 = dma.hbm_to_vmem [thread:$0]  %s2, 16, %s29, [#allocation5]
    $region13: #{generator_forward.11} parent=1 // pred_fallthru
      _
    // Predicated region
    $region14: #{generator_forward.11} parent=1 // pred_check
      _
    $region15: #{generator_forward.11} parent=1 // pred_check_branch
      %33 = sbr.rel (0) target = $region17
    $region16: #{generator_forward.11} parent=1 // pred_region
      %34 = dma.done [#allocation3], 16
    $region17: #{generator_forward.11} parent=1 // pred_fallthru
      _
    // Predicated region
    $region18: #{generator_forward.11} parent=1 // pred_check
      _
    $region19: #{generator_forward.11} parent=1 // pred_check_branch
      %36 = sbr.rel (0) target = $region21
    $region20: #{generator_forward.11} parent=1 // pred_region
      %37 = dma.done [#allocation5], 16
    $region21: #{generator_forward.11} parent=1 // pred_fallthru
      _
    %v38 = vld [vmem:[%s0] sm:$0xff]
    %v39 = vld [vmem:[%s0 + $0x8] sm:$0xff]
    %v40 = vld [vmem:[%s0 + $0x10] sm:$0xff]
    %v41 = vld [vmem:[%s0 + $0x18] sm:$0xff]
    %v42 = vadd.f32 %v38, %v39
    %v43 = vadd.f32 %v42, %v40
    %v44 = vadd.f32 %v43, %v41
    %v45 = vrot.slane %v44, 4
    %v46 = vadd.f32 %v44, %v45
    %v47 = vrot.slane %v46, 2
    %v48 = vadd.f32 %v46, %v47
    %v49 = vrot.slane %v48, 1
    %v50 = vadd.f32 %v48, %v49
    %v51 = vmul.f32 %v50, 0.03125
    %v52 = vsub.f32 %v38, %v51
    %v53 = vsub.f32 %v39, %v51
    %v54 = vsub.f32 %v40, %v51
    %v55 = vsub.f32 %v41, %v51
    %v56 = vmul.f32 %v52, %v52
    %v57 = vmul.f32 %v53, %v53
    %v58 = vmul.f32 %v54, %v54
    %v59 = vmul.f32 %v55, %v55
    %v60 = vadd.f32 %v56, %v57
    %v61 = vadd.f32 %v60, %v58
    %v62 = vadd.f32 %v61, %v59
    %v63 = vrot.slane %v62, 4
    %v64 = vadd.f32 %v62, %v63
    %v65 = vrot.slane %v64, 2
    %v66 = vadd.f32 %v64, %v65
    %v67 = vrot.slane %v66, 1
    %v68 = vadd.f32 %v66, %v67
    %v69 = vmul.f32 %v68, 0.03125
    %v70 = vadd.f32 %v69, 1e-05
    %v71 = vrsqrt.pop %v70
    %v72 = vld [vmem:[#allocation2] sm:$0x1]
    %v73 = vmul.f32 %v71, %v72
    %v74 = vlaneseq
    %v75 = vshrl.u32 %v74, 7
    %v76 = vsub.s32 0, %v75
    %v77 = vrot.slane %v73, %v76
    %v78 = vmul.f32 %v52, %v77
    %v79 = vmul.f32 %v53, %v77
    %v80 = vmul.f32 %v54, %v77
    %v81 = vmul.f32 %v55, %v77
    %v82 = vld [vmem:[#allocation4] sm:$0x1]
    %v84 = vlaneseq
    %v85 = vshrl.u32 %v84, 7
    %v86 = vsub.s32 0, %v85
    %v87 = vrot.slane %v82, %v86
    %v89 = vadd.f32 %v78, %v87
    %v90 = vadd.f32 %v79, %v87
    %v91 = vadd.f32 %v80, %v87
    %v92 = vadd.f32 %v81, %v87
    %v93 = vmax.f32 %v89, 0.0
    %v94 = vmax.f32 %v90, 0.0
    %v95 = vmax.f32 %v91, 0.0
    %v96 = vmax.f32 %v92, 0.0
    %v97 = vpack.c.bf16 %v94, %v93
    %v98 = vpack.c.bf16 %v96, %v95
    %v101 = vunpack.c.l.b16 %v97
    %v102 = vunpack.c.h.b16 %v97
    %v103 = vunpack.c.l.b16 %v98
    %v104 = vunpack.c.h.b16 %v98
    %v105 = vpack.c.b16 %v101, %v101
    %v106 = vpack.c.b16 %v102, %v102
    %v107 = vpack.c.b16 %v103, %v103
    %v108 = vpack.c.b16 %v104, %v104
    %113 = vst [vmem:[%s3] sm:$0xf] %v105
    %114 = vst [vmem:[%s3 + $0x4] sm:$0xf] %v106
    %115 = vst [vmem:[%s3 + $0x8] sm:$0xf] %v107
    %116 = vst [vmem:[%s3 + $0xc] sm:$0xf] %v108
    // Predicated region
    $region22: #{generator_forward.11} parent=1 // pred_check
      _
    $region23: #{generator_forward.11} parent=1 // pred_check_branch
      %118 = sbr.rel (0) target = $region25
    $region24: #{generator_forward.11} parent=1 // pred_region
      _
    $region25: #{generator_forward.11} parent=1 // pred_fallthru
      _
    // Predicated region
    $region26: #{generator_forward.11} parent=1 // pred_check
      _
    $region27: #{generator_forward.11} parent=1 // pred_check_branch
      %120 = sbr.rel (0) target = $region29
    $region28: #{generator_forward.11} parent=1 // pred_region
      _
    $region29: #{generator_forward.11} parent=1 // pred_fallthru
      _
    %121 = vsyncpa [#allocation3], 1
    %122 = vsyncpa [#allocation5], 1

// kernel: generator_forward.10
$region0: #{generator_forward.10}
  #allocation0 [shape = 'u32[]', space=smem, size = 0x4, offset = 0x4, fixed_abs, tag = 'smem constant byte address 0x4 - core index']
  #allocation1 [shape = 'u32[144,128]{1,0:T(1,128)}', space=vmem, size = 0x12000, scoped, tag = 'internal scratch']
  %s0 = inlined_call_operand.vmem [shape: bf16[8,32], index: 0, kind: input, shape index: {}]
  %s1 = inlined_call_operand.hbm [shape: bf16[32,2048], index: 1, kind: input, shape index: {}]
  %s2 = inlined_call_operand.vmem [shape: f32[8,2048], index: 2, kind: output, shape index: {}]
  %s3 = sld [smem:[#allocation0]]
  $region22: #{generator_forward.10} parent=0
    _
  %s5 = ssub.s32 1, %s3
  %s6 = scalar_select 0, %s5, %s3
  $region1: #{generator_forward.10} parent=0
    #allocation2 [shape = 'u8[131072]{0}', space=vmem, size = 0x20000, scoped, tag = 'input window, operand 1, single buffered']
    #allocation3 [shape = 's32[1]{0}', space=sflag, size = 0x4, scoped, tag = 'scoped memory for generator_forward.10']
    %7 = vsyncpa [#allocation3], 0
    // Predicated region
    $region2: #{generator_forward.10} parent=1 // pred_check
      _
    $region3: #{generator_forward.10} parent=1 // pred_check_branch
      %9 = sbr.rel (0) target = $region5
    $region4: #{generator_forward.10} parent=1 // pred_region
      _
    $region5: #{generator_forward.10} parent=1 // pred_fallthru
      _
    // Predicated region
    $region6: #{generator_forward.10} parent=1 // pred_check
      _
    $region7: #{generator_forward.10} parent=1 // pred_check_branch
      %11 = sbr.rel (0) target = $region9
    $region8: #{generator_forward.10} parent=1 // pred_region
      %s13 = ssub.s32 4096, 4096
      %14 = vsyncadd [#allocation3], %s13
      %s15 = sshll.u32 [#allocation2], 4
      %s16 = int_to_ptr.vmem [resolvable:$true] %s15
      %21 = dma.hbm_to_vmem [thread:$0]  %s1, 4096, %s16, [#allocation3], 1024, 1024, 64
    $region9: #{generator_forward.10} parent=1 // pred_fallthru
      _
    // Predicated region
    $region10: #{generator_forward.10} parent=1 // pred_check
      _
    $region11: #{generator_forward.10} parent=1 // pred_check_branch
      %23 = sbr.rel (0) target = $region13
    $region12: #{generator_forward.10} parent=1 // pred_region
      %24 = dma.done [#allocation3], 4096
    $region13: #{generator_forward.10} parent=1 // pred_fallthru
      _
    %v26 = vld [vmem:[%s0] sm:$0xf]
    %v27 = vld [vmem:[#allocation2] sm:$0xff]
    %v28 = vld [vmem:[#allocation2 + $0x8] sm:$0xff]
    %v29 = vld [vmem:[#allocation2 + $0x10] sm:$0xff]
    %v30 = vld [vmem:[#allocation2 + $0x18] sm:$0xff]
    %v31 = vld [vmem:[#allocation2 + $0x20] sm:$0xff]
    %v32 = vld [vmem:[#allocation2 + $0x28] sm:$0xff]
    %v33 = vld [vmem:[#allocation2 + $0x30] sm:$0xff]
    %v34 = vld [vmem:[#allocation2 + $0x38] sm:$0xff]
    %v35 = vld [vmem:[#allocation2 + $0x40] sm:$0xff]
    %v36 = vld [vmem:[#allocation2 + $0x48] sm:$0xff]
    %v37 = vld [vmem:[#allocation2 + $0x50] sm:$0xff]
    %v38 = vld [vmem:[#allocation2 + $0x58] sm:$0xff]
    %v39 = vld [vmem:[#allocation2 + $0x60] sm:$0xff]
    %v40 = vld [vmem:[#allocation2 + $0x68] sm:$0xff]
    %v41 = vld [vmem:[#allocation2 + $0x70] sm:$0xff]
    %v42 = vld [vmem:[#allocation2 + $0x78] sm:$0xff]
    %v43 = vld [vmem:[#allocation2 + $0x80] sm:$0xff]
    %v44 = vld [vmem:[#allocation2 + $0x88] sm:$0xff]
    %v45 = vld [vmem:[#allocation2 + $0x90] sm:$0xff]
    %v46 = vld [vmem:[#allocation2 + $0x98] sm:$0xff]
    %v47 = vld [vmem:[#allocation2 + $0xa0] sm:$0xff]
    %v48 = vld [vmem:[#allocation2 + $0xa8] sm:$0xff]
    %v49 = vld [vmem:[#allocation2 + $0xb0] sm:$0xff]
    %v50 = vld [vmem:[#allocation2 + $0xb8] sm:$0xff]
    %v51 = vld [vmem:[#allocation2 + $0xc0] sm:$0xff]
    %v52 = vld [vmem:[#allocation2 + $0xc8] sm:$0xff]
    %v53 = vld [vmem:[#allocation2 + $0xd0] sm:$0xff]
    %v54 = vld [vmem:[#allocation2 + $0xd8] sm:$0xff]
    %v55 = vld [vmem:[#allocation2 + $0xe0] sm:$0xff]
    %v56 = vld [vmem:[#allocation2 + $0xe8] sm:$0xff]
    %v57 = vld [vmem:[#allocation2 + $0xf0] sm:$0xff]
    %v58 = vld [vmem:[#allocation2 + $0xf8] sm:$0xff]
    %v91 = vunpack.c.l.b16 %v27
    %v92 = vunpack.c.h.b16 %v27
    %v93 = vunpack.c.l.b16 %v28
    %v94 = vunpack.c.h.b16 %v28
    %v95 = vunpack.c.l.b16 %v29
    %v96 = vunpack.c.h.b16 %v29
    %v97 = vunpack.c.l.b16 %v30
    %v98 = vunpack.c.h.b16 %v30
    %v99 = vunpack.c.l.b16 %v31
    %v100 = vunpack.c.h.b16 %v31
    %v101 = vunpack.c.l.b16 %v32
    %v102 = vunpack.c.h.b16 %v32
    %v103 = vunpack.c.l.b16 %v33
    %v104 = vunpack.c.h.b16 %v33
    %v105 = vunpack.c.l.b16 %v34
    %v106 = vunpack.c.h.b16 %v34
    %v107 = vunpack.c.l.b16 %v35
    %v108 = vunpack.c.h.b16 %v35
    %v109 = vunpack.c.l.b16 %v36
    %v110 = vunpack.c.h.b16 %v36
    %v111 = vunpack.c.l.b16 %v37
    %v112 = vunpack.c.h.b16 %v37
    %v113 = vunpack.c.l.b16 %v38
    %v114 = vunpack.c.h.b16 %v38
    %v115 = vunpack.c.l.b16 %v39
    %v116 = vunpack.c.h.b16 %v39
    %v117 = vunpack.c.l.b16 %v40
    %v118 = vunpack.c.h.b16 %v40
    %v119 = vunpack.c.l.b16 %v41
    %v120 = vunpack.c.h.b16 %v41
    %v121 = vunpack.c.l.b16 %v42
    %v122 = vunpack.c.h.b16 %v42
    %v123 = vunpack.c.l.b16 %v43
    %v124 = vunpack.c.h.b16 %v43
    %v125 = vunpack.c.l.b16 %v44
    %v126 = vunpack.c.h.b16 %v44
    %v127 = vunpack.c.l.b16 %v45
    %v128 = vunpack.c.h.b16 %v45
    %v129 = vunpack.c.l.b16 %v46
    %v130 = vunpack.c.h.b16 %v46
    %v131 = vunpack.c.l.b16 %v47
    %v132 = vunpack.c.h.b16 %v47
    %v133 = vunpack.c.l.b16 %v48
    %v134 = vunpack.c.h.b16 %v48
    %v135 = vunpack.c.l.b16 %v49
    %v136 = vunpack.c.h.b16 %v49
    %v137 = vunpack.c.l.b16 %v50
    %v138 = vunpack.c.h.b16 %v50
    %v139 = vunpack.c.l.b16 %v51
    %v140 = vunpack.c.h.b16 %v51
    %v141 = vunpack.c.l.b16 %v52
    %v142 = vunpack.c.h.b16 %v52
    %v143 = vunpack.c.l.b16 %v53
    %v144 = vunpack.c.h.b16 %v53
    %v145 = vunpack.c.l.b16 %v54
    %v146 = vunpack.c.h.b16 %v54
    %v147 = vunpack.c.l.b16 %v55
    %v148 = vunpack.c.h.b16 %v55
    %v149 = vunpack.c.l.b16 %v56
    %v150 = vunpack.c.h.b16 %v56
    %v151 = vunpack.c.l.b16 %v57
    %v152 = vunpack.c.h.b16 %v57
    %v153 = vunpack.c.l.b16 %v58
    %v154 = vunpack.c.h.b16 %v58
    %v155 = vpack.c.b16 %v107, %v91
    %v156 = vpack.c.b16 %v108, %v92
    %v157 = vpack.c.b16 %v109, %v93
    %v158 = vpack.c.b16 %v110, %v94
    %v159 = vpack.c.b16 %v111, %v95
    %v160 = vpack.c.b16 %v112, %v96
    %v161 = vpack.c.b16 %v113, %v97
    %v162 = vpack.c.b16 %v114, %v98
    %v163 = vpack.c.b16 %v115, %v99
    %v164 = vpack.c.b16 %v116, %v100
    %v165 = vpack.c.b16 %v117, %v101
    %v166 = vpack.c.b16 %v118, %v102
    %v167 = vpack.c.b16 %v119, %v103
    %v168 = vpack.c.b16 %v120, %v104
    %v169 = vpack.c.b16 %v121, %v105
    %v170 = vpack.c.b16 %v122, %v106
    %v171 = vpack.c.b16 %v139, %v123
    %v172 = vpack.c.b16 %v140, %v124
    %v173 = vpack.c.b16 %v141, %v125
    %v174 = vpack.c.b16 %v142, %v126
    %v175 = vpack.c.b16 %v143, %v127
    %v176 = vpack.c.b16 %v144, %v128
    %v177 = vpack.c.b16 %v145, %v129
    %v178 = vpack.c.b16 %v146, %v130
    %v179 = vpack.c.b16 %v147, %v131
    %v180 = vpack.c.b16 %v148, %v132
    %v181 = vpack.c.b16 %v149, %v133
    %v182 = vpack.c.b16 %v150, %v134
    %v183 = vpack.c.b16 %v151, %v135
    %v184 = vpack.c.b16 %v152, %v136
    %v185 = vpack.c.b16 %v153, %v137
    %v186 = vpack.c.b16 %v154, %v138
    %vm219 = vcmask 261120
    %v221 = vsel %vm219, %v26, 0
    %223 = vmatprep.subr.bf16.mxu0 0
    %224 = vmatpush1.bf16.msra.mxu0 0
    %225 = vmatprep.subr.bf16.mxu0 0
    %226 = vmatpush1.bf16.msra.mxu0 0
    %227 = vmatprep.subr.bf16.mxu0 0
    %228 = vmatpush1.bf16.msra.mxu0 0
    %229 = vmatprep.subr.bf16.mxu0 0
    %230 = vmatpush1.bf16.msra.mxu0 0
    %231 = vmatprep.subr.bf16.mxu0 0
    %232 = vmatpush1.bf16.msra.mxu0 0
    %233 = vmatprep.subr.bf16.mxu0 0
    %234 = vmatpush1.bf16.msra.mxu0 0
    %235 = vmatprep.subr.bf16.mxu0 %v172
    %236 = vmatpush1.bf16.msra.mxu0 %v171
    %237 = vmatprep.subr.bf16.mxu0 %v156
    %238 = vmatpush1.bf16.msra.mxu0 %v155
    %239 = vmatprep.subr.bf16.mxu0 0
    %240 = vmatpush2.bf16.msra.mxu0 0
    %241 = vmatprep.subr.bf16.mxu0 0
    %242 = vmatpush2.bf16.msra.mxu0 0
    %243 = vmatprep.subr.bf16.mxu0 0
    %244 = vmatpush2.bf16.msra.mxu0 0
    %245 = vmatprep.subr.bf16.mxu0 0
    %246 = vmatpush2.bf16.msra.mxu0 0
    %247 = vmatprep.subr.bf16.mxu0 0
    %248 = vmatpush2.bf16.msra.mxu0 0
    %249 = vmatprep.subr.bf16.mxu0 0
    %250 = vmatpush2.bf16.msra.mxu0 0
    %251 = vmatprep.subr.bf16.mxu0 0
    %252 = vmatpush2.bf16.msra.mxu0 0
    %253 = vmatprep.subr.bf16.mxu0 0
    %254 = vmatpush2.bf16.msra.mxu0 0
    %255 = vmatprep.mubr.bf16.mxu0 0
    %256 = vmatmul.mubr.bf16.gmra.mxu0 %v221
    %v257 = vpop.f32.mrf.mxu0
    %v258 = vadd.f32 0.0, %v257
    %v259 = vpop.f32.mrf.mxu0
    %v260 = vadd.f32 0.0, %v259
    %v261 = vpop.f32.mrf.mxu0
    %v262 = vpop.f32.mrf.mxu0
    %263 = vdwg.mxu0
    %264 = vmatprep.subr.bf16.mxu0 0
    %265 = vmatpush1.bf16.msra.mxu0 0
    %266 = vmatprep.subr.bf16.mxu0 0
    %267 = vmatpush1.bf16.msra.mxu0 0
    %268 = vmatprep.subr.bf16.mxu0 0
    %269 = vmatpush1.bf16.msra.mxu0 0
    %270 = vmatprep.subr.bf16.mxu0 0
    %271 = vmatpush1.bf16.msra.mxu0 0
    %272 = vmatprep.subr.bf16.mxu0 0
    %273 = vmatpush1.bf16.msra.mxu0 0
    %274 = vmatprep.subr.bf16.mxu0 0
    %275 = vmatpush1.bf16.msra.mxu0 0
    %276 = vmatprep.subr.bf16.mxu0 %v174
    %277 = vmatpush1.bf16.msra.mxu0 %v173
    %278 = vmatprep.subr.bf16.mxu0 %v158
    %279 = vmatpush1.bf16.msra.mxu0 %v157
    %280 = vmatprep.subr.bf16.mxu0 0
    %281 = vmatpush2.bf16.msra.mxu0 0
    %282 = vmatprep.subr.bf16.mxu0 0
    %283 = vmatpush2.bf16.msra.mxu0 0
    %284 = vmatprep.subr.bf16.mxu0 0
    %285 = vmatpush2.bf16.msra.mxu0 0
    %286 = vmatprep.subr.bf16.mxu0 0
    %287 = vmatpush2.bf16.msra.mxu0 0
    %288 = vmatprep.subr.bf16.mxu0 0
    %289 = vmatpush2.bf16.msra.mxu0 0
    %290 = vmatprep.subr.bf16.mxu0 0
    %291 = vmatpush2.bf16.msra.mxu0 0
    %292 = vmatprep.subr.bf16.mxu0 0
    %293 = vmatpush2.bf16.msra.mxu0 0
    %294 = vmatprep.subr.bf16.mxu0 0
    %295 = vmatpush2.bf16.msra.mxu0 0
    %296 = vmatprep.mubr.bf16.mxu0 0
    %297 = vmatmul.mubr.bf16.gmra.mxu0 %v221
    %v298 = vpop.f32.mrf.mxu0
    %v299 = vadd.f32 0.0, %v298
    %v300 = vpop.f32.mrf.mxu0
    %v301 = vadd.f32 0.0, %v300
    %v302 = vpop.f32.mrf.mxu0
    %v303 = vpop.f32.mrf.mxu0
    %304 = vdwg.mxu0
    %305 = vmatprep.subr.bf16.mxu0 0
    %306 = vmatpush1.bf16.msra.mxu0 0
    %307 = vmatprep.subr.bf16.mxu0 0
    %308 = vmatpush1.bf16.msra.mxu0 0
    %309 = vmatprep.subr.bf16.mxu0 0
    %310 = vmatpush1.bf16.msra.mxu0 0
    %311 = vmatprep.subr.bf16.mxu0 0
    %312 = vmatpush1.bf16.msra.mxu0 0
    %313 = vmatprep.subr.bf16.mxu0 0
    %314 = vmatpush1.bf16.msra.mxu0 0
    %315 = vmatprep.subr.bf16.mxu0 0
    %316 = vmatpush1.bf16.msra.mxu0 0
    %317 = vmatprep.subr.bf16.mxu0 %v176
    %318 = vmatpush1.bf16.msra.mxu0 %v175
    %319 = vmatprep.subr.bf16.mxu0 %v160
    %320 = vmatpush1.bf16.msra.mxu0 %v159
    %321 = vmatprep.subr.bf16.mxu0 0
    %322 = vmatpush2.bf16.msra.mxu0 0
    %323 = vmatprep.subr.bf16.mxu0 0
    %324 = vmatpush2.bf16.msra.mxu0 0
    %325 = vmatprep.subr.bf16.mxu0 0
    %326 = vmatpush2.bf16.msra.mxu0 0
    %327 = vmatprep.subr.bf16.mxu0 0
    %328 = vmatpush2.bf16.msra.mxu0 0
    %329 = vmatprep.subr.bf16.mxu0 0
    %330 = vmatpush2.bf16.msra.mxu0 0
    %331 = vmatprep.subr.bf16.mxu0 0
    %332 = vmatpush2.bf16.msra.mxu0 0
    %333 = vmatprep.subr.bf16.mxu0 0
    %334 = vmatpush2.bf16.msra.mxu0 0
    %335 = vmatprep.subr.bf16.mxu0 0
    %336 = vmatpush2.bf16.msra.mxu0 0
    %337 = vmatprep.mubr.bf16.mxu0 0
    %338 = vmatmul.mubr.bf16.gmra.mxu0 %v221
    %v339 = vpop.f32.mrf.mxu0
    %v340 = vadd.f32 0.0, %v339
    %v341 = vpop.f32.mrf.mxu0
    %v342 = vadd.f32 0.0, %v341
    %v343 = vpop.f32.mrf.mxu0
    %v344 = vpop.f32.mrf.mxu0
    %345 = vdwg.mxu0
    %346 = vmatprep.subr.bf16.mxu0 0
    %347 = vmatpush1.bf16.msra.mxu0 0
    %348 = vmatprep.subr.bf16.mxu0 0
    %349 = vmatpush1.bf16.msra.mxu0 0
    %350 = vmatprep.subr.bf16.mxu0 0
    %351 = vmatpush1.bf16.msra.mxu0 0
    %352 = vmatprep.subr.bf16.mxu0 0
    %353 = vmatpush1.bf16.msra.mxu0 0
    %354 = vmatprep.subr.bf16.mxu0 0
    %355 = vmatpush1.bf16.msra.mxu0 0
    %356 = vmatprep.subr.bf16.mxu0 0
    %357 = vmatpush1.bf16.msra.mxu0 0
    %358 = vmatprep.subr.bf16.mxu0 %v178
    %359 = vmatpush1.bf16.msra.mxu0 %v177
    %360 = vmatprep.subr.bf16.mxu0 %v162
    %361 = vmatpush1.bf16.msra.mxu0 %v161
    %362 = vmatprep.subr.bf16.mxu0 0
    %363 = vmatpush2.bf16.msra.mxu0 0
    %364 = vmatprep.subr.bf16.mxu0 0
    %365 = vmatpush2.bf16.msra.mxu0 0
    %366 = vmatprep.subr.bf16.mxu0 0
    %367 = vmatpush2.bf16.msra.mxu0 0
    %368 = vmatprep.subr.bf16.mxu0 0
    %369 = vmatpush2.bf16.msra.mxu0 0
    %370 = vmatprep.subr.bf16.mxu0 0
    %371 = vmatpush2.bf16.msra.mxu0 0
    %372 = vmatprep.subr.bf16.mxu0 0
    %373 = vmatpush2.bf16.msra.mxu0 0
    %374 = vmatprep.subr.bf16.mxu0 0
    %375 = vmatpush2.bf16.msra.mxu0 0
    %376 = vmatprep.subr.bf16.mxu0 0
    %377 = vmatpush2.bf16.msra.mxu0 0
    %378 = vmatprep.mubr.bf16.mxu0 0
    %379 = vmatmul.mubr.bf16.gmra.mxu0 %v221
    %v380 = vpop.f32.mrf.mxu0
    %v381 = vadd.f32 0.0, %v380
    %v382 = vpop.f32.mrf.mxu0
    %v383 = vadd.f32 0.0, %v382
    %v384 = vpop.f32.mrf.mxu0
    %v385 = vpop.f32.mrf.mxu0
    %386 = vdwg.mxu0
    %387 = vmatprep.subr.bf16.mxu0 0
    %388 = vmatpush1.bf16.msra.mxu0 0
    %389 = vmatprep.subr.bf16.mxu0 0
    %390 = vmatpush1.bf16.msra.mxu0 0
    %391 = vmatprep.subr.bf16.mxu0 0
    %392 = vmatpush1.bf16.msra.mxu0 0
    %393 = vmatprep.subr.bf16.mxu0 0
    %394 = vmatpush1.bf16.msra.mxu0 0
    %395 = vmatprep.subr.bf16.mxu0 0
    %396 = vmatpush1.bf16.msra.mxu0 0
    %397 = vmatprep.subr.bf16.mxu0 0
    %398 = vmatpush1.bf16.msra.mxu0 0
    %399 = vmatprep.subr.bf16.mxu0 %v180
    %400 = vmatpush1.bf16.msra.mxu0 %v179
    %401 = vmatprep.subr.bf16.mxu0 %v164
    %402 = vmatpush1.bf16.msra.mxu0 %v163
    %403 = vmatprep.subr.bf16.mxu0 0
    %404 = vmatpush2.bf16.msra.mxu0 0
    %405 = vmatprep.subr.bf16.mxu0 0
    %406 = vmatpush2.bf16.msra.mxu0 0
    %407 = vmatprep.subr.bf16.mxu0 0
    %408 = vmatpush2.bf16.msra.mxu0 0
    %409 = vmatprep.subr.bf16.mxu0 0
    %410 = vmatpush2.bf16.msra.mxu0 0
    %411 = vmatprep.subr.bf16.mxu0 0
    %412 = vmatpush2.bf16.msra.mxu0 0
    %413 = vmatprep.subr.bf16.mxu0 0
    %414 = vmatpush2.bf16.msra.mxu0 0
    %415 = vmatprep.subr.bf16.mxu0 0
    %416 = vmatpush2.bf16.msra.mxu0 0
    %417 = vmatprep.subr.bf16.mxu0 0
    %418 = vmatpush2.bf16.msra.mxu0 0
    %419 = vmatprep.mubr.bf16.mxu0 0
    %420 = vmatmul.mubr.bf16.gmra.mxu0 %v221
    %v421 = vpop.f32.mrf.mxu0
    %v422 = vadd.f32 0.0, %v421
    %v423 = vpop.f32.mrf.mxu0
    %v424 = vadd.f32 0.0, %v423
    %v425 = vpop.f32.mrf.mxu0
    %v426 = vpop.f32.mrf.mxu0
    %427 = vdwg.mxu0
    %428 = vmatprep.subr.bf16.mxu0 0
    %429 = vmatpush1.bf16.msra.mxu0 0
    %430 = vmatprep.subr.bf16.mxu0 0
    %431 = vmatpush1.bf16.msra.mxu0 0
    %432 = vmatprep.subr.bf16.mxu0 0
    %433 = vmatpush1.bf16.msra.mxu0 0
    %434 = vmatprep.subr.bf16.mxu0 0
    %435 = vmatpush1.bf16.msra.mxu0 0
    %436 = vmatprep.subr.bf16.mxu0 0
    %437 = vmatpush1.bf16.msra.mxu0 0
    %438 = vmatprep.subr.bf16.mxu0 0
    %439 = vmatpush1.bf16.msra.mxu0 0
    %440 = vmatprep.subr.bf16.mxu0 %v182
    %441 = vmatpush1.bf16.msra.mxu0 %v181
    %442 = vmatprep.subr.bf16.mxu0 %v166
    %443 = vmatpush1.bf16.msra.mxu0 %v165
    %444 = vmatprep.subr.bf16.mxu0 0
    %445 = vmatpush2.bf16.msra.mxu0 0
    %446 = vmatprep.subr.bf16.mxu0 0
    %447 = vmatpush2.bf16.msra.mxu0 0
    %448 = vmatprep.subr.bf16.mxu0 0
    %449 = vmatpush2.bf16.msra.mxu0 0
    %450 = vmatprep.subr.bf16.mxu0 0
    %451 = vmatpush2.bf16.msra.mxu0 0
    %452 = vmatprep.subr.bf16.mxu0 0
    %453 = vmatpush2.bf16.msra.mxu0 0
    %454 = vmatprep.subr.bf16.mxu0 0
    %455 = vmatpush2.bf16.msra.mxu0 0
    %456 = vmatprep.subr.bf16.mxu0 0
    %457 = vmatpush2.bf16.msra.mxu0 0
    %458 = vmatprep.subr.bf16.mxu0 0
    %459 = vmatpush2.bf16.msra.mxu0 0
    %460 = vmatprep.mubr.bf16.mxu0 0
    %461 = vmatmul.mubr.bf16.gmra.mxu0 %v221
    %v462 = vpop.f32.mrf.mxu0
    %v463 = vadd.f32 0.0, %v462
    %v464 = vpop.f32.mrf.mxu0
    %v465 = vadd.f32 0.0, %v464
    %v466 = vpop.f32.mrf.mxu0
    %v467 = vpop.f32.mrf.mxu0
    %468 = vdwg.mxu0
    %469 = vmatprep.subr.bf16.mxu0 0
    %470 = vmatpush1.bf16.msra.mxu0 0
    %471 = vmatprep.subr.bf16.mxu0 0
    %472 = vmatpush1.bf16.msra.mxu0 0
    %473 = vmatprep.subr.bf16.mxu0 0
    %474 = vmatpush1.bf16.msra.mxu0 0
    %475 = vmatprep.subr.bf16.mxu0 0
    %476 = vmatpush1.bf16.msra.mxu0 0
    %477 = vmatprep.subr.bf16.mxu0 0
    %478 = vmatpush1.bf16.msra.mxu0 0
    %479 = vmatprep.subr.bf16.mxu0 0
    %480 = vmatpush1.bf16.msra.mxu0 0
    %481 = vmatprep.subr.bf16.mxu0 %v184
    %482 = vmatpush1.bf16.msra.mxu0 %v183
    %483 = vmatprep.subr.bf16.mxu0 %v168
    %484 = vmatpush1.bf16.msra.mxu0 %v167
    %485 = vmatprep.subr.bf16.mxu0 0
    %486 = vmatpush2.bf16.msra.mxu0 0
    %487 = vmatprep.subr.bf16.mxu0 0
    %488 = vmatpush2.bf16.msra.mxu0 0
    %489 = vmatprep.subr.bf16.mxu0 0
    %490 = vmatpush2.bf16.msra.mxu0 0
    %491 = vmatprep.subr.bf16.mxu0 0
    %492 = vmatpush2.bf16.msra.mxu0 0
    %493 = vmatprep.subr.bf16.mxu0 0
    %494 = vmatpush2.bf16.msra.mxu0 0
    %495 = vmatprep.subr.bf16.mxu0 0
    %496 = vmatpush2.bf16.msra.mxu0 0
    %497 = vmatprep.subr.bf16.mxu0 0
    %498 = vmatpush2.bf16.msra.mxu0 0
    %499 = vmatprep.subr.bf16.mxu0 0
    %500 = vmatpush2.bf16.msra.mxu0 0
    %501 = vmatprep.mubr.bf16.mxu0 0
    %502 = vmatmul.mubr.bf16.gmra.mxu0 %v221
    %v503 = vpop.f32.mrf.mxu0
    %v504 = vadd.f32 0.0, %v503
    %v505 = vpop.f32.mrf.mxu0
    %v506 = vadd.f32 0.0, %v505
    %v507 = vpop.f32.mrf.mxu0
    %v508 = vpop.f32.mrf.mxu0
    %509 = vdwg.mxu0
    %510 = vmatprep.subr.bf16.mxu0 0
    %511 = vmatpush1.bf16.msra.mxu0 0
    %512 = vmatprep.subr.bf16.mxu0 0
    %513 = vmatpush1.bf16.msra.mxu0 0
    %514 = vmatprep.subr.bf16.mxu0 0
    %515 = vmatpush1.bf16.msra.mxu0 0
    %516 = vmatprep.subr.bf16.mxu0 0
    %517 = vmatpush1.bf16.msra.mxu0 0
    %518 = vmatprep.subr.bf16.mxu0 0
    %519 = vmatpush1.bf16.msra.mxu0 0
    %520 = vmatprep.subr.bf16.mxu0 0
    %521 = vmatpush1.bf16.msra.mxu0 0
    %522 = vmatprep.subr.bf16.mxu0 %v186
    %523 = vmatpush1.bf16.msra.mxu0 %v185
    %524 = vmatprep.subr.bf16.mxu0 %v170
    %525 = vmatpush1.bf16.msra.mxu0 %v169
    %526 = vmatprep.subr.bf16.mxu0 0
    %527 = vmatpush2.bf16.msra.mxu0 0
    %528 = vmatprep.subr.bf16.mxu0 0
    %529 = vmatpush2.bf16.msra.mxu0 0
    %530 = vmatprep.subr.bf16.mxu0 0
    %531 = vmatpush2.bf16.msra.mxu0 0
    %532 = vmatprep.subr.bf16.mxu0 0
    %533 = vmatpush2.bf16.msra.mxu0 0
    %534 = vmatprep.subr.bf16.mxu0 0
    %535 = vmatpush2.bf16.msra.mxu0 0
    %536 = vmatprep.subr.bf16.mxu0 0
    %537 = vmatpush2.bf16.msra.mxu0 0
    %538 = vmatprep.subr.bf16.mxu0 0
    %539 = vmatpush2.bf16.msra.mxu0 0
    %540 = vmatprep.subr.bf16.mxu0 0
    %541 = vmatpush2.bf16.msra.mxu0 0
    %542 = vmatprep.mubr.bf16.mxu0 0
    %543 = vmatmul.mubr.bf16.gmra.mxu0 %v221
    %v544 = vpop.f32.mrf.mxu0
    %v545 = vadd.f32 0.0, %v544
    %v546 = vpop.f32.mrf.mxu0
    %v547 = vadd.f32 0.0, %v546
    %v548 = vpop.f32.mrf.mxu0
    %v549 = vpop.f32.mrf.mxu0
    %550 = vdwg.mxu0
    %551 = vst [vmem:[%s2] sm:$0xff] %v258
    %552 = vst [vmem:[%s2 + $0x8] sm:$0xff] %v260
    %553 = vst [vmem:[%s2 + $0x10] sm:$0xff] %v299
    %554 = vst [vmem:[%s2 + $0x18] sm:$0xff] %v301
    %555 = vst [vmem:[%s2 + $0x20] sm:$0xff] %v340
    %556 = vst [vmem:[%s2 + $0x28] sm:$0xff] %v342
    %557 = vst [vmem:[%s2 + $0x30] sm:$0xff] %v381
    %558 = vst [vmem:[%s2 + $0x38] sm:$0xff] %v383
    %559 = vst [vmem:[%s2 + $0x40] sm:$0xff] %v422
    %560 = vst [vmem:[%s2 + $0x48] sm:$0xff] %v424
    %561 = vst [vmem:[%s2 + $0x50] sm:$0xff] %v463
    %562 = vst [vmem:[%s2 + $0x58] sm:$0xff] %v465
    %563 = vst [vmem:[%s2 + $0x60] sm:$0xff] %v504
    %564 = vst [vmem:[%s2 + $0x68] sm:$0xff] %v506
    %565 = vst [vmem:[%s2 + $0x70] sm:$0xff] %v545
    %566 = vst [vmem:[%s2 + $0x78] sm:$0xff] %v547
    // Predicated region
    $region14: #{generator_forward.10} parent=1 // pred_check
      _
    $region15: #{generator_forward.10} parent=1 // pred_check_branch
      %568 = sbr.rel (0) target = $region17
    $region16: #{generator_forward.10} parent=1 // pred_region
      _
    $region17: #{generator_forward.10} parent=1 // pred_fallthru
      _
    // Predicated region
    $region18: #{generator_forward.10} parent=1 // pred_check
      _
    $region19: #{generator_forward.10} parent=1 // pred_check_branch
      %570 = sbr.rel (0) target = $region21
    $region20: #{generator_forward.10} parent=1 // pred_region
      _
    $region21: #{generator_forward.10} parent=1 // pred_fallthru
      _
    %571 = vsyncpa [#allocation3], 1

// kernel: generator_forward.12
$region0: #{generator_forward.12}
  #allocation0 [shape = 'u32[]', space=smem, size = 0x4, offset = 0x4, fixed_abs, tag = 'smem constant byte address 0x4 - core index']
  #allocation1 [shape = 'u32[144,128]{1,0:T(1,128)}', space=vmem, size = 0x12000, scoped, tag = 'internal scratch']
  %s0 = inlined_call_operand.vmem [shape: bf16[32,128], index: 0, kind: input, shape index: {}]
  %s1 = inlined_call_operand.hbm [shape: bf16[128,1024], index: 1, kind: input, shape index: {}]
  %s2 = inlined_call_operand.vmem [shape: f32[32,1024], index: 2, kind: output, shape index: {}]
  %s3 = sld [smem:[#allocation0]]
  $region22: #{generator_forward.12} parent=0
    _
  %s5 = ssub.s32 1, %s3
  %s6 = scalar_select 0, %s5, %s3
  $region1: #{generator_forward.12} parent=0
    #allocation2 [shape = 'u8[262144]{0}', space=vmem, size = 0x40000, scoped, tag = 'input window, operand 1, single buffered']
    #allocation3 [shape = 's32[1]{0}', space=sflag, size = 0x4, scoped, tag = 'scoped memory for generator_forward.12']
    %7 = vsyncpa [#allocation3], 0
    // Predicated region
    $region2: #{generator_forward.12} parent=1 // pred_check
      _
    $region3: #{generator_forward.12} parent=1 // pred_check_branch
      %9 = sbr.rel (0) target = $region5
    $region4: #{generator_forward.12} parent=1 // pred_region
      _
    $region5: #{generator_forward.12} parent=1 // pred_fallthru
      _
    // Predicated region
    $region6: #{generator_forward.12} parent=1 // pred_check
      _
    $region7: #{generator_forward.12} parent=1 // pred_check_branch
      %11 = sbr.rel (0) target = $region9
    $region8: #{generator_forward.12} parent=1 // pred_region
      %s13 = ssub.s32 8192, 8192
      %14 = vsyncadd [#allocation3], %s13
      %s15 = sshll.u32 [#allocation2], 4
      %s16 = int_to_ptr.vmem [resolvable:$true] %s15
      %21 = dma.hbm_to_vmem [thread:$0]  %s1, 8192, %s16, [#allocation3], 512, 512, 32
    $region9: #{generator_forward.12} parent=1 // pred_fallthru
      _
    // Predicated region
    $region10: #{generator_forward.12} parent=1 // pred_check
      _
    $region11: #{generator_forward.12} parent=1 // pred_check_branch
      %23 = sbr.rel (0) target = $region13
    $region12: #{generator_forward.12} parent=1 // pred_region
      %24 = dma.done [#allocation3], 8192
    $region13: #{generator_forward.12} parent=1 // pred_fallthru
      _
    %v26 = vld [vmem:[%s0] sm:$0xf]
    %v27 = vld [vmem:[%s0 + $0x4] sm:$0xf]
    %v28 = vld [vmem:[%s0 + $0x8] sm:$0xf]
    %v29 = vld [vmem:[%s0 + $0xc] sm:$0xf]
    %v30 = vld [vmem:[#allocation2] sm:$0xff]
    %v31 = vld [vmem:[#allocation2 + $0x8] sm:$0xff]
    %v32 = vld [vmem:[#allocation2 + $0x10] sm:$0xff]
    %v33 = vld [vmem:[#allocation2 + $0x18] sm:$0xff]
    %v34 = vld [vmem:[#allocation2 + $0x20] sm:$0xff]
    %v35 = vld [vmem:[#allocation2 + $0x28] sm:$0xff]
    %v36 = vld [vmem:[#allocation2 + $0x30] sm:$0xff]
    %v37 = vld [vmem:[#allocation2 + $0x38] sm:$0xff]
    %v38 = vld [vmem:[#allocation2 + $0x40] sm:$0xff]
    %v39 = vld [vmem:[#allocation2 + $0x48] sm:$0xff]
    %v40 = vld [vmem:[#allocation2 + $0x50] sm:$0xff]
    %v41 = vld [vmem:[#allocation2 + $0x58] sm:$0xff]
    %v42 = vld [vmem:[#allocation2 + $0x60] sm:$0xff]
    %v43 = vld [vmem:[#allocation2 + $0x68] sm:$0xff]
    %v44 = vld [vmem:[#allocation2 + $0x70] sm:$0xff]
    %v45 = vld [vmem:[#allocation2 + $0x78] sm:$0xff]
    %v46 = vld [vmem:[#allocation2 + $0x80] sm:$0xff]
    %v47 = vld [vmem:[#allocation2 + $0x88] sm:$0xff]
    %v48 = vld [vmem:[#allocation2 + $0x90] sm:$0xff]
    %v49 = vld [vmem:[#allocation2 + $0x98] sm:$0xff]
    %v50 = vld [vmem:[#allocation2 + $0xa0] sm:$0xff]
    %v51 = vld [vmem:[#allocation2 + $0xa8] sm:$0xff]
    %v52 = vld [vmem:[#allocation2 + $0xb0] sm:$0xff]
    %v53 = vld [vmem:[#allocation2 + $0xb8] sm:$0xff]
    %v54 = vld [vmem:[#allocation2 + $0xc0] sm:$0xff]
    %v55 = vld [vmem:[#allocation2 + $0xc8] sm:$0xff]
    %v56 = vld [vmem:[#allocation2 + $0xd0] sm:$0xff]
    %v57 = vld [vmem:[#allocation2 + $0xd8] sm:$0xff]
    %v58 = vld [vmem:[#allocation2 + $0xe0] sm:$0xff]
    %v59 = vld [vmem:[#allocation2 + $0xe8] sm:$0xff]
    %v60 = vld [vmem:[#allocation2 + $0xf0] sm:$0xff]
    %v61 = vld [vmem:[#allocation2 + $0xf8] sm:$0xff]
    %v62 = vld [vmem:[#allocation2 + $0x100] sm:$0xff]
    %v63 = vld [vmem:[#allocation2 + $0x108] sm:$0xff]
    %v64 = vld [vmem:[#allocation2 + $0x110] sm:$0xff]
    %v65 = vld [vmem:[#allocation2 + $0x118] sm:$0xff]
    %v66 = vld [vmem:[#allocation2 + $0x120] sm:$0xff]
    %v67 = vld [vmem:[#allocation2 + $0x128] sm:$0xff]
    %v68 = vld [vmem:[#allocation2 + $0x130] sm:$0xff]
    %v69 = vld [vmem:[#allocation2 + $0x138] sm:$0xff]
    %v70 = vld [vmem:[#allocation2 + $0x140] sm:$0xff]
    %v71 = vld [vmem:[#allocation2 + $0x148] sm:$0xff]
    %v72 = vld [vmem:[#allocation2 + $0x150] sm:$0xff]
    %v73 = vld [vmem:[#allocation2 + $0x158] sm:$0xff]
    %v74 = vld [vmem:[#allocation2 + $0x160] sm:$0xff]
    %v75 = vld [vmem:[#allocation2 + $0x168] sm:$0xff]
    %v76 = vld [vmem:[#allocation2 + $0x170] sm:$0xff]
    %v77 = vld [vmem:[#allocation2 + $0x178] sm:$0xff]
    %v78 = vld [vmem:[#allocation2 + $0x180] sm:$0xff]
    %v79 = vld [vmem:[#allocation2 + $0x188] sm:$0xff]
    %v80 = vld [vmem:[#allocation2 + $0x190] sm:$0xff]
    %v81 = vld [vmem:[#allocation2 + $0x198] sm:$0xff]
    %v82 = vld [vmem:[#allocation2 + $0x1a0] sm:$0xff]
    %v83 = vld [vmem:[#allocation2 + $0x1a8] sm:$0xff]
    %v84 = vld [vmem:[#allocation2 + $0x1b0] sm:$0xff]
    %v85 = vld [vmem:[#allocation2 + $0x1b8] sm:$0xff]
    %v86 = vld [vmem:[#allocation2 + $0x1c0] sm:$0xff]
    %v87 = vld [vmem:[#allocation2 + $0x1c8] sm:$0xff]
    %v88 = vld [vmem:[#allocation2 + $0x1d0] sm:$0xff]
    %v89 = vld [vmem:[#allocation2 + $0x1d8] sm:$0xff]
    %v90 = vld [vmem:[#allocation2 + $0x1e0] sm:$0xff]
    %v91 = vld [vmem:[#allocation2 + $0x1e8] sm:$0xff]
    %v92 = vld [vmem:[#allocation2 + $0x1f0] sm:$0xff]
    %v93 = vld [vmem:[#allocation2 + $0x1f8] sm:$0xff]
    %v98 = vunpack.c.l.b16 %v26
    %v99 = vunpack.c.l.b16 %v27
    %v100 = vunpack.c.l.b16 %v28
    %v101 = vunpack.c.l.b16 %v29
    %v102 = vpack.c.b16 %v99, %v98
    %v103 = vpack.c.b16 %v101, %v100
    %v170 = vunpack.c.l.b16 %v30
    %v171 = vunpack.c.h.b16 %v30
    %v172 = vunpack.c.l.b16 %v31
    %v173 = vunpack.c.h.b16 %v31
    %v174 = vunpack.c.l.b16 %v32
    %v175 = vunpack.c.h.b16 %v32
    %v176 = vunpack.c.l.b16 %v33
    %v177 = vunpack.c.h.b16 %v33
    %v178 = vunpack.c.l.b16 %v34
    %v179 = vunpack.c.h.b16 %v34
    %v180 = vunpack.c.l.b16 %v35
    %v181 = vunpack.c.h.b16 %v35
    %v182 = vunpack.c.l.b16 %v36
    %v183 = vunpack.c.h.b16 %v36
    %v184 = vunpack.c.l.b16 %v37
    %v185 = vunpack.c.h.b16 %v37
    %v186 = vunpack.c.l.b16 %v38
    %v187 = vunpack.c.h.b16 %v38
    %v188 = vunpack.c.l.b16 %v39
    %v189 = vunpack.c.h.b16 %v39
    %v190 = vunpack.c.l.b16 %v40
    %v191 = vunpack.c.h.b16 %v40
    %v192 = vunpack.c.l.b16 %v41
    %v193 = vunpack.c.h.b16 %v41
    %v194 = vunpack.c.l.b16 %v42
    %v195 = vunpack.c.h.b16 %v42
    %v196 = vunpack.c.l.b16 %v43
    %v197 = vunpack.c.h.b16 %v43
    %v198 = vunpack.c.l.b16 %v44
    %v199 = vunpack.c.h.b16 %v44
    %v200 = vunpack.c.l.b16 %v45
    %v201 = vunpack.c.h.b16 %v45
    %v202 = vunpack.c.l.b16 %v46
    %v203 = vunpack.c.h.b16 %v46
    %v204 = vunpack.c.l.b16 %v47
    %v205 = vunpack.c.h.b16 %v47
    %v206 = vunpack.c.l.b16 %v48
    %v207 = vunpack.c.h.b16 %v48
    %v208 = vunpack.c.l.b16 %v49
    %v209 = vunpack.c.h.b16 %v49
    %v210 = vunpack.c.l.b16 %v50
    %v211 = vunpack.c.h.b16 %v50
    %v212 = vunpack.c.l.b16 %v51
    %v213 = vunpack.c.h.b16 %v51
    %v214 = vunpack.c.l.b16 %v52
    %v215 = vunpack.c.h.b16 %v52
    %v216 = vunpack.c.l.b16 %v53
    %v217 = vunpack.c.h.b16 %v53
    %v218 = vunpack.c.l.b16 %v54
    %v219 = vunpack.c.h.b16 %v54
    %v220 = vunpack.c.l.b16 %v55
    %v221 = vunpack.c.h.b16 %v55
    %v222 = vunpack.c.l.b16 %v56
    %v223 = vunpack.c.h.b16 %v56
    %v224 = vunpack.c.l.b16 %v57
    %v225 = vunpack.c.h.b16 %v57
    %v226 = vunpack.c.l.b16 %v58
    %v227 = vunpack.c.h.b16 %v58
    %v228 = vunpack.c.l.b16 %v59
    %v229 = vunpack.c.h.b16 %v59
    %v230 = vunpack.c.l.b16 %v60
    %v231 = vunpack.c.h.b16 %v60
    %v232 = vunpack.c.l.b16 %v61
    %v233 = vunpack.c.h.b16 %v61
    %v234 = vunpack.c.l.b16 %v62
    %v235 = vunpack.c.h.b16 %v62
    %v236 = vunpack.c.l.b16 %v63
    %v237 = vunpack.c.h.b16 %v63
    %v238 = vunpack.c.l.b16 %v64
    %v239 = vunpack.c.h.b16 %v64
    %v240 = vunpack.c.l.b16 %v65
    %v241 = vunpack.c.h.b16 %v65
    %v242 = vunpack.c.l.b16 %v66
    %v243 = vunpack.c.h.b16 %v66
    %v244 = vunpack.c.l.b16 %v67
    %v245 = vunpack.c.h.b16 %v67
    %v246 = vunpack.c.l.b16 %v68
    %v247 = vunpack.c.h.b16 %v68
    %v248 = vunpack.c.l.b16 %v69
    %v249 = vunpack.c.h.b16 %v69
    %v250 = vunpack.c.l.b16 %v70
    %v251 = vunpack.c.h.b16 %v70
    %v252 = vunpack.c.l.b16 %v71
    %v253 = vunpack.c.h.b16 %v71
    %v254 = vunpack.c.l.b16 %v72
    %v255 = vunpack.c.h.b16 %v72
    %v256 = vunpack.c.l.b16 %v73
    %v257 = vunpack.c.h.b16 %v73
    %v258 = vunpack.c.l.b16 %v74
    %v259 = vunpack.c.h.b16 %v74
    %v260 = vunpack.c.l.b16 %v75
    %v261 = vunpack.c.h.b16 %v75
    %v262 = vunpack.c.l.b16 %v76
    %v263 = vunpack.c.h.b16 %v76
    %v264 = vunpack.c.l.b16 %v77
    %v265 = vunpack.c.h.b16 %v77
    %v266 = vunpack.c.l.b16 %v78
    %v267 = vunpack.c.h.b16 %v78
    %v268 = vunpack.c.l.b16 %v79
    %v269 = vunpack.c.h.b16 %v79
    %v270 = vunpack.c.l.b16 %v80
    %v271 = vunpack.c.h.b16 %v80
    %v272 = vunpack.c.l.b16 %v81
    %v273 = vunpack.c.h.b16 %v81
    %v274 = vunpack.c.l.b16 %v82
    %v275 = vunpack.c.h.b16 %v82
    %v276 = vunpack.c.l.b16 %v83
    %v277 = vunpack.c.h.b16 %v83
    %v278 = vunpack.c.l.b16 %v84
    %v279 = vunpack.c.h.b16 %v84
    %v280 = vunpack.c.l.b16 %v85
    %v281 = vunpack.c.h.b16 %v85
    %v282 = vunpack.c.l.b16 %v86
    %v283 = vunpack.c.h.b16 %v86
    %v284 = vunpack.c.l.b16 %v87
    %v285 = vunpack.c.h.b16 %v87
    %v286 = vunpack.c.l.b16 %v88
    %v287 = vunpack.c.h.b16 %v88
    %v288 = vunpack.c.l.b16 %v89
    %v289 = vunpack.c.h.b16 %v89
    %v290 = vunpack.c.l.b16 %v90
    %v291 = vunpack.c.h.b16 %v90
    %v292 = vunpack.c.l.b16 %v91
    %v293 = vunpack.c.h.b16 %v91
    %v294 = vunpack.c.l.b16 %v92
    %v295 = vunpack.c.h.b16 %v92
    %v296 = vunpack.c.l.b16 %v93
    %v297 = vunpack.c.h.b16 %v93
    %v298 = vpack.c.b16 %v178, %v170
    %v299 = vpack.c.b16 %v179, %v171
    %v300 = vpack.c.b16 %v180, %v172
    %v301 = vpack.c.b16 %v181, %v173
    %v302 = vpack.c.b16 %v182, %v174
    %v303 = vpack.c.b16 %v183, %v175
    %v304 = vpack.c.b16 %v184, %v176
    %v305 = vpack.c.b16 %v185, %v177
    %v306 = vpack.c.b16 %v194, %v186
    %v307 = vpack.c.b16 %v195, %v187
    %v308 = vpack.c.b16 %v196, %v188
    %v309 = vpack.c.b16 %v197, %v189
    %v310 = vpack.c.b16 %v198, %v190
    %v311 = vpack.c.b16 %v199, %v191
    %v312 = vpack.c.b16 %v200, %v192
    %v313 = vpack.c.b16 %v201, %v193
    %v314 = vpack.c.b16 %v210, %v202
    %v315 = vpack.c.b16 %v211, %v203
    %v316 = vpack.c.b16 %v212, %v204
    %v317 = vpack.c.b16 %v213, %v205
    %v318 = vpack.c.b16 %v214, %v206
    %v319 = vpack.c.b16 %v215, %v207
    %v320 = vpack.c.b16 %v216, %v208
    %v321 = vpack.c.b16 %v217, %v209
    %v322 = vpack.c.b16 %v226, %v218
    %v323 = vpack.c.b16 %v227, %v219
    %v324 = vpack.c.b16 %v228, %v220
    %v325 = vpack.c.b16 %v229, %v221
    %v326 = vpack.c.b16 %v230, %v222
    %v327 = vpack.c.b16 %v231, %v223
    %v328 = vpack.c.b16 %v232, %v224
    %v329 = vpack.c.b16 %v233, %v225
    %v330 = vpack.c.b16 %v242, %v234
    %v331 = vpack.c.b16 %v243, %v235
    %v332 = vpack.c.b16 %v244, %v236
    %v333 = vpack.c.b16 %v245, %v237
    %v334 = vpack.c.b16 %v246, %v238
    %v335 = vpack.c.b16 %v247, %v239
    %v336 = vpack.c.b16 %v248, %v240
    %v337 = vpack.c.b16 %v249, %v241
    %v338 = vpack.c.b16 %v258, %v250
    %v339 = vpack.c.b16 %v259, %v251
    %v340 = vpack.c.b16 %v260, %v252
    %v341 = vpack.c.b16 %v261, %v253
    %v342 = vpack.c.b16 %v262, %v254
    %v343 = vpack.c.b16 %v263, %v255
    %v344 = vpack.c.b16 %v264, %v256
    %v345 = vpack.c.b16 %v265, %v257
    %v346 = vpack.c.b16 %v274, %v266
    %v347 = vpack.c.b16 %v275, %v267
    %v348 = vpack.c.b16 %v276, %v268
    %v349 = vpack.c.b16 %v277, %v269
    %v350 = vpack.c.b16 %v278, %v270
    %v351 = vpack.c.b16 %v279, %v271
    %v352 = vpack.c.b16 %v280, %v272
    %v353 = vpack.c.b16 %v281, %v273
    %v354 = vpack.c.b16 %v290, %v282
    %v355 = vpack.c.b16 %v291, %v283
    %v356 = vpack.c.b16 %v292, %v284
    %v357 = vpack.c.b16 %v293, %v285
    %v358 = vpack.c.b16 %v294, %v286
    %v359 = vpack.c.b16 %v295, %v287
    %v360 = vpack.c.b16 %v296, %v288
    %v361 = vpack.c.b16 %v297, %v289
    %426 = vmatprep.subr.bf16.mxu0 %v355
    %427 = vmatpush1.bf16.msra.mxu0 %v354
    %428 = vmatprep.subr.bf16.mxu0 %v347
    %429 = vmatpush1.bf16.msra.mxu0 %v346
    %430 = vmatprep.subr.bf16.mxu0 %v339
    %431 = vmatpush1.bf16.msra.mxu0 %v338
    %432 = vmatprep.subr.bf16.mxu0 %v331
    %433 = vmatpush1.bf16.msra.mxu0 %v330
    %434 = vmatprep.subr.bf16.mxu0 %v323
    %435 = vmatpush1.bf16.msra.mxu0 %v322
    %436 = vmatprep.subr.bf16.mxu0 %v315
    %437 = vmatpush1.bf16.msra.mxu0 %v314
    %438 = vmatprep.subr.bf16.mxu0 %v307
    %439 = vmatpush1.bf16.msra.mxu0 %v306
    %440 = vmatprep.subr.bf16.mxu0 %v299
    %441 = vmatpush1.bf16.msra.mxu0 %v298
    %442 = vmatprep.subr.bf16.mxu0 0
    %443 = vmatpush2.bf16.msra.mxu0 0
    %444 = vmatprep.subr.bf16.mxu0 0
    %445 = vmatpush2.bf16.msra.mxu0 0
    %446 = vmatprep.subr.bf16.mxu0 0
    %447 = vmatpush2.bf16.msra.mxu0 0
    %448 = vmatprep.subr.bf16.mxu0 0
    %449 = vmatpush2.bf16.msra.mxu0 0
    %450 = vmatprep.subr.bf16.mxu0 0
    %451 = vmatpush2.bf16.msra.mxu0 0
    %452 = vmatprep.subr.bf16.mxu0 0
    %453 = vmatpush2.bf16.msra.mxu0 0
    %454 = vmatprep.subr.bf16.mxu0 0
    %455 = vmatpush2.bf16.msra.mxu0 0
    %456 = vmatprep.subr.bf16.mxu0 0
    %457 = vmatpush2.bf16.msra.mxu0 0
    %458 = vmatprep.mubr.bf16.mxu0 0
    %459 = vmatmul.mubr.bf16.gmra.mxu0 %v102
    %v460 = vpop.f32.mrf.mxu0
    %v461 = vadd.f32 0.0, %v460
    %v462 = vpop.f32.mrf.mxu0
    %v463 = vadd.f32 0.0, %v462
    %v464 = vpop.f32.mrf.mxu0
    %v465 = vadd.f32 0.0, %v464
    %v466 = vpop.f32.mrf.mxu0
    %v467 = vadd.f32 0.0, %v466
    %468 = vmatprep.mubr.bf16.mxu0 0
    %469 = vmatmul.mubr.bf16.gmra.mxu0 %v103
    %v470 = vpop.f32.mrf.mxu0
    %v471 = vadd.f32 0.0, %v470
    %v472 = vpop.f32.mrf.mxu0
    %v473 = vadd.f32 0.0, %v472
    %v474 = vpop.f32.mrf.mxu0
    %v475 = vadd.f32 0.0, %v474
    %v476 = vpop.f32.mrf.mxu0
    %v477 = vadd.f32 0.0, %v476
    %478 = vdwg.mxu0
    %479 = vmatprep.subr.bf16.mxu0 %v357
    %480 = vmatpush1.bf16.msra.mxu0 %v356
    %481 = vmatprep.subr.bf16.mxu0 %v349
    %482 = vmatpush1.bf16.msra.mxu0 %v348
    %483 = vmatprep.subr.bf16.mxu0 %v341
    %484 = vmatpush1.bf16.msra.mxu0 %v340
    %485 = vmatprep.subr.bf16.mxu0 %v333
    %486 = vmatpush1.bf16.msra.mxu0 %v332
    %487 = vmatprep.subr.bf16.mxu0 %v325
    %488 = vmatpush1.bf16.msra.mxu0 %v324
    %489 = vmatprep.subr.bf16.mxu0 %v317
    %490 = vmatpush1.bf16.msra.mxu0 %v316
    %491 = vmatprep.subr.bf16.mxu0 %v309
    %492 = vmatpush1.bf16.msra.mxu0 %v308
    %493 = vmatprep.subr.bf16.mxu0 %v301
    %494 = vmatpush1.bf16.msra.mxu0 %v300
    %495 = vmatprep.subr.bf16.mxu0 0
    %496 = vmatpush2.bf16.msra.mxu0 0
    %497 = vmatprep.subr.bf16.mxu0 0
    %498 = vmatpush2.bf16.msra.mxu0 0
    %499 = vmatprep.subr.bf16.mxu0 0
    %500 = vmatpush2.bf16.msra.mxu0 0
    %501 = vmatprep.subr.bf16.mxu0 0
    %502 = vmatpush2.bf16.msra.mxu0 0
    %503 = vmatprep.subr.bf16.mxu0 0
    %504 = vmatpush2.bf16.msra.mxu0 0
    %505 = vmatprep.subr.bf16.mxu0 0
    %506 = vmatpush2.bf16.msra.mxu0 0
    %507 = vmatprep.subr.bf16.mxu0 0
    %508 = vmatpush2.bf16.msra.mxu0 0
    %509 = vmatprep.subr.bf16.mxu0 0
    %510 = vmatpush2.bf16.msra.mxu0 0
    %511 = vmatprep.mubr.bf16.mxu0 0
    %512 = vmatmul.mubr.bf16.gmra.mxu0 %v102
    %v513 = vpop.f32.mrf.mxu0
    %v514 = vadd.f32 0.0, %v513
    %v515 = vpop.f32.mrf.mxu0
    %v516 = vadd.f32 0.0, %v515
    %v517 = vpop.f32.mrf.mxu0
    %v518 = vadd.f32 0.0, %v517
    %v519 = vpop.f32.mrf.mxu0
    %v520 = vadd.f32 0.0, %v519
    %521 = vmatprep.mubr.bf16.mxu0 0
    %522 = vmatmul.mubr.bf16.gmra.mxu0 %v103
    %v523 = vpop.f32.mrf.mxu0
    %v524 = vadd.f32 0.0, %v523
    %v525 = vpop.f32.mrf.mxu0
    %v526 = vadd.f32 0.0, %v525
    %v527 = vpop.f32.mrf.mxu0
    %v528 = vadd.f32 0.0, %v527
    %v529 = vpop.f32.mrf.mxu0
    %v530 = vadd.f32 0.0, %v529
    %531 = vdwg.mxu0
    %532 = vmatprep.subr.bf16.mxu0 %v359
    %533 = vmatpush1.bf16.msra.mxu0 %v358
    %534 = vmatprep.subr.bf16.mxu0 %v351
    %535 = vmatpush1.bf16.msra.mxu0 %v350
    %536 = vmatprep.subr.bf16.mxu0 %v343
    %537 = vmatpush1.bf16.msra.mxu0 %v342
    %538 = vmatprep.subr.bf16.mxu0 %v335
    %539 = vmatpush1.bf16.msra.mxu0 %v334
    %540 = vmatprep.subr.bf16.mxu0 %v327
    %541 = vmatpush1.bf16.msra.mxu0 %v326
    %542 = vmatprep.subr.bf16.mxu0 %v319
    %543 = vmatpush1.bf16.msra.mxu0 %v318
    %544 = vmatprep.subr.bf16.mxu0 %v311
    %545 = vmatpush1.bf16.msra.mxu0 %v310
    %546 = vmatprep.subr.bf16.mxu0 %v303
    %547 = vmatpush1.bf16.msra.mxu0 %v302
    %548 = vmatprep.subr.bf16.mxu0 0
    %549 = vmatpush2.bf16.msra.mxu0 0
    %550 = vmatprep.subr.bf16.mxu0 0
    %551 = vmatpush2.bf16.msra.mxu0 0
    %552 = vmatprep.subr.bf16.mxu0 0
    %553 = vmatpush2.bf16.msra.mxu0 0
    %554 = vmatprep.subr.bf16.mxu0 0
    %555 = vmatpush2.bf16.msra.mxu0 0
    %556 = vmatprep.subr.bf16.mxu0 0
    %557 = vmatpush2.bf16.msra.mxu0 0
    %558 = vmatprep.subr.bf16.mxu0 0
    %559 = vmatpush2.bf16.msra.mxu0 0
    %560 = vmatprep.subr.bf16.mxu0 0
    %561 = vmatpush2.bf16.msra.mxu0 0
    %562 = vmatprep.subr.bf16.mxu0 0
    %563 = vmatpush2.bf16.msra.mxu0 0
    %564 = vmatprep.mubr.bf16.mxu0 0
    %565 = vmatmul.mubr.bf16.gmra.mxu0 %v102
    %v566 = vpop.f32.mrf.mxu0
    %v567 = vadd.f32 0.0, %v566
    %v568 = vpop.f32.mrf.mxu0
    %v569 = vadd.f32 0.0, %v568
    %v570 = vpop.f32.mrf.mxu0
    %v571 = vadd.f32 0.0, %v570
    %v572 = vpop.f32.mrf.mxu0
    %v573 = vadd.f32 0.0, %v572
    %574 = vmatprep.mubr.bf16.mxu0 0
    %575 = vmatmul.mubr.bf16.gmra.mxu0 %v103
    %v576 = vpop.f32.mrf.mxu0
    %v577 = vadd.f32 0.0, %v576
    %v578 = vpop.f32.mrf.mxu0
    %v579 = vadd.f32 0.0, %v578
    %v580 = vpop.f32.mrf.mxu0
    %v581 = vadd.f32 0.0, %v580
    %v582 = vpop.f32.mrf.mxu0
    %v583 = vadd.f32 0.0, %v582
    %584 = vdwg.mxu0
    %585 = vmatprep.subr.bf16.mxu0 %v361
    %586 = vmatpush1.bf16.msra.mxu0 %v360
    %587 = vmatprep.subr.bf16.mxu0 %v353
    %588 = vmatpush1.bf16.msra.mxu0 %v352
    %589 = vmatprep.subr.bf16.mxu0 %v345
    %590 = vmatpush1.bf16.msra.mxu0 %v344
    %591 = vmatprep.subr.bf16.mxu0 %v337
    %592 = vmatpush1.bf16.msra.mxu0 %v336
    %593 = vmatprep.subr.bf16.mxu0 %v329
    %594 = vmatpush1.bf16.msra.mxu0 %v328
    %595 = vmatprep.subr.bf16.mxu0 %v321
    %596 = vmatpush1.bf16.msra.mxu0 %v320
    %597 = vmatprep.subr.bf16.mxu0 %v313
    %598 = vmatpush1.bf16.msra.mxu0 %v312
    %599 = vmatprep.subr.bf16.mxu0 %v305
    %600 = vmatpush1.bf16.msra.mxu0 %v304
    %601 = vmatprep.subr.bf16.mxu0 0
    %602 = vmatpush2.bf16.msra.mxu0 0
    %603 = vmatprep.subr.bf16.mxu0 0
    %604 = vmatpush2.bf16.msra.mxu0 0
    %605 = vmatprep.subr.bf16.mxu0 0
    %606 = vmatpush2.bf16.msra.mxu0 0
    %607 = vmatprep.subr.bf16.mxu0 0
    %608 = vmatpush2.bf16.msra.mxu0 0
    %609 = vmatprep.subr.bf16.mxu0 0
    %610 = vmatpush2.bf16.msra.mxu0 0
    %611 = vmatprep.subr.bf16.mxu0 0
    %612 = vmatpush2.bf16.msra.mxu0 0
    %613 = vmatprep.subr.bf16.mxu0 0
    %614 = vmatpush2.bf16.msra.mxu0 0
    %615 = vmatprep.subr.bf16.mxu0 0
    %616 = vmatpush2.bf16.msra.mxu0 0
    %617 = vmatprep.mubr.bf16.mxu0 0
    %618 = vmatmul.mubr.bf16.gmra.mxu0 %v102
    %v619 = vpop.f32.mrf.mxu0
    %v620 = vadd.f32 0.0, %v619
    %v621 = vpop.f32.mrf.mxu0
    %v622 = vadd.f32 0.0, %v621
    %v623 = vpop.f32.mrf.mxu0
    %v624 = vadd.f32 0.0, %v623
    %v625 = vpop.f32.mrf.mxu0
    %v626 = vadd.f32 0.0, %v625
    %627 = vmatprep.mubr.bf16.mxu0 0
    %628 = vmatmul.mubr.bf16.gmra.mxu0 %v103
    %v629 = vpop.f32.mrf.mxu0
    %v630 = vadd.f32 0.0, %v629
    %v631 = vpop.f32.mrf.mxu0
    %v632 = vadd.f32 0.0, %v631
    %v633 = vpop.f32.mrf.mxu0
    %v634 = vadd.f32 0.0, %v633
    %v635 = vpop.f32.mrf.mxu0
    %v636 = vadd.f32 0.0, %v635
    %637 = vdwg.mxu0
    %638 = vst [vmem:[%s2] sm:$0xff] %v461
    %639 = vst [vmem:[%s2 + $0x8] sm:$0xff] %v463
    %640 = vst [vmem:[%s2 + $0x10] sm:$0xff] %v514
    %641 = vst [vmem:[%s2 + $0x18] sm:$0xff] %v516
    %642 = vst [vmem:[%s2 + $0x20] sm:$0xff] %v567
    %643 = vst [vmem:[%s2 + $0x28] sm:$0xff] %v569
    %644 = vst [vmem:[%s2 + $0x30] sm:$0xff] %v620
    %645 = vst [vmem:[%s2 + $0x38] sm:$0xff] %v622
    %646 = vst [vmem:[%s2 + $0x40] sm:$0xff] %v465
    %647 = vst [vmem:[%s2 + $0x48] sm:$0xff] %v467
    %648 = vst [vmem:[%s2 + $0x50] sm:$0xff] %v518
    %649 = vst [vmem:[%s2 + $0x58] sm:$0xff] %v520
    %650 = vst [vmem:[%s2 + $0x60] sm:$0xff] %v571
    %651 = vst [vmem:[%s2 + $0x68] sm:$0xff] %v573
    %652 = vst [vmem:[%s2 + $0x70] sm:$0xff] %v624
    %653 = vst [vmem:[%s2 + $0x78] sm:$0xff] %v626
    %654 = vst [vmem:[%s2 + $0x80] sm:$0xff] %v471
    %655 = vst [vmem:[%s2 + $0x88] sm:$0xff] %v473
    %656 = vst [vmem:[%s2 + $0x90] sm:$0xff] %v524
    %657 = vst [vmem:[%s2 + $0x98] sm:$0xff] %v526
    %658 = vst [vmem:[%s2 + $0xa0] sm:$0xff] %v577
    %659 = vst [vmem:[%s2 + $0xa8] sm:$0xff] %v579
    %660 = vst [vmem:[%s2 + $0xb0] sm:$0xff] %v630
    %661 = vst [vmem:[%s2 + $0xb8] sm:$0xff] %v632
    %662 = vst [vmem:[%s2 + $0xc0] sm:$0xff] %v475
    %663 = vst [vmem:[%s2 + $0xc8] sm:$0xff] %v477
    %664 = vst [vmem:[%s2 + $0xd0] sm:$0xff] %v528
    %665 = vst [vmem:[%s2 + $0xd8] sm:$0xff] %v530
    %666 = vst [vmem:[%s2 + $0xe0] sm:$0xff] %v581
    %667 = vst [vmem:[%s2 + $0xe8] sm:$0xff] %v583
    %668 = vst [vmem:[%s2 + $0xf0] sm:$0xff] %v634
    %669 = vst [vmem:[%s2 + $0xf8] sm:$0xff] %v636
    // Predicated region
    $region14: #{generator_forward.12} parent=1 // pred_check
      _
    $region15: #{generator_forward.12} parent=1 // pred_check_branch
      %671 = sbr.rel (0) target = $region17
    $region16: #{generator_forward.12} parent=1 // pred_region
      _
    $region17: #{generator_forward.12} parent=1 // pred_fallthru
      _
    // Predicated region
    $region18: #{generator_forward.12} parent=1 // pred_check
      _
    $region19: #{generator_forward.12} parent=1 // pred_check_branch
      %673 = sbr.rel (0) target = $region21
    $region20: #{generator_forward.12} parent=1 // pred_region
      _
    $region21: #{generator_forward.12} parent=1 // pred_fallthru
      _
    %674 = vsyncpa [#allocation3], 1

// kernel: generator_forward.13
$region0: #{generator_forward.13}
  #allocation0 [shape = 'u32[]', space=smem, size = 0x4, offset = 0x4, fixed_abs, tag = 'smem constant byte address 0x4 - core index']
  #allocation1 [shape = 'u32[144,128]{1,0:T(1,128)}', space=vmem, size = 0x12000, scoped, tag = 'internal scratch']
  %s0 = inlined_call_operand.vmem [shape: f32[128,64], index: 0, kind: input, shape index: {}]
  %s1 = inlined_call_operand.vmem [shape: f32[1,64], index: 1, kind: input, shape index: {}]
  %s2 = inlined_call_operand.vmem [shape: f32[1,64], index: 2, kind: input, shape index: {}]
  %s3 = inlined_call_operand.vmem [shape: bf16[128,64], index: 3, kind: output, shape index: {}]
  %s4 = sld [smem:[#allocation0]]
  $region22: #{generator_forward.13} parent=0
    _
  %s6 = ssub.s32 1, %s4
  %s7 = scalar_select 0, %s6, %s4
  // Predicated region
  $region2: #{generator_forward.13} parent=0 // pred_check
    _
  $region3: #{generator_forward.13} parent=0 // pred_check_branch
    %9 = sbr.rel (0) target = $region5
  $region4: #{generator_forward.13} parent=0 // pred_region
    _
  $region5: #{generator_forward.13} parent=0 // pred_fallthru
    _
  // Predicated region
  $region6: #{generator_forward.13} parent=0 // pred_check
    _
  $region7: #{generator_forward.13} parent=0 // pred_check_branch
    %11 = sbr.rel (0) target = $region9
  $region8: #{generator_forward.13} parent=0 // pred_region
    _
  $region9: #{generator_forward.13} parent=0 // pred_fallthru
    _
  // Predicated region
  $region10: #{generator_forward.13} parent=0 // pred_check
    _
  $region11: #{generator_forward.13} parent=0 // pred_check_branch
    %13 = sbr.rel (0) target = $region13
  $region12: #{generator_forward.13} parent=0 // pred_region
    _
  $region13: #{generator_forward.13} parent=0 // pred_fallthru
    _
  %v14 = vld [vmem:[%s0] sm:$0xff]
  %v15 = vld [vmem:[%s0 + $0x8] sm:$0xff]
  %v16 = vld [vmem:[%s0 + $0x10] sm:$0xff]
  %v17 = vld [vmem:[%s0 + $0x18] sm:$0xff]
  %v18 = vld [vmem:[%s0 + $0x20] sm:$0xff]
  %v19 = vld [vmem:[%s0 + $0x28] sm:$0xff]
  %v20 = vld [vmem:[%s0 + $0x30] sm:$0xff]
  %v21 = vld [vmem:[%s0 + $0x38] sm:$0xff]
  %v22 = vld [vmem:[%s0 + $0x40] sm:$0xff]
  %v23 = vld [vmem:[%s0 + $0x48] sm:$0xff]
  %v24 = vld [vmem:[%s0 + $0x50] sm:$0xff]
  %v25 = vld [vmem:[%s0 + $0x58] sm:$0xff]
  %v26 = vld [vmem:[%s0 + $0x60] sm:$0xff]
  %v27 = vld [vmem:[%s0 + $0x68] sm:$0xff]
  %v28 = vld [vmem:[%s0 + $0x70] sm:$0xff]
  %v29 = vld [vmem:[%s0 + $0x78] sm:$0xff]
  %vm30 = vcmask 523264
  %v31 = vsel %vm30, %v14, 0.0
  %v32 = vsel %vm30, %v15, 0.0
  %v33 = vadd.f32 %v31, %v32
  %v34 = vsel %vm30, %v16, 0.0
  %v35 = vadd.f32 %v33, %v34
  %v36 = vsel %vm30, %v17, 0.0
  %v37 = vadd.f32 %v35, %v36
  %v38 = vsel %vm30, %v18, 0.0
  %v39 = vadd.f32 %v37, %v38
  %v40 = vsel %vm30, %v19, 0.0
  %v41 = vadd.f32 %v39, %v40
  %v42 = vsel %vm30, %v20, 0.0
  %v43 = vadd.f32 %v41, %v42
  %v44 = vsel %vm30, %v21, 0.0
  %v45 = vadd.f32 %v43, %v44
  %v46 = vsel %vm30, %v22, 0.0
  %v47 = vadd.f32 %v45, %v46
  %v48 = vsel %vm30, %v23, 0.0
  %v49 = vadd.f32 %v47, %v48
  %v50 = vsel %vm30, %v24, 0.0
  %v51 = vadd.f32 %v49, %v50
  %v52 = vsel %vm30, %v25, 0.0
  %v53 = vadd.f32 %v51, %v52
  %v54 = vsel %vm30, %v26, 0.0
  %v55 = vadd.f32 %v53, %v54
  %v56 = vsel %vm30, %v27, 0.0
  %v57 = vadd.f32 %v55, %v56
  %v58 = vsel %vm30, %v28, 0.0
  %v59 = vadd.f32 %v57, %v58
  %v60 = vsel %vm30, %v29, 0.0
  %v61 = vadd.f32 %v59, %v60
  %v62 = vrot.slane %v61, 4
  %v63 = vadd.f32 %v61, %v62
  %v64 = vrot.slane %v63, 2
  %v65 = vadd.f32 %v63, %v64
  %v66 = vrot.slane %v65, 1
  %v67 = vadd.f32 %v65, %v66
  %v68 = vmul.f32 %v67, 0.0078125
  %v69 = vsub.f32 %v14, %v68
  %v70 = vsub.f32 %v15, %v68
  %v71 = vsub.f32 %v16, %v68
  %v72 = vsub.f32 %v17, %v68
  %v73 = vsub.f32 %v18, %v68
  %v74 = vsub.f32 %v19, %v68
  %v75 = vsub.f32 %v20, %v68
  %v76 = vsub.f32 %v21, %v68
  %v77 = vsub.f32 %v22, %v68
  %v78 = vsub.f32 %v23, %v68
  %v79 = vsub.f32 %v24, %v68
  %v80 = vsub.f32 %v25, %v68
  %v81 = vsub.f32 %v26, %v68
  %v82 = vsub.f32 %v27, %v68
  %v83 = vsub.f32 %v28, %v68
  %v84 = vsub.f32 %v29, %v68
  %v85 = vmul.f32 %v69, %v69
  %v86 = vmul.f32 %v70, %v70
  %v87 = vmul.f32 %v71, %v71
  %v88 = vmul.f32 %v72, %v72
  %v89 = vmul.f32 %v73, %v73
  %v90 = vmul.f32 %v74, %v74
  %v91 = vmul.f32 %v75, %v75
  %v92 = vmul.f32 %v76, %v76
  %v93 = vmul.f32 %v77, %v77
  %v94 = vmul.f32 %v78, %v78
  %v95 = vmul.f32 %v79, %v79
  %v96 = vmul.f32 %v80, %v80
  %v97 = vmul.f32 %v81, %v81
  %v98 = vmul.f32 %v82, %v82
  %v99 = vmul.f32 %v83, %v83
  %v100 = vmul.f32 %v84, %v84
  %v101 = vsel %vm30, %v85, 0.0
  %v102 = vsel %vm30, %v86, 0.0
  %v103 = vadd.f32 %v101, %v102
  %v104 = vsel %vm30, %v87, 0.0
  %v105 = vadd.f32 %v103, %v104
  %v106 = vsel %vm30, %v88, 0.0
  %v107 = vadd.f32 %v105, %v106
  %v108 = vsel %vm30, %v89, 0.0
  %v109 = vadd.f32 %v107, %v108
  %v110 = vsel %vm30, %v90, 0.0
  %v111 = vadd.f32 %v109, %v110
  %v112 = vsel %vm30, %v91, 0.0
  %v113 = vadd.f32 %v111, %v112
  %v114 = vsel %vm30, %v92, 0.0
  %v115 = vadd.f32 %v113, %v114
  %v116 = vsel %vm30, %v93, 0.0
  %v117 = vadd.f32 %v115, %v116
  %v118 = vsel %vm30, %v94, 0.0
  %v119 = vadd.f32 %v117, %v118
  %v120 = vsel %vm30, %v95, 0.0
  %v121 = vadd.f32 %v119, %v120
  %v122 = vsel %vm30, %v96, 0.0
  %v123 = vadd.f32 %v121, %v122
  %v124 = vsel %vm30, %v97, 0.0
  %v125 = vadd.f32 %v123, %v124
  %v126 = vsel %vm30, %v98, 0.0
  %v127 = vadd.f32 %v125, %v126
  %v128 = vsel %vm30, %v99, 0.0
  %v129 = vadd.f32 %v127, %v128
  %v130 = vsel %vm30, %v100, 0.0
  %v131 = vadd.f32 %v129, %v130
  %v132 = vrot.slane %v131, 4
  %v133 = vadd.f32 %v131, %v132
  %v134 = vrot.slane %v133, 2
  %v135 = vadd.f32 %v133, %v134
  %v136 = vrot.slane %v135, 1
  %v137 = vadd.f32 %v135, %v136
  %v138 = vmul.f32 %v137, 0.0078125
  %v139 = vadd.f32 %v138, 1e-05
  %v140 = vrsqrt.pop %v139
  %v141 = vld [vmem:[%s1] sm:$0x1]
  %v142 = vmul.f32 %v140, %v141
  %v143 = vlaneseq
  %v144 = vshrl.u32 %v143, 7
  %v145 = vsub.s32 0, %v144
  %v146 = vrot.slane %v142, %v145
  %v147 = vmul.f32 %v69, %v146
  %v148 = vmul.f32 %v70, %v146
  %v149 = vmul.f32 %v71, %v146
  %v150 = vmul.f32 %v72, %v146
  %v151 = vmul.f32 %v73, %v146
  %v152 = vmul.f32 %v74, %v146
  %v153 = vmul.f32 %v75, %v146
  %v154 = vmul.f32 %v76, %v146
  %v155 = vmul.f32 %v77, %v146
  %v156 = vmul.f32 %v78, %v146
  %v157 = vmul.f32 %v79, %v146
  %v158 = vmul.f32 %v80, %v146
  %v159 = vmul.f32 %v81, %v146
  %v160 = vmul.f32 %v82, %v146
  %v161 = vmul.f32 %v83, %v146
  %v162 = vmul.f32 %v84, %v146
  %v163 = vld [vmem:[%s2] sm:$0x1]
  %v165 = vlaneseq
  %v166 = vshrl.u32 %v165, 7
  %v167 = vsub.s32 0, %v166
  %v168 = vrot.slane %v163, %v167
  %v170 = vadd.f32 %v147, %v168
  %v171 = vadd.f32 %v148, %v168
  %v172 = vadd.f32 %v149, %v168
  %v173 = vadd.f32 %v150, %v168
  %v174 = vadd.f32 %v151, %v168
  %v175 = vadd.f32 %v152, %v168
  %v176 = vadd.f32 %v153, %v168
  %v177 = vadd.f32 %v154, %v168
  %v178 = vadd.f32 %v155, %v168
  %v179 = vadd.f32 %v156, %v168
  %v180 = vadd.f32 %v157, %v168
  %v181 = vadd.f32 %v158, %v168
  %v182 = vadd.f32 %v159, %v168
  %v183 = vadd.f32 %v160, %v168
  %v184 = vadd.f32 %v161, %v168
  %v185 = vadd.f32 %v162, %v168
  %v186 = vmax.f32 %v170, 0.0
  %v187 = vmax.f32 %v171, 0.0
  %v188 = vmax.f32 %v172, 0.0
  %v189 = vmax.f32 %v173, 0.0
  %v190 = vmax.f32 %v174, 0.0
  %v191 = vmax.f32 %v175, 0.0
  %v192 = vmax.f32 %v176, 0.0
  %v193 = vmax.f32 %v177, 0.0
  %v194 = vmax.f32 %v178, 0.0
  %v195 = vmax.f32 %v179, 0.0
  %v196 = vmax.f32 %v180, 0.0
  %v197 = vmax.f32 %v181, 0.0
  %v198 = vmax.f32 %v182, 0.0
  %v199 = vmax.f32 %v183, 0.0
  %v200 = vmax.f32 %v184, 0.0
  %v201 = vmax.f32 %v185, 0.0
  %v202 = vpack.c.bf16 %v187, %v186
  %v203 = vpack.c.bf16 %v189, %v188
  %v204 = vpack.c.bf16 %v191, %v190
  %v205 = vpack.c.bf16 %v193, %v192
  %v206 = vpack.c.bf16 %v195, %v194
  %v207 = vpack.c.bf16 %v197, %v196
  %v208 = vpack.c.bf16 %v199, %v198
  %v209 = vpack.c.bf16 %v201, %v200
  %v218 = vunpack.c.l.b16 %v202
  %v219 = vunpack.c.h.b16 %v202
  %v220 = vunpack.c.l.b16 %v203
  %v221 = vunpack.c.h.b16 %v203
  %v222 = vunpack.c.l.b16 %v204
  %v223 = vunpack.c.h.b16 %v204
  %v224 = vunpack.c.l.b16 %v205
  %v225 = vunpack.c.h.b16 %v205
  %v226 = vunpack.c.l.b16 %v206
  %v227 = vunpack.c.h.b16 %v206
  %v228 = vunpack.c.l.b16 %v207
  %v229 = vunpack.c.h.b16 %v207
  %v230 = vunpack.c.l.b16 %v208
  %v231 = vunpack.c.h.b16 %v208
  %v232 = vunpack.c.l.b16 %v209
  %v233 = vunpack.c.h.b16 %v209
  %v234 = vpack.c.b16 %v218, %v218
  %v235 = vpack.c.b16 %v219, %v219
  %v236 = vpack.c.b16 %v220, %v220
  %v237 = vpack.c.b16 %v221, %v221
  %v238 = vpack.c.b16 %v222, %v222
  %v239 = vpack.c.b16 %v223, %v223
  %v240 = vpack.c.b16 %v224, %v224
  %v241 = vpack.c.b16 %v225, %v225
  %v242 = vpack.c.b16 %v226, %v226
  %v243 = vpack.c.b16 %v227, %v227
  %v244 = vpack.c.b16 %v228, %v228
  %v245 = vpack.c.b16 %v229, %v229
  %v246 = vpack.c.b16 %v230, %v230
  %v247 = vpack.c.b16 %v231, %v231
  %v248 = vpack.c.b16 %v232, %v232
  %v249 = vpack.c.b16 %v233, %v233
  %vm266 = vcmask 519168
  %267 = vst.msk [vmem:[%s3] sm:$0xf] %vm266, %v234
  %268 = vst.msk [vmem:[%s3 + $0x4] sm:$0xf] %vm266, %v235
  %269 = vst.msk [vmem:[%s3 + $0x8] sm:$0xf] %vm266, %v236
  %270 = vst.msk [vmem:[%s3 + $0xc] sm:$0xf] %vm266, %v237
  %271 = vst.msk [vmem:[%s3 + $0x10] sm:$0xf] %vm266, %v238
  %272 = vst.msk [vmem:[%s3 + $0x14] sm:$0xf] %vm266, %v239
  %273 = vst.msk [vmem:[%s3 + $0x18] sm:$0xf] %vm266, %v240
  %274 = vst.msk [vmem:[%s3 + $0x1c] sm:$0xf] %vm266, %v241
  %275 = vst.msk [vmem:[%s3 + $0x20] sm:$0xf] %vm266, %v242
  %276 = vst.msk [vmem:[%s3 + $0x24] sm:$0xf] %vm266, %v243
  %277 = vst.msk [vmem:[%s3 + $0x28] sm:$0xf] %vm266, %v244
  %278 = vst.msk [vmem:[%s3 + $0x2c] sm:$0xf] %vm266, %v245
  %279 = vst.msk [vmem:[%s3 + $0x30] sm:$0xf] %vm266, %v246
  %280 = vst.msk [vmem:[%s3 + $0x34] sm:$0xf] %vm266, %v247
  %281 = vst.msk [vmem:[%s3 + $0x38] sm:$0xf] %vm266, %v248
  %282 = vst.msk [vmem:[%s3 + $0x3c] sm:$0xf] %vm266, %v249
  // Predicated region
  $region14: #{generator_forward.13} parent=0 // pred_check
    _
  $region15: #{generator_forward.13} parent=0 // pred_check_branch
    %284 = sbr.rel (0) target = $region17
  $region16: #{generator_forward.13} parent=0 // pred_region
    _
  $region17: #{generator_forward.13} parent=0 // pred_fallthru
    _
  // Predicated region
  $region18: #{generator_forward.13} parent=0 // pred_check
    _
  $region19: #{generator_forward.13} parent=0 // pred_check_branch
    %286 = sbr.rel (0) target = $region21
  $region20: #{generator_forward.13} parent=0 // pred_region
    _
  $region21: #{generator_forward.13} parent=0 // pred_fallthru
    _

// kernel: generator_forward.14
$region0: #{generator_forward.14}
  #allocation0 [shape = 'u32[]', space=smem, size = 0x4, offset = 0x4, fixed_abs, tag = 'smem constant byte address 0x4 - core index']
  #allocation1 [shape = 'u32[144,128]{1,0:T(1,128)}', space=vmem, size = 0x12000, scoped, tag = 'internal scratch']
  %s0 = inlined_call_operand.vmem [shape: bf16[128,64], index: 0, kind: input, shape index: {}]
  %s1 = inlined_call_operand.vmem [shape: bf16[64,512], index: 1, kind: input, shape index: {}]
  %s2 = inlined_call_operand.vmem [shape: f32[128,512], index: 2, kind: output, shape index: {}]
  %s3 = sld [smem:[#allocation0]]
  $region18: #{generator_forward.14} parent=0
    _
  %s5 = ssub.s32 1, %s3
  %s6 = scalar_select 0, %s5, %s3
  // Predicated region
  $region2: #{generator_forward.14} parent=0 // pred_check
    _
  $region3: #{generator_forward.14} parent=0 // pred_check_branch
    %8 = sbr.rel (0) target = $region5
  $region4: #{generator_forward.14} parent=0 // pred_region
    _
  $region5: #{generator_forward.14} parent=0 // pred_fallthru
    _
  // Predicated region
  $region6: #{generator_forward.14} parent=0 // pred_check
    _
  $region7: #{generator_forward.14} parent=0 // pred_check_branch
    %10 = sbr.rel (0) target = $region9
  $region8: #{generator_forward.14} parent=0 // pred_region
    _
  $region9: #{generator_forward.14} parent=0 // pred_fallthru
    _
  %v12 = vld [vmem:[%s0] sm:$0xf]
  %v13 = vld [vmem:[%s0 + $0x4] sm:$0xf]
  %v14 = vld [vmem:[%s0 + $0x8] sm:$0xf]
  %v15 = vld [vmem:[%s0 + $0xc] sm:$0xf]
  %v16 = vld [vmem:[%s0 + $0x10] sm:$0xf]
  %v17 = vld [vmem:[%s0 + $0x14] sm:$0xf]
  %v18 = vld [vmem:[%s0 + $0x18] sm:$0xf]
  %v19 = vld [vmem:[%s0 + $0x1c] sm:$0xf]
  %v20 = vld [vmem:[%s0 + $0x20] sm:$0xf]
  %v21 = vld [vmem:[%s0 + $0x24] sm:$0xf]
  %v22 = vld [vmem:[%s0 + $0x28] sm:$0xf]
  %v23 = vld [vmem:[%s0 + $0x2c] sm:$0xf]
  %v24 = vld [vmem:[%s0 + $0x30] sm:$0xf]
  %v25 = vld [vmem:[%s0 + $0x34] sm:$0xf]
  %v26 = vld [vmem:[%s0 + $0x38] sm:$0xf]
  %v27 = vld [vmem:[%s0 + $0x3c] sm:$0xf]
  %v28 = vld [vmem:[%s1] sm:$0xff]
  %v29 = vld [vmem:[%s1 + $0x8] sm:$0xff]
  %v30 = vld [vmem:[%s1 + $0x10] sm:$0xff]
  %v31 = vld [vmem:[%s1 + $0x18] sm:$0xff]
  %v32 = vld [vmem:[%s1 + $0x20] sm:$0xff]
  %v33 = vld [vmem:[%s1 + $0x28] sm:$0xff]
  %v34 = vld [vmem:[%s1 + $0x30] sm:$0xff]
  %v35 = vld [vmem:[%s1 + $0x38] sm:$0xff]
  %v36 = vld [vmem:[%s1 + $0x40] sm:$0xff]
  %v37 = vld [vmem:[%s1 + $0x48] sm:$0xff]
  %v38 = vld [vmem:[%s1 + $0x50] sm:$0xff]
  %v39 = vld [vmem:[%s1 + $0x58] sm:$0xff]
  %v40 = vld [vmem:[%s1 + $0x60] sm:$0xff]
  %v41 = vld [vmem:[%s1 + $0x68] sm:$0xff]
  %v42 = vld [vmem:[%s1 + $0x70] sm:$0xff]
  %v43 = vld [vmem:[%s1 + $0x78] sm:$0xff]
  %v60 = vunpack.c.l.b16 %v12
  %v61 = vunpack.c.l.b16 %v13
  %v62 = vunpack.c.l.b16 %v14
  %v63 = vunpack.c.l.b16 %v15
  %v64 = vunpack.c.l.b16 %v16
  %v65 = vunpack.c.l.b16 %v17
  %v66 = vunpack.c.l.b16 %v18
  %v67 = vunpack.c.l.b16 %v19
  %v68 = vunpack.c.l.b16 %v20
  %v69 = vunpack.c.l.b16 %v21
  %v70 = vunpack.c.l.b16 %v22
  %v71 = vunpack.c.l.b16 %v23
  %v72 = vunpack.c.l.b16 %v24
  %v73 = vunpack.c.l.b16 %v25
  %v74 = vunpack.c.l.b16 %v26
  %v75 = vunpack.c.l.b16 %v27
  %v76 = vpack.c.b16 %v61, %v60
  %v77 = vpack.c.b16 %v63, %v62
  %v78 = vpack.c.b16 %v65, %v64
  %v79 = vpack.c.b16 %v67, %v66
  %v80 = vpack.c.b16 %v69, %v68
  %v81 = vpack.c.b16 %v71, %v70
  %v82 = vpack.c.b16 %v73, %v72
  %v83 = vpack.c.b16 %v75, %v74
  %v100 = vunpack.c.l.b16 %v28
  %v101 = vunpack.c.h.b16 %v28
  %v102 = vunpack.c.l.b16 %v29
  %v103 = vunpack.c.h.b16 %v29
  %v104 = vunpack.c.l.b16 %v30
  %v105 = vunpack.c.h.b16 %v30
  %v106 = vunpack.c.l.b16 %v31
  %v107 = vunpack.c.h.b16 %v31
  %v108 = vunpack.c.l.b16 %v32
  %v109 = vunpack.c.h.b16 %v32
  %v110 = vunpack.c.l.b16 %v33
  %v111 = vunpack.c.h.b16 %v33
  %v112 = vunpack.c.l.b16 %v34
  %v113 = vunpack.c.h.b16 %v34
  %v114 = vunpack.c.l.b16 %v35
  %v115 = vunpack.c.h.b16 %v35
  %v116 = vunpack.c.l.b16 %v36
  %v117 = vunpack.c.h.b16 %v36
  %v118 = vunpack.c.l.b16 %v37
  %v119 = vunpack.c.h.b16 %v37
  %v120 = vunpack.c.l.b16 %v38
  %v121 = vunpack.c.h.b16 %v38
  %v122 = vunpack.c.l.b16 %v39
  %v123 = vunpack.c.h.b16 %v39
  %v124 = vunpack.c.l.b16 %v40
  %v125 = vunpack.c.h.b16 %v40
  %v126 = vunpack.c.l.b16 %v41
  %v127 = vunpack.c.h.b16 %v41
  %v128 = vunpack.c.l.b16 %v42
  %v129 = vunpack.c.h.b16 %v42
  %v130 = vunpack.c.l.b16 %v43
  %v131 = vunpack.c.h.b16 %v43
  %v132 = vpack.c.b16 %v104, %v100
  %v133 = vpack.c.b16 %v105, %v101
  %v134 = vpack.c.b16 %v106, %v102
  %v135 = vpack.c.b16 %v107, %v103
  %v136 = vpack.c.b16 %v112, %v108
  %v137 = vpack.c.b16 %v113, %v109
  %v138 = vpack.c.b16 %v114, %v110
  %v139 = vpack.c.b16 %v115, %v111
  %v140 = vpack.c.b16 %v120, %v116
  %v141 = vpack.c.b16 %v121, %v117
  %v142 = vpack.c.b16 %v122, %v118
  %v143 = vpack.c.b16 %v123, %v119
  %v144 = vpack.c.b16 %v128, %v124
  %v145 = vpack.c.b16 %v129, %v125
  %v146 = vpack.c.b16 %v130, %v126
  %v147 = vpack.c.b16 %v131, %v127
  %vm164 = vcmask 523264
  %v166 = vsel %vm164, %v76, 0
  %v169 = vsel %vm164, %v77, 0
  %v172 = vsel %vm164, %v78, 0
  %v175 = vsel %vm164, %v79, 0
  %v178 = vsel %vm164, %v80, 0
  %v181 = vsel %vm164, %v81, 0
  %v184 = vsel %vm164, %v82, 0
  %v187 = vsel %vm164, %v83, 0
  %189 = vmatprep.subr.bf16.mxu0 0
  %190 = vmatpush1.bf16.msra.mxu0 0
  %191 = vmatprep.subr.bf16.mxu0 0
  %192 = vmatpush1.bf16.msra.mxu0 0
  %193 = vmatprep.subr.bf16.mxu0 0
  %194 = vmatpush1.bf16.msra.mxu0 0
  %195 = vmatprep.subr.bf16.mxu0 0
  %196 = vmatpush1.bf16.msra.mxu0 0
  %197 = vmatprep.subr.bf16.mxu0 %v145
  %198 = vmatpush1.bf16.msra.mxu0 %v144
  %199 = vmatprep.subr.bf16.mxu0 %v141
  %200 = vmatpush1.bf16.msra.mxu0 %v140
  %201 = vmatprep.subr.bf16.mxu0 %v137
  %202 = vmatpush1.bf16.msra.mxu0 %v136
  %203 = vmatprep.subr.bf16.mxu0 %v133
  %204 = vmatpush1.bf16.msra.mxu0 %v132
  %205 = vmatprep.subr.bf16.mxu0 0
  %206 = vmatpush2.bf16.msra.mxu0 0
  %207 = vmatprep.subr.bf16.mxu0 0
  %208 = vmatpush2.bf16.msra.mxu0 0
  %209 = vmatprep.subr.bf16.mxu0 0
  %210 = vmatpush2.bf16.msra.mxu0 0
  %211 = vmatprep.subr.bf16.mxu0 0
  %212 = vmatpush2.bf16.msra.mxu0 0
  %213 = vmatprep.subr.bf16.mxu0 0
  %214 = vmatpush2.bf16.msra.mxu0 0
  %215 = vmatprep.subr.bf16.mxu0 0
  %216 = vmatpush2.bf16.msra.mxu0 0
  %217 = vmatprep.subr.bf16.mxu0 0
  %218 = vmatpush2.bf16.msra.mxu0 0
  %219 = vmatprep.subr.bf16.mxu0 0
  %220 = vmatpush2.bf16.msra.mxu0 0
  %221 = vmatprep.mubr.bf16.mxu0 0
  %222 = vmatmul.mubr.bf16.gmra.mxu0 %v166
  %v223 = vpop.f32.mrf.mxu0
  %v224 = vadd.f32 0.0, %v223
  %v225 = vpop.f32.mrf.mxu0
  %v226 = vadd.f32 0.0, %v225
  %v227 = vpop.f32.mrf.mxu0
  %v228 = vadd.f32 0.0, %v227
  %v229 = vpop.f32.mrf.mxu0
  %v230 = vadd.f32 0.0, %v229
  %231 = vmatprep.mubr.bf16.mxu0 0
  %232 = vmatmul.mubr.bf16.gmra.mxu0 %v169
  %v233 = vpop.f32.mrf.mxu0
  %v234 = vadd.f32 0.0, %v233
  %v235 = vpop.f32.mrf.mxu0
  %v236 = vadd.f32 0.0, %v235
  %v237 = vpop.f32.mrf.mxu0
  %v238 = vadd.f32 0.0, %v237
  %v239 = vpop.f32.mrf.mxu0
  %v240 = vadd.f32 0.0, %v239
  %241 = vmatprep.mubr.bf16.mxu0 0
  %242 = vmatmul.mubr.bf16.gmra.mxu0 %v172
  %v243 = vpop.f32.mrf.mxu0
  %v244 = vadd.f32 0.0, %v243
  %v245 = vpop.f32.mrf.mxu0
  %v246 = vadd.f32 0.0, %v245
  %v247 = vpop.f32.mrf.mxu0
  %v248 = vadd.f32 0.0, %v247
  %v249 = vpop.f32.mrf.mxu0
  %v250 = vadd.f32 0.0, %v249
  %251 = vmatprep.mubr.bf16.mxu0 0
  %252 = vmatmul.mubr.bf16.gmra.mxu0 %v175
  %v253 = vpop.f32.mrf.mxu0
  %v254 = vadd.f32 0.0, %v253
  %v255 = vpop.f32.mrf.mxu0
  %v256 = vadd.f32 0.0, %v255
  %v257 = vpop.f32.mrf.mxu0
  %v258 = vadd.f32 0.0, %v257
  %v259 = vpop.f32.mrf.mxu0
  %v260 = vadd.f32 0.0, %v259
  %261 = vmatprep.mubr.bf16.mxu0 0
  %262 = vmatmul.mubr.bf16.gmra.mxu0 %v178
  %v263 = vpop.f32.mrf.mxu0
  %v264 = vadd.f32 0.0, %v263
  %v265 = vpop.f32.mrf.mxu0
  %v266 = vadd.f32 0.0, %v265
  %v267 = vpop.f32.mrf.mxu0
  %v268 = vadd.f32 0.0, %v267
  %v269 = vpop.f32.mrf.mxu0
  %v270 = vadd.f32 0.0, %v269
  %271 = vmatprep.mubr.bf16.mxu0 0
  %272 = vmatmul.mubr.bf16.gmra.mxu0 %v181
  %v273 = vpop.f32.mrf.mxu0
  %v274 = vadd.f32 0.0, %v273
  %v275 = vpop.f32.mrf.mxu0
  %v276 = vadd.f32 0.0, %v275
  %v277 = vpop.f32.mrf.mxu0
  %v278 = vadd.f32 0.0, %v277
  %v279 = vpop.f32.mrf.mxu0
  %v280 = vadd.f32 0.0, %v279
  %281 = vmatprep.mubr.bf16.mxu0 0
  %282 = vmatmul.mubr.bf16.gmra.mxu0 %v184
  %v283 = vpop.f32.mrf.mxu0
  %v284 = vadd.f32 0.0, %v283
  %v285 = vpop.f32.mrf.mxu0
  %v286 = vadd.f32 0.0, %v285
  %v287 = vpop.f32.mrf.mxu0
  %v288 = vadd.f32 0.0, %v287
  %v289 = vpop.f32.mrf.mxu0
  %v290 = vadd.f32 0.0, %v289
  %291 = vmatprep.mubr.bf16.mxu0 0
  %292 = vmatmul.mubr.bf16.gmra.mxu0 %v187
  %v293 = vpop.f32.mrf.mxu0
  %v294 = vadd.f32 0.0, %v293
  %v295 = vpop.f32.mrf.mxu0
  %v296 = vadd.f32 0.0, %v295
  %v297 = vpop.f32.mrf.mxu0
  %v298 = vadd.f32 0.0, %v297
  %v299 = vpop.f32.mrf.mxu0
  %v300 = vadd.f32 0.0, %v299
  %301 = vdwg.mxu0
  %302 = vmatprep.subr.bf16.mxu0 0
  %303 = vmatpush1.bf16.msra.mxu0 0
  %304 = vmatprep.subr.bf16.mxu0 0
  %305 = vmatpush1.bf16.msra.mxu0 0
  %306 = vmatprep.subr.bf16.mxu0 0
  %307 = vmatpush1.bf16.msra.mxu0 0
  %308 = vmatprep.subr.bf16.mxu0 0
  %309 = vmatpush1.bf16.msra.mxu0 0
  %310 = vmatprep.subr.bf16.mxu0 %v147
  %311 = vmatpush1.bf16.msra.mxu0 %v146
  %312 = vmatprep.subr.bf16.mxu0 %v143
  %313 = vmatpush1.bf16.msra.mxu0 %v142
  %314 = vmatprep.subr.bf16.mxu0 %v139
  %315 = vmatpush1.bf16.msra.mxu0 %v138
  %316 = vmatprep.subr.bf16.mxu0 %v135
  %317 = vmatpush1.bf16.msra.mxu0 %v134
  %318 = vmatprep.subr.bf16.mxu0 0
  %319 = vmatpush2.bf16.msra.mxu0 0
  %320 = vmatprep.subr.bf16.mxu0 0
  %321 = vmatpush2.bf16.msra.mxu0 0
  %322 = vmatprep.subr.bf16.mxu0 0
  %323 = vmatpush2.bf16.msra.mxu0 0
  %324 = vmatprep.subr.bf16.mxu0 0
  %325 = vmatpush2.bf16.msra.mxu0 0
  %326 = vmatprep.subr.bf16.mxu0 0
  %327 = vmatpush2.bf16.msra.mxu0 0
  %328 = vmatprep.subr.bf16.mxu0 0
  %329 = vmatpush2.bf16.msra.mxu0 0
  %330 = vmatprep.subr.bf16.mxu0 0
  %331 = vmatpush2.bf16.msra.mxu0 0
  %332 = vmatprep.subr.bf16.mxu0 0
  %333 = vmatpush2.bf16.msra.mxu0 0
  %334 = vmatprep.mubr.bf16.mxu0 0
  %335 = vmatmul.mubr.bf16.gmra.mxu0 %v166
  %v336 = vpop.f32.mrf.mxu0
  %v337 = vadd.f32 0.0, %v336
  %v338 = vpop.f32.mrf.mxu0
  %v339 = vadd.f32 0.0, %v338
  %v340 = vpop.f32.mrf.mxu0
  %v341 = vadd.f32 0.0, %v340
  %v342 = vpop.f32.mrf.mxu0
  %v343 = vadd.f32 0.0, %v342
  %344 = vmatprep.mubr.bf16.mxu0 0
  %345 = vmatmul.mubr.bf16.gmra.mxu0 %v169
  %v346 = vpop.f32.mrf.mxu0
  %v347 = vadd.f32 0.0, %v346
  %v348 = vpop.f32.mrf.mxu0
  %v349 = vadd.f32 0.0, %v348
  %v350 = vpop.f32.mrf.mxu0
  %v351 = vadd.f32 0.0, %v350
  %v352 = vpop.f32.mrf.mxu0
  %v353 = vadd.f32 0.0, %v352
  %354 = vmatprep.mubr.bf16.mxu0 0
  %355 = vmatmul.mubr.bf16.gmra.mxu0 %v172
  %v356 = vpop.f32.mrf.mxu0
  %v357 = vadd.f32 0.0, %v356
  %v358 = vpop.f32.mrf.mxu0
  %v359 = vadd.f32 0.0, %v358
  %v360 = vpop.f32.mrf.mxu0
  %v361 = vadd.f32 0.0, %v360
  %v362 = vpop.f32.mrf.mxu0
  %v363 = vadd.f32 0.0, %v362
  %364 = vmatprep.mubr.bf16.mxu0 0
  %365 = vmatmul.mubr.bf16.gmra.mxu0 %v175
  %v366 = vpop.f32.mrf.mxu0
  %v367 = vadd.f32 0.0, %v366
  %v368 = vpop.f32.mrf.mxu0
  %v369 = vadd.f32 0.0, %v368
  %v370 = vpop.f32.mrf.mxu0
  %v371 = vadd.f32 0.0, %v370
  %v372 = vpop.f32.mrf.mxu0
  %v373 = vadd.f32 0.0, %v372
  %374 = vmatprep.mubr.bf16.mxu0 0
  %375 = vmatmul.mubr.bf16.gmra.mxu0 %v178
  %v376 = vpop.f32.mrf.mxu0
  %v377 = vadd.f32 0.0, %v376
  %v378 = vpop.f32.mrf.mxu0
  %v379 = vadd.f32 0.0, %v378
  %v380 = vpop.f32.mrf.mxu0
  %v381 = vadd.f32 0.0, %v380
  %v382 = vpop.f32.mrf.mxu0
  %v383 = vadd.f32 0.0, %v382
  %384 = vmatprep.mubr.bf16.mxu0 0
  %385 = vmatmul.mubr.bf16.gmra.mxu0 %v181
  %v386 = vpop.f32.mrf.mxu0
  %v387 = vadd.f32 0.0, %v386
  %v388 = vpop.f32.mrf.mxu0
  %v389 = vadd.f32 0.0, %v388
  %v390 = vpop.f32.mrf.mxu0
  %v391 = vadd.f32 0.0, %v390
  %v392 = vpop.f32.mrf.mxu0
  %v393 = vadd.f32 0.0, %v392
  %394 = vmatprep.mubr.bf16.mxu0 0
  %395 = vmatmul.mubr.bf16.gmra.mxu0 %v184
  %v396 = vpop.f32.mrf.mxu0
  %v397 = vadd.f32 0.0, %v396
  %v398 = vpop.f32.mrf.mxu0
  %v399 = vadd.f32 0.0, %v398
  %v400 = vpop.f32.mrf.mxu0
  %v401 = vadd.f32 0.0, %v400
  %v402 = vpop.f32.mrf.mxu0
  %v403 = vadd.f32 0.0, %v402
  %404 = vmatprep.mubr.bf16.mxu0 0
  %405 = vmatmul.mubr.bf16.gmra.mxu0 %v187
  %v406 = vpop.f32.mrf.mxu0
  %v407 = vadd.f32 0.0, %v406
  %v408 = vpop.f32.mrf.mxu0
  %v409 = vadd.f32 0.0, %v408
  %v410 = vpop.f32.mrf.mxu0
  %v411 = vadd.f32 0.0, %v410
  %v412 = vpop.f32.mrf.mxu0
  %v413 = vadd.f32 0.0, %v412
  %414 = vdwg.mxu0
  %415 = vst [vmem:[%s2] sm:$0xff] %v224
  %416 = vst [vmem:[%s2 + $0x8] sm:$0xff] %v226
  %417 = vst [vmem:[%s2 + $0x10] sm:$0xff] %v337
  %418 = vst [vmem:[%s2 + $0x18] sm:$0xff] %v339
  %419 = vst [vmem:[%s2 + $0x20] sm:$0xff] %v228
  %420 = vst [vmem:[%s2 + $0x28] sm:$0xff] %v230
  %421 = vst [vmem:[%s2 + $0x30] sm:$0xff] %v341
  %422 = vst [vmem:[%s2 + $0x38] sm:$0xff] %v343
  %423 = vst [vmem:[%s2 + $0x40] sm:$0xff] %v234
  %424 = vst [vmem:[%s2 + $0x48] sm:$0xff] %v236
  %425 = vst [vmem:[%s2 + $0x50] sm:$0xff] %v347
  %426 = vst [vmem:[%s2 + $0x58] sm:$0xff] %v349
  %427 = vst [vmem:[%s2 + $0x60] sm:$0xff] %v238
  %428 = vst [vmem:[%s2 + $0x68] sm:$0xff] %v240
  %429 = vst [vmem:[%s2 + $0x70] sm:$0xff] %v351
  %430 = vst [vmem:[%s2 + $0x78] sm:$0xff] %v353
  %431 = vst [vmem:[%s2 + $0x80] sm:$0xff] %v244
  %432 = vst [vmem:[%s2 + $0x88] sm:$0xff] %v246
  %433 = vst [vmem:[%s2 + $0x90] sm:$0xff] %v357
  %434 = vst [vmem:[%s2 + $0x98] sm:$0xff] %v359
  %435 = vst [vmem:[%s2 + $0xa0] sm:$0xff] %v248
  %436 = vst [vmem:[%s2 + $0xa8] sm:$0xff] %v250
  %437 = vst [vmem:[%s2 + $0xb0] sm:$0xff] %v361
  %438 = vst [vmem:[%s2 + $0xb8] sm:$0xff] %v363
  %439 = vst [vmem:[%s2 + $0xc0] sm:$0xff] %v254
  %440 = vst [vmem:[%s2 + $0xc8] sm:$0xff] %v256
  %441 = vst [vmem:[%s2 + $0xd0] sm:$0xff] %v367
  %442 = vst [vmem:[%s2 + $0xd8] sm:$0xff] %v369
  %443 = vst [vmem:[%s2 + $0xe0] sm:$0xff] %v258
  %444 = vst [vmem:[%s2 + $0xe8] sm:$0xff] %v260
  %445 = vst [vmem:[%s2 + $0xf0] sm:$0xff] %v371
  %446 = vst [vmem:[%s2 + $0xf8] sm:$0xff] %v373
  %447 = vst [vmem:[%s2 + $0x100] sm:$0xff] %v264
  %448 = vst [vmem:[%s2 + $0x108] sm:$0xff] %v266
  %449 = vst [vmem:[%s2 + $0x110] sm:$0xff] %v377
  %450 = vst [vmem:[%s2 + $0x118] sm:$0xff] %v379
  %451 = vst [vmem:[%s2 + $0x120] sm:$0xff] %v268
  %452 = vst [vmem:[%s2 + $0x128] sm:$0xff] %v270
  %453 = vst [vmem:[%s2 + $0x130] sm:$0xff] %v381
  %454 = vst [vmem:[%s2 + $0x138] sm:$0xff] %v383
  %455 = vst [vmem:[%s2 + $0x140] sm:$0xff] %v274
  %456 = vst [vmem:[%s2 + $0x148] sm:$0xff] %v276
  %457 = vst [vmem:[%s2 + $0x150] sm:$0xff] %v387
  %458 = vst [vmem:[%s2 + $0x158] sm:$0xff] %v389
  %459 = vst [vmem:[%s2 + $0x160] sm:$0xff] %v278
  %460 = vst [vmem:[%s2 + $0x168] sm:$0xff] %v280
  %461 = vst [vmem:[%s2 + $0x170] sm:$0xff] %v391
  %462 = vst [vmem:[%s2 + $0x178] sm:$0xff] %v393
  %463 = vst [vmem:[%s2 + $0x180] sm:$0xff] %v284
  %464 = vst [vmem:[%s2 + $0x188] sm:$0xff] %v286
  %465 = vst [vmem:[%s2 + $0x190] sm:$0xff] %v397
  %466 = vst [vmem:[%s2 + $0x198] sm:$0xff] %v399
  %467 = vst [vmem:[%s2 + $0x1a0] sm:$0xff] %v288
  %468 = vst [vmem:[%s2 + $0x1a8] sm:$0xff] %v290
  %469 = vst [vmem:[%s2 + $0x1b0] sm:$0xff] %v401
  %470 = vst [vmem:[%s2 + $0x1b8] sm:$0xff] %v403
  %471 = vst [vmem:[%s2 + $0x1c0] sm:$0xff] %v294
  %472 = vst [vmem:[%s2 + $0x1c8] sm:$0xff] %v296
  %473 = vst [vmem:[%s2 + $0x1d0] sm:$0xff] %v407
  %474 = vst [vmem:[%s2 + $0x1d8] sm:$0xff] %v409
  %475 = vst [vmem:[%s2 + $0x1e0] sm:$0xff] %v298
  %476 = vst [vmem:[%s2 + $0x1e8] sm:$0xff] %v300
  %477 = vst [vmem:[%s2 + $0x1f0] sm:$0xff] %v411
  %478 = vst [vmem:[%s2 + $0x1f8] sm:$0xff] %v413
  // Predicated region
  $region10: #{generator_forward.14} parent=0 // pred_check
    _
  $region11: #{generator_forward.14} parent=0 // pred_check_branch
    %480 = sbr.rel (0) target = $region13
  $region12: #{generator_forward.14} parent=0 // pred_region
    _
  $region13: #{generator_forward.14} parent=0 // pred_fallthru
    _
  // Predicated region
  $region14: #{generator_forward.14} parent=0 // pred_check
    _
  $region15: #{generator_forward.14} parent=0 // pred_check_branch
    %482 = sbr.rel (0) target = $region17
  $region16: #{generator_forward.14} parent=0 // pred_region
    _
  $region17: #{generator_forward.14} parent=0 // pred_fallthru
    _

// kernel: generator_forward.15
$region0: #{generator_forward.15}
  #allocation0 [shape = 'u32[]', space=smem, size = 0x4, offset = 0x4, fixed_abs, tag = 'smem constant byte address 0x4 - core index']
  #allocation1 [shape = 'u32[144,128]{1,0:T(1,128)}', space=vmem, size = 0x12000, scoped, tag = 'internal scratch']
  %s0 = inlined_call_operand.vmem [shape: f32[512,32], index: 0, kind: input, shape index: {}]
  %s1 = inlined_call_operand.vmem [shape: f32[1,32], index: 1, kind: input, shape index: {}]
  %s2 = inlined_call_operand.vmem [shape: f32[1,32], index: 2, kind: input, shape index: {}]
  %s3 = inlined_call_operand.vmem [shape: bf16[512,32], index: 3, kind: output, shape index: {}]
  %s4 = sld [smem:[#allocation0]]
  $region22: #{generator_forward.15} parent=0
    _
  %s6 = ssub.s32 1, %s4
  %s7 = scalar_select 0, %s6, %s4
  // Predicated region
  $region2: #{generator_forward.15} parent=0 // pred_check
    _
  $region3: #{generator_forward.15} parent=0 // pred_check_branch
    %9 = sbr.rel (0) target = $region5
  $region4: #{generator_forward.15} parent=0 // pred_region
    _
  $region5: #{generator_forward.15} parent=0 // pred_fallthru
    _
  // Predicated region
  $region6: #{generator_forward.15} parent=0 // pred_check
    _
  $region7: #{generator_forward.15} parent=0 // pred_check_branch
    %11 = sbr.rel (0) target = $region9
  $region8: #{generator_forward.15} parent=0 // pred_region
    _
  $region9: #{generator_forward.15} parent=0 // pred_fallthru
    _
  // Predicated region
  $region10: #{generator_forward.15} parent=0 // pred_check
    _
  $region11: #{generator_forward.15} parent=0 // pred_check_branch
    %13 = sbr.rel (0) target = $region13
  $region12: #{generator_forward.15} parent=0 // pred_region
    _
  $region13: #{generator_forward.15} parent=0 // pred_fallthru
    _
  %v14 = vld [vmem:[%s0] sm:$0xff]
  %v15 = vld [vmem:[%s0 + $0x8] sm:$0xff]
  %v16 = vld [vmem:[%s0 + $0x10] sm:$0xff]
  %v17 = vld [vmem:[%s0 + $0x18] sm:$0xff]
  %v18 = vld [vmem:[%s0 + $0x20] sm:$0xff]
  %v19 = vld [vmem:[%s0 + $0x28] sm:$0xff]
  %v20 = vld [vmem:[%s0 + $0x30] sm:$0xff]
  %v21 = vld [vmem:[%s0 + $0x38] sm:$0xff]
  %v22 = vld [vmem:[%s0 + $0x40] sm:$0xff]
  %v23 = vld [vmem:[%s0 + $0x48] sm:$0xff]
  %v24 = vld [vmem:[%s0 + $0x50] sm:$0xff]
  %v25 = vld [vmem:[%s0 + $0x58] sm:$0xff]
  %v26 = vld [vmem:[%s0 + $0x60] sm:$0xff]
  %v27 = vld [vmem:[%s0 + $0x68] sm:$0xff]
  %v28 = vld [vmem:[%s0 + $0x70] sm:$0xff]
  %v29 = vld [vmem:[%s0 + $0x78] sm:$0xff]
  %v30 = vld [vmem:[%s0 + $0x80] sm:$0xff]
  %v31 = vld [vmem:[%s0 + $0x88] sm:$0xff]
  %v32 = vld [vmem:[%s0 + $0x90] sm:$0xff]
  %v33 = vld [vmem:[%s0 + $0x98] sm:$0xff]
  %v34 = vld [vmem:[%s0 + $0xa0] sm:$0xff]
  %v35 = vld [vmem:[%s0 + $0xa8] sm:$0xff]
  %v36 = vld [vmem:[%s0 + $0xb0] sm:$0xff]
  %v37 = vld [vmem:[%s0 + $0xb8] sm:$0xff]
  %v38 = vld [vmem:[%s0 + $0xc0] sm:$0xff]
  %v39 = vld [vmem:[%s0 + $0xc8] sm:$0xff]
  %v40 = vld [vmem:[%s0 + $0xd0] sm:$0xff]
  %v41 = vld [vmem:[%s0 + $0xd8] sm:$0xff]
  %v42 = vld [vmem:[%s0 + $0xe0] sm:$0xff]
  %v43 = vld [vmem:[%s0 + $0xe8] sm:$0xff]
  %v44 = vld [vmem:[%s0 + $0xf0] sm:$0xff]
  %v45 = vld [vmem:[%s0 + $0xf8] sm:$0xff]
  %v46 = vld [vmem:[%s0 + $0x100] sm:$0xff]
  %v47 = vld [vmem:[%s0 + $0x108] sm:$0xff]
  %v48 = vld [vmem:[%s0 + $0x110] sm:$0xff]
  %v49 = vld [vmem:[%s0 + $0x118] sm:$0xff]
  %v50 = vld [vmem:[%s0 + $0x120] sm:$0xff]
  %v51 = vld [vmem:[%s0 + $0x128] sm:$0xff]
  %v52 = vld [vmem:[%s0 + $0x130] sm:$0xff]
  %v53 = vld [vmem:[%s0 + $0x138] sm:$0xff]
  %v54 = vld [vmem:[%s0 + $0x140] sm:$0xff]
  %v55 = vld [vmem:[%s0 + $0x148] sm:$0xff]
  %v56 = vld [vmem:[%s0 + $0x150] sm:$0xff]
  %v57 = vld [vmem:[%s0 + $0x158] sm:$0xff]
  %v58 = vld [vmem:[%s0 + $0x160] sm:$0xff]
  %v59 = vld [vmem:[%s0 + $0x168] sm:$0xff]
  %v60 = vld [vmem:[%s0 + $0x170] sm:$0xff]
  %v61 = vld [vmem:[%s0 + $0x178] sm:$0xff]
  %v62 = vld [vmem:[%s0 + $0x180] sm:$0xff]
  %v63 = vld [vmem:[%s0 + $0x188] sm:$0xff]
  %v64 = vld [vmem:[%s0 + $0x190] sm:$0xff]
  %v65 = vld [vmem:[%s0 + $0x198] sm:$0xff]
  %v66 = vld [vmem:[%s0 + $0x1a0] sm:$0xff]
  %v67 = vld [vmem:[%s0 + $0x1a8] sm:$0xff]
  %v68 = vld [vmem:[%s0 + $0x1b0] sm:$0xff]
  %v69 = vld [vmem:[%s0 + $0x1b8] sm:$0xff]
  %v70 = vld [vmem:[%s0 + $0x1c0] sm:$0xff]
  %v71 = vld [vmem:[%s0 + $0x1c8] sm:$0xff]
  %v72 = vld [vmem:[%s0 + $0x1d0] sm:$0xff]
  %v73 = vld [vmem:[%s0 + $0x1d8] sm:$0xff]
  %v74 = vld [vmem:[%s0 + $0x1e0] sm:$0xff]
  %v75 = vld [vmem:[%s0 + $0x1e8] sm:$0xff]
  %v76 = vld [vmem:[%s0 + $0x1f0] sm:$0xff]
  %v77 = vld [vmem:[%s0 + $0x1f8] sm:$0xff]
  %vm78 = vcmask 261120
  %v79 = vsel %vm78, %v14, 0.0
  %v80 = vsel %vm78, %v15, 0.0
  %v81 = vadd.f32 %v79, %v80
  %v82 = vsel %vm78, %v16, 0.0
  %v83 = vadd.f32 %v81, %v82
  %v84 = vsel %vm78, %v17, 0.0
  %v85 = vadd.f32 %v83, %v84
  %v86 = vsel %vm78, %v18, 0.0
  %v87 = vadd.f32 %v85, %v86
  %v88 = vsel %vm78, %v19, 0.0
  %v89 = vadd.f32 %v87, %v88
  %v90 = vsel %vm78, %v20, 0.0
  %v91 = vadd.f32 %v89, %v90
  %v92 = vsel %vm78, %v21, 0.0
  %v93 = vadd.f32 %v91, %v92
  %v94 = vsel %vm78, %v22, 0.0
  %v95 = vadd.f32 %v93, %v94
  %v96 = vsel %vm78, %v23, 0.0
  %v97 = vadd.f32 %v95, %v96
  %v98 = vsel %vm78, %v24, 0.0
  %v99 = vadd.f32 %v97, %v98
  %v100 = vsel %vm78, %v25, 0.0
  %v101 = vadd.f32 %v99, %v100
  %v102 = vsel %vm78, %v26, 0.0
  %v103 = vadd.f32 %v101, %v102
  %v104 = vsel %vm78, %v27, 0.0
  %v105 = vadd.f32 %v103, %v104
  %v106 = vsel %vm78, %v28, 0.0
  %v107 = vadd.f32 %v105, %v106
  %v108 = vsel %vm78, %v29, 0.0
  %v109 = vadd.f32 %v107, %v108
  %v110 = vsel %vm78, %v30, 0.0
  %v111 = vadd.f32 %v109, %v110
  %v112 = vsel %vm78, %v31, 0.0
  %v113 = vadd.f32 %v111, %v112
  %v114 = vsel %vm78, %v32, 0.0
  %v115 = vadd.f32 %v113, %v114
  %v116 = vsel %vm78, %v33, 0.0
  %v117 = vadd.f32 %v115, %v116
  %v118 = vsel %vm78, %v34, 0.0
  %v119 = vadd.f32 %v117, %v118
  %v120 = vsel %vm78, %v35, 0.0
  %v121 = vadd.f32 %v119, %v120
  %v122 = vsel %vm78, %v36, 0.0
  %v123 = vadd.f32 %v121, %v122
  %v124 = vsel %vm78, %v37, 0.0
  %v125 = vadd.f32 %v123, %v124
  %v126 = vsel %vm78, %v38, 0.0
  %v127 = vadd.f32 %v125, %v126
  %v128 = vsel %vm78, %v39, 0.0
  %v129 = vadd.f32 %v127, %v128
  %v130 = vsel %vm78, %v40, 0.0
  %v131 = vadd.f32 %v129, %v130
  %v132 = vsel %vm78, %v41, 0.0
  %v133 = vadd.f32 %v131, %v132
  %v134 = vsel %vm78, %v42, 0.0
  %v135 = vadd.f32 %v133, %v134
  %v136 = vsel %vm78, %v43, 0.0
  %v137 = vadd.f32 %v135, %v136
  %v138 = vsel %vm78, %v44, 0.0
  %v139 = vadd.f32 %v137, %v138
  %v140 = vsel %vm78, %v45, 0.0
  %v141 = vadd.f32 %v139, %v140
  %v142 = vsel %vm78, %v46, 0.0
  %v143 = vadd.f32 %v141, %v142
  %v144 = vsel %vm78, %v47, 0.0
  %v145 = vadd.f32 %v143, %v144
  %v146 = vsel %vm78, %v48, 0.0
  %v147 = vadd.f32 %v145, %v146
  %v148 = vsel %vm78, %v49, 0.0
  %v149 = vadd.f32 %v147, %v148
  %v150 = vsel %vm78, %v50, 0.0
  %v151 = vadd.f32 %v149, %v150
  %v152 = vsel %vm78, %v51, 0.0
  %v153 = vadd.f32 %v151, %v152
  %v154 = vsel %vm78, %v52, 0.0
  %v155 = vadd.f32 %v153, %v154
  %v156 = vsel %vm78, %v53, 0.0
  %v157 = vadd.f32 %v155, %v156
  %v158 = vsel %vm78, %v54, 0.0
  %v159 = vadd.f32 %v157, %v158
  %v160 = vsel %vm78, %v55, 0.0
  %v161 = vadd.f32 %v159, %v160
  %v162 = vsel %vm78, %v56, 0.0
  %v163 = vadd.f32 %v161, %v162
  %v164 = vsel %vm78, %v57, 0.0
  %v165 = vadd.f32 %v163, %v164
  %v166 = vsel %vm78, %v58, 0.0
  %v167 = vadd.f32 %v165, %v166
  %v168 = vsel %vm78, %v59, 0.0
  %v169 = vadd.f32 %v167, %v168
  %v170 = vsel %vm78, %v60, 0.0
  %v171 = vadd.f32 %v169, %v170
  %v172 = vsel %vm78, %v61, 0.0
  %v173 = vadd.f32 %v171, %v172
  %v174 = vsel %vm78, %v62, 0.0
  %v175 = vadd.f32 %v173, %v174
  %v176 = vsel %vm78, %v63, 0.0
  %v177 = vadd.f32 %v175, %v176
  %v178 = vsel %vm78, %v64, 0.0
  %v179 = vadd.f32 %v177, %v178
  %v180 = vsel %vm78, %v65, 0.0
  %v181 = vadd.f32 %v179, %v180
  %v182 = vsel %vm78, %v66, 0.0
  %v183 = vadd.f32 %v181, %v182
  %v184 = vsel %vm78, %v67, 0.0
  %v185 = vadd.f32 %v183, %v184
  %v186 = vsel %vm78, %v68, 0.0
  %v187 = vadd.f32 %v185, %v186
  %v188 = vsel %vm78, %v69, 0.0
  %v189 = vadd.f32 %v187, %v188
  %v190 = vsel %vm78, %v70, 0.0
  %v191 = vadd.f32 %v189, %v190
  %v192 = vsel %vm78, %v71, 0.0
  %v193 = vadd.f32 %v191, %v192
  %v194 = vsel %vm78, %v72, 0.0
  %v195 = vadd.f32 %v193, %v194
  %v196 = vsel %vm78, %v73, 0.0
  %v197 = vadd.f32 %v195, %v196
  %v198 = vsel %vm78, %v74, 0.0
  %v199 = vadd.f32 %v197, %v198
  %v200 = vsel %vm78, %v75, 0.0
  %v201 = vadd.f32 %v199, %v200
  %v202 = vsel %vm78, %v76, 0.0
  %v203 = vadd.f32 %v201, %v202
  %v204 = vsel %vm78, %v77, 0.0
  %v205 = vadd.f32 %v203, %v204
  %v206 = vrot.slane %v205, 4
  %v207 = vadd.f32 %v205, %v206
  %v208 = vrot.slane %v207, 2
  %v209 = vadd.f32 %v207, %v208
  %v210 = vrot.slane %v209, 1
  %v211 = vadd.f32 %v209, %v210
  %v212 = vmul.f32 %v211, 0.001953125
  %v213 = vsub.f32 %v14, %v212
  %v214 = vsub.f32 %v15, %v212
  %v215 = vsub.f32 %v16, %v212
  %v216 = vsub.f32 %v17, %v212
  %v217 = vsub.f32 %v18, %v212
  %v218 = vsub.f32 %v19, %v212
  %v219 = vsub.f32 %v20, %v212
  %v220 = vsub.f32 %v21, %v212
  %v221 = vsub.f32 %v22, %v212
  %v222 = vsub.f32 %v23, %v212
  %v223 = vsub.f32 %v24, %v212
  %v224 = vsub.f32 %v25, %v212
  %v225 = vsub.f32 %v26, %v212
  %v226 = vsub.f32 %v27, %v212
  %v227 = vsub.f32 %v28, %v212
  %v228 = vsub.f32 %v29, %v212
  %v229 = vsub.f32 %v30, %v212
  %v230 = vsub.f32 %v31, %v212
  %v231 = vsub.f32 %v32, %v212
  %v232 = vsub.f32 %v33, %v212
  %v233 = vsub.f32 %v34, %v212
  %v234 = vsub.f32 %v35, %v212
  %v235 = vsub.f32 %v36, %v212
  %v236 = vsub.f32 %v37, %v212
  %v237 = vsub.f32 %v38, %v212
  %v238 = vsub.f32 %v39, %v212
  %v239 = vsub.f32 %v40, %v212
  %v240 = vsub.f32 %v41, %v212
  %v241 = vsub.f32 %v42, %v212
  %v242 = vsub.f32 %v43, %v212
  %v243 = vsub.f32 %v44, %v212
  %v244 = vsub.f32 %v45, %v212
  %v245 = vsub.f32 %v46, %v212
  %v246 = vsub.f32 %v47, %v212
  %v247 = vsub.f32 %v48, %v212
  %v248 = vsub.f32 %v49, %v212
  %v249 = vsub.f32 %v50, %v212
  %v250 = vsub.f32 %v51, %v212
  %v251 = vsub.f32 %v52, %v212
  %v252 = vsub.f32 %v53, %v212
  %v253 = vsub.f32 %v54, %v212
  %v254 = vsub.f32 %v55, %v212
  %v255 = vsub.f32 %v56, %v212
  %v256 = vsub.f32 %v57, %v212
  %v257 = vsub.f32 %v58, %v212
  %v258 = vsub.f32 %v59, %v212
  %v259 = vsub.f32 %v60, %v212
  %v260 = vsub.f32 %v61, %v212
  %v261 = vsub.f32 %v62, %v212
  %v262 = vsub.f32 %v63, %v212
  %v263 = vsub.f32 %v64, %v212
  %v264 = vsub.f32 %v65, %v212
  %v265 = vsub.f32 %v66, %v212
  %v266 = vsub.f32 %v67, %v212
  %v267 = vsub.f32 %v68, %v212
  %v268 = vsub.f32 %v69, %v212
  %v269 = vsub.f32 %v70, %v212
  %v270 = vsub.f32 %v71, %v212
  %v271 = vsub.f32 %v72, %v212
  %v272 = vsub.f32 %v73, %v212
  %v273 = vsub.f32 %v74, %v212
  %v274 = vsub.f32 %v75, %v212
  %v275 = vsub.f32 %v76, %v212
  %v276 = vsub.f32 %v77, %v212
  %v277 = vmul.f32 %v213, %v213
  %v278 = vmul.f32 %v214, %v214
  %v279 = vmul.f32 %v215, %v215
  %v280 = vmul.f32 %v216, %v216
  %v281 = vmul.f32 %v217, %v217
  %v282 = vmul.f32 %v218, %v218
  %v283 = vmul.f32 %v219, %v219
  %v284 = vmul.f32 %v220, %v220
  %v285 = vmul.f32 %v221, %v221
  %v286 = vmul.f32 %v222, %v222
  %v287 = vmul.f32 %v223, %v223
  %v288 = vmul.f32 %v224, %v224
  %v289 = vmul.f32 %v225, %v225
  %v290 = vmul.f32 %v226, %v226
  %v291 = vmul.f32 %v227, %v227
  %v292 = vmul.f32 %v228, %v228
  %v293 = vmul.f32 %v229, %v229
  %v294 = vmul.f32 %v230, %v230
  %v295 = vmul.f32 %v231, %v231
  %v296 = vmul.f32 %v232, %v232
  %v297 = vmul.f32 %v233, %v233
  %v298 = vmul.f32 %v234, %v234
  %v299 = vmul.f32 %v235, %v235
  %v300 = vmul.f32 %v236, %v236
  %v301 = vmul.f32 %v237, %v237
  %v302 = vmul.f32 %v238, %v238
  %v303 = vmul.f32 %v239, %v239
  %v304 = vmul.f32 %v240, %v240
  %v305 = vmul.f32 %v241, %v241
  %v306 = vmul.f32 %v242, %v242
  %v307 = vmul.f32 %v243, %v243
  %v308 = vmul.f32 %v244, %v244
  %v309 = vmul.f32 %v245, %v245
  %v310 = vmul.f32 %v246, %v246
  %v311 = vmul.f32 %v247, %v247
  %v312 = vmul.f32 %v248, %v248
  %v313 = vmul.f32 %v249, %v249
  %v314 = vmul.f32 %v250, %v250
  %v315 = vmul.f32 %v251, %v251
  %v316 = vmul.f32 %v252, %v252
  %v317 = vmul.f32 %v253, %v253
  %v318 = vmul.f32 %v254, %v254
  %v319 = vmul.f32 %v255, %v255
  %v320 = vmul.f32 %v256, %v256
  %v321 = vmul.f32 %v257, %v257
  %v322 = vmul.f32 %v258, %v258
  %v323 = vmul.f32 %v259, %v259
  %v324 = vmul.f32 %v260, %v260
  %v325 = vmul.f32 %v261, %v261
  %v326 = vmul.f32 %v262, %v262
  %v327 = vmul.f32 %v263, %v263
  %v328 = vmul.f32 %v264, %v264
  %v329 = vmul.f32 %v265, %v265
  %v330 = vmul.f32 %v266, %v266
  %v331 = vmul.f32 %v267, %v267
  %v332 = vmul.f32 %v268, %v268
  %v333 = vmul.f32 %v269, %v269
  %v334 = vmul.f32 %v270, %v270
  %v335 = vmul.f32 %v271, %v271
  %v336 = vmul.f32 %v272, %v272
  %v337 = vmul.f32 %v273, %v273
  %v338 = vmul.f32 %v274, %v274
  %v339 = vmul.f32 %v275, %v275
  %v340 = vmul.f32 %v276, %v276
  %v341 = vsel %vm78, %v277, 0.0
  %v342 = vsel %vm78, %v278, 0.0
  %v343 = vadd.f32 %v341, %v342
  %v344 = vsel %vm78, %v279, 0.0
  %v345 = vadd.f32 %v343, %v344
  %v346 = vsel %vm78, %v280, 0.0
  %v347 = vadd.f32 %v345, %v346
  %v348 = vsel %vm78, %v281, 0.0
  %v349 = vadd.f32 %v347, %v348
  %v350 = vsel %vm78, %v282, 0.0
  %v351 = vadd.f32 %v349, %v350
  %v352 = vsel %vm78, %v283, 0.0
  %v353 = vadd.f32 %v351, %v352
  %v354 = vsel %vm78, %v284, 0.0
  %v355 = vadd.f32 %v353, %v354
  %v356 = vsel %vm78, %v285, 0.0
  %v357 = vadd.f32 %v355, %v356
  %v358 = vsel %vm78, %v286, 0.0
  %v359 = vadd.f32 %v357, %v358
  %v360 = vsel %vm78, %v287, 0.0
  %v361 = vadd.f32 %v359, %v360
  %v362 = vsel %vm78, %v288, 0.0
  %v363 = vadd.f32 %v361, %v362
  %v364 = vsel %vm78, %v289, 0.0
  %v365 = vadd.f32 %v363, %v364
  %v366 = vsel %vm78, %v290, 0.0
  %v367 = vadd.f32 %v365, %v366
  %v368 = vsel %vm78, %v291, 0.0
  %v369 = vadd.f32 %v367, %v368
  %v370 = vsel %vm78, %v292, 0.0
  %v371 = vadd.f32 %v369, %v370
  %v372 = vsel %vm78, %v293, 0.0
  %v373 = vadd.f32 %v371, %v372
  %v374 = vsel %vm78, %v294, 0.0
  %v375 = vadd.f32 %v373, %v374
  %v376 = vsel %vm78, %v295, 0.0
  %v377 = vadd.f32 %v375, %v376
  %v378 = vsel %vm78, %v296, 0.0
  %v379 = vadd.f32 %v377, %v378
  %v380 = vsel %vm78, %v297, 0.0
  %v381 = vadd.f32 %v379, %v380
  %v382 = vsel %vm78, %v298, 0.0
  %v383 = vadd.f32 %v381, %v382
  %v384 = vsel %vm78, %v299, 0.0
  %v385 = vadd.f32 %v383, %v384
  %v386 = vsel %vm78, %v300, 0.0
  %v387 = vadd.f32 %v385, %v386
  %v388 = vsel %vm78, %v301, 0.0
  %v389 = vadd.f32 %v387, %v388
  %v390 = vsel %vm78, %v302, 0.0
  %v391 = vadd.f32 %v389, %v390
  %v392 = vsel %vm78, %v303, 0.0
  %v393 = vadd.f32 %v391, %v392
  %v394 = vsel %vm78, %v304, 0.0
  %v395 = vadd.f32 %v393, %v394
  %v396 = vsel %vm78, %v305, 0.0
  %v397 = vadd.f32 %v395, %v396
  %v398 = vsel %vm78, %v306, 0.0
  %v399 = vadd.f32 %v397, %v398
  %v400 = vsel %vm78, %v307, 0.0
  %v401 = vadd.f32 %v399, %v400
  %v402 = vsel %vm78, %v308, 0.0
  %v403 = vadd.f32 %v401, %v402
  %v404 = vsel %vm78, %v309, 0.0
  %v405 = vadd.f32 %v403, %v404
  %v406 = vsel %vm78, %v310, 0.0
  %v407 = vadd.f32 %v405, %v406
  %v408 = vsel %vm78, %v311, 0.0
  %v409 = vadd.f32 %v407, %v408
  %v410 = vsel %vm78, %v312, 0.0
  %v411 = vadd.f32 %v409, %v410
  %v412 = vsel %vm78, %v313, 0.0
  %v413 = vadd.f32 %v411, %v412
  %v414 = vsel %vm78, %v314, 0.0
  %v415 = vadd.f32 %v413, %v414
  %v416 = vsel %vm78, %v315, 0.0
  %v417 = vadd.f32 %v415, %v416
  %v418 = vsel %vm78, %v316, 0.0
  %v419 = vadd.f32 %v417, %v418
  %v420 = vsel %vm78, %v317, 0.0
  %v421 = vadd.f32 %v419, %v420
  %v422 = vsel %vm78, %v318, 0.0
  %v423 = vadd.f32 %v421, %v422
  %v424 = vsel %vm78, %v319, 0.0
  %v425 = vadd.f32 %v423, %v424
  %v426 = vsel %vm78, %v320, 0.0
  %v427 = vadd.f32 %v425, %v426
  %v428 = vsel %vm78, %v321, 0.0
  %v429 = vadd.f32 %v427, %v428
  %v430 = vsel %vm78, %v322, 0.0
  %v431 = vadd.f32 %v429, %v430
  %v432 = vsel %vm78, %v323, 0.0
  %v433 = vadd.f32 %v431, %v432
  %v434 = vsel %vm78, %v324, 0.0
  %v435 = vadd.f32 %v433, %v434
  %v436 = vsel %vm78, %v325, 0.0
  %v437 = vadd.f32 %v435, %v436
  %v438 = vsel %vm78, %v326, 0.0
  %v439 = vadd.f32 %v437, %v438
  %v440 = vsel %vm78, %v327, 0.0
  %v441 = vadd.f32 %v439, %v440
  %v442 = vsel %vm78, %v328, 0.0
  %v443 = vadd.f32 %v441, %v442
  %v444 = vsel %vm78, %v329, 0.0
  %v445 = vadd.f32 %v443, %v444
  %v446 = vsel %vm78, %v330, 0.0
  %v447 = vadd.f32 %v445, %v446
  %v448 = vsel %vm78, %v331, 0.0
  %v449 = vadd.f32 %v447, %v448
  %v450 = vsel %vm78, %v332, 0.0
  %v451 = vadd.f32 %v449, %v450
  %v452 = vsel %vm78, %v333, 0.0
  %v453 = vadd.f32 %v451, %v452
  %v454 = vsel %vm78, %v334, 0.0
  %v455 = vadd.f32 %v453, %v454
  %v456 = vsel %vm78, %v335, 0.0
  %v457 = vadd.f32 %v455, %v456
  %v458 = vsel %vm78, %v336, 0.0
  %v459 = vadd.f32 %v457, %v458
  %v460 = vsel %vm78, %v337, 0.0
  %v461 = vadd.f32 %v459, %v460
  %v462 = vsel %vm78, %v338, 0.0
  %v463 = vadd.f32 %v461, %v462
  %v464 = vsel %vm78, %v339, 0.0
  %v465 = vadd.f32 %v463, %v464
  %v466 = vsel %vm78, %v340, 0.0
  %v467 = vadd.f32 %v465, %v466
  %v468 = vrot.slane %v467, 4
  %v469 = vadd.f32 %v467, %v468
  %v470 = vrot.slane %v469, 2
  %v471 = vadd.f32 %v469, %v470
  %v472 = vrot.slane %v471, 1
  %v473 = vadd.f32 %v471, %v472
  %v474 = vmul.f32 %v473, 0.001953125
  %v475 = vadd.f32 %v474, 1e-05
  %v476 = vrsqrt.pop %v475
  %v477 = vld [vmem:[%s1] sm:$0x1]
  %v478 = vmul.f32 %v476, %v477
  %v479 = vlaneseq
  %v480 = vshrl.u32 %v479, 7
  %v481 = vsub.s32 0, %v480
  %v482 = vrot.slane %v478, %v481
  %v483 = vmul.f32 %v213, %v482
  %v484 = vmul.f32 %v214, %v482
  %v485 = vmul.f32 %v215, %v482
  %v486 = vmul.f32 %v216, %v482
  %v487 = vmul.f32 %v217, %v482
  %v488 = vmul.f32 %v218, %v482
  %v489 = vmul.f32 %v219, %v482
  %v490 = vmul.f32 %v220, %v482
  %v491 = vmul.f32 %v221, %v482
  %v492 = vmul.f32 %v222, %v482
  %v493 = vmul.f32 %v223, %v482
  %v494 = vmul.f32 %v224, %v482
  %v495 = vmul.f32 %v225, %v482
  %v496 = vmul.f32 %v226, %v482
  %v497 = vmul.f32 %v227, %v482
  %v498 = vmul.f32 %v228, %v482
  %v499 = vmul.f32 %v229, %v482
  %v500 = vmul.f32 %v230, %v482
  %v501 = vmul.f32 %v231, %v482
  %v502 = vmul.f32 %v232, %v482
  %v503 = vmul.f32 %v233, %v482
  %v504 = vmul.f32 %v234, %v482
  %v505 = vmul.f32 %v235, %v482
  %v506 = vmul.f32 %v236, %v482
  %v507 = vmul.f32 %v237, %v482
  %v508 = vmul.f32 %v238, %v482
  %v509 = vmul.f32 %v239, %v482
  %v510 = vmul.f32 %v240, %v482
  %v511 = vmul.f32 %v241, %v482
  %v512 = vmul.f32 %v242, %v482
  %v513 = vmul.f32 %v243, %v482
  %v514 = vmul.f32 %v244, %v482
  %v515 = vmul.f32 %v245, %v482
  %v516 = vmul.f32 %v246, %v482
  %v517 = vmul.f32 %v247, %v482
  %v518 = vmul.f32 %v248, %v482
  %v519 = vmul.f32 %v249, %v482
  %v520 = vmul.f32 %v250, %v482
  %v521 = vmul.f32 %v251, %v482
  %v522 = vmul.f32 %v252, %v482
  %v523 = vmul.f32 %v253, %v482
  %v524 = vmul.f32 %v254, %v482
  %v525 = vmul.f32 %v255, %v482
  %v526 = vmul.f32 %v256, %v482
  %v527 = vmul.f32 %v257, %v482
  %v528 = vmul.f32 %v258, %v482
  %v529 = vmul.f32 %v259, %v482
  %v530 = vmul.f32 %v260, %v482
  %v531 = vmul.f32 %v261, %v482
  %v532 = vmul.f32 %v262, %v482
  %v533 = vmul.f32 %v263, %v482
  %v534 = vmul.f32 %v264, %v482
  %v535 = vmul.f32 %v265, %v482
  %v536 = vmul.f32 %v266, %v482
  %v537 = vmul.f32 %v267, %v482
  %v538 = vmul.f32 %v268, %v482
  %v539 = vmul.f32 %v269, %v482
  %v540 = vmul.f32 %v270, %v482
  %v541 = vmul.f32 %v271, %v482
  %v542 = vmul.f32 %v272, %v482
  %v543 = vmul.f32 %v273, %v482
  %v544 = vmul.f32 %v274, %v482
  %v545 = vmul.f32 %v275, %v482
  %v546 = vmul.f32 %v276, %v482
  %v547 = vld [vmem:[%s2] sm:$0x1]
  %v549 = vlaneseq
  %v550 = vshrl.u32 %v549, 7
  %v551 = vsub.s32 0, %v550
  %v552 = vrot.slane %v547, %v551
  %v554 = vadd.f32 %v483, %v552
  %v555 = vadd.f32 %v484, %v552
  %v556 = vadd.f32 %v485, %v552
  %v557 = vadd.f32 %v486, %v552
  %v558 = vadd.f32 %v487, %v552
  %v559 = vadd.f32 %v488, %v552
  %v560 = vadd.f32 %v489, %v552
  %v561 = vadd.f32 %v490, %v552
  %v562 = vadd.f32 %v491, %v552
  %v563 = vadd.f32 %v492, %v552
  %v564 = vadd.f32 %v493, %v552
  %v565 = vadd.f32 %v494, %v552
  %v566 = vadd.f32 %v495, %v552
  %v567 = vadd.f32 %v496, %v552
  %v568 = vadd.f32 %v497, %v552
  %v569 = vadd.f32 %v498, %v552
  %v570 = vadd.f32 %v499, %v552
  %v571 = vadd.f32 %v500, %v552
  %v572 = vadd.f32 %v501, %v552
  %v573 = vadd.f32 %v502, %v552
  %v574 = vadd.f32 %v503, %v552
  %v575 = vadd.f32 %v504, %v552
  %v576 = vadd.f32 %v505, %v552
  %v577 = vadd.f32 %v506, %v552
  %v578 = vadd.f32 %v507, %v552
  %v579 = vadd.f32 %v508, %v552
  %v580 = vadd.f32 %v509, %v552
  %v581 = vadd.f32 %v510, %v552
  %v582 = vadd.f32 %v511, %v552
  %v583 = vadd.f32 %v512, %v552
  %v584 = vadd.f32 %v513, %v552
  %v585 = vadd.f32 %v514, %v552
  %v586 = vadd.f32 %v515, %v552
  %v587 = vadd.f32 %v516, %v552
  %v588 = vadd.f32 %v517, %v552
  %v589 = vadd.f32 %v518, %v552
  %v590 = vadd.f32 %v519, %v552
  %v591 = vadd.f32 %v520, %v552
  %v592 = vadd.f32 %v521, %v552
  %v593 = vadd.f32 %v522, %v552
  %v594 = vadd.f32 %v523, %v552
  %v595 = vadd.f32 %v524, %v552
  %v596 = vadd.f32 %v525, %v552
  %v597 = vadd.f32 %v526, %v552
  %v598 = vadd.f32 %v527, %v552
  %v599 = vadd.f32 %v528, %v552
  %v600 = vadd.f32 %v529, %v552
  %v601 = vadd.f32 %v530, %v552
  %v602 = vadd.f32 %v531, %v552
  %v603 = vadd.f32 %v532, %v552
  %v604 = vadd.f32 %v533, %v552
  %v605 = vadd.f32 %v534, %v552
  %v606 = vadd.f32 %v535, %v552
  %v607 = vadd.f32 %v536, %v552
  %v608 = vadd.f32 %v537, %v552
  %v609 = vadd.f32 %v538, %v552
  %v610 = vadd.f32 %v539, %v552
  %v611 = vadd.f32 %v540, %v552
  %v612 = vadd.f32 %v541, %v552
  %v613 = vadd.f32 %v542, %v552
  %v614 = vadd.f32 %v543, %v552
  %v615 = vadd.f32 %v544, %v552
  %v616 = vadd.f32 %v545, %v552
  %v617 = vadd.f32 %v546, %v552
  %v618 = vmax.f32 %v554, 0.0
  %v619 = vmax.f32 %v555, 0.0
  %v620 = vmax.f32 %v556, 0.0
  %v621 = vmax.f32 %v557, 0.0
  %v622 = vmax.f32 %v558, 0.0
  %v623 = vmax.f32 %v559, 0.0
  %v624 = vmax.f32 %v560, 0.0
  %v625 = vmax.f32 %v561, 0.0
  %v626 = vmax.f32 %v562, 0.0
  %v627 = vmax.f32 %v563, 0.0
  %v628 = vmax.f32 %v564, 0.0
  %v629 = vmax.f32 %v565, 0.0
  %v630 = vmax.f32 %v566, 0.0
  %v631 = vmax.f32 %v567, 0.0
  %v632 = vmax.f32 %v568, 0.0
  %v633 = vmax.f32 %v569, 0.0
  %v634 = vmax.f32 %v570, 0.0
  %v635 = vmax.f32 %v571, 0.0
  %v636 = vmax.f32 %v572, 0.0
  %v637 = vmax.f32 %v573, 0.0
  %v638 = vmax.f32 %v574, 0.0
  %v639 = vmax.f32 %v575, 0.0
  %v640 = vmax.f32 %v576, 0.0
  %v641 = vmax.f32 %v577, 0.0
  %v642 = vmax.f32 %v578, 0.0
  %v643 = vmax.f32 %v579, 0.0
  %v644 = vmax.f32 %v580, 0.0
  %v645 = vmax.f32 %v581, 0.0
  %v646 = vmax.f32 %v582, 0.0
  %v647 = vmax.f32 %v583, 0.0
  %v648 = vmax.f32 %v584, 0.0
  %v649 = vmax.f32 %v585, 0.0
  %v650 = vmax.f32 %v586, 0.0
  %v651 = vmax.f32 %v587, 0.0
  %v652 = vmax.f32 %v588, 0.0
  %v653 = vmax.f32 %v589, 0.0
  %v654 = vmax.f32 %v590, 0.0
  %v655 = vmax.f32 %v591, 0.0
  %v656 = vmax.f32 %v592, 0.0
  %v657 = vmax.f32 %v593, 0.0
  %v658 = vmax.f32 %v594, 0.0
  %v659 = vmax.f32 %v595, 0.0
  %v660 = vmax.f32 %v596, 0.0
  %v661 = vmax.f32 %v597, 0.0
  %v662 = vmax.f32 %v598, 0.0
  %v663 = vmax.f32 %v599, 0.0
  %v664 = vmax.f32 %v600, 0.0
  %v665 = vmax.f32 %v601, 0.0
  %v666 = vmax.f32 %v602, 0.0
  %v667 = vmax.f32 %v603, 0.0
  %v668 = vmax.f32 %v604, 0.0
  %v669 = vmax.f32 %v605, 0.0
  %v670 = vmax.f32 %v606, 0.0
  %v671 = vmax.f32 %v607, 0.0
  %v672 = vmax.f32 %v608, 0.0
  %v673 = vmax.f32 %v609, 0.0
  %v674 = vmax.f32 %v610, 0.0
  %v675 = vmax.f32 %v611, 0.0
  %v676 = vmax.f32 %v612, 0.0
  %v677 = vmax.f32 %v613, 0.0
  %v678 = vmax.f32 %v614, 0.0
  %v679 = vmax.f32 %v615, 0.0
  %v680 = vmax.f32 %v616, 0.0
  %v681 = vmax.f32 %v617, 0.0
  %v682 = vpack.c.bf16 %v619, %v618
  %v683 = vpack.c.bf16 %v621, %v620
  %v684 = vpack.c.bf16 %v623, %v622
  %v685 = vpack.c.bf16 %v625, %v624
  %v686 = vpack.c.bf16 %v627, %v626
  %v687 = vpack.c.bf16 %v629, %v628
  %v688 = vpack.c.bf16 %v631, %v630
  %v689 = vpack.c.bf16 %v633, %v632
  %v690 = vpack.c.bf16 %v635, %v634
  %v691 = vpack.c.bf16 %v637, %v636
  %v692 = vpack.c.bf16 %v639, %v638
  %v693 = vpack.c.bf16 %v641, %v640
  %v694 = vpack.c.bf16 %v643, %v642
  %v695 = vpack.c.bf16 %v645, %v644
  %v696 = vpack.c.bf16 %v647, %v646
  %v697 = vpack.c.bf16 %v649, %v648
  %v698 = vpack.c.bf16 %v651, %v650
  %v699 = vpack.c.bf16 %v653, %v652
  %v700 = vpack.c.bf16 %v655, %v654
  %v701 = vpack.c.bf16 %v657, %v656
  %v702 = vpack.c.bf16 %v659, %v658
  %v703 = vpack.c.bf16 %v661, %v660
  %v704 = vpack.c.bf16 %v663, %v662
  %v705 = vpack.c.bf16 %v665, %v664
  %v706 = vpack.c.bf16 %v667, %v666
  %v707 = vpack.c.bf16 %v669, %v668
  %v708 = vpack.c.bf16 %v671, %v670
  %v709 = vpack.c.bf16 %v673, %v672
  %v710 = vpack.c.bf16 %v675, %v674
  %v711 = vpack.c.bf16 %v677, %v676
  %v712 = vpack.c.bf16 %v679, %v678
  %v713 = vpack.c.bf16 %v681, %v680
  %v746 = vunpack.c.l.b16 %v682
  %v747 = vunpack.c.h.b16 %v682
  %v748 = vunpack.c.l.b16 %v683
  %v749 = vunpack.c.h.b16 %v683
  %v750 = vunpack.c.l.b16 %v684
  %v751 = vunpack.c.h.b16 %v684
  %v752 = vunpack.c.l.b16 %v685
  %v753 = vunpack.c.h.b16 %v685
  %v754 = vunpack.c.l.b16 %v686
  %v755 = vunpack.c.h.b16 %v686
  %v756 = vunpack.c.l.b16 %v687
  %v757 = vunpack.c.h.b16 %v687
  %v758 = vunpack.c.l.b16 %v688
  %v759 = vunpack.c.h.b16 %v688
  %v760 = vunpack.c.l.b16 %v689
  %v761 = vunpack.c.h.b16 %v689
  %v762 = vunpack.c.l.b16 %v690
  %v763 = vunpack.c.h.b16 %v690
  %v764 = vunpack.c.l.b16 %v691
  %v765 = vunpack.c.h.b16 %v691
  %v766 = vunpack.c.l.b16 %v692
  %v767 = vunpack.c.h.b16 %v692
  %v768 = vunpack.c.l.b16 %v693
  %v769 = vunpack.c.h.b16 %v693
  %v770 = vunpack.c.l.b16 %v694
  %v771 = vunpack.c.h.b16 %v694
  %v772 = vunpack.c.l.b16 %v695
  %v773 = vunpack.c.h.b16 %v695
  %v774 = vunpack.c.l.b16 %v696
  %v775 = vunpack.c.h.b16 %v696
  %v776 = vunpack.c.l.b16 %v697
  %v777 = vunpack.c.h.b16 %v697
  %v778 = vunpack.c.l.b16 %v698
  %v779 = vunpack.c.h.b16 %v698
  %v780 = vunpack.c.l.b16 %v699
  %v781 = vunpack.c.h.b16 %v699
  %v782 = vunpack.c.l.b16 %v700
  %v783 = vunpack.c.h.b16 %v700
  %v784 = vunpack.c.l.b16 %v701
  %v785 = vunpack.c.h.b16 %v701
  %v786 = vunpack.c.l.b16 %v702
  %v787 = vunpack.c.h.b16 %v702
  %v788 = vunpack.c.l.b16 %v703
  %v789 = vunpack.c.h.b16 %v703
  %v790 = vunpack.c.l.b16 %v704
  %v791 = vunpack.c.h.b16 %v704
  %v792 = vunpack.c.l.b16 %v705
  %v793 = vunpack.c.h.b16 %v705
  %v794 = vunpack.c.l.b16 %v706
  %v795 = vunpack.c.h.b16 %v706
  %v796 = vunpack.c.l.b16 %v707
  %v797 = vunpack.c.h.b16 %v707
  %v798 = vunpack.c.l.b16 %v708
  %v799 = vunpack.c.h.b16 %v708
  %v800 = vunpack.c.l.b16 %v709
  %v801 = vunpack.c.h.b16 %v709
  %v802 = vunpack.c.l.b16 %v710
  %v803 = vunpack.c.h.b16 %v710
  %v804 = vunpack.c.l.b16 %v711
  %v805 = vunpack.c.h.b16 %v711
  %v806 = vunpack.c.l.b16 %v712
  %v807 = vunpack.c.h.b16 %v712
  %v808 = vunpack.c.l.b16 %v713
  %v809 = vunpack.c.h.b16 %v713
  %v810 = vpack.c.b16 %v746, %v746
  %v811 = vpack.c.b16 %v747, %v747
  %v812 = vpack.c.b16 %v748, %v748
  %v813 = vpack.c.b16 %v749, %v749
  %v814 = vpack.c.b16 %v750, %v750
  %v815 = vpack.c.b16 %v751, %v751
  %v816 = vpack.c.b16 %v752, %v752
  %v817 = vpack.c.b16 %v753, %v753
  %v818 = vpack.c.b16 %v754, %v754
  %v819 = vpack.c.b16 %v755, %v755
  %v820 = vpack.c.b16 %v756, %v756
  %v821 = vpack.c.b16 %v757, %v757
  %v822 = vpack.c.b16 %v758, %v758
  %v823 = vpack.c.b16 %v759, %v759
  %v824 = vpack.c.b16 %v760, %v760
  %v825 = vpack.c.b16 %v761, %v761
  %v826 = vpack.c.b16 %v762, %v762
  %v827 = vpack.c.b16 %v763, %v763
  %v828 = vpack.c.b16 %v764, %v764
  %v829 = vpack.c.b16 %v765, %v765
  %v830 = vpack.c.b16 %v766, %v766
  %v831 = vpack.c.b16 %v767, %v767
  %v832 = vpack.c.b16 %v768, %v768
  %v833 = vpack.c.b16 %v769, %v769
  %v834 = vpack.c.b16 %v770, %v770
  %v835 = vpack.c.b16 %v771, %v771
  %v836 = vpack.c.b16 %v772, %v772
  %v837 = vpack.c.b16 %v773, %v773
  %v838 = vpack.c.b16 %v774, %v774
  %v839 = vpack.c.b16 %v775, %v775
  %v840 = vpack.c.b16 %v776, %v776
  %v841 = vpack.c.b16 %v777, %v777
  %v842 = vpack.c.b16 %v778, %v778
  %v843 = vpack.c.b16 %v779, %v779
  %v844 = vpack.c.b16 %v780, %v780
  %v845 = vpack.c.b16 %v781, %v781
  %v846 = vpack.c.b16 %v782, %v782
  %v847 = vpack.c.b16 %v783, %v783
  %v848 = vpack.c.b16 %v784, %v784
  %v849 = vpack.c.b16 %v785, %v785
  %v850 = vpack.c.b16 %v786, %v786
  %v851 = vpack.c.b16 %v787, %v787
  %v852 = vpack.c.b16 %v788, %v788
  %v853 = vpack.c.b16 %v789, %v789
  %v854 = vpack.c.b16 %v790, %v790
  %v855 = vpack.c.b16 %v791, %v791
  %v856 = vpack.c.b16 %v792, %v792
  %v857 = vpack.c.b16 %v793, %v793
  %v858 = vpack.c.b16 %v794, %v794
  %v859 = vpack.c.b16 %v795, %v795
  %v860 = vpack.c.b16 %v796, %v796
  %v861 = vpack.c.b16 %v797, %v797
  %v862 = vpack.c.b16 %v798, %v798
  %v863 = vpack.c.b16 %v799, %v799
  %v864 = vpack.c.b16 %v800, %v800
  %v865 = vpack.c.b16 %v801, %v801
  %v866 = vpack.c.b16 %v802, %v802
  %v867 = vpack.c.b16 %v803, %v803
  %v868 = vpack.c.b16 %v804, %v804
  %v869 = vpack.c.b16 %v805, %v805
  %v870 = vpack.c.b16 %v806, %v806
  %v871 = vpack.c.b16 %v807, %v807
  %v872 = vpack.c.b16 %v808, %v808
  %v873 = vpack.c.b16 %v809, %v809
  %vm938 = vcmask 257024
  %939 = vst.msk [vmem:[%s3] sm:$0xf] %vm938, %v810
  %940 = vst.msk [vmem:[%s3 + $0x4] sm:$0xf] %vm938, %v811
  %941 = vst.msk [vmem:[%s3 + $0x8] sm:$0xf] %vm938, %v812
  %942 = vst.msk [vmem:[%s3 + $0xc] sm:$0xf] %vm938, %v813
  %943 = vst.msk [vmem:[%s3 + $0x10] sm:$0xf] %vm938, %v814
  %944 = vst.msk [vmem:[%s3 + $0x14] sm:$0xf] %vm938, %v815
  %945 = vst.msk [vmem:[%s3 + $0x18] sm:$0xf] %vm938, %v816
  %946 = vst.msk [vmem:[%s3 + $0x1c] sm:$0xf] %vm938, %v817
  %947 = vst.msk [vmem:[%s3 + $0x20] sm:$0xf] %vm938, %v818
  %948 = vst.msk [vmem:[%s3 + $0x24] sm:$0xf] %vm938, %v819
  %949 = vst.msk [vmem:[%s3 + $0x28] sm:$0xf] %vm938, %v820
  %950 = vst.msk [vmem:[%s3 + $0x2c] sm:$0xf] %vm938, %v821
  %951 = vst.msk [vmem:[%s3 + $0x30] sm:$0xf] %vm938, %v822
  %952 = vst.msk [vmem:[%s3 + $0x34] sm:$0xf] %vm938, %v823
  %953 = vst.msk [vmem:[%s3 + $0x38] sm:$0xf] %vm938, %v824
  %954 = vst.msk [vmem:[%s3 + $0x3c] sm:$0xf] %vm938, %v825
  %955 = vst.msk [vmem:[%s3 + $0x40] sm:$0xf] %vm938, %v826
  %956 = vst.msk [vmem:[%s3 + $0x44] sm:$0xf] %vm938, %v827
  %957 = vst.msk [vmem:[%s3 + $0x48] sm:$0xf] %vm938, %v828
  %958 = vst.msk [vmem:[%s3 + $0x4c] sm:$0xf] %vm938, %v829
  %959 = vst.msk [vmem:[%s3 + $0x50] sm:$0xf] %vm938, %v830
  %960 = vst.msk [vmem:[%s3 + $0x54] sm:$0xf] %vm938, %v831
  %961 = vst.msk [vmem:[%s3 + $0x58] sm:$0xf] %vm938, %v832
  %962 = vst.msk [vmem:[%s3 + $0x5c] sm:$0xf] %vm938, %v833
  %963 = vst.msk [vmem:[%s3 + $0x60] sm:$0xf] %vm938, %v834
  %964 = vst.msk [vmem:[%s3 + $0x64] sm:$0xf] %vm938, %v835
  %965 = vst.msk [vmem:[%s3 + $0x68] sm:$0xf] %vm938, %v836
  %966 = vst.msk [vmem:[%s3 + $0x6c] sm:$0xf] %vm938, %v837
  %967 = vst.msk [vmem:[%s3 + $0x70] sm:$0xf] %vm938, %v838
  %968 = vst.msk [vmem:[%s3 + $0x74] sm:$0xf] %vm938, %v839
  %969 = vst.msk [vmem:[%s3 + $0x78] sm:$0xf] %vm938, %v840
  %970 = vst.msk [vmem:[%s3 + $0x7c] sm:$0xf] %vm938, %v841
  %971 = vst.msk [vmem:[%s3 + $0x80] sm:$0xf] %vm938, %v842
  %972 = vst.msk [vmem:[%s3 + $0x84] sm:$0xf] %vm938, %v843
  %973 = vst.msk [vmem:[%s3 + $0x88] sm:$0xf] %vm938, %v844
  %974 = vst.msk [vmem:[%s3 + $0x8c] sm:$0xf] %vm938, %v845
  %975 = vst.msk [vmem:[%s3 + $0x90] sm:$0xf] %vm938, %v846
  %976 = vst.msk [vmem:[%s3 + $0x94] sm:$0xf] %vm938, %v847
  %977 = vst.msk [vmem:[%s3 + $0x98] sm:$0xf] %vm938, %v848
  %978 = vst.msk [vmem:[%s3 + $0x9c] sm:$0xf] %vm938, %v849
  %979 = vst.msk [vmem:[%s3 + $0xa0] sm:$0xf] %vm938, %v850
  %980 = vst.msk [vmem:[%s3 + $0xa4] sm:$0xf] %vm938, %v851
  %981 = vst.msk [vmem:[%s3 + $0xa8] sm:$0xf] %vm938, %v852
  %982 = vst.msk [vmem:[%s3 + $0xac] sm:$0xf] %vm938, %v853
  %983 = vst.msk [vmem:[%s3 + $0xb0] sm:$0xf] %vm938, %v854
  %984 = vst.msk [vmem:[%s3 + $0xb4] sm:$0xf] %vm938, %v855
  %985 = vst.msk [vmem:[%s3 + $0xb8] sm:$0xf] %vm938, %v856
  %986 = vst.msk [vmem:[%s3 + $0xbc] sm:$0xf] %vm938, %v857
  %987 = vst.msk [vmem:[%s3 + $0xc0] sm:$0xf] %vm938, %v858
  %988 = vst.msk [vmem:[%s3 + $0xc4] sm:$0xf] %vm938, %v859
  %989 = vst.msk [vmem:[%s3 + $0xc8] sm:$0xf] %vm938, %v860
  %990 = vst.msk [vmem:[%s3 + $0xcc] sm:$0xf] %vm938, %v861
  %991 = vst.msk [vmem:[%s3 + $0xd0] sm:$0xf] %vm938, %v862
  %992 = vst.msk [vmem:[%s3 + $0xd4] sm:$0xf] %vm938, %v863
  %993 = vst.msk [vmem:[%s3 + $0xd8] sm:$0xf] %vm938, %v864
  %994 = vst.msk [vmem:[%s3 + $0xdc] sm:$0xf] %vm938, %v865
  %995 = vst.msk [vmem:[%s3 + $0xe0] sm:$0xf] %vm938, %v866
  %996 = vst.msk [vmem:[%s3 + $0xe4] sm:$0xf] %vm938, %v867
  %997 = vst.msk [vmem:[%s3 + $0xe8] sm:$0xf] %vm938, %v868
  %998 = vst.msk [vmem:[%s3 + $0xec] sm:$0xf] %vm938, %v869
  %999 = vst.msk [vmem:[%s3 + $0xf0] sm:$0xf] %vm938, %v870
  %1000 = vst.msk [vmem:[%s3 + $0xf4] sm:$0xf] %vm938, %v871
  %1001 = vst.msk [vmem:[%s3 + $0xf8] sm:$0xf] %vm938, %v872
  %1002 = vst.msk [vmem:[%s3 + $0xfc] sm:$0xf] %vm938, %v873
  // Predicated region
  $region14: #{generator_forward.15} parent=0 // pred_check
    _
  $region15: #{generator_forward.15} parent=0 // pred_check_branch
    %1004 = sbr.rel (0) target = $region17
  $region16: #{generator_forward.15} parent=0 // pred_region
    _
  $region17: #{generator_forward.15} parent=0 // pred_fallthru
    _
  // Predicated region
  $region18: #{generator_forward.15} parent=0 // pred_check
    _
  $region19: #{generator_forward.15} parent=0 // pred_check_branch
    %1006 = sbr.rel (0) target = $region21
  $region20: #{generator_forward.15} parent=0 // pred_region
    _
  $region21: #{generator_forward.15} parent=0 // pred_fallthru
    _

// kernel: generator_forward.16
$region0: #{generator_forward.16}
  #allocation0 [shape = 'u32[]', space=smem, size = 0x4, offset = 0x4, fixed_abs, tag = 'smem constant byte address 0x4 - core index']
  #allocation1 [shape = 'u32[144,128]{1,0:T(1,128)}', space=vmem, size = 0x12000, scoped, tag = 'internal scratch']
  %s0 = inlined_call_operand.vmem [shape: bf16[512,32], index: 0, kind: input, shape index: {}]
  %s1 = inlined_call_operand.vmem [shape: bf16[32,256], index: 1, kind: input, shape index: {}]
  %s2 = inlined_call_operand.vmem [shape: f32[512,256], index: 2, kind: output, shape index: {}]
  %s3 = sld [smem:[#allocation0]]
  $region41: #{generator_forward.16} parent=0
    _
  %s5 = ssub.s32 1, %s3
  %s6 = scalar_select 0, %s5, %s3
  loop: start=0, step=1, limit=4
  $region2: #{generator_forward.16} parent=0 // loop_pre_header
    _
  $region3: #{generator_forward.16} parent=0 // loop_header
    %s8 = sphi 0, %s12
    %p9 = scmp.ge.s32.totalorder %s8, 4
    %s18 = sphi 0, %s20
    %s21 = sphi 0, %s18
    %s22 = sphi 0, %s21
    %s38 = sphi 0, %s22
    %s42 = sphi 0, %s42
    %s44 = sphi 0, %s42
    %s45 = sphi 0, %s44
    %s59 = sphi 0, %s45
    %s65 = sphi 0, %s67
    %s68 = sphi 0, %s65
    %s69 = sphi 0, %s68
    %s85 = sphi 0, %s69
  $region4: #{generator_forward.16} parent=0 // loop_header_branch
    %11 = sbr.rel (%p9) target = $region8
  $region5: #{generator_forward.16} parent=0 // loop_body
    %s13 = ssub.s32 %s8, 1
    %s14 = ssub.s32 %s8, 2
    %s15 = sadd.s32 %s8, 1
    %s16 = ssub.s32 %s8, %s15
    %p17 = scmp.eq.s32.totalorder %s16, 0
    %s19 = sadd.s32 %s18, 1
    %s20 = scalar_select %p17, %s18, %s19
    %p23 = pneg %p17
    %p24 = scmp.eq.s32.totalorder %s8, 1
    %p25 = por %p23, %p24
    %p26 = scmp.ne.s32.totalorder %s18, %s21
    %p27 = scmp.eq.s32.totalorder %s8, 0
    %p28 = por %p26, %p27
    %p29 = scmp.ne.s32.totalorder %s18, %s21
    %p30 = scmp.eq.s32.totalorder %s13, 1
    %p31 = por %p29, %p30
    %p32 = scmp.ne.s32.totalorder %s21, %s22
    %p33 = scmp.eq.s32.totalorder %s13, 0
    %p34 = por %p32, %p33
    %p35 = scmp.ne.s32.totalorder %s21, %s22
    %p36 = scmp.eq.s32.totalorder %s14, 1
    %p37 = por %p35, %p36
    %p39 = scmp.ne.s32.totalorder %s22, %s38
    %p40 = scmp.eq.s32.totalorder %s14, 0
    %p41 = por %p39, %p40
    %s43 = sadd.s32 %s42, 1
    %p46 = scmp.eq.s32.totalorder %s8, 1
    %p47 = scmp.ne.s32.totalorder %s42, %s44
    %p48 = scmp.eq.s32.totalorder %s8, 0
    %p49 = por %p47, %p48
    %p50 = scmp.ne.s32.totalorder %s42, %s44
    %p51 = scmp.eq.s32.totalorder %s13, 1
    %p52 = por %p50, %p51
    %p53 = scmp.ne.s32.totalorder %s44, %s45
    %p54 = scmp.eq.s32.totalorder %s13, 0
    %p55 = por %p53, %p54
    %p56 = scmp.ne.s32.totalorder %s44, %s45
    %p57 = scmp.eq.s32.totalorder %s14, 1
    %p58 = por %p56, %p57
    %p60 = scmp.ne.s32.totalorder %s45, %s59
    %p61 = scmp.eq.s32.totalorder %s14, 0
    %p62 = por %p60, %p61
    %s63 = ssub.s32 %s8, %s15
    %p64 = scmp.eq.s32.totalorder %s63, 0
    %s66 = sadd.s32 %s65, 1
    %s67 = scalar_select %p64, %s65, %s66
    %p70 = pneg %p64
    %p71 = scmp.eq.s32.totalorder %s8, 1
    %p72 = por %p70, %p71
    %p73 = scmp.ne.s32.totalorder %s65, %s68
    %p74 = scmp.eq.s32.totalorder %s8, 0
    %p75 = por %p73, %p74
    %p76 = scmp.ne.s32.totalorder %s65, %s68
    %p77 = scmp.eq.s32.totalorder %s13, 1
    %p78 = por %p76, %p77
    %p79 = scmp.ne.s32.totalorder %s68, %s69
    %p80 = scmp.eq.s32.totalorder %s13, 0
    %p81 = por %p79, %p80
    %p82 = scmp.ne.s32.totalorder %s68, %s69
    %p83 = scmp.eq.s32.totalorder %s14, 1
    %p84 = por %p82, %p83
    %p86 = scmp.ne.s32.totalorder %s69, %s85
    %p87 = scmp.eq.s32.totalorder %s14, 0
    %p88 = por %p86, %p87
    %p89 = scmp.le.s32.totalorder 1, %s8
    %p90 = scmp.lt.s32.totalorder %s8, 3
    %p91 = pnand %p89, %p90
    %p92 = pneg %p91
    // Predicated region
    $region9: #{generator_forward.16} parent=5 // pred_check
      _
    $region10: #{generator_forward.16} parent=5 // pred_check_branch
      %94 = sbr.rel (%p91) target = $region12
    $region11: #{generator_forward.16} parent=5 // pred_region
      %s95 = ssub.s32 %s8, 1
      // Predicated region
      $region13: #{generator_forward.16} parent=11 // pred_check
        %p96 = pneg %p55
      $region14: #{generator_forward.16} parent=11 // pred_check_branch
        %98 = sbr.rel (%p96) target = $region16
      $region15: #{generator_forward.16} parent=11 // pred_region
        _
      $region16: #{generator_forward.16} parent=11 // pred_fallthru
        _
    $region12: #{generator_forward.16} parent=5 // pred_fallthru
      _
    %p99 = scmp.lt.s32.totalorder %s8, 2
    // Predicated region
    $region17: #{generator_forward.16} parent=5 // pred_check
      %p100 = pneg %p99
    $region18: #{generator_forward.16} parent=5 // pred_check_branch
      %102 = sbr.rel (%p100) target = $region20
    $region19: #{generator_forward.16} parent=5 // pred_region
      // Predicated region
      $region21: #{generator_forward.16} parent=19 // pred_check
        %p103 = pneg %p28
      $region22: #{generator_forward.16} parent=19 // pred_check_branch
        %105 = sbr.rel (%p103) target = $region24
      $region23: #{generator_forward.16} parent=19 // pred_region
        %s106 = smul.u32 32, %s8
        %p107 = scmp.lt.s32.totalorder %s106, 63
        %s108 = scalar_select %p107, %s106, 63
        %s109 = smul.addr %s108, 4
        %s110 = scalar_lea.vmem %s0, %s109
        %s111 = smul.u32 32, %s8
      $region24: #{generator_forward.16} parent=19 // pred_fallthru
        _
    $region20: #{generator_forward.16} parent=5 // pred_fallthru
      _
    %p112 = scmp.le.s32.totalorder 1, %s8
    %p113 = scmp.lt.s32.totalorder %s8, 3
    %p114 = pnand %p112, %p113
    %p115 = pneg %p114
    // Predicated region
    $region25: #{generator_forward.16} parent=5 // pred_check
      _
    $region26: #{generator_forward.16} parent=5 // pred_check_branch
      %117 = sbr.rel (%p114) target = $region28
    $region27: #{generator_forward.16} parent=5 // pred_region
      %s118 = ssub.s32 %s8, 1
      %s119 = smul.u32 32, %s13
      %p120 = scmp.lt.s32.totalorder %s119, 63
      %s121 = scalar_select %p120, %s119, 63
      %s122 = smul.addr %s121, 4
      %s123 = scalar_lea.vmem %s0, %s122
      %p124 = pneg %p34
      %p125 = pneg %p31
      %p126 = pneg %p55
      %p127 = pneg %p52
      %p128 = pneg %p81
      %p129 = pneg %p78
      %s130 = smul.u32 32, %s13
      %p131 = scmp.lt.s32.totalorder %s130, 63
      %s132 = scalar_select %p131, %s130, 63
      %s133 = smul.addr %s132, 2
      %s134 = smul.addr %s133, 8
      %s135 = scalar_lea.vmem %s2, %s134
      %s136 = smul.u32 32, %s13
      %p137 = scmp.lt.s32.totalorder %s136, 63
      %s138 = scalar_select %p137, %s136, 63
      %s139 = smul.addr %s138, 4
      %s140 = scalar_lea.vmem %s0, %s139
      %s141 = smul.u32 32, %s13
      %s142 = smul.u32 32, %s13
      %p143 = scmp.lt.s32.totalorder %s142, 63
      %s144 = scalar_select %p143, %s142, 63
      %s145 = smul.addr %s144, 2
      %s146 = smul.addr %s145, 8
      %s147 = scalar_lea.vmem %s2, %s146
      %s148 = smul.u32 32, %s13
      %v150 = vld [vmem:[%s140] sm:$0xf]
      %v151 = vld [vmem:[%s140 + $0x4] sm:$0xf]
      %v152 = vld [vmem:[%s140 + $0x8] sm:$0xf]
      %v153 = vld [vmem:[%s140 + $0xc] sm:$0xf]
      %v154 = vld [vmem:[%s140 + $0x10] sm:$0xf]
      %v155 = vld [vmem:[%s140 + $0x14] sm:$0xf]
      %v156 = vld [vmem:[%s140 + $0x18] sm:$0xf]
      %v157 = vld [vmem:[%s140 + $0x1c] sm:$0xf]
      %v158 = vld [vmem:[%s140 + $0x20] sm:$0xf]
      %v159 = vld [vmem:[%s140 + $0x24] sm:$0xf]
      %v160 = vld [vmem:[%s140 + $0x28] sm:$0xf]
      %v161 = vld [vmem:[%s140 + $0x2c] sm:$0xf]
      %v162 = vld [vmem:[%s140 + $0x30] sm:$0xf]
      %v163 = vld [vmem:[%s140 + $0x34] sm:$0xf]
      %v164 = vld [vmem:[%s140 + $0x38] sm:$0xf]
      %v165 = vld [vmem:[%s140 + $0x3c] sm:$0xf]
      %v166 = vld [vmem:[%s140 + $0x40] sm:$0xf]
      %v167 = vld [vmem:[%s140 + $0x44] sm:$0xf]
      %v168 = vld [vmem:[%s140 + $0x48] sm:$0xf]
      %v169 = vld [vmem:[%s140 + $0x4c] sm:$0xf]
      %v170 = vld [vmem:[%s140 + $0x50] sm:$0xf]
      %v171 = vld [vmem:[%s140 + $0x54] sm:$0xf]
      %v172 = vld [vmem:[%s140 + $0x58] sm:$0xf]
      %v173 = vld [vmem:[%s140 + $0x5c] sm:$0xf]
      %v174 = vld [vmem:[%s140 + $0x60] sm:$0xf]
      %v175 = vld [vmem:[%s140 + $0x64] sm:$0xf]
      %v176 = vld [vmem:[%s140 + $0x68] sm:$0xf]
      %v177 = vld [vmem:[%s140 + $0x6c] sm:$0xf]
      %v178 = vld [vmem:[%s140 + $0x70] sm:$0xf]
      %v179 = vld [vmem:[%s140 + $0x74] sm:$0xf]
      %v180 = vld [vmem:[%s140 + $0x78] sm:$0xf]
      %v181 = vld [vmem:[%s140 + $0x7c] sm:$0xf]
      %v182 = vld [vmem:[%s1] sm:$0xff]
      %v183 = vld [vmem:[%s1 + $0x8] sm:$0xff]
      %v184 = vld [vmem:[%s1 + $0x10] sm:$0xff]
      %v185 = vld [vmem:[%s1 + $0x18] sm:$0xff]
      %v218 = vunpack.c.l.b16 %v150
      %v219 = vunpack.c.l.b16 %v151
      %v220 = vunpack.c.l.b16 %v152
      %v221 = vunpack.c.l.b16 %v153
      %v222 = vunpack.c.l.b16 %v154
      %v223 = vunpack.c.l.b16 %v155
      %v224 = vunpack.c.l.b16 %v156
      %v225 = vunpack.c.l.b16 %v157
      %v226 = vunpack.c.l.b16 %v158
      %v227 = vunpack.c.l.b16 %v159
      %v228 = vunpack.c.l.b16 %v160
      %v229 = vunpack.c.l.b16 %v161
      %v230 = vunpack.c.l.b16 %v162
      %v231 = vunpack.c.l.b16 %v163
      %v232 = vunpack.c.l.b16 %v164
      %v233 = vunpack.c.l.b16 %v165
      %v234 = vunpack.c.l.b16 %v166
      %v235 = vunpack.c.l.b16 %v167
      %v236 = vunpack.c.l.b16 %v168
      %v237 = vunpack.c.l.b16 %v169
      %v238 = vunpack.c.l.b16 %v170
      %v239 = vunpack.c.l.b16 %v171
      %v240 = vunpack.c.l.b16 %v172
      %v241 = vunpack.c.l.b16 %v173
      %v242 = vunpack.c.l.b16 %v174
      %v243 = vunpack.c.l.b16 %v175
      %v244 = vunpack.c.l.b16 %v176
      %v245 = vunpack.c.l.b16 %v177
      %v246 = vunpack.c.l.b16 %v178
      %v247 = vunpack.c.l.b16 %v179
      %v248 = vunpack.c.l.b16 %v180
      %v249 = vunpack.c.l.b16 %v181
      %v250 = vpack.c.b16 %v219, %v218
      %v251 = vpack.c.b16 %v221, %v220
      %v252 = vpack.c.b16 %v223, %v222
      %v253 = vpack.c.b16 %v225, %v224
      %v254 = vpack.c.b16 %v227, %v226
      %v255 = vpack.c.b16 %v229, %v228
      %v256 = vpack.c.b16 %v231, %v230
      %v257 = vpack.c.b16 %v233, %v232
      %v258 = vpack.c.b16 %v235, %v234
      %v259 = vpack.c.b16 %v237, %v236
      %v260 = vpack.c.b16 %v239, %v238
      %v261 = vpack.c.b16 %v241, %v240
      %v262 = vpack.c.b16 %v243, %v242
      %v263 = vpack.c.b16 %v245, %v244
      %v264 = vpack.c.b16 %v247, %v246
      %v265 = vpack.c.b16 %v249, %v248
      %v270 = vunpack.c.l.b16 %v182
      %v271 = vunpack.c.h.b16 %v182
      %v272 = vunpack.c.l.b16 %v183
      %v273 = vunpack.c.h.b16 %v183
      %v274 = vunpack.c.l.b16 %v184
      %v275 = vunpack.c.h.b16 %v184
      %v276 = vunpack.c.l.b16 %v185
      %v277 = vunpack.c.h.b16 %v185
      %v278 = vpack.c.b16 %v272, %v270
      %v279 = vpack.c.b16 %v273, %v271
      %v280 = vpack.c.b16 %v276, %v274
      %v281 = vpack.c.b16 %v277, %v275
      %vm286 = vcmask 261120
      %v288 = vsel %vm286, %v250, 0
      %v291 = vsel %vm286, %v251, 0
      %v294 = vsel %vm286, %v252, 0
      %v297 = vsel %vm286, %v253, 0
      %v300 = vsel %vm286, %v254, 0
      %v303 = vsel %vm286, %v255, 0
      %v306 = vsel %vm286, %v256, 0
      %v309 = vsel %vm286, %v257, 0
      %v312 = vsel %vm286, %v258, 0
      %v315 = vsel %vm286, %v259, 0
      %v318 = vsel %vm286, %v260, 0
      %v321 = vsel %vm286, %v261, 0
      %v324 = vsel %vm286, %v262, 0
      %v327 = vsel %vm286, %v263, 0
      %v330 = vsel %vm286, %v264, 0
      %v333 = vsel %vm286, %v265, 0
      %335 = vmatprep.subr.bf16.mxu0 0
      %336 = vmatpush1.bf16.msra.mxu0 0
      %337 = vmatprep.subr.bf16.mxu0 0
      %338 = vmatpush1.bf16.msra.mxu0 0
      %339 = vmatprep.subr.bf16.mxu0 0
      %340 = vmatpush1.bf16.msra.mxu0 0
      %341 = vmatprep.subr.bf16.mxu0 0
      %342 = vmatpush1.bf16.msra.mxu0 0
      %343 = vmatprep.subr.bf16.mxu0 0
      %344 = vmatpush1.bf16.msra.mxu0 0
      %345 = vmatprep.subr.bf16.mxu0 0
      %346 = vmatpush1.bf16.msra.mxu0 0
      %347 = vmatprep.subr.bf16.mxu0 %v281
      %348 = vmatpush1.bf16.msra.mxu0 %v280
      %349 = vmatprep.subr.bf16.mxu0 %v279
      %350 = vmatpush1.bf16.msra.mxu0 %v278
      %351 = vmatprep.subr.bf16.mxu0 0
      %352 = vmatpush2.bf16.msra.mxu0 0
      %353 = vmatprep.subr.bf16.mxu0 0
      %354 = vmatpush2.bf16.msra.mxu0 0
      %355 = vmatprep.subr.bf16.mxu0 0
      %356 = vmatpush2.bf16.msra.mxu0 0
      %357 = vmatprep.subr.bf16.mxu0 0
      %358 = vmatpush2.bf16.msra.mxu0 0
      %359 = vmatprep.subr.bf16.mxu0 0
      %360 = vmatpush2.bf16.msra.mxu0 0
      %361 = vmatprep.subr.bf16.mxu0 0
      %362 = vmatpush2.bf16.msra.mxu0 0
      %363 = vmatprep.subr.bf16.mxu0 0
      %364 = vmatpush2.bf16.msra.mxu0 0
      %365 = vmatprep.subr.bf16.mxu0 0
      %366 = vmatpush2.bf16.msra.mxu0 0
      %367 = vmatprep.mubr.bf16.mxu0 0
      %368 = vmatmul.mubr.bf16.gmra.mxu0 %v288
      %v369 = vpop.f32.mrf.mxu0
      %v370 = vadd.f32 0.0, %v369
      %v371 = vpop.f32.mrf.mxu0
      %v372 = vadd.f32 0.0, %v371
      %v373 = vpop.f32.mrf.mxu0
      %v374 = vadd.f32 0.0, %v373
      %v375 = vpop.f32.mrf.mxu0
      %v376 = vadd.f32 0.0, %v375
      %377 = vmatprep.mubr.bf16.mxu0 0
      %378 = vmatmul.mubr.bf16.gmra.mxu0 %v291
      %v379 = vpop.f32.mrf.mxu0
      %v380 = vadd.f32 0.0, %v379
      %v381 = vpop.f32.mrf.mxu0
      %v382 = vadd.f32 0.0, %v381
      %v383 = vpop.f32.mrf.mxu0
      %v384 = vadd.f32 0.0, %v383
      %v385 = vpop.f32.mrf.mxu0
      %v386 = vadd.f32 0.0, %v385
      %387 = vmatprep.mubr.bf16.mxu0 0
      %388 = vmatmul.mubr.bf16.gmra.mxu0 %v294
      %v389 = vpop.f32.mrf.mxu0
      %v390 = vadd.f32 0.0, %v389
      %v391 = vpop.f32.mrf.mxu0
      %v392 = vadd.f32 0.0, %v391
      %v393 = vpop.f32.mrf.mxu0
      %v394 = vadd.f32 0.0, %v393
      %v395 = vpop.f32.mrf.mxu0
      %v396 = vadd.f32 0.0, %v395
      %397 = vmatprep.mubr.bf16.mxu0 0
      %398 = vmatmul.mubr.bf16.gmra.mxu0 %v297
      %v399 = vpop.f32.mrf.mxu0
      %v400 = vadd.f32 0.0, %v399
      %v401 = vpop.f32.mrf.mxu0
      %v402 = vadd.f32 0.0, %v401
      %v403 = vpop.f32.mrf.mxu0
      %v404 = vadd.f32 0.0, %v403
      %v405 = vpop.f32.mrf.mxu0
      %v406 = vadd.f32 0.0, %v405
      %407 = vmatprep.mubr.bf16.mxu0 0
      %408 = vmatmul.mubr.bf16.gmra.mxu0 %v300
      %v409 = vpop.f32.mrf.mxu0
      %v410 = vadd.f32 0.0, %v409
      %v411 = vpop.f32.mrf.mxu0
      %v412 = vadd.f32 0.0, %v411
      %v413 = vpop.f32.mrf.mxu0
      %v414 = vadd.f32 0.0, %v413
      %v415 = vpop.f32.mrf.mxu0
      %v416 = vadd.f32 0.0, %v415
      %417 = vmatprep.mubr.bf16.mxu0 0
      %418 = vmatmul.mubr.bf16.gmra.mxu0 %v303
      %v419 = vpop.f32.mrf.mxu0
      %v420 = vadd.f32 0.0, %v419
      %v421 = vpop.f32.mrf.mxu0
      %v422 = vadd.f32 0.0, %v421
      %v423 = vpop.f32.mrf.mxu0
      %v424 = vadd.f32 0.0, %v423
      %v425 = vpop.f32.mrf.mxu0
      %v426 = vadd.f32 0.0, %v425
      %427 = vmatprep.mubr.bf16.mxu0 0
      %428 = vmatmul.mubr.bf16.gmra.mxu0 %v306
      %v429 = vpop.f32.mrf.mxu0
      %v430 = vadd.f32 0.0, %v429
      %v431 = vpop.f32.mrf.mxu0
      %v432 = vadd.f32 0.0, %v431
      %v433 = vpop.f32.mrf.mxu0
      %v434 = vadd.f32 0.0, %v433
      %v435 = vpop.f32.mrf.mxu0
      %v436 = vadd.f32 0.0, %v435
      %437 = vmatprep.mubr.bf16.mxu0 0
      %438 = vmatmul.mubr.bf16.gmra.mxu0 %v309
      %v439 = vpop.f32.mrf.mxu0
      %v440 = vadd.f32 0.0, %v439
      %v441 = vpop.f32.mrf.mxu0
      %v442 = vadd.f32 0.0, %v441
      %v443 = vpop.f32.mrf.mxu0
      %v444 = vadd.f32 0.0, %v443
      %v445 = vpop.f32.mrf.mxu0
      %v446 = vadd.f32 0.0, %v445
      %447 = vmatprep.mubr.bf16.mxu0 0
      %448 = vmatmul.mubr.bf16.gmra.mxu0 %v312
      %v449 = vpop.f32.mrf.mxu0
      %v450 = vadd.f32 0.0, %v449
      %v451 = vpop.f32.mrf.mxu0
      %v452 = vadd.f32 0.0, %v451
      %v453 = vpop.f32.mrf.mxu0
      %v454 = vadd.f32 0.0, %v453
      %v455 = vpop.f32.mrf.mxu0
      %v456 = vadd.f32 0.0, %v455
      %457 = vmatprep.mubr.bf16.mxu0 0
      %458 = vmatmul.mubr.bf16.gmra.mxu0 %v315
      %v459 = vpop.f32.mrf.mxu0
      %v460 = vadd.f32 0.0, %v459
      %v461 = vpop.f32.mrf.mxu0
      %v462 = vadd.f32 0.0, %v461
      %v463 = vpop.f32.mrf.mxu0
      %v464 = vadd.f32 0.0, %v463
      %v465 = vpop.f32.mrf.mxu0
      %v466 = vadd.f32 0.0, %v465
      %467 = vmatprep.mubr.bf16.mxu0 0
      %468 = vmatmul.mubr.bf16.gmra.mxu0 %v318
      %v469 = vpop.f32.mrf.mxu0
      %v470 = vadd.f32 0.0, %v469
      %v471 = vpop.f32.mrf.mxu0
      %v472 = vadd.f32 0.0, %v471
      %v473 = vpop.f32.mrf.mxu0
      %v474 = vadd.f32 0.0, %v473
      %v475 = vpop.f32.mrf.mxu0
      %v476 = vadd.f32 0.0, %v475
      %477 = vmatprep.mubr.bf16.mxu0 0
      %478 = vmatmul.mubr.bf16.gmra.mxu0 %v321
      %v479 = vpop.f32.mrf.mxu0
      %v480 = vadd.f32 0.0, %v479
      %v481 = vpop.f32.mrf.mxu0
      %v482 = vadd.f32 0.0, %v481
      %v483 = vpop.f32.mrf.mxu0
      %v484 = vadd.f32 0.0, %v483
      %v485 = vpop.f32.mrf.mxu0
      %v486 = vadd.f32 0.0, %v485
      %487 = vmatprep.mubr.bf16.mxu0 0
      %488 = vmatmul.mubr.bf16.gmra.mxu0 %v324
      %v489 = vpop.f32.mrf.mxu0
      %v490 = vadd.f32 0.0, %v489
      %v491 = vpop.f32.mrf.mxu0
      %v492 = vadd.f32 0.0, %v491
      %v493 = vpop.f32.mrf.mxu0
      %v494 = vadd.f32 0.0, %v493
      %v495 = vpop.f32.mrf.mxu0
      %v496 = vadd.f32 0.0, %v495
      %497 = vmatprep.mubr.bf16.mxu0 0
      %498 = vmatmul.mubr.bf16.gmra.mxu0 %v327
      %v499 = vpop.f32.mrf.mxu0
      %v500 = vadd.f32 0.0, %v499
      %v501 = vpop.f32.mrf.mxu0
      %v502 = vadd.f32 0.0, %v501
      %v503 = vpop.f32.mrf.mxu0
      %v504 = vadd.f32 0.0, %v503
      %v505 = vpop.f32.mrf.mxu0
      %v506 = vadd.f32 0.0, %v505
      %507 = vmatprep.mubr.bf16.mxu0 0
      %508 = vmatmul.mubr.bf16.gmra.mxu0 %v330
      %v509 = vpop.f32.mrf.mxu0
      %v510 = vadd.f32 0.0, %v509
      %v511 = vpop.f32.mrf.mxu0
      %v512 = vadd.f32 0.0, %v511
      %v513 = vpop.f32.mrf.mxu0
      %v514 = vadd.f32 0.0, %v513
      %v515 = vpop.f32.mrf.mxu0
      %v516 = vadd.f32 0.0, %v515
      %517 = vmatprep.mubr.bf16.mxu0 0
      %518 = vmatmul.mubr.bf16.gmra.mxu0 %v333
      %v519 = vpop.f32.mrf.mxu0
      %v520 = vadd.f32 0.0, %v519
      %v521 = vpop.f32.mrf.mxu0
      %v522 = vadd.f32 0.0, %v521
      %v523 = vpop.f32.mrf.mxu0
      %v524 = vadd.f32 0.0, %v523
      %v525 = vpop.f32.mrf.mxu0
      %v526 = vadd.f32 0.0, %v525
      %527 = vdwg.mxu0
      %528 = vst [vmem:[%s147] sm:$0xff] %v370
      %529 = vst [vmem:[%s147 + $0x8] sm:$0xff] %v372
      %530 = vst [vmem:[%s147 + $0x10] sm:$0xff] %v374
      %531 = vst [vmem:[%s147 + $0x18] sm:$0xff] %v376
      %532 = vst [vmem:[%s147 + $0x20] sm:$0xff] %v380
      %533 = vst [vmem:[%s147 + $0x28] sm:$0xff] %v382
      %534 = vst [vmem:[%s147 + $0x30] sm:$0xff] %v384
      %535 = vst [vmem:[%s147 + $0x38] sm:$0xff] %v386
      %536 = vst [vmem:[%s147 + $0x40] sm:$0xff] %v390
      %537 = vst [vmem:[%s147 + $0x48] sm:$0xff] %v392
      %538 = vst [vmem:[%s147 + $0x50] sm:$0xff] %v394
      %539 = vst [vmem:[%s147 + $0x58] sm:$0xff] %v396
      %540 = vst [vmem:[%s147 + $0x60] sm:$0xff] %v400
      %541 = vst [vmem:[%s147 + $0x68] sm:$0xff] %v402
      %542 = vst [vmem:[%s147 + $0x70] sm:$0xff] %v404
      %543 = vst [vmem:[%s147 + $0x78] sm:$0xff] %v406
      %544 = vst [vmem:[%s147 + $0x80] sm:$0xff] %v410
      %545 = vst [vmem:[%s147 + $0x88] sm:$0xff] %v412
      %546 = vst [vmem:[%s147 + $0x90] sm:$0xff] %v414
      %547 = vst [vmem:[%s147 + $0x98] sm:$0xff] %v416
      %548 = vst [vmem:[%s147 + $0xa0] sm:$0xff] %v420
      %549 = vst [vmem:[%s147 + $0xa8] sm:$0xff] %v422
      %550 = vst [vmem:[%s147 + $0xb0] sm:$0xff] %v424
      %551 = vst [vmem:[%s147 + $0xb8] sm:$0xff] %v426
      %552 = vst [vmem:[%s147 + $0xc0] sm:$0xff] %v430
      %553 = vst [vmem:[%s147 + $0xc8] sm:$0xff] %v432
      %554 = vst [vmem:[%s147 + $0xd0] sm:$0xff] %v434
      %555 = vst [vmem:[%s147 + $0xd8] sm:$0xff] %v436
      %556 = vst [vmem:[%s147 + $0xe0] sm:$0xff] %v440
      %557 = vst [vmem:[%s147 + $0xe8] sm:$0xff] %v442
      %558 = vst [vmem:[%s147 + $0xf0] sm:$0xff] %v444
      %559 = vst [vmem:[%s147 + $0xf8] sm:$0xff] %v446
      %560 = vst [vmem:[%s147 + $0x100] sm:$0xff] %v450
      %561 = vst [vmem:[%s147 + $0x108] sm:$0xff] %v452
      %562 = vst [vmem:[%s147 + $0x110] sm:$0xff] %v454
      %563 = vst [vmem:[%s147 + $0x118] sm:$0xff] %v456
      %564 = vst [vmem:[%s147 + $0x120] sm:$0xff] %v460
      %565 = vst [vmem:[%s147 + $0x128] sm:$0xff] %v462
      %566 = vst [vmem:[%s147 + $0x130] sm:$0xff] %v464
      %567 = vst [vmem:[%s147 + $0x138] sm:$0xff] %v466
      %568 = vst [vmem:[%s147 + $0x140] sm:$0xff] %v470
      %569 = vst [vmem:[%s147 + $0x148] sm:$0xff] %v472
      %570 = vst [vmem:[%s147 + $0x150] sm:$0xff] %v474
      %571 = vst [vmem:[%s147 + $0x158] sm:$0xff] %v476
      %572 = vst [vmem:[%s147 + $0x160] sm:$0xff] %v480
      %573 = vst [vmem:[%s147 + $0x168] sm:$0xff] %v482
      %574 = vst [vmem:[%s147 + $0x170] sm:$0xff] %v484
      %575 = vst [vmem:[%s147 + $0x178] sm:$0xff] %v486
      %576 = vst [vmem:[%s147 + $0x180] sm:$0xff] %v490
      %577 = vst [vmem:[%s147 + $0x188] sm:$0xff] %v492
      %578 = vst [vmem:[%s147 + $0x190] sm:$0xff] %v494
      %579 = vst [vmem:[%s147 + $0x198] sm:$0xff] %v496
      %580 = vst [vmem:[%s147 + $0x1a0] sm:$0xff] %v500
      %581 = vst [vmem:[%s147 + $0x1a8] sm:$0xff] %v502
      %582 = vst [vmem:[%s147 + $0x1b0] sm:$0xff] %v504
      %583 = vst [vmem:[%s147 + $0x1b8] sm:$0xff] %v506
      %584 = vst [vmem:[%s147 + $0x1c0] sm:$0xff] %v510
      %585 = vst [vmem:[%s147 + $0x1c8] sm:$0xff] %v512
      %586 = vst [vmem:[%s147 + $0x1d0] sm:$0xff] %v514
      %587 = vst [vmem:[%s147 + $0x1d8] sm:$0xff] %v516
      %588 = vst [vmem:[%s147 + $0x1e0] sm:$0xff] %v520
      %589 = vst [vmem:[%s147 + $0x1e8] sm:$0xff] %v522
      %590 = vst [vmem:[%s147 + $0x1f0] sm:$0xff] %v524
      %591 = vst [vmem:[%s147 + $0x1f8] sm:$0xff] %v526
      %s592 = smul.u32 32, %s13
      %p593 = scmp.lt.s32.totalorder %s592, 63
      %s594 = scalar_select %p593, %s592, 63
      %s595 = smul.addr %s594, 2
      %s596 = smul.addr %s595, 8
      %s597 = scalar_lea.vmem %s2, %s596
      // Predicated region
      $region29: #{generator_forward.16} parent=27 // pred_check
        %p598 = pneg %p78
      $region30: #{generator_forward.16} parent=27 // pred_check_branch
        %600 = sbr.rel (%p598) target = $region32
      $region31: #{generator_forward.16} parent=27 // pred_region
        %s601 = smul.u32 32, %s13
      $region32: #{generator_forward.16} parent=27 // pred_fallthru
        _
    $region28: #{generator_forward.16} parent=5 // pred_fallthru
      _
    %p602 = scmp.le.s32.totalorder 2, %s8
    // Predicated region
    $region33: #{generator_forward.16} parent=5 // pred_check
      %p603 = pneg %p602
    $region34: #{generator_forward.16} parent=5 // pred_check_branch
      %605 = sbr.rel (%p603) target = $region36
    $region35: #{generator_forward.16} parent=5 // pred_region
      %s606 = ssub.s32 %s8, 2
      // Predicated region
      $region37: #{generator_forward.16} parent=35 // pred_check
        %p607 = pneg %p84
      $region38: #{generator_forward.16} parent=35 // pred_check_branch
        %609 = sbr.rel (%p607) target = $region40
      $region39: #{generator_forward.16} parent=35 // pred_region
        %s610 = smul.u32 32, %s14
        %p611 = scmp.lt.s32.totalorder %s610, 63
        %s612 = scalar_select %p611, %s610, 63
        %s613 = smul.addr %s612, 2
        %s614 = smul.addr %s613, 8
        %s615 = scalar_lea.vmem %s2, %s614
      $region40: #{generator_forward.16} parent=35 // pred_fallthru
        _
    $region36: #{generator_forward.16} parent=5 // pred_fallthru
      _
  $region6: #{generator_forward.16} parent=0 // loop_footer
    %s12 = sadd.s32 1, %s8
  $region7: #{generator_forward.16} parent=0 // loop_footer_branch
    %7 = sbr.rel target = $region3
  $region8: #{generator_forward.16} parent=0 // loop_exit
    _

// kernel: generator_forward.18
$region0: #{generator_forward.18}
  #allocation0 [shape = 'u32[]', space=smem, size = 0x4, offset = 0x4, fixed_abs, tag = 'smem constant byte address 0x4 - core index']
  #allocation1 [shape = 'u32[144,128]{1,0:T(1,128)}', space=vmem, size = 0x12000, scoped, tag = 'internal scratch']
  %s0 = inlined_call_operand.vmem [shape: bf16[2048,16], index: 0, kind: input, shape index: {}]
  %s1 = inlined_call_operand.vmem [shape: bf16[16,128], index: 1, kind: input, shape index: {}]
  %s2 = inlined_call_operand.vmem [shape: f32[2048,128], index: 2, kind: output, shape index: {}]
  %s3 = sld [smem:[#allocation0]]
  $region41: #{generator_forward.18} parent=0
    _
  %s5 = ssub.s32 1, %s3
  %s6 = scalar_select 0, %s5, %s3
  loop: start=0, step=1, limit=4
  $region2: #{generator_forward.18} parent=0 // loop_pre_header
    _
  $region3: #{generator_forward.18} parent=0 // loop_header
    %s8 = sphi 0, %s12
    %p9 = scmp.ge.s32.totalorder %s8, 4
    %s18 = sphi 0, %s20
    %s21 = sphi 0, %s18
    %s22 = sphi 0, %s21
    %s38 = sphi 0, %s22
    %s42 = sphi 0, %s42
    %s44 = sphi 0, %s42
    %s45 = sphi 0, %s44
    %s59 = sphi 0, %s45
    %s65 = sphi 0, %s67
    %s68 = sphi 0, %s65
    %s69 = sphi 0, %s68
    %s85 = sphi 0, %s69
  $region4: #{generator_forward.18} parent=0 // loop_header_branch
    %11 = sbr.rel (%p9) target = $region8
  $region5: #{generator_forward.18} parent=0 // loop_body
    %s13 = ssub.s32 %s8, 1
    %s14 = ssub.s32 %s8, 2
    %s15 = sadd.s32 %s8, 1
    %s16 = ssub.s32 %s8, %s15
    %p17 = scmp.eq.s32.totalorder %s16, 0
    %s19 = sadd.s32 %s18, 1
    %s20 = scalar_select %p17, %s18, %s19
    %p23 = pneg %p17
    %p24 = scmp.eq.s32.totalorder %s8, 1
    %p25 = por %p23, %p24
    %p26 = scmp.ne.s32.totalorder %s18, %s21
    %p27 = scmp.eq.s32.totalorder %s8, 0
    %p28 = por %p26, %p27
    %p29 = scmp.ne.s32.totalorder %s18, %s21
    %p30 = scmp.eq.s32.totalorder %s13, 1
    %p31 = por %p29, %p30
    %p32 = scmp.ne.s32.totalorder %s21, %s22
    %p33 = scmp.eq.s32.totalorder %s13, 0
    %p34 = por %p32, %p33
    %p35 = scmp.ne.s32.totalorder %s21, %s22
    %p36 = scmp.eq.s32.totalorder %s14, 1
    %p37 = por %p35, %p36
    %p39 = scmp.ne.s32.totalorder %s22, %s38
    %p40 = scmp.eq.s32.totalorder %s14, 0
    %p41 = por %p39, %p40
    %s43 = sadd.s32 %s42, 1
    %p46 = scmp.eq.s32.totalorder %s8, 1
    %p47 = scmp.ne.s32.totalorder %s42, %s44
    %p48 = scmp.eq.s32.totalorder %s8, 0
    %p49 = por %p47, %p48
    %p50 = scmp.ne.s32.totalorder %s42, %s44
    %p51 = scmp.eq.s32.totalorder %s13, 1
    %p52 = por %p50, %p51
    %p53 = scmp.ne.s32.totalorder %s44, %s45
    %p54 = scmp.eq.s32.totalorder %s13, 0
    %p55 = por %p53, %p54
    %p56 = scmp.ne.s32.totalorder %s44, %s45
    %p57 = scmp.eq.s32.totalorder %s14, 1
    %p58 = por %p56, %p57
    %p60 = scmp.ne.s32.totalorder %s45, %s59
    %p61 = scmp.eq.s32.totalorder %s14, 0
    %p62 = por %p60, %p61
    %s63 = ssub.s32 %s8, %s15
    %p64 = scmp.eq.s32.totalorder %s63, 0
    %s66 = sadd.s32 %s65, 1
    %s67 = scalar_select %p64, %s65, %s66
    %p70 = pneg %p64
    %p71 = scmp.eq.s32.totalorder %s8, 1
    %p72 = por %p70, %p71
    %p73 = scmp.ne.s32.totalorder %s65, %s68
    %p74 = scmp.eq.s32.totalorder %s8, 0
    %p75 = por %p73, %p74
    %p76 = scmp.ne.s32.totalorder %s65, %s68
    %p77 = scmp.eq.s32.totalorder %s13, 1
    %p78 = por %p76, %p77
    %p79 = scmp.ne.s32.totalorder %s68, %s69
    %p80 = scmp.eq.s32.totalorder %s13, 0
    %p81 = por %p79, %p80
    %p82 = scmp.ne.s32.totalorder %s68, %s69
    %p83 = scmp.eq.s32.totalorder %s14, 1
    %p84 = por %p82, %p83
    %p86 = scmp.ne.s32.totalorder %s69, %s85
    %p87 = scmp.eq.s32.totalorder %s14, 0
    %p88 = por %p86, %p87
    %p89 = scmp.le.s32.totalorder 1, %s8
    %p90 = scmp.lt.s32.totalorder %s8, 3
    %p91 = pnand %p89, %p90
    %p92 = pneg %p91
    // Predicated region
    $region9: #{generator_forward.18} parent=5 // pred_check
      _
    $region10: #{generator_forward.18} parent=5 // pred_check_branch
      %94 = sbr.rel (%p91) target = $region12
    $region11: #{generator_forward.18} parent=5 // pred_region
      %s95 = ssub.s32 %s8, 1
      // Predicated region
      $region13: #{generator_forward.18} parent=11 // pred_check
        %p96 = pneg %p55
      $region14: #{generator_forward.18} parent=11 // pred_check_branch
        %98 = sbr.rel (%p96) target = $region16
      $region15: #{generator_forward.18} parent=11 // pred_region
        _
      $region16: #{generator_forward.18} parent=11 // pred_fallthru
        _
    $region12: #{generator_forward.18} parent=5 // pred_fallthru
      _
    %p99 = scmp.lt.s32.totalorder %s8, 2
    // Predicated region
    $region17: #{generator_forward.18} parent=5 // pred_check
      %p100 = pneg %p99
    $region18: #{generator_forward.18} parent=5 // pred_check_branch
      %102 = sbr.rel (%p100) target = $region20
    $region19: #{generator_forward.18} parent=5 // pred_region
      // Predicated region
      $region21: #{generator_forward.18} parent=19 // pred_check
        %p103 = pneg %p28
      $region22: #{generator_forward.18} parent=19 // pred_check_branch
        %105 = sbr.rel (%p103) target = $region24
      $region23: #{generator_forward.18} parent=19 // pred_region
        %s106 = smul.u32 128, %s8
        %p107 = scmp.lt.s32.totalorder %s106, 255
        %s108 = scalar_select %p107, %s106, 255
        %s109 = smul.addr %s108, 4
        %s110 = scalar_lea.vmem %s0, %s109
        %s111 = smul.u32 128, %s8
      $region24: #{generator_forward.18} parent=19 // pred_fallthru
        _
    $region20: #{generator_forward.18} parent=5 // pred_fallthru
      _
    %p112 = scmp.le.s32.totalorder 1, %s8
    %p113 = scmp.lt.s32.totalorder %s8, 3
    %p114 = pnand %p112, %p113
    %p115 = pneg %p114
    // Predicated region
    $region25: #{generator_forward.18} parent=5 // pred_check
      _
    $region26: #{generator_forward.18} parent=5 // pred_check_branch
      %117 = sbr.rel (%p114) target = $region28
    $region27: #{generator_forward.18} parent=5 // pred_region
      %s118 = ssub.s32 %s8, 1
      %s119 = smul.u32 128, %s13
      %p120 = scmp.lt.s32.totalorder %s119, 255
      %s121 = scalar_select %p120, %s119, 255
      %s122 = smul.addr %s121, 4
      %s123 = scalar_lea.vmem %s0, %s122
      %p124 = pneg %p34
      %p125 = pneg %p31
      %p126 = pneg %p55
      %p127 = pneg %p52
      %p128 = pneg %p81
      %p129 = pneg %p78
      %s130 = smul.u32 128, %s13
      %p131 = scmp.lt.s32.totalorder %s130, 255
      %s132 = scalar_select %p131, %s130, 255
      %s133 = smul.addr %s132, 8
      %s134 = scalar_lea.vmem %s2, %s133
      %s135 = smul.u32 128, %s13
      %p136 = scmp.lt.s32.totalorder %s135, 255
      %s137 = scalar_select %p136, %s135, 255
      %s138 = smul.addr %s137, 4
      %s139 = scalar_lea.vmem %s0, %s138
      %s140 = smul.u32 128, %s13
      %s141 = smul.u32 128, %s13
      %p142 = scmp.lt.s32.totalorder %s141, 255
      %s143 = scalar_select %p142, %s141, 255
      %s144 = smul.addr %s143, 8
      %s145 = scalar_lea.vmem %s2, %s144
      %s146 = smul.u32 128, %s13
      %v148 = vld [vmem:[%s139] sm:$0xf]
      %v149 = vld [vmem:[%s139 + $0x4] sm:$0xf]
      %v150 = vld [vmem:[%s139 + $0x8] sm:$0xf]
      %v151 = vld [vmem:[%s139 + $0xc] sm:$0xf]
      %v152 = vld [vmem:[%s139 + $0x10] sm:$0xf]
      %v153 = vld [vmem:[%s139 + $0x14] sm:$0xf]
      %v154 = vld [vmem:[%s139 + $0x18] sm:$0xf]
      %v155 = vld [vmem:[%s139 + $0x1c] sm:$0xf]
      %v156 = vld [vmem:[%s139 + $0x20] sm:$0xf]
      %v157 = vld [vmem:[%s139 + $0x24] sm:$0xf]
      %v158 = vld [vmem:[%s139 + $0x28] sm:$0xf]
      %v159 = vld [vmem:[%s139 + $0x2c] sm:$0xf]
      %v160 = vld [vmem:[%s139 + $0x30] sm:$0xf]
      %v161 = vld [vmem:[%s139 + $0x34] sm:$0xf]
      %v162 = vld [vmem:[%s139 + $0x38] sm:$0xf]
      %v163 = vld [vmem:[%s139 + $0x3c] sm:$0xf]
      %v164 = vld [vmem:[%s139 + $0x40] sm:$0xf]
      %v165 = vld [vmem:[%s139 + $0x44] sm:$0xf]
      %v166 = vld [vmem:[%s139 + $0x48] sm:$0xf]
      %v167 = vld [vmem:[%s139 + $0x4c] sm:$0xf]
      %v168 = vld [vmem:[%s139 + $0x50] sm:$0xf]
      %v169 = vld [vmem:[%s139 + $0x54] sm:$0xf]
      %v170 = vld [vmem:[%s139 + $0x58] sm:$0xf]
      %v171 = vld [vmem:[%s139 + $0x5c] sm:$0xf]
      %v172 = vld [vmem:[%s139 + $0x60] sm:$0xf]
      %v173 = vld [vmem:[%s139 + $0x64] sm:$0xf]
      %v174 = vld [vmem:[%s139 + $0x68] sm:$0xf]
      %v175 = vld [vmem:[%s139 + $0x6c] sm:$0xf]
      %v176 = vld [vmem:[%s139 + $0x70] sm:$0xf]
      %v177 = vld [vmem:[%s139 + $0x74] sm:$0xf]
      %v178 = vld [vmem:[%s139 + $0x78] sm:$0xf]
      %v179 = vld [vmem:[%s139 + $0x7c] sm:$0xf]
      %v180 = vld [vmem:[%s139 + $0x80] sm:$0xf]
      %v181 = vld [vmem:[%s139 + $0x84] sm:$0xf]
      %v182 = vld [vmem:[%s139 + $0x88] sm:$0xf]
      %v183 = vld [vmem:[%s139 + $0x8c] sm:$0xf]
      %v184 = vld [vmem:[%s139 + $0x90] sm:$0xf]
      %v185 = vld [vmem:[%s139 + $0x94] sm:$0xf]
      %v186 = vld [vmem:[%s139 + $0x98] sm:$0xf]
      %v187 = vld [vmem:[%s139 + $0x9c] sm:$0xf]
      %v188 = vld [vmem:[%s139 + $0xa0] sm:$0xf]
      %v189 = vld [vmem:[%s139 + $0xa4] sm:$0xf]
      %v190 = vld [vmem:[%s139 + $0xa8] sm:$0xf]
      %v191 = vld [vmem:[%s139 + $0xac] sm:$0xf]
      %v192 = vld [vmem:[%s139 + $0xb0] sm:$0xf]
      %v193 = vld [vmem:[%s139 + $0xb4] sm:$0xf]
      %v194 = vld [vmem:[%s139 + $0xb8] sm:$0xf]
      %v195 = vld [vmem:[%s139 + $0xbc] sm:$0xf]
      %v196 = vld [vmem:[%s139 + $0xc0] sm:$0xf]
      %v197 = vld [vmem:[%s139 + $0xc4] sm:$0xf]
      %v198 = vld [vmem:[%s139 + $0xc8] sm:$0xf]
      %v199 = vld [vmem:[%s139 + $0xcc] sm:$0xf]
      %v200 = vld [vmem:[%s139 + $0xd0] sm:$0xf]
      %v201 = vld [vmem:[%s139 + $0xd4] sm:$0xf]
      %v202 = vld [vmem:[%s139 + $0xd8] sm:$0xf]
      %v203 = vld [vmem:[%s139 + $0xdc] sm:$0xf]
      %v204 = vld [vmem:[%s139 + $0xe0] sm:$0xf]
      %v205 = vld [vmem:[%s139 + $0xe4] sm:$0xf]
      %v206 = vld [vmem:[%s139 + $0xe8] sm:$0xf]
      %v207 = vld [vmem:[%s139 + $0xec] sm:$0xf]
      %v208 = vld [vmem:[%s139 + $0xf0] sm:$0xf]
      %v209 = vld [vmem:[%s139 + $0xf4] sm:$0xf]
      %v210 = vld [vmem:[%s139 + $0xf8] sm:$0xf]
      %v211 = vld [vmem:[%s139 + $0xfc] sm:$0xf]
      %v212 = vld [vmem:[%s139 + $0x100] sm:$0xf]
      %v213 = vld [vmem:[%s139 + $0x104] sm:$0xf]
      %v214 = vld [vmem:[%s139 + $0x108] sm:$0xf]
      %v215 = vld [vmem:[%s139 + $0x10c] sm:$0xf]
      %v216 = vld [vmem:[%s139 + $0x110] sm:$0xf]
      %v217 = vld [vmem:[%s139 + $0x114] sm:$0xf]
      %v218 = vld [vmem:[%s139 + $0x118] sm:$0xf]
      %v219 = vld [vmem:[%s139 + $0x11c] sm:$0xf]
      %v220 = vld [vmem:[%s139 + $0x120] sm:$0xf]
      %v221 = vld [vmem:[%s139 + $0x124] sm:$0xf]
      %v222 = vld [vmem:[%s139 + $0x128] sm:$0xf]
      %v223 = vld [vmem:[%s139 + $0x12c] sm:$0xf]
      %v224 = vld [vmem:[%s139 + $0x130] sm:$0xf]
      %v225 = vld [vmem:[%s139 + $0x134] sm:$0xf]
      %v226 = vld [vmem:[%s139 + $0x138] sm:$0xf]
      %v227 = vld [vmem:[%s139 + $0x13c] sm:$0xf]
      %v228 = vld [vmem:[%s139 + $0x140] sm:$0xf]
      %v229 = vld [vmem:[%s139 + $0x144] sm:$0xf]
      %v230 = vld [vmem:[%s139 + $0x148] sm:$0xf]
      %v231 = vld [vmem:[%s139 + $0x14c] sm:$0xf]
      %v232 = vld [vmem:[%s139 + $0x150] sm:$0xf]
      %v233 = vld [vmem:[%s139 + $0x154] sm:$0xf]
      %v234 = vld [vmem:[%s139 + $0x158] sm:$0xf]
      %v235 = vld [vmem:[%s139 + $0x15c] sm:$0xf]
      %v236 = vld [vmem:[%s139 + $0x160] sm:$0xf]
      %v237 = vld [vmem:[%s139 + $0x164] sm:$0xf]
      %v238 = vld [vmem:[%s139 + $0x168] sm:$0xf]
      %v239 = vld [vmem:[%s139 + $0x16c] sm:$0xf]
      %v240 = vld [vmem:[%s139 + $0x170] sm:$0xf]
      %v241 = vld [vmem:[%s139 + $0x174] sm:$0xf]
      %v242 = vld [vmem:[%s139 + $0x178] sm:$0xf]
      %v243 = vld [vmem:[%s139 + $0x17c] sm:$0xf]
      %v244 = vld [vmem:[%s139 + $0x180] sm:$0xf]
      %v245 = vld [vmem:[%s139 + $0x184] sm:$0xf]
      %v246 = vld [vmem:[%s139 + $0x188] sm:$0xf]
      %v247 = vld [vmem:[%s139 + $0x18c] sm:$0xf]
      %v248 = vld [vmem:[%s139 + $0x190] sm:$0xf]
      %v249 = vld [vmem:[%s139 + $0x194] sm:$0xf]
      %v250 = vld [vmem:[%s139 + $0x198] sm:$0xf]
      %v251 = vld [vmem:[%s139 + $0x19c] sm:$0xf]
      %v252 = vld [vmem:[%s139 + $0x1a0] sm:$0xf]
      %v253 = vld [vmem:[%s139 + $0x1a4] sm:$0xf]
      %v254 = vld [vmem:[%s139 + $0x1a8] sm:$0xf]
      %v255 = vld [vmem:[%s139 + $0x1ac] sm:$0xf]
      %v256 = vld [vmem:[%s139 + $0x1b0] sm:$0xf]
      %v257 = vld [vmem:[%s139 + $0x1b4] sm:$0xf]
      %v258 = vld [vmem:[%s139 + $0x1b8] sm:$0xf]
      %v259 = vld [vmem:[%s139 + $0x1bc] sm:$0xf]
      %v260 = vld [vmem:[%s139 + $0x1c0] sm:$0xf]
      %v261 = vld [vmem:[%s139 + $0x1c4] sm:$0xf]
      %v262 = vld [vmem:[%s139 + $0x1c8] sm:$0xf]
      %v263 = vld [vmem:[%s139 + $0x1cc] sm:$0xf]
      %v264 = vld [vmem:[%s139 + $0x1d0] sm:$0xf]
      %v265 = vld [vmem:[%s139 + $0x1d4] sm:$0xf]
      %v266 = vld [vmem:[%s139 + $0x1d8] sm:$0xf]
      %v267 = vld [vmem:[%s139 + $0x1dc] sm:$0xf]
      %v268 = vld [vmem:[%s139 + $0x1e0] sm:$0xf]
      %v269 = vld [vmem:[%s139 + $0x1e4] sm:$0xf]
      %v270 = vld [vmem:[%s139 + $0x1e8] sm:$0xf]
      %v271 = vld [vmem:[%s139 + $0x1ec] sm:$0xf]
      %v272 = vld [vmem:[%s139 + $0x1f0] sm:$0xf]
      %v273 = vld [vmem:[%s139 + $0x1f4] sm:$0xf]
      %v274 = vld [vmem:[%s139 + $0x1f8] sm:$0xf]
      %v275 = vld [vmem:[%s139 + $0x1fc] sm:$0xf]
      %v276 = vld [vmem:[%s1] sm:$0xf]
      %v277 = vld [vmem:[%s1 + $0x4] sm:$0xf]
      %v406 = vunpack.c.l.b16 %v148
      %v407 = vunpack.c.l.b16 %v149
      %v408 = vunpack.c.l.b16 %v150
      %v409 = vunpack.c.l.b16 %v151
      %v410 = vunpack.c.l.b16 %v152
      %v411 = vunpack.c.l.b16 %v153
      %v412 = vunpack.c.l.b16 %v154
      %v413 = vunpack.c.l.b16 %v155
      %v414 = vunpack.c.l.b16 %v156
      %v415 = vunpack.c.l.b16 %v157
      %v416 = vunpack.c.l.b16 %v158
      %v417 = vunpack.c.l.b16 %v159
      %v418 = vunpack.c.l.b16 %v160
      %v419 = vunpack.c.l.b16 %v161
      %v420 = vunpack.c.l.b16 %v162
      %v421 = vunpack.c.l.b16 %v163
      %v422 = vunpack.c.l.b16 %v164
      %v423 = vunpack.c.l.b16 %v165
      %v424 = vunpack.c.l.b16 %v166
      %v425 = vunpack.c.l.b16 %v167
      %v426 = vunpack.c.l.b16 %v168
      %v427 = vunpack.c.l.b16 %v169
      %v428 = vunpack.c.l.b16 %v170
      %v429 = vunpack.c.l.b16 %v171
      %v430 = vunpack.c.l.b16 %v172
      %v431 = vunpack.c.l.b16 %v173
      %v432 = vunpack.c.l.b16 %v174
      %v433 = vunpack.c.l.b16 %v175
      %v434 = vunpack.c.l.b16 %v176
      %v435 = vunpack.c.l.b16 %v177
      %v436 = vunpack.c.l.b16 %v178
      %v437 = vunpack.c.l.b16 %v179
      %v438 = vunpack.c.l.b16 %v180
      %v439 = vunpack.c.l.b16 %v181
      %v440 = vunpack.c.l.b16 %v182
      %v441 = vunpack.c.l.b16 %v183
      %v442 = vunpack.c.l.b16 %v184
      %v443 = vunpack.c.l.b16 %v185
      %v444 = vunpack.c.l.b16 %v186
      %v445 = vunpack.c.l.b16 %v187
      %v446 = vunpack.c.l.b16 %v188
      %v447 = vunpack.c.l.b16 %v189
      %v448 = vunpack.c.l.b16 %v190
      %v449 = vunpack.c.l.b16 %v191
      %v450 = vunpack.c.l.b16 %v192
      %v451 = vunpack.c.l.b16 %v193
      %v452 = vunpack.c.l.b16 %v194
      %v453 = vunpack.c.l.b16 %v195
      %v454 = vunpack.c.l.b16 %v196
      %v455 = vunpack.c.l.b16 %v197
      %v456 = vunpack.c.l.b16 %v198
      %v457 = vunpack.c.l.b16 %v199
      %v458 = vunpack.c.l.b16 %v200
      %v459 = vunpack.c.l.b16 %v201
      %v460 = vunpack.c.l.b16 %v202
      %v461 = vunpack.c.l.b16 %v203
      %v462 = vunpack.c.l.b16 %v204
      %v463 = vunpack.c.l.b16 %v205
      %v464 = vunpack.c.l.b16 %v206
      %v465 = vunpack.c.l.b16 %v207
      %v466 = vunpack.c.l.b16 %v208
      %v467 = vunpack.c.l.b16 %v209
      %v468 = vunpack.c.l.b16 %v210
      %v469 = vunpack.c.l.b16 %v211
      %v470 = vunpack.c.l.b16 %v212
      %v471 = vunpack.c.l.b16 %v213
      %v472 = vunpack.c.l.b16 %v214
      %v473 = vunpack.c.l.b16 %v215
      %v474 = vunpack.c.l.b16 %v216
      %v475 = vunpack.c.l.b16 %v217
      %v476 = vunpack.c.l.b16 %v218
      %v477 = vunpack.c.l.b16 %v219
      %v478 = vunpack.c.l.b16 %v220
      %v479 = vunpack.c.l.b16 %v221
      %v480 = vunpack.c.l.b16 %v222
      %v481 = vunpack.c.l.b16 %v223
      %v482 = vunpack.c.l.b16 %v224
      %v483 = vunpack.c.l.b16 %v225
      %v484 = vunpack.c.l.b16 %v226
      %v485 = vunpack.c.l.b16 %v227
      %v486 = vunpack.c.l.b16 %v228
      %v487 = vunpack.c.l.b16 %v229
      %v488 = vunpack.c.l.b16 %v230
      %v489 = vunpack.c.l.b16 %v231
      %v490 = vunpack.c.l.b16 %v232
      %v491 = vunpack.c.l.b16 %v233
      %v492 = vunpack.c.l.b16 %v234
      %v493 = vunpack.c.l.b16 %v235
      %v494 = vunpack.c.l.b16 %v236
      %v495 = vunpack.c.l.b16 %v237
      %v496 = vunpack.c.l.b16 %v238
      %v497 = vunpack.c.l.b16 %v239
      %v498 = vunpack.c.l.b16 %v240
      %v499 = vunpack.c.l.b16 %v241
      %v500 = vunpack.c.l.b16 %v242
      %v501 = vunpack.c.l.b16 %v243
      %v502 = vunpack.c.l.b16 %v244
      %v503 = vunpack.c.l.b16 %v245
      %v504 = vunpack.c.l.b16 %v246
      %v505 = vunpack.c.l.b16 %v247
      %v506 = vunpack.c.l.b16 %v248
      %v507 = vunpack.c.l.b16 %v249
      %v508 = vunpack.c.l.b16 %v250
      %v509 = vunpack.c.l.b16 %v251
      %v510 = vunpack.c.l.b16 %v252
      %v511 = vunpack.c.l.b16 %v253
      %v512 = vunpack.c.l.b16 %v254
      %v513 = vunpack.c.l.b16 %v255
      %v514 = vunpack.c.l.b16 %v256
      %v515 = vunpack.c.l.b16 %v257
      %v516 = vunpack.c.l.b16 %v258
      %v517 = vunpack.c.l.b16 %v259
      %v518 = vunpack.c.l.b16 %v260
      %v519 = vunpack.c.l.b16 %v261
      %v520 = vunpack.c.l.b16 %v262
      %v521 = vunpack.c.l.b16 %v263
      %v522 = vunpack.c.l.b16 %v264
      %v523 = vunpack.c.l.b16 %v265
      %v524 = vunpack.c.l.b16 %v266
      %v525 = vunpack.c.l.b16 %v267
      %v526 = vunpack.c.l.b16 %v268
      %v527 = vunpack.c.l.b16 %v269
      %v528 = vunpack.c.l.b16 %v270
      %v529 = vunpack.c.l.b16 %v271
      %v530 = vunpack.c.l.b16 %v272
      %v531 = vunpack.c.l.b16 %v273
      %v532 = vunpack.c.l.b16 %v274
      %v533 = vunpack.c.l.b16 %v275
      %v534 = vpack.c.b16 %v407, %v406
      %v535 = vpack.c.b16 %v409, %v408
      %v536 = vpack.c.b16 %v411, %v410
      %v537 = vpack.c.b16 %v413, %v412
      %v538 = vpack.c.b16 %v415, %v414
      %v539 = vpack.c.b16 %v417, %v416
      %v540 = vpack.c.b16 %v419, %v418
      %v541 = vpack.c.b16 %v421, %v420
      %v542 = vpack.c.b16 %v423, %v422
      %v543 = vpack.c.b16 %v425, %v424
      %v544 = vpack.c.b16 %v427, %v426
      %v545 = vpack.c.b16 %v429, %v428
      %v546 = vpack.c.b16 %v431, %v430
      %v547 = vpack.c.b16 %v433, %v432
      %v548 = vpack.c.b16 %v435, %v434
      %v549 = vpack.c.b16 %v437, %v436
      %v550 = vpack.c.b16 %v439, %v438
      %v551 = vpack.c.b16 %v441, %v440
      %v552 = vpack.c.b16 %v443, %v442
      %v553 = vpack.c.b16 %v445, %v444
      %v554 = vpack.c.b16 %v447, %v446
      %v555 = vpack.c.b16 %v449, %v448
      %v556 = vpack.c.b16 %v451, %v450
      %v557 = vpack.c.b16 %v453, %v452
      %v558 = vpack.c.b16 %v455, %v454
      %v559 = vpack.c.b16 %v457, %v456
      %v560 = vpack.c.b16 %v459, %v458
      %v561 = vpack.c.b16 %v461, %v460
      %v562 = vpack.c.b16 %v463, %v462
      %v563 = vpack.c.b16 %v465, %v464
      %v564 = vpack.c.b16 %v467, %v466
      %v565 = vpack.c.b16 %v469, %v468
      %v566 = vpack.c.b16 %v471, %v470
      %v567 = vpack.c.b16 %v473, %v472
      %v568 = vpack.c.b16 %v475, %v474
      %v569 = vpack.c.b16 %v477, %v476
      %v570 = vpack.c.b16 %v479, %v478
      %v571 = vpack.c.b16 %v481, %v480
      %v572 = vpack.c.b16 %v483, %v482
      %v573 = vpack.c.b16 %v485, %v484
      %v574 = vpack.c.b16 %v487, %v486
      %v575 = vpack.c.b16 %v489, %v488
      %v576 = vpack.c.b16 %v491, %v490
      %v577 = vpack.c.b16 %v493, %v492
      %v578 = vpack.c.b16 %v495, %v494
      %v579 = vpack.c.b16 %v497, %v496
      %v580 = vpack.c.b16 %v499, %v498
      %v581 = vpack.c.b16 %v501, %v500
      %v582 = vpack.c.b16 %v503, %v502
      %v583 = vpack.c.b16 %v505, %v504
      %v584 = vpack.c.b16 %v507, %v506
      %v585 = vpack.c.b16 %v509, %v508
      %v586 = vpack.c.b16 %v511, %v510
      %v587 = vpack.c.b16 %v513, %v512
      %v588 = vpack.c.b16 %v515, %v514
      %v589 = vpack.c.b16 %v517, %v516
      %v590 = vpack.c.b16 %v519, %v518
      %v591 = vpack.c.b16 %v521, %v520
      %v592 = vpack.c.b16 %v523, %v522
      %v593 = vpack.c.b16 %v525, %v524
      %v594 = vpack.c.b16 %v527, %v526
      %v595 = vpack.c.b16 %v529, %v528
      %v596 = vpack.c.b16 %v531, %v530
      %v597 = vpack.c.b16 %v533, %v532
      %v600 = vunpack.c.l.b16 %v276
      %v601 = vunpack.c.l.b16 %v277
      %v602 = vpack.c.b16 %v601, %v600
      %vm604 = vcmask 130048
      %v606 = vsel %vm604, %v534, 0
      %v609 = vsel %vm604, %v535, 0
      %v612 = vsel %vm604, %v536, 0
      %v615 = vsel %vm604, %v537, 0
      %v618 = vsel %vm604, %v538, 0
      %v621 = vsel %vm604, %v539, 0
      %v624 = vsel %vm604, %v540, 0
      %v627 = vsel %vm604, %v541, 0
      %v630 = vsel %vm604, %v542, 0
      %v633 = vsel %vm604, %v543, 0
      %v636 = vsel %vm604, %v544, 0
      %v639 = vsel %vm604, %v545, 0
      %v642 = vsel %vm604, %v546, 0
      %v645 = vsel %vm604, %v547, 0
      %v648 = vsel %vm604, %v548, 0
      %v651 = vsel %vm604, %v549, 0
      %v654 = vsel %vm604, %v550, 0
      %v657 = vsel %vm604, %v551, 0
      %v660 = vsel %vm604, %v552, 0
      %v663 = vsel %vm604, %v553, 0
      %v666 = vsel %vm604, %v554, 0
      %v669 = vsel %vm604, %v555, 0
      %v672 = vsel %vm604, %v556, 0
      %v675 = vsel %vm604, %v557, 0
      %v678 = vsel %vm604, %v558, 0
      %v681 = vsel %vm604, %v559, 0
      %v684 = vsel %vm604, %v560, 0
      %v687 = vsel %vm604, %v561, 0
      %v690 = vsel %vm604, %v562, 0
      %v693 = vsel %vm604, %v563, 0
      %v696 = vsel %vm604, %v564, 0
      %v699 = vsel %vm604, %v565, 0
      %v702 = vsel %vm604, %v566, 0
      %v705 = vsel %vm604, %v567, 0
      %v708 = vsel %vm604, %v568, 0
      %v711 = vsel %vm604, %v569, 0
      %v714 = vsel %vm604, %v570, 0
      %v717 = vsel %vm604, %v571, 0
      %v720 = vsel %vm604, %v572, 0
      %v723 = vsel %vm604, %v573, 0
      %v726 = vsel %vm604, %v574, 0
      %v729 = vsel %vm604, %v575, 0
      %v732 = vsel %vm604, %v576, 0
      %v735 = vsel %vm604, %v577, 0
      %v738 = vsel %vm604, %v578, 0
      %v741 = vsel %vm604, %v579, 0
      %v744 = vsel %vm604, %v580, 0
      %v747 = vsel %vm604, %v581, 0
      %v750 = vsel %vm604, %v582, 0
      %v753 = vsel %vm604, %v583, 0
      %v756 = vsel %vm604, %v584, 0
      %v759 = vsel %vm604, %v585, 0
      %v762 = vsel %vm604, %v586, 0
      %v765 = vsel %vm604, %v587, 0
      %v768 = vsel %vm604, %v588, 0
      %v771 = vsel %vm604, %v589, 0
      %v774 = vsel %vm604, %v590, 0
      %v777 = vsel %vm604, %v591, 0
      %v780 = vsel %vm604, %v592, 0
      %v783 = vsel %vm604, %v593, 0
      %v786 = vsel %vm604, %v594, 0
      %v789 = vsel %vm604, %v595, 0
      %v792 = vsel %vm604, %v596, 0
      %v795 = vsel %vm604, %v597, 0
      %797 = vmatprep.subr.bf16.mxu0 0
      %798 = vmatpush1.bf16.msra.mxu0 0
      %799 = vmatprep.subr.bf16.mxu0 0
      %800 = vmatpush1.bf16.msra.mxu0 0
      %801 = vmatprep.subr.bf16.mxu0 0
      %802 = vmatpush1.bf16.msra.mxu0 0
      %803 = vmatprep.subr.bf16.mxu0 0
      %804 = vmatpush1.bf16.msra.mxu0 0
      %805 = vmatprep.subr.bf16.mxu0 0
      %806 = vmatpush1.bf16.msra.mxu0 0
      %807 = vmatprep.subr.bf16.mxu0 0
      %808 = vmatpush1.bf16.msra.mxu0 0
      %809 = vmatprep.subr.bf16.mxu0 0
      %810 = vmatpush1.bf16.msra.mxu0 0
      %811 = vmatprep.subr.bf16.mxu0 0
      %812 = vmatpush1.bf16.msra.mxu0 %v602
      %813 = vmatprep.subr.bf16.mxu0 0
      %814 = vmatpush2.bf16.msra.mxu0 0
      %815 = vmatprep.subr.bf16.mxu0 0
      %816 = vmatpush2.bf16.msra.mxu0 0
      %817 = vmatprep.subr.bf16.mxu0 0
      %818 = vmatpush2.bf16.msra.mxu0 0
      %819 = vmatprep.subr.bf16.mxu0 0
      %820 = vmatpush2.bf16.msra.mxu0 0
      %821 = vmatprep.subr.bf16.mxu0 0
      %822 = vmatpush2.bf16.msra.mxu0 0
      %823 = vmatprep.subr.bf16.mxu0 0
      %824 = vmatpush2.bf16.msra.mxu0 0
      %825 = vmatprep.subr.bf16.mxu0 0
      %826 = vmatpush2.bf16.msra.mxu0 0
      %827 = vmatprep.subr.bf16.mxu0 0
      %828 = vmatpush2.bf16.msra.mxu0 0
      %829 = vmatprep.mubr.bf16.mxu0 0
      %830 = vmatmul.mubr.bf16.gmra.mxu0 %v606
      %v831 = vpop.f32.mrf.mxu0
      %v832 = vadd.f32 0.0, %v831
      %v833 = vpop.f32.mrf.mxu0
      %v834 = vpop.f32.mrf.mxu0
      %v835 = vadd.f32 0.0, %v834
      %v836 = vpop.f32.mrf.mxu0
      %837 = vmatprep.mubr.bf16.mxu0 0
      %838 = vmatmul.mubr.bf16.gmra.mxu0 %v609
      %v839 = vpop.f32.mrf.mxu0
      %v840 = vadd.f32 0.0, %v839
      %v841 = vpop.f32.mrf.mxu0
      %v842 = vpop.f32.mrf.mxu0
      %v843 = vadd.f32 0.0, %v842
      %v844 = vpop.f32.mrf.mxu0
      %845 = vmatprep.mubr.bf16.mxu0 0
      %846 = vmatmul.mubr.bf16.gmra.mxu0 %v612
      %v847 = vpop.f32.mrf.mxu0
      %v848 = vadd.f32 0.0, %v847
      %v849 = vpop.f32.mrf.mxu0
      %v850 = vpop.f32.mrf.mxu0
      %v851 = vadd.f32 0.0, %v850
      %v852 = vpop.f32.mrf.mxu0
      %853 = vmatprep.mubr.bf16.mxu0 0
      %854 = vmatmul.mubr.bf16.gmra.mxu0 %v615
      %v855 = vpop.f32.mrf.mxu0
      %v856 = vadd.f32 0.0, %v855
      %v857 = vpop.f32.mrf.mxu0
      %v858 = vpop.f32.mrf.mxu0
      %v859 = vadd.f32 0.0, %v858
      %v860 = vpop.f32.mrf.mxu0
      %861 = vmatprep.mubr.bf16.mxu0 0
      %862 = vmatmul.mubr.bf16.gmra.mxu0 %v618
      %v863 = vpop.f32.mrf.mxu0
      %v864 = vadd.f32 0.0, %v863
      %v865 = vpop.f32.mrf.mxu0
      %v866 = vpop.f32.mrf.mxu0
      %v867 = vadd.f32 0.0, %v866
      %v868 = vpop.f32.mrf.mxu0
      %869 = vmatprep.mubr.bf16.mxu0 0
      %870 = vmatmul.mubr.bf16.gmra.mxu0 %v621
      %v871 = vpop.f32.mrf.mxu0
      %v872 = vadd.f32 0.0, %v871
      %v873 = vpop.f32.mrf.mxu0
      %v874 = vpop.f32.mrf.mxu0
      %v875 = vadd.f32 0.0, %v874
      %v876 = vpop.f32.mrf.mxu0
      %877 = vmatprep.mubr.bf16.mxu0 0
      %878 = vmatmul.mubr.bf16.gmra.mxu0 %v624
      %v879 = vpop.f32.mrf.mxu0
      %v880 = vadd.f32 0.0, %v879
      %v881 = vpop.f32.mrf.mxu0
      %v882 = vpop.f32.mrf.mxu0
      %v883 = vadd.f32 0.0, %v882
      %v884 = vpop.f32.mrf.mxu0
      %885 = vmatprep.mubr.bf16.mxu0 0
      %886 = vmatmul.mubr.bf16.gmra.mxu0 %v627
      %v887 = vpop.f32.mrf.mxu0
      %v888 = vadd.f32 0.0, %v887
      %v889 = vpop.f32.mrf.mxu0
      %v890 = vpop.f32.mrf.mxu0
      %v891 = vadd.f32 0.0, %v890
      %v892 = vpop.f32.mrf.mxu0
      %893 = vmatprep.mubr.bf16.mxu0 0
      %894 = vmatmul.mubr.bf16.gmra.mxu0 %v630
      %v895 = vpop.f32.mrf.mxu0
      %v896 = vadd.f32 0.0, %v895
      %v897 = vpop.f32.mrf.mxu0
      %v898 = vpop.f32.mrf.mxu0
      %v899 = vadd.f32 0.0, %v898
      %v900 = vpop.f32.mrf.mxu0
      %901 = vmatprep.mubr.bf16.mxu0 0
      %902 = vmatmul.mubr.bf16.gmra.mxu0 %v633
      %v903 = vpop.f32.mrf.mxu0
      %v904 = vadd.f32 0.0, %v903
      %v905 = vpop.f32.mrf.mxu0
      %v906 = vpop.f32.mrf.mxu0
      %v907 = vadd.f32 0.0, %v906
      %v908 = vpop.f32.mrf.mxu0
      %909 = vmatprep.mubr.bf16.mxu0 0
      %910 = vmatmul.mubr.bf16.gmra.mxu0 %v636
      %v911 = vpop.f32.mrf.mxu0
      %v912 = vadd.f32 0.0, %v911
      %v913 = vpop.f32.mrf.mxu0
      %v914 = vpop.f32.mrf.mxu0
      %v915 = vadd.f32 0.0, %v914
      %v916 = vpop.f32.mrf.mxu0
      %917 = vmatprep.mubr.bf16.mxu0 0
      %918 = vmatmul.mubr.bf16.gmra.mxu0 %v639
      %v919 = vpop.f32.mrf.mxu0
      %v920 = vadd.f32 0.0, %v919
      %v921 = vpop.f32.mrf.mxu0
      %v922 = vpop.f32.mrf.mxu0
      %v923 = vadd.f32 0.0, %v922
      %v924 = vpop.f32.mrf.mxu0
      %925 = vmatprep.mubr.bf16.mxu0 0
      %926 = vmatmul.mubr.bf16.gmra.mxu0 %v642
      %v927 = vpop.f32.mrf.mxu0
      %v928 = vadd.f32 0.0, %v927
      %v929 = vpop.f32.mrf.mxu0
      %v930 = vpop.f32.mrf.mxu0
      %v931 = vadd.f32 0.0, %v930
      %v932 = vpop.f32.mrf.mxu0
      %933 = vmatprep.mubr.bf16.mxu0 0
      %934 = vmatmul.mubr.bf16.gmra.mxu0 %v645
      %v935 = vpop.f32.mrf.mxu0
      %v936 = vadd.f32 0.0, %v935
      %v937 = vpop.f32.mrf.mxu0
      %v938 = vpop.f32.mrf.mxu0
      %v939 = vadd.f32 0.0, %v938
      %v940 = vpop.f32.mrf.mxu0
      %941 = vmatprep.mubr.bf16.mxu0 0
      %942 = vmatmul.mubr.bf16.gmra.mxu0 %v648
      %v943 = vpop.f32.mrf.mxu0
      %v944 = vadd.f32 0.0, %v943
      %v945 = vpop.f32.mrf.mxu0
      %v946 = vpop.f32.mrf.mxu0
      %v947 = vadd.f32 0.0, %v946
      %v948 = vpop.f32.mrf.mxu0
      %949 = vmatprep.mubr.bf16.mxu0 0
      %950 = vmatmul.mubr.bf16.gmra.mxu0 %v651
      %v951 = vpop.f32.mrf.mxu0
      %v952 = vadd.f32 0.0, %v951
      %v953 = vpop.f32.mrf.mxu0
      %v954 = vpop.f32.mrf.mxu0
      %v955 = vadd.f32 0.0, %v954
      %v956 = vpop.f32.mrf.mxu0
      %957 = vmatprep.mubr.bf16.mxu0 0
      %958 = vmatmul.mubr.bf16.gmra.mxu0 %v654
      %v959 = vpop.f32.mrf.mxu0
      %v960 = vadd.f32 0.0, %v959
      %v961 = vpop.f32.mrf.mxu0
      %v962 = vpop.f32.mrf.mxu0
      %v963 = vadd.f32 0.0, %v962
      %v964 = vpop.f32.mrf.mxu0
      %965 = vmatprep.mubr.bf16.mxu0 0
      %966 = vmatmul.mubr.bf16.gmra.mxu0 %v657
      %v967 = vpop.f32.mrf.mxu0
      %v968 = vadd.f32 0.0, %v967
      %v969 = vpop.f32.mrf.mxu0
      %v970 = vpop.f32.mrf.mxu0
      %v971 = vadd.f32 0.0, %v970
      %v972 = vpop.f32.mrf.mxu0
      %973 = vmatprep.mubr.bf16.mxu0 0
      %974 = vmatmul.mubr.bf16.gmra.mxu0 %v660
      %v975 = vpop.f32.mrf.mxu0
      %v976 = vadd.f32 0.0, %v975
      %v977 = vpop.f32.mrf.mxu0
      %v978 = vpop.f32.mrf.mxu0
      %v979 = vadd.f32 0.0, %v978
      %v980 = vpop.f32.mrf.mxu0
      %981 = vmatprep.mubr.bf16.mxu0 0
      %982 = vmatmul.mubr.bf16.gmra.mxu0 %v663
      %v983 = vpop.f32.mrf.mxu0
      %v984 = vadd.f32 0.0, %v983
      %v985 = vpop.f32.mrf.mxu0
      %v986 = vpop.f32.mrf.mxu0
      %v987 = vadd.f32 0.0, %v986
      %v988 = vpop.f32.mrf.mxu0
      %989 = vmatprep.mubr.bf16.mxu0 0
      %990 = vmatmul.mubr.bf16.gmra.mxu0 %v666
      %v991 = vpop.f32.mrf.mxu0
      %v992 = vadd.f32 0.0, %v991
      %v993 = vpop.f32.mrf.mxu0
      %v994 = vpop.f32.mrf.mxu0
      %v995 = vadd.f32 0.0, %v994
      %v996 = vpop.f32.mrf.mxu0
      %997 = vmatprep.mubr.bf16.mxu0 0
      %998 = vmatmul.mubr.bf16.gmra.mxu0 %v669
      %v999 = vpop.f32.mrf.mxu0
      %v1000 = vadd.f32 0.0, %v999
      %v1001 = vpop.f32.mrf.mxu0
      %v1002 = vpop.f32.mrf.mxu0
      %v1003 = vadd.f32 0.0, %v1002
      %v1004 = vpop.f32.mrf.mxu0
      %1005 = vmatprep.mubr.bf16.mxu0 0
      %1006 = vmatmul.mubr.bf16.gmra.mxu0 %v672
      %v1007 = vpop.f32.mrf.mxu0
      %v1008 = vadd.f32 0.0, %v1007
      %v1009 = vpop.f32.mrf.mxu0
      %v1010 = vpop.f32.mrf.mxu0
      %v1011 = vadd.f32 0.0, %v1010
      %v1012 = vpop.f32.mrf.mxu0
      %1013 = vmatprep.mubr.bf16.mxu0 0
      %1014 = vmatmul.mubr.bf16.gmra.mxu0 %v675
      %v1015 = vpop.f32.mrf.mxu0
      %v1016 = vadd.f32 0.0, %v1015
      %v1017 = vpop.f32.mrf.mxu0
      %v1018 = vpop.f32.mrf.mxu0
      %v1019 = vadd.f32 0.0, %v1018
      %v1020 = vpop.f32.mrf.mxu0
      %1021 = vmatprep.mubr.bf16.mxu0 0
      %1022 = vmatmul.mubr.bf16.gmra.mxu0 %v678
      %v1023 = vpop.f32.mrf.mxu0
      %v1024 = vadd.f32 0.0, %v1023
      %v1025 = vpop.f32.mrf.mxu0
      %v1026 = vpop.f32.mrf.mxu0
      %v1027 = vadd.f32 0.0, %v1026
      %v1028 = vpop.f32.mrf.mxu0
      %1029 = vmatprep.mubr.bf16.mxu0 0
      %1030 = vmatmul.mubr.bf16.gmra.mxu0 %v681
      %v1031 = vpop.f32.mrf.mxu0
      %v1032 = vadd.f32 0.0, %v1031
      %v1033 = vpop.f32.mrf.mxu0
      %v1034 = vpop.f32.mrf.mxu0
      %v1035 = vadd.f32 0.0, %v1034
      %v1036 = vpop.f32.mrf.mxu0
      %1037 = vmatprep.mubr.bf16.mxu0 0
      %1038 = vmatmul.mubr.bf16.gmra.mxu0 %v684
      %v1039 = vpop.f32.mrf.mxu0
      %v1040 = vadd.f32 0.0, %v1039
      %v1041 = vpop.f32.mrf.mxu0
      %v1042 = vpop.f32.mrf.mxu0
      %v1043 = vadd.f32 0.0, %v1042
      %v1044 = vpop.f32.mrf.mxu0
      %1045 = vmatprep.mubr.bf16.mxu0 0
      %1046 = vmatmul.mubr.bf16.gmra.mxu0 %v687
      %v1047 = vpop.f32.mrf.mxu0
      %v1048 = vadd.f32 0.0, %v1047
      %v1049 = vpop.f32.mrf.mxu0
      %v1050 = vpop.f32.mrf.mxu0
      %v1051 = vadd.f32 0.0, %v1050
      %v1052 = vpop.f32.mrf.mxu0
      %1053 = vmatprep.mubr.bf16.mxu0 0
      %1054 = vmatmul.mubr.bf16.gmra.mxu0 %v690
      %v1055 = vpop.f32.mrf.mxu0
      %v1056 = vadd.f32 0.0, %v1055
      %v1057 = vpop.f32.mrf.mxu0
      %v1058 = vpop.f32.mrf.mxu0
      %v1059 = vadd.f32 0.0, %v1058
      %v1060 = vpop.f32.mrf.mxu0
      %1061 = vmatprep.mubr.bf16.mxu0 0
      %1062 = vmatmul.mubr.bf16.gmra.mxu0 %v693
      %v1063 = vpop.f32.mrf.mxu0
      %v1064 = vadd.f32 0.0, %v1063
      %v1065 = vpop.f32.mrf.mxu0
      %v1066 = vpop.f32.mrf.mxu0
      %v1067 = vadd.f32 0.0, %v1066
      %v1068 = vpop.f32.mrf.mxu0
      %1069 = vmatprep.mubr.bf16.mxu0 0
      %1070 = vmatmul.mubr.bf16.gmra.mxu0 %v696
      %v1071 = vpop.f32.mrf.mxu0
      %v1072 = vadd.f32 0.0, %v1071
      %v1073 = vpop.f32.mrf.mxu0
      %v1074 = vpop.f32.mrf.mxu0
      %v1075 = vadd.f32 0.0, %v1074
      %v1076 = vpop.f32.mrf.mxu0
      %1077 = vmatprep.mubr.bf16.mxu0 0
      %1078 = vmatmul.mubr.bf16.gmra.mxu0 %v699
      %v1079 = vpop.f32.mrf.mxu0
      %v1080 = vadd.f32 0.0, %v1079
      %v1081 = vpop.f32.mrf.mxu0
      %v1082 = vpop.f32.mrf.mxu0
      %v1083 = vadd.f32 0.0, %v1082
      %v1084 = vpop.f32.mrf.mxu0
      %1085 = vmatprep.mubr.bf16.mxu0 0
      %1086 = vmatmul.mubr.bf16.gmra.mxu0 %v702
      %v1087 = vpop.f32.mrf.mxu0
      %v1088 = vadd.f32 0.0, %v1087
      %v1089 = vpop.f32.mrf.mxu0
      %v1090 = vpop.f32.mrf.mxu0
      %v1091 = vadd.f32 0.0, %v1090
      %v1092 = vpop.f32.mrf.mxu0
      %1093 = vmatprep.mubr.bf16.mxu0 0
      %1094 = vmatmul.mubr.bf16.gmra.mxu0 %v705
      %v1095 = vpop.f32.mrf.mxu0
      %v1096 = vadd.f32 0.0, %v1095
      %v1097 = vpop.f32.mrf.mxu0
      %v1098 = vpop.f32.mrf.mxu0
      %v1099 = vadd.f32 0.0, %v1098
      %v1100 = vpop.f32.mrf.mxu0
      %1101 = vmatprep.mubr.bf16.mxu0 0
      %1102 = vmatmul.mubr.bf16.gmra.mxu0 %v708
      %v1103 = vpop.f32.mrf.mxu0
      %v1104 = vadd.f32 0.0, %v1103
      %v1105 = vpop.f32.mrf.mxu0
      %v1106 = vpop.f32.mrf.mxu0
      %v1107 = vadd.f32 0.0, %v1106
      %v1108 = vpop.f32.mrf.mxu0
      %1109 = vmatprep.mubr.bf16.mxu0 0
      %1110 = vmatmul.mubr.bf16.gmra.mxu0 %v711
      %v1111 = vpop.f32.mrf.mxu0
      %v1112 = vadd.f32 0.0, %v1111
      %v1113 = vpop.f32.mrf.mxu0
      %v1114 = vpop.f32.mrf.mxu0
      %v1115 = vadd.f32 0.0, %v1114
      %v1116 = vpop.f32.mrf.mxu0
      %1117 = vmatprep.mubr.bf16.mxu0 0
      %1118 = vmatmul.mubr.bf16.gmra.mxu0 %v714
      %v1119 = vpop.f32.mrf.mxu0
      %v1120 = vadd.f32 0.0, %v1119
      %v1121 = vpop.f32.mrf.mxu0
      %v1122 = vpop.f32.mrf.mxu0
      %v1123 = vadd.f32 0.0, %v1122
      %v1124 = vpop.f32.mrf.mxu0
      %1125 = vmatprep.mubr.bf16.mxu0 0
      %1126 = vmatmul.mubr.bf16.gmra.mxu0 %v717
      %v1127 = vpop.f32.mrf.mxu0
      %v1128 = vadd.f32 0.0, %v1127
      %v1129 = vpop.f32.mrf.mxu0
      %v1130 = vpop.f32.mrf.mxu0
      %v1131 = vadd.f32 0.0, %v1130
      %v1132 = vpop.f32.mrf.mxu0
      %1133 = vmatprep.mubr.bf16.mxu0 0
      %1134 = vmatmul.mubr.bf16.gmra.mxu0 %v720
      %v1135 = vpop.f32.mrf.mxu0
      %v1136 = vadd.f32 0.0, %v1135
      %v1137 = vpop.f32.mrf.mxu0
      %v1138 = vpop.f32.mrf.mxu0
      %v1139 = vadd.f32 0.0, %v1138
      %v1140 = vpop.f32.mrf.mxu0
      %1141 = vmatprep.mubr.bf16.mxu0 0
      %1142 = vmatmul.mubr.bf16.gmra.mxu0 %v723
      %v1143 = vpop.f32.mrf.mxu0
      %v1144 = vadd.f32 0.0, %v1143
      %v1145 = vpop.f32.mrf.mxu0
      %v1146 = vpop.f32.mrf.mxu0
      %v1147 = vadd.f32 0.0, %v1146
      %v1148 = vpop.f32.mrf.mxu0
      %1149 = vmatprep.mubr.bf16.mxu0 0
      %1150 = vmatmul.mubr.bf16.gmra.mxu0 %v726
      %v1151 = vpop.f32.mrf.mxu0
      %v1152 = vadd.f32 0.0, %v1151
      %v1153 = vpop.f32.mrf.mxu0
      %v1154 = vpop.f32.mrf.mxu0
      %v1155 = vadd.f32 0.0, %v1154
      %v1156 = vpop.f32.mrf.mxu0
      %1157 = vmatprep.mubr.bf16.mxu0 0
      %1158 = vmatmul.mubr.bf16.gmra.mxu0 %v729
      %v1159 = vpop.f32.mrf.mxu0
      %v1160 = vadd.f32 0.0, %v1159
      %v1161 = vpop.f32.mrf.mxu0
      %v1162 = vpop.f32.mrf.mxu0
      %v1163 = vadd.f32 0.0, %v1162
      %v1164 = vpop.f32.mrf.mxu0
      %1165 = vmatprep.mubr.bf16.mxu0 0
      %1166 = vmatmul.mubr.bf16.gmra.mxu0 %v732
      %v1167 = vpop.f32.mrf.mxu0
      %v1168 = vadd.f32 0.0, %v1167
      %v1169 = vpop.f32.mrf.mxu0
      %v1170 = vpop.f32.mrf.mxu0
      %v1171 = vadd.f32 0.0, %v1170
      %v1172 = vpop.f32.mrf.mxu0
      %1173 = vmatprep.mubr.bf16.mxu0 0
      %1174 = vmatmul.mubr.bf16.gmra.mxu0 %v735
      %v1175 = vpop.f32.mrf.mxu0
      %v1176 = vadd.f32 0.0, %v1175
      %v1177 = vpop.f32.mrf.mxu0
      %v1178 = vpop.f32.mrf.mxu0
      %v1179 = vadd.f32 0.0, %v1178
      %v1180 = vpop.f32.mrf.mxu0
      %1181 = vmatprep.mubr.bf16.mxu0 0
      %1182 = vmatmul.mubr.bf16.gmra.mxu0 %v738
      %v1183 = vpop.f32.mrf.mxu0
      %v1184 = vadd.f32 0.0, %v1183
      %v1185 = vpop.f32.mrf.mxu0
      %v1186 = vpop.f32.mrf.mxu0
      %v1187 = vadd.f32 0.0, %v1186
      %v1188 = vpop.f32.mrf.mxu0
      %1189 = vmatprep.mubr.bf16.mxu0 0
      %1190 = vmatmul.mubr.bf16.gmra.mxu0 %v741
      %v1191 = vpop.f32.mrf.mxu0
      %v1192 = vadd.f32 0.0, %v1191
      %v1193 = vpop.f32.mrf.mxu0
      %v1194 = vpop.f32.mrf.mxu0
      %v1195 = vadd.f32 0.0, %v1194
      %v1196 = vpop.f32.mrf.mxu0
      %1197 = vmatprep.mubr.bf16.mxu0 0
      %1198 = vmatmul.mubr.bf16.gmra.mxu0 %v744
      %v1199 = vpop.f32.mrf.mxu0
      %v1200 = vadd.f32 0.0, %v1199
      %v1201 = vpop.f32.mrf.mxu0
      %v1202 = vpop.f32.mrf.mxu0
      %v1203 = vadd.f32 0.0, %v1202
      %v1204 = vpop.f32.mrf.mxu0
      %1205 = vmatprep.mubr.bf16.mxu0 0
      %1206 = vmatmul.mubr.bf16.gmra.mxu0 %v747
      %v1207 = vpop.f32.mrf.mxu0
      %v1208 = vadd.f32 0.0, %v1207
      %v1209 = vpop.f32.mrf.mxu0
      %v1210 = vpop.f32.mrf.mxu0
      %v1211 = vadd.f32 0.0, %v1210
      %v1212 = vpop.f32.mrf.mxu0
      %1213 = vmatprep.mubr.bf16.mxu0 0
      %1214 = vmatmul.mubr.bf16.gmra.mxu0 %v750
      %v1215 = vpop.f32.mrf.mxu0
      %v1216 = vadd.f32 0.0, %v1215
      %v1217 = vpop.f32.mrf.mxu0
      %v1218 = vpop.f32.mrf.mxu0
      %v1219 = vadd.f32 0.0, %v1218
      %v1220 = vpop.f32.mrf.mxu0
      %1221 = vmatprep.mubr.bf16.mxu0 0
      %1222 = vmatmul.mubr.bf16.gmra.mxu0 %v753
      %v1223 = vpop.f32.mrf.mxu0
      %v1224 = vadd.f32 0.0, %v1223
      %v1225 = vpop.f32.mrf.mxu0
      %v1226 = vpop.f32.mrf.mxu0
      %v1227 = vadd.f32 0.0, %v1226
      %v1228 = vpop.f32.mrf.mxu0
      %1229 = vmatprep.mubr.bf16.mxu0 0
      %1230 = vmatmul.mubr.bf16.gmra.mxu0 %v756
      %v1231 = vpop.f32.mrf.mxu0
      %v1232 = vadd.f32 0.0, %v1231
      %v1233 = vpop.f32.mrf.mxu0
      %v1234 = vpop.f32.mrf.mxu0
      %v1235 = vadd.f32 0.0, %v1234
      %v1236 = vpop.f32.mrf.mxu0
      %1237 = vmatprep.mubr.bf16.mxu0 0
      %1238 = vmatmul.mubr.bf16.gmra.mxu0 %v759
      %v1239 = vpop.f32.mrf.mxu0
      %v1240 = vadd.f32 0.0, %v1239
      %v1241 = vpop.f32.mrf.mxu0
      %v1242 = vpop.f32.mrf.mxu0
      %v1243 = vadd.f32 0.0, %v1242
      %v1244 = vpop.f32.mrf.mxu0
      %1245 = vmatprep.mubr.bf16.mxu0 0
      %1246 = vmatmul.mubr.bf16.gmra.mxu0 %v762
      %v1247 = vpop.f32.mrf.mxu0
      %v1248 = vadd.f32 0.0, %v1247
      %v1249 = vpop.f32.mrf.mxu0
      %v1250 = vpop.f32.mrf.mxu0
      %v1251 = vadd.f32 0.0, %v1250
      %v1252 = vpop.f32.mrf.mxu0
      %1253 = vmatprep.mubr.bf16.mxu0 0
      %1254 = vmatmul.mubr.bf16.gmra.mxu0 %v765
      %v1255 = vpop.f32.mrf.mxu0
      %v1256 = vadd.f32 0.0, %v1255
      %v1257 = vpop.f32.mrf.mxu0
      %v1258 = vpop.f32.mrf.mxu0
      %v1259 = vadd.f32 0.0, %v1258
      %v1260 = vpop.f32.mrf.mxu0
      %1261 = vmatprep.mubr.bf16.mxu0 0
      %1262 = vmatmul.mubr.bf16.gmra.mxu0 %v768
      %v1263 = vpop.f32.mrf.mxu0
      %v1264 = vadd.f32 0.0, %v1263
      %v1265 = vpop.f32.mrf.mxu0
      %v1266 = vpop.f32.mrf.mxu0
      %v1267 = vadd.f32 0.0, %v1266
      %v1268 = vpop.f32.mrf.mxu0
      %1269 = vmatprep.mubr.bf16.mxu0 0
      %1270 = vmatmul.mubr.bf16.gmra.mxu0 %v771
      %v1271 = vpop.f32.mrf.mxu0
      %v1272 = vadd.f32 0.0, %v1271
      %v1273 = vpop.f32.mrf.mxu0
      %v1274 = vpop.f32.mrf.mxu0
      %v1275 = vadd.f32 0.0, %v1274
      %v1276 = vpop.f32.mrf.mxu0
      %1277 = vmatprep.mubr.bf16.mxu0 0
      %1278 = vmatmul.mubr.bf16.gmra.mxu0 %v774
      %v1279 = vpop.f32.mrf.mxu0
      %v1280 = vadd.f32 0.0, %v1279
      %v1281 = vpop.f32.mrf.mxu0
      %v1282 = vpop.f32.mrf.mxu0
      %v1283 = vadd.f32 0.0, %v1282
      %v1284 = vpop.f32.mrf.mxu0
      %1285 = vmatprep.mubr.bf16.mxu0 0
      %1286 = vmatmul.mubr.bf16.gmra.mxu0 %v777
      %v1287 = vpop.f32.mrf.mxu0
      %v1288 = vadd.f32 0.0, %v1287
      %v1289 = vpop.f32.mrf.mxu0
      %v1290 = vpop.f32.mrf.mxu0
      %v1291 = vadd.f32 0.0, %v1290
      %v1292 = vpop.f32.mrf.mxu0
      %1293 = vmatprep.mubr.bf16.mxu0 0
      %1294 = vmatmul.mubr.bf16.gmra.mxu0 %v780
      %v1295 = vpop.f32.mrf.mxu0
      %v1296 = vadd.f32 0.0, %v1295
      %v1297 = vpop.f32.mrf.mxu0
      %v1298 = vpop.f32.mrf.mxu0
      %v1299 = vadd.f32 0.0, %v1298
      %v1300 = vpop.f32.mrf.mxu0
      %1301 = vmatprep.mubr.bf16.mxu0 0
      %1302 = vmatmul.mubr.bf16.gmra.mxu0 %v783
      %v1303 = vpop.f32.mrf.mxu0
      %v1304 = vadd.f32 0.0, %v1303
      %v1305 = vpop.f32.mrf.mxu0
      %v1306 = vpop.f32.mrf.mxu0
      %v1307 = vadd.f32 0.0, %v1306
      %v1308 = vpop.f32.mrf.mxu0
      %1309 = vmatprep.mubr.bf16.mxu0 0
      %1310 = vmatmul.mubr.bf16.gmra.mxu0 %v786
      %v1311 = vpop.f32.mrf.mxu0
      %v1312 = vadd.f32 0.0, %v1311
      %v1313 = vpop.f32.mrf.mxu0
      %v1314 = vpop.f32.mrf.mxu0
      %v1315 = vadd.f32 0.0, %v1314
      %v1316 = vpop.f32.mrf.mxu0
      %1317 = vmatprep.mubr.bf16.mxu0 0
      %1318 = vmatmul.mubr.bf16.gmra.mxu0 %v789
      %v1319 = vpop.f32.mrf.mxu0
      %v1320 = vadd.f32 0.0, %v1319
      %v1321 = vpop.f32.mrf.mxu0
      %v1322 = vpop.f32.mrf.mxu0
      %v1323 = vadd.f32 0.0, %v1322
      %v1324 = vpop.f32.mrf.mxu0
      %1325 = vmatprep.mubr.bf16.mxu0 0
      %1326 = vmatmul.mubr.bf16.gmra.mxu0 %v792
      %v1327 = vpop.f32.mrf.mxu0
      %v1328 = vadd.f32 0.0, %v1327
      %v1329 = vpop.f32.mrf.mxu0
      %v1330 = vpop.f32.mrf.mxu0
      %v1331 = vadd.f32 0.0, %v1330
      %v1332 = vpop.f32.mrf.mxu0
      %1333 = vmatprep.mubr.bf16.mxu0 0
      %1334 = vmatmul.mubr.bf16.gmra.mxu0 %v795
      %v1335 = vpop.f32.mrf.mxu0
      %v1336 = vadd.f32 0.0, %v1335
      %v1337 = vpop.f32.mrf.mxu0
      %v1338 = vpop.f32.mrf.mxu0
      %v1339 = vadd.f32 0.0, %v1338
      %v1340 = vpop.f32.mrf.mxu0
      %1341 = vdwg.mxu0
      %1342 = vst [vmem:[%s145] sm:$0xff] %v832
      %1343 = vst [vmem:[%s145 + $0x8] sm:$0xff] %v835
      %1344 = vst [vmem:[%s145 + $0x10] sm:$0xff] %v840
      %1345 = vst [vmem:[%s145 + $0x18] sm:$0xff] %v843
      %1346 = vst [vmem:[%s145 + $0x20] sm:$0xff] %v848
      %1347 = vst [vmem:[%s145 + $0x28] sm:$0xff] %v851
      %1348 = vst [vmem:[%s145 + $0x30] sm:$0xff] %v856
      %1349 = vst [vmem:[%s145 + $0x38] sm:$0xff] %v859
      %1350 = vst [vmem:[%s145 + $0x40] sm:$0xff] %v864
      %1351 = vst [vmem:[%s145 + $0x48] sm:$0xff] %v867
      %1352 = vst [vmem:[%s145 + $0x50] sm:$0xff] %v872
      %1353 = vst [vmem:[%s145 + $0x58] sm:$0xff] %v875
      %1354 = vst [vmem:[%s145 + $0x60] sm:$0xff] %v880
      %1355 = vst [vmem:[%s145 + $0x68] sm:$0xff] %v883
      %1356 = vst [vmem:[%s145 + $0x70] sm:$0xff] %v888
      %1357 = vst [vmem:[%s145 + $0x78] sm:$0xff] %v891
      %1358 = vst [vmem:[%s145 + $0x80] sm:$0xff] %v896
      %1359 = vst [vmem:[%s145 + $0x88] sm:$0xff] %v899
      %1360 = vst [vmem:[%s145 + $0x90] sm:$0xff] %v904
      %1361 = vst [vmem:[%s145 + $0x98] sm:$0xff] %v907
      %1362 = vst [vmem:[%s145 + $0xa0] sm:$0xff] %v912
      %1363 = vst [vmem:[%s145 + $0xa8] sm:$0xff] %v915
      %1364 = vst [vmem:[%s145 + $0xb0] sm:$0xff] %v920
      %1365 = vst [vmem:[%s145 + $0xb8] sm:$0xff] %v923
      %1366 = vst [vmem:[%s145 + $0xc0] sm:$0xff] %v928
      %1367 = vst [vmem:[%s145 + $0xc8] sm:$0xff] %v931
      %1368 = vst [vmem:[%s145 + $0xd0] sm:$0xff] %v936
      %1369 = vst [vmem:[%s145 + $0xd8] sm:$0xff] %v939
      %1370 = vst [vmem:[%s145 + $0xe0] sm:$0xff] %v944
      %1371 = vst [vmem:[%s145 + $0xe8] sm:$0xff] %v947
      %1372 = vst [vmem:[%s145 + $0xf0] sm:$0xff] %v952
      %1373 = vst [vmem:[%s145 + $0xf8] sm:$0xff] %v955
      %1374 = vst [vmem:[%s145 + $0x100] sm:$0xff] %v960
      %1375 = vst [vmem:[%s145 + $0x108] sm:$0xff] %v963
      %1376 = vst [vmem:[%s145 + $0x110] sm:$0xff] %v968
      %1377 = vst [vmem:[%s145 + $0x118] sm:$0xff] %v971
      %1378 = vst [vmem:[%s145 + $0x120] sm:$0xff] %v976
      %1379 = vst [vmem:[%s145 + $0x128] sm:$0xff] %v979
      %1380 = vst [vmem:[%s145 + $0x130] sm:$0xff] %v984
      %1381 = vst [vmem:[%s145 + $0x138] sm:$0xff] %v987
      %1382 = vst [vmem:[%s145 + $0x140] sm:$0xff] %v992
      %1383 = vst [vmem:[%s145 + $0x148] sm:$0xff] %v995
      %1384 = vst [vmem:[%s145 + $0x150] sm:$0xff] %v1000
      %1385 = vst [vmem:[%s145 + $0x158] sm:$0xff] %v1003
      %1386 = vst [vmem:[%s145 + $0x160] sm:$0xff] %v1008
      %1387 = vst [vmem:[%s145 + $0x168] sm:$0xff] %v1011
      %1388 = vst [vmem:[%s145 + $0x170] sm:$0xff] %v1016
      %1389 = vst [vmem:[%s145 + $0x178] sm:$0xff] %v1019
      %1390 = vst [vmem:[%s145 + $0x180] sm:$0xff] %v1024
      %1391 = vst [vmem:[%s145 + $0x188] sm:$0xff] %v1027
      %1392 = vst [vmem:[%s145 + $0x190] sm:$0xff] %v1032
      %1393 = vst [vmem:[%s145 + $0x198] sm:$0xff] %v1035
      %1394 = vst [vmem:[%s145 + $0x1a0] sm:$0xff] %v1040
      %1395 = vst [vmem:[%s145 + $0x1a8] sm:$0xff] %v1043
      %1396 = vst [vmem:[%s145 + $0x1b0] sm:$0xff] %v1048
      %1397 = vst [vmem:[%s145 + $0x1b8] sm:$0xff] %v1051
      %1398 = vst [vmem:[%s145 + $0x1c0] sm:$0xff] %v1056
      %1399 = vst [vmem:[%s145 + $0x1c8] sm:$0xff] %v1059
      %1400 = vst [vmem:[%s145 + $0x1d0] sm:$0xff] %v1064
      %1401 = vst [vmem:[%s145 + $0x1d8] sm:$0xff] %v1067
      %1402 = vst [vmem:[%s145 + $0x1e0] sm:$0xff] %v1072
      %1403 = vst [vmem:[%s145 + $0x1e8] sm:$0xff] %v1075
      %1404 = vst [vmem:[%s145 + $0x1f0] sm:$0xff] %v1080
      %1405 = vst [vmem:[%s145 + $0x1f8] sm:$0xff] %v1083
      %1406 = vst [vmem:[%s145 + $0x200] sm:$0xff] %v1088
      %1407 = vst [vmem:[%s145 + $0x208] sm:$0xff] %v1091
      %1408 = vst [vmem:[%s145 + $0x210] sm:$0xff] %v1096
      %1409 = vst [vmem:[%s145 + $0x218] sm:$0xff] %v1099
      %1410 = vst [vmem:[%s145 + $0x220] sm:$0xff] %v1104
      %1411 = vst [vmem:[%s145 + $0x228] sm:$0xff] %v1107
      %1412 = vst [vmem:[%s145 + $0x230] sm:$0xff] %v1112
      %1413 = vst [vmem:[%s145 + $0x238] sm:$0xff] %v1115
      %1414 = vst [vmem:[%s145 + $0x240] sm:$0xff] %v1120
      %1415 = vst [vmem:[%s145 + $0x248] sm:$0xff] %v1123
      %1416 = vst [vmem:[%s145 + $0x250] sm:$0xff] %v1128
      %1417 = vst [vmem:[%s145 + $0x258] sm:$0xff] %v1131
      %1418 = vst [vmem:[%s145 + $0x260] sm:$0xff] %v1136
      %1419 = vst [vmem:[%s145 + $0x268] sm:$0xff] %v1139
      %1420 = vst [vmem:[%s145 + $0x270] sm:$0xff] %v1144
      %1421 = vst [vmem:[%s145 + $0x278] sm:$0xff] %v1147
      %1422 = vst [vmem:[%s145 + $0x280] sm:$0xff] %v1152
      %1423 = vst [vmem:[%s145 + $0x288] sm:$0xff] %v1155
      %1424 = vst [vmem:[%s145 + $0x290] sm:$0xff] %v1160
      %1425 = vst [vmem:[%s145 + $0x298] sm:$0xff] %v1163
      %1426 = vst [vmem:[%s145 + $0x2a0] sm:$0xff] %v1168
      %1427 = vst [vmem:[%s145 + $0x2a8] sm:$0xff] %v1171
      %1428 = vst [vmem:[%s145 + $0x2b0] sm:$0xff] %v1176
      %1429 = vst [vmem:[%s145 + $0x2b8] sm:$0xff] %v1179
      %1430 = vst [vmem:[%s145 + $0x2c0] sm:$0xff] %v1184
      %1431 = vst [vmem:[%s145 + $0x2c8] sm:$0xff] %v1187
      %1432 = vst [vmem:[%s145 + $0x2d0] sm:$0xff] %v1192
      %1433 = vst [vmem:[%s145 + $0x2d8] sm:$0xff] %v1195
      %1434 = vst [vmem:[%s145 + $0x2e0] sm:$0xff] %v1200
      %1435 = vst [vmem:[%s145 + $0x2e8] sm:$0xff] %v1203
      %1436 = vst [vmem:[%s145 + $0x2f0] sm:$0xff] %v1208
      %1437 = vst [vmem:[%s145 + $0x2f8] sm:$0xff] %v1211
      %1438 = vst [vmem:[%s145 + $0x300] sm:$0xff] %v1216
      %1439 = vst [vmem:[%s145 + $0x308] sm:$0xff] %v1219
      %1440 = vst [vmem:[%s145 + $0x310] sm:$0xff] %v1224
      %1441 = vst [vmem:[%s145 + $0x318] sm:$0xff] %v1227
      %1442 = vst [vmem:[%s145 + $0x320] sm:$0xff] %v1232
      %1443 = vst [vmem:[%s145 + $0x328] sm:$0xff] %v1235
      %1444 = vst [vmem:[%s145 + $0x330] sm:$0xff] %v1240
      %1445 = vst [vmem:[%s145 + $0x338] sm:$0xff] %v1243
      %1446 = vst [vmem:[%s145 + $0x340] sm:$0xff] %v1248
      %1447 = vst [vmem:[%s145 + $0x348] sm:$0xff] %v1251
      %1448 = vst [vmem:[%s145 + $0x350] sm:$0xff] %v1256
      %1449 = vst [vmem:[%s145 + $0x358] sm:$0xff] %v1259
      %1450 = vst [vmem:[%s145 + $0x360] sm:$0xff] %v1264
      %1451 = vst [vmem:[%s145 + $0x368] sm:$0xff] %v1267
      %1452 = vst [vmem:[%s145 + $0x370] sm:$0xff] %v1272
      %1453 = vst [vmem:[%s145 + $0x378] sm:$0xff] %v1275
      %1454 = vst [vmem:[%s145 + $0x380] sm:$0xff] %v1280
      %1455 = vst [vmem:[%s145 + $0x388] sm:$0xff] %v1283
      %1456 = vst [vmem:[%s145 + $0x390] sm:$0xff] %v1288
      %1457 = vst [vmem:[%s145 + $0x398] sm:$0xff] %v1291
      %1458 = vst [vmem:[%s145 + $0x3a0] sm:$0xff] %v1296
      %1459 = vst [vmem:[%s145 + $0x3a8] sm:$0xff] %v1299
      %1460 = vst [vmem:[%s145 + $0x3b0] sm:$0xff] %v1304
      %1461 = vst [vmem:[%s145 + $0x3b8] sm:$0xff] %v1307
      %1462 = vst [vmem:[%s145 + $0x3c0] sm:$0xff] %v1312
      %1463 = vst [vmem:[%s145 + $0x3c8] sm:$0xff] %v1315
      %1464 = vst [vmem:[%s145 + $0x3d0] sm:$0xff] %v1320
      %1465 = vst [vmem:[%s145 + $0x3d8] sm:$0xff] %v1323
      %1466 = vst [vmem:[%s145 + $0x3e0] sm:$0xff] %v1328
      %1467 = vst [vmem:[%s145 + $0x3e8] sm:$0xff] %v1331
      %1468 = vst [vmem:[%s145 + $0x3f0] sm:$0xff] %v1336
      %1469 = vst [vmem:[%s145 + $0x3f8] sm:$0xff] %v1339
      %s1470 = smul.u32 128, %s13
      %p1471 = scmp.lt.s32.totalorder %s1470, 255
      %s1472 = scalar_select %p1471, %s1470, 255
      %s1473 = smul.addr %s1472, 8
      %s1474 = scalar_lea.vmem %s2, %s1473
      // Predicated region
      $region29: #{generator_forward.18} parent=27 // pred_check
        %p1475 = pneg %p78
      $region30: #{generator_forward.18} parent=27 // pred_check_branch
        %1477 = sbr.rel (%p1475) target = $region32
      $region31: #{generator_forward.18} parent=27 // pred_region
        %s1478 = smul.u32 128, %s13
      $region32: #{generator_forward.18} parent=27 // pred_fallthru
        _
    $region28: #{generator_forward.18} parent=5 // pred_fallthru
      _
    %p1479 = scmp.le.s32.totalorder 2, %s8
    // Predicated region
    $region33: #{generator_forward.18} parent=5 // pred_check
      %p1480 = pneg %p1479
    $region34: #{generator_forward.18} parent=5 // pred_check_branch
      %1482 = sbr.rel (%p1480) target = $region36
    $region35: #{generator_forward.18} parent=5 // pred_region
      %s1483 = ssub.s32 %s8, 2
      // Predicated region
      $region37: #{generator_forward.18} parent=35 // pred_check
        %p1484 = pneg %p84
      $region38: #{generator_forward.18} parent=35 // pred_check_branch
        %1486 = sbr.rel (%p1484) target = $region40
      $region39: #{generator_forward.18} parent=35 // pred_region
        %s1487 = smul.u32 128, %s14
        %p1488 = scmp.lt.s32.totalorder %s1487, 255
        %s1489 = scalar_select %p1488, %s1487, 255
        %s1490 = smul.addr %s1489, 8
        %s1491 = scalar_lea.vmem %s2, %s1490
      $region40: #{generator_forward.18} parent=35 // pred_fallthru
        _
    $region36: #{generator_forward.18} parent=5 // pred_fallthru
      _
  $region6: #{generator_forward.18} parent=0 // loop_footer
    %s12 = sadd.s32 1, %s8
  $region7: #{generator_forward.18} parent=0 // loop_footer_branch
    %7 = sbr.rel target = $region3
  $region8: #{generator_forward.18} parent=0 // loop_exit
    _

// kernel: generator_forward.17
$region0: #{generator_forward.17}
  #allocation0 [shape = 'u32[]', space=smem, size = 0x4, offset = 0x4, fixed_abs, tag = 'smem constant byte address 0x4 - core index']
  #allocation1 [shape = 'u32[144,128]{1,0:T(1,128)}', space=vmem, size = 0x12000, scoped, tag = 'internal scratch']
  %s0 = inlined_call_operand.vmem [shape: f32[2048,16], index: 0, kind: input, shape index: {}]
  %s1 = inlined_call_operand.vmem [shape: f32[1,16], index: 1, kind: input, shape index: {}]
  %s2 = inlined_call_operand.vmem [shape: f32[1,16], index: 2, kind: input, shape index: {}]
  %s3 = inlined_call_operand.vmem [shape: bf16[2048,16], index: 3, kind: output, shape index: {}]
  %s4 = sld [smem:[#allocation0]]
  $region22: #{generator_forward.17} parent=0
    _
  %s6 = ssub.s32 1, %s4
  %s7 = scalar_select 0, %s6, %s4
  // Predicated region
  $region2: #{generator_forward.17} parent=0 // pred_check
    _
  $region3: #{generator_forward.17} parent=0 // pred_check_branch
    %9 = sbr.rel (0) target = $region5
  $region4: #{generator_forward.17} parent=0 // pred_region
    _
  $region5: #{generator_forward.17} parent=0 // pred_fallthru
    _
  // Predicated region
  $region6: #{generator_forward.17} parent=0 // pred_check
    _
  $region7: #{generator_forward.17} parent=0 // pred_check_branch
    %11 = sbr.rel (0) target = $region9
  $region8: #{generator_forward.17} parent=0 // pred_region
    _
  $region9: #{generator_forward.17} parent=0 // pred_fallthru
    _
  // Predicated region
  $region10: #{generator_forward.17} parent=0 // pred_check
    _
  $region11: #{generator_forward.17} parent=0 // pred_check_branch
    %13 = sbr.rel (0) target = $region13
  $region12: #{generator_forward.17} parent=0 // pred_region
    _
  $region13: #{generator_forward.17} parent=0 // pred_fallthru
    _
  %v14 = vld [vmem:[%s0] sm:$0xff]
  %v15 = vld [vmem:[%s0 + $0x8] sm:$0xff]
  %v16 = vld [vmem:[%s0 + $0x10] sm:$0xff]
  %v17 = vld [vmem:[%s0 + $0x18] sm:$0xff]
  %v18 = vld [vmem:[%s0 + $0x20] sm:$0xff]
  %v19 = vld [vmem:[%s0 + $0x28] sm:$0xff]
  %v20 = vld [vmem:[%s0 + $0x30] sm:$0xff]
  %v21 = vld [vmem:[%s0 + $0x38] sm:$0xff]
  %v22 = vld [vmem:[%s0 + $0x40] sm:$0xff]
  %v23 = vld [vmem:[%s0 + $0x48] sm:$0xff]
  %v24 = vld [vmem:[%s0 + $0x50] sm:$0xff]
  %v25 = vld [vmem:[%s0 + $0x58] sm:$0xff]
  %v26 = vld [vmem:[%s0 + $0x60] sm:$0xff]
  %v27 = vld [vmem:[%s0 + $0x68] sm:$0xff]
  %v28 = vld [vmem:[%s0 + $0x70] sm:$0xff]
  %v29 = vld [vmem:[%s0 + $0x78] sm:$0xff]
  %v30 = vld [vmem:[%s0 + $0x80] sm:$0xff]
  %v31 = vld [vmem:[%s0 + $0x88] sm:$0xff]
  %v32 = vld [vmem:[%s0 + $0x90] sm:$0xff]
  %v33 = vld [vmem:[%s0 + $0x98] sm:$0xff]
  %v34 = vld [vmem:[%s0 + $0xa0] sm:$0xff]
  %v35 = vld [vmem:[%s0 + $0xa8] sm:$0xff]
  %v36 = vld [vmem:[%s0 + $0xb0] sm:$0xff]
  %v37 = vld [vmem:[%s0 + $0xb8] sm:$0xff]
  %v38 = vld [vmem:[%s0 + $0xc0] sm:$0xff]
  %v39 = vld [vmem:[%s0 + $0xc8] sm:$0xff]
  %v40 = vld [vmem:[%s0 + $0xd0] sm:$0xff]
  %v41 = vld [vmem:[%s0 + $0xd8] sm:$0xff]
  %v42 = vld [vmem:[%s0 + $0xe0] sm:$0xff]
  %v43 = vld [vmem:[%s0 + $0xe8] sm:$0xff]
  %v44 = vld [vmem:[%s0 + $0xf0] sm:$0xff]
  %v45 = vld [vmem:[%s0 + $0xf8] sm:$0xff]
  %v46 = vld [vmem:[%s0 + $0x100] sm:$0xff]
  %v47 = vld [vmem:[%s0 + $0x108] sm:$0xff]
  %v48 = vld [vmem:[%s0 + $0x110] sm:$0xff]
  %v49 = vld [vmem:[%s0 + $0x118] sm:$0xff]
  %v50 = vld [vmem:[%s0 + $0x120] sm:$0xff]
  %v51 = vld [vmem:[%s0 + $0x128] sm:$0xff]
  %v52 = vld [vmem:[%s0 + $0x130] sm:$0xff]
  %v53 = vld [vmem:[%s0 + $0x138] sm:$0xff]
  %v54 = vld [vmem:[%s0 + $0x140] sm:$0xff]
  %v55 = vld [vmem:[%s0 + $0x148] sm:$0xff]
  %v56 = vld [vmem:[%s0 + $0x150] sm:$0xff]
  %v57 = vld [vmem:[%s0 + $0x158] sm:$0xff]
  %v58 = vld [vmem:[%s0 + $0x160] sm:$0xff]
  %v59 = vld [vmem:[%s0 + $0x168] sm:$0xff]
  %v60 = vld [vmem:[%s0 + $0x170] sm:$0xff]
  %v61 = vld [vmem:[%s0 + $0x178] sm:$0xff]
  %v62 = vld [vmem:[%s0 + $0x180] sm:$0xff]
  %v63 = vld [vmem:[%s0 + $0x188] sm:$0xff]
  %v64 = vld [vmem:[%s0 + $0x190] sm:$0xff]
  %v65 = vld [vmem:[%s0 + $0x198] sm:$0xff]
  %v66 = vld [vmem:[%s0 + $0x1a0] sm:$0xff]
  %v67 = vld [vmem:[%s0 + $0x1a8] sm:$0xff]
  %v68 = vld [vmem:[%s0 + $0x1b0] sm:$0xff]
  %v69 = vld [vmem:[%s0 + $0x1b8] sm:$0xff]
  %v70 = vld [vmem:[%s0 + $0x1c0] sm:$0xff]
  %v71 = vld [vmem:[%s0 + $0x1c8] sm:$0xff]
  %v72 = vld [vmem:[%s0 + $0x1d0] sm:$0xff]
  %v73 = vld [vmem:[%s0 + $0x1d8] sm:$0xff]
  %v74 = vld [vmem:[%s0 + $0x1e0] sm:$0xff]
  %v75 = vld [vmem:[%s0 + $0x1e8] sm:$0xff]
  %v76 = vld [vmem:[%s0 + $0x1f0] sm:$0xff]
  %v77 = vld [vmem:[%s0 + $0x1f8] sm:$0xff]
  %v78 = vld [vmem:[%s0 + $0x200] sm:$0xff]
  %v79 = vld [vmem:[%s0 + $0x208] sm:$0xff]
  %v80 = vld [vmem:[%s0 + $0x210] sm:$0xff]
  %v81 = vld [vmem:[%s0 + $0x218] sm:$0xff]
  %v82 = vld [vmem:[%s0 + $0x220] sm:$0xff]
  %v83 = vld [vmem:[%s0 + $0x228] sm:$0xff]
  %v84 = vld [vmem:[%s0 + $0x230] sm:$0xff]
  %v85 = vld [vmem:[%s0 + $0x238] sm:$0xff]
  %v86 = vld [vmem:[%s0 + $0x240] sm:$0xff]
  %v87 = vld [vmem:[%s0 + $0x248] sm:$0xff]
  %v88 = vld [vmem:[%s0 + $0x250] sm:$0xff]
  %v89 = vld [vmem:[%s0 + $0x258] sm:$0xff]
  %v90 = vld [vmem:[%s0 + $0x260] sm:$0xff]
  %v91 = vld [vmem:[%s0 + $0x268] sm:$0xff]
  %v92 = vld [vmem:[%s0 + $0x270] sm:$0xff]
  %v93 = vld [vmem:[%s0 + $0x278] sm:$0xff]
  %v94 = vld [vmem:[%s0 + $0x280] sm:$0xff]
  %v95 = vld [vmem:[%s0 + $0x288] sm:$0xff]
  %v96 = vld [vmem:[%s0 + $0x290] sm:$0xff]
  %v97 = vld [vmem:[%s0 + $0x298] sm:$0xff]
  %v98 = vld [vmem:[%s0 + $0x2a0] sm:$0xff]
  %v99 = vld [vmem:[%s0 + $0x2a8] sm:$0xff]
  %v100 = vld [vmem:[%s0 + $0x2b0] sm:$0xff]
  %v101 = vld [vmem:[%s0 + $0x2b8] sm:$0xff]
  %v102 = vld [vmem:[%s0 + $0x2c0] sm:$0xff]
  %v103 = vld [vmem:[%s0 + $0x2c8] sm:$0xff]
  %v104 = vld [vmem:[%s0 + $0x2d0] sm:$0xff]
  %v105 = vld [vmem:[%s0 + $0x2d8] sm:$0xff]
  %v106 = vld [vmem:[%s0 + $0x2e0] sm:$0xff]
  %v107 = vld [vmem:[%s0 + $0x2e8] sm:$0xff]
  %v108 = vld [vmem:[%s0 + $0x2f0] sm:$0xff]
  %v109 = vld [vmem:[%s0 + $0x2f8] sm:$0xff]
  %v110 = vld [vmem:[%s0 + $0x300] sm:$0xff]
  %v111 = vld [vmem:[%s0 + $0x308] sm:$0xff]
  %v112 = vld [vmem:[%s0 + $0x310] sm:$0xff]
  %v113 = vld [vmem:[%s0 + $0x318] sm:$0xff]
  %v114 = vld [vmem:[%s0 + $0x320] sm:$0xff]
  %v115 = vld [vmem:[%s0 + $0x328] sm:$0xff]
  %v116 = vld [vmem:[%s0 + $0x330] sm:$0xff]
  %v117 = vld [vmem:[%s0 + $0x338] sm:$0xff]
  %v118 = vld [vmem:[%s0 + $0x340] sm:$0xff]
  %v119 = vld [vmem:[%s0 + $0x348] sm:$0xff]
  %v120 = vld [vmem:[%s0 + $0x350] sm:$0xff]
  %v121 = vld [vmem:[%s0 + $0x358] sm:$0xff]
  %v122 = vld [vmem:[%s0 + $0x360] sm:$0xff]
  %v123 = vld [vmem:[%s0 + $0x368] sm:$0xff]
  %v124 = vld [vmem:[%s0 + $0x370] sm:$0xff]
  %v125 = vld [vmem:[%s0 + $0x378] sm:$0xff]
  %v126 = vld [vmem:[%s0 + $0x380] sm:$0xff]
  %v127 = vld [vmem:[%s0 + $0x388] sm:$0xff]
  %v128 = vld [vmem:[%s0 + $0x390] sm:$0xff]
  %v129 = vld [vmem:[%s0 + $0x398] sm:$0xff]
  %v130 = vld [vmem:[%s0 + $0x3a0] sm:$0xff]
  %v131 = vld [vmem:[%s0 + $0x3a8] sm:$0xff]
  %v132 = vld [vmem:[%s0 + $0x3b0] sm:$0xff]
  %v133 = vld [vmem:[%s0 + $0x3b8] sm:$0xff]
  %v134 = vld [vmem:[%s0 + $0x3c0] sm:$0xff]
  %v135 = vld [vmem:[%s0 + $0x3c8] sm:$0xff]
  %v136 = vld [vmem:[%s0 + $0x3d0] sm:$0xff]
  %v137 = vld [vmem:[%s0 + $0x3d8] sm:$0xff]
  %v138 = vld [vmem:[%s0 + $0x3e0] sm:$0xff]
  %v139 = vld [vmem:[%s0 + $0x3e8] sm:$0xff]
  %v140 = vld [vmem:[%s0 + $0x3f0] sm:$0xff]
  %v141 = vld [vmem:[%s0 + $0x3f8] sm:$0xff]
  %v142 = vld [vmem:[%s0 + $0x400] sm:$0xff]
  %v143 = vld [vmem:[%s0 + $0x408] sm:$0xff]
  %v144 = vld [vmem:[%s0 + $0x410] sm:$0xff]
  %v145 = vld [vmem:[%s0 + $0x418] sm:$0xff]
  %v146 = vld [vmem:[%s0 + $0x420] sm:$0xff]
  %v147 = vld [vmem:[%s0 + $0x428] sm:$0xff]
  %v148 = vld [vmem:[%s0 + $0x430] sm:$0xff]
  %v149 = vld [vmem:[%s0 + $0x438] sm:$0xff]
  %v150 = vld [vmem:[%s0 + $0x440] sm:$0xff]
  %v151 = vld [vmem:[%s0 + $0x448] sm:$0xff]
  %v152 = vld [vmem:[%s0 + $0x450] sm:$0xff]
  %v153 = vld [vmem:[%s0 + $0x458] sm:$0xff]
  %v154 = vld [vmem:[%s0 + $0x460] sm:$0xff]
  %v155 = vld [vmem:[%s0 + $0x468] sm:$0xff]
  %v156 = vld [vmem:[%s0 + $0x470] sm:$0xff]
  %v157 = vld [vmem:[%s0 + $0x478] sm:$0xff]
  %v158 = vld [vmem:[%s0 + $0x480] sm:$0xff]
  %v159 = vld [vmem:[%s0 + $0x488] sm:$0xff]
  %v160 = vld [vmem:[%s0 + $0x490] sm:$0xff]
  %v161 = vld [vmem:[%s0 + $0x498] sm:$0xff]
  %v162 = vld [vmem:[%s0 + $0x4a0] sm:$0xff]
  %v163 = vld [vmem:[%s0 + $0x4a8] sm:$0xff]
  %v164 = vld [vmem:[%s0 + $0x4b0] sm:$0xff]
  %v165 = vld [vmem:[%s0 + $0x4b8] sm:$0xff]
  %v166 = vld [vmem:[%s0 + $0x4c0] sm:$0xff]
  %v167 = vld [vmem:[%s0 + $0x4c8] sm:$0xff]
  %v168 = vld [vmem:[%s0 + $0x4d0] sm:$0xff]
  %v169 = vld [vmem:[%s0 + $0x4d8] sm:$0xff]
  %v170 = vld [vmem:[%s0 + $0x4e0] sm:$0xff]
  %v171 = vld [vmem:[%s0 + $0x4e8] sm:$0xff]
  %v172 = vld [vmem:[%s0 + $0x4f0] sm:$0xff]
  %v173 = vld [vmem:[%s0 + $0x4f8] sm:$0xff]
  %v174 = vld [vmem:[%s0 + $0x500] sm:$0xff]
  %v175 = vld [vmem:[%s0 + $0x508] sm:$0xff]
  %v176 = vld [vmem:[%s0 + $0x510] sm:$0xff]
  %v177 = vld [vmem:[%s0 + $0x518] sm:$0xff]
  %v178 = vld [vmem:[%s0 + $0x520] sm:$0xff]
  %v179 = vld [vmem:[%s0 + $0x528] sm:$0xff]
  %v180 = vld [vmem:[%s0 + $0x530] sm:$0xff]
  %v181 = vld [vmem:[%s0 + $0x538] sm:$0xff]
  %v182 = vld [vmem:[%s0 + $0x540] sm:$0xff]
  %v183 = vld [vmem:[%s0 + $0x548] sm:$0xff]
  %v184 = vld [vmem:[%s0 + $0x550] sm:$0xff]
  %v185 = vld [vmem:[%s0 + $0x558] sm:$0xff]
  %v186 = vld [vmem:[%s0 + $0x560] sm:$0xff]
  %v187 = vld [vmem:[%s0 + $0x568] sm:$0xff]
  %v188 = vld [vmem:[%s0 + $0x570] sm:$0xff]
  %v189 = vld [vmem:[%s0 + $0x578] sm:$0xff]
  %v190 = vld [vmem:[%s0 + $0x580] sm:$0xff]
  %v191 = vld [vmem:[%s0 + $0x588] sm:$0xff]
  %v192 = vld [vmem:[%s0 + $0x590] sm:$0xff]
  %v193 = vld [vmem:[%s0 + $0x598] sm:$0xff]
  %v194 = vld [vmem:[%s0 + $0x5a0] sm:$0xff]
  %v195 = vld [vmem:[%s0 + $0x5a8] sm:$0xff]
  %v196 = vld [vmem:[%s0 + $0x5b0] sm:$0xff]
  %v197 = vld [vmem:[%s0 + $0x5b8] sm:$0xff]
  %v198 = vld [vmem:[%s0 + $0x5c0] sm:$0xff]
  %v199 = vld [vmem:[%s0 + $0x5c8] sm:$0xff]
  %v200 = vld [vmem:[%s0 + $0x5d0] sm:$0xff]
  %v201 = vld [vmem:[%s0 + $0x5d8] sm:$0xff]
  %v202 = vld [vmem:[%s0 + $0x5e0] sm:$0xff]
  %v203 = vld [vmem:[%s0 + $0x5e8] sm:$0xff]
  %v204 = vld [vmem:[%s0 + $0x5f0] sm:$0xff]
  %v205 = vld [vmem:[%s0 + $0x5f8] sm:$0xff]
  %v206 = vld [vmem:[%s0 + $0x600] sm:$0xff]
  %v207 = vld [vmem:[%s0 + $0x608] sm:$0xff]
  %v208 = vld [vmem:[%s0 + $0x610] sm:$0xff]
  %v209 = vld [vmem:[%s0 + $0x618] sm:$0xff]
  %v210 = vld [vmem:[%s0 + $0x620] sm:$0xff]
  %v211 = vld [vmem:[%s0 + $0x628] sm:$0xff]
  %v212 = vld [vmem:[%s0 + $0x630] sm:$0xff]
  %v213 = vld [vmem:[%s0 + $0x638] sm:$0xff]
  %v214 = vld [vmem:[%s0 + $0x640] sm:$0xff]
  %v215 = vld [vmem:[%s0 + $0x648] sm:$0xff]
  %v216 = vld [vmem:[%s0 + $0x650] sm:$0xff]
  %v217 = vld [vmem:[%s0 + $0x658] sm:$0xff]
  %v218 = vld [vmem:[%s0 + $0x660] sm:$0xff]
  %v219 = vld [vmem:[%s0 + $0x668] sm:$0xff]
  %v220 = vld [vmem:[%s0 + $0x670] sm:$0xff]
  %v221 = vld [vmem:[%s0 + $0x678] sm:$0xff]
  %v222 = vld [vmem:[%s0 + $0x680] sm:$0xff]
  %v223 = vld [vmem:[%s0 + $0x688] sm:$0xff]
  %v224 = vld [vmem:[%s0 + $0x690] sm:$0xff]
  %v225 = vld [vmem:[%s0 + $0x698] sm:$0xff]
  %v226 = vld [vmem:[%s0 + $0x6a0] sm:$0xff]
  %v227 = vld [vmem:[%s0 + $0x6a8] sm:$0xff]
  %v228 = vld [vmem:[%s0 + $0x6b0] sm:$0xff]
  %v229 = vld [vmem:[%s0 + $0x6b8] sm:$0xff]
  %v230 = vld [vmem:[%s0 + $0x6c0] sm:$0xff]
  %v231 = vld [vmem:[%s0 + $0x6c8] sm:$0xff]
  %v232 = vld [vmem:[%s0 + $0x6d0] sm:$0xff]
  %v233 = vld [vmem:[%s0 + $0x6d8] sm:$0xff]
  %v234 = vld [vmem:[%s0 + $0x6e0] sm:$0xff]
  %v235 = vld [vmem:[%s0 + $0x6e8] sm:$0xff]
  %v236 = vld [vmem:[%s0 + $0x6f0] sm:$0xff]
  %v237 = vld [vmem:[%s0 + $0x6f8] sm:$0xff]
  %v238 = vld [vmem:[%s0 + $0x700] sm:$0xff]
  %v239 = vld [vmem:[%s0 + $0x708] sm:$0xff]
  %v240 = vld [vmem:[%s0 + $0x710] sm:$0xff]
  %v241 = vld [vmem:[%s0 + $0x718] sm:$0xff]
  %v242 = vld [vmem:[%s0 + $0x720] sm:$0xff]
  %v243 = vld [vmem:[%s0 + $0x728] sm:$0xff]
  %v244 = vld [vmem:[%s0 + $0x730] sm:$0xff]
  %v245 = vld [vmem:[%s0 + $0x738] sm:$0xff]
  %v246 = vld [vmem:[%s0 + $0x740] sm:$0xff]
  %v247 = vld [vmem:[%s0 + $0x748] sm:$0xff]
  %v248 = vld [vmem:[%s0 + $0x750] sm:$0xff]
  %v249 = vld [vmem:[%s0 + $0x758] sm:$0xff]
  %v250 = vld [vmem:[%s0 + $0x760] sm:$0xff]
  %v251 = vld [vmem:[%s0 + $0x768] sm:$0xff]
  %v252 = vld [vmem:[%s0 + $0x770] sm:$0xff]
  %v253 = vld [vmem:[%s0 + $0x778] sm:$0xff]
  %v254 = vld [vmem:[%s0 + $0x780] sm:$0xff]
  %v255 = vld [vmem:[%s0 + $0x788] sm:$0xff]
  %v256 = vld [vmem:[%s0 + $0x790] sm:$0xff]
  %v257 = vld [vmem:[%s0 + $0x798] sm:$0xff]
  %v258 = vld [vmem:[%s0 + $0x7a0] sm:$0xff]
  %v259 = vld [vmem:[%s0 + $0x7a8] sm:$0xff]
  %v260 = vld [vmem:[%s0 + $0x7b0] sm:$0xff]
  %v261 = vld [vmem:[%s0 + $0x7b8] sm:$0xff]
  %v262 = vld [vmem:[%s0 + $0x7c0] sm:$0xff]
  %v263 = vld [vmem:[%s0 + $0x7c8] sm:$0xff]
  %v264 = vld [vmem:[%s0 + $0x7d0] sm:$0xff]
  %v265 = vld [vmem:[%s0 + $0x7d8] sm:$0xff]
  %v266 = vld [vmem:[%s0 + $0x7e0] sm:$0xff]
  %v267 = vld [vmem:[%s0 + $0x7e8] sm:$0xff]
  %v268 = vld [vmem:[%s0 + $0x7f0] sm:$0xff]
  %v269 = vld [vmem:[%s0 + $0x7f8] sm:$0xff]
  %vm270 = vcmask 130048
  %v271 = vsel %vm270, %v14, 0.0
  %v272 = vsel %vm270, %v15, 0.0
  %v273 = vadd.f32 %v271, %v272
  %v274 = vsel %vm270, %v16, 0.0
  %v275 = vadd.f32 %v273, %v274
  %v276 = vsel %vm270, %v17, 0.0
  %v277 = vadd.f32 %v275, %v276
  %v278 = vsel %vm270, %v18, 0.0
  %v279 = vadd.f32 %v277, %v278
  %v280 = vsel %vm270, %v19, 0.0
  %v281 = vadd.f32 %v279, %v280
  %v282 = vsel %vm270, %v20, 0.0
  %v283 = vadd.f32 %v281, %v282
  %v284 = vsel %vm270, %v21, 0.0
  %v285 = vadd.f32 %v283, %v284
  %v286 = vsel %vm270, %v22, 0.0
  %v287 = vadd.f32 %v285, %v286
  %v288 = vsel %vm270, %v23, 0.0
  %v289 = vadd.f32 %v287, %v288
  %v290 = vsel %vm270, %v24, 0.0
  %v291 = vadd.f32 %v289, %v290
  %v292 = vsel %vm270, %v25, 0.0
  %v293 = vadd.f32 %v291, %v292
  %v294 = vsel %vm270, %v26, 0.0
  %v295 = vadd.f32 %v293, %v294
  %v296 = vsel %vm270, %v27, 0.0
  %v297 = vadd.f32 %v295, %v296
  %v298 = vsel %vm270, %v28, 0.0
  %v299 = vadd.f32 %v297, %v298
  %v300 = vsel %vm270, %v29, 0.0
  %v301 = vadd.f32 %v299, %v300
  %v302 = vsel %vm270, %v30, 0.0
  %v303 = vadd.f32 %v301, %v302
  %v304 = vsel %vm270, %v31, 0.0
  %v305 = vadd.f32 %v303, %v304
  %v306 = vsel %vm270, %v32, 0.0
  %v307 = vadd.f32 %v305, %v306
  %v308 = vsel %vm270, %v33, 0.0
  %v309 = vadd.f32 %v307, %v308
  %v310 = vsel %vm270, %v34, 0.0
  %v311 = vadd.f32 %v309, %v310
  %v312 = vsel %vm270, %v35, 0.0
  %v313 = vadd.f32 %v311, %v312
  %v314 = vsel %vm270, %v36, 0.0
  %v315 = vadd.f32 %v313, %v314
  %v316 = vsel %vm270, %v37, 0.0
  %v317 = vadd.f32 %v315, %v316
  %v318 = vsel %vm270, %v38, 0.0
  %v319 = vadd.f32 %v317, %v318
  %v320 = vsel %vm270, %v39, 0.0
  %v321 = vadd.f32 %v319, %v320
  %v322 = vsel %vm270, %v40, 0.0
  %v323 = vadd.f32 %v321, %v322
  %v324 = vsel %vm270, %v41, 0.0
  %v325 = vadd.f32 %v323, %v324
  %v326 = vsel %vm270, %v42, 0.0
  %v327 = vadd.f32 %v325, %v326
  %v328 = vsel %vm270, %v43, 0.0
  %v329 = vadd.f32 %v327, %v328
  %v330 = vsel %vm270, %v44, 0.0
  %v331 = vadd.f32 %v329, %v330
  %v332 = vsel %vm270, %v45, 0.0
  %v333 = vadd.f32 %v331, %v332
  %v334 = vsel %vm270, %v46, 0.0
  %v335 = vadd.f32 %v333, %v334
  %v336 = vsel %vm270, %v47, 0.0
  %v337 = vadd.f32 %v335, %v336
  %v338 = vsel %vm270, %v48, 0.0
  %v339 = vadd.f32 %v337, %v338
  %v340 = vsel %vm270, %v49, 0.0
  %v341 = vadd.f32 %v339, %v340
  %v342 = vsel %vm270, %v50, 0.0
  %v343 = vadd.f32 %v341, %v342
  %v344 = vsel %vm270, %v51, 0.0
  %v345 = vadd.f32 %v343, %v344
  %v346 = vsel %vm270, %v52, 0.0
  %v347 = vadd.f32 %v345, %v346
  %v348 = vsel %vm270, %v53, 0.0
  %v349 = vadd.f32 %v347, %v348
  %v350 = vsel %vm270, %v54, 0.0
  %v351 = vadd.f32 %v349, %v350
  %v352 = vsel %vm270, %v55, 0.0
  %v353 = vadd.f32 %v351, %v352
  %v354 = vsel %vm270, %v56, 0.0
  %v355 = vadd.f32 %v353, %v354
  %v356 = vsel %vm270, %v57, 0.0
  %v357 = vadd.f32 %v355, %v356
  %v358 = vsel %vm270, %v58, 0.0
  %v359 = vadd.f32 %v357, %v358
  %v360 = vsel %vm270, %v59, 0.0
  %v361 = vadd.f32 %v359, %v360
  %v362 = vsel %vm270, %v60, 0.0
  %v363 = vadd.f32 %v361, %v362
  %v364 = vsel %vm270, %v61, 0.0
  %v365 = vadd.f32 %v363, %v364
  %v366 = vsel %vm270, %v62, 0.0
  %v367 = vadd.f32 %v365, %v366
  %v368 = vsel %vm270, %v63, 0.0
  %v369 = vadd.f32 %v367, %v368
  %v370 = vsel %vm270, %v64, 0.0
  %v371 = vadd.f32 %v369, %v370
  %v372 = vsel %vm270, %v65, 0.0
  %v373 = vadd.f32 %v371, %v372
  %v374 = vsel %vm270, %v66, 0.0
  %v375 = vadd.f32 %v373, %v374
  %v376 = vsel %vm270, %v67, 0.0
  %v377 = vadd.f32 %v375, %v376
  %v378 = vsel %vm270, %v68, 0.0
  %v379 = vadd.f32 %v377, %v378
  %v380 = vsel %vm270, %v69, 0.0
  %v381 = vadd.f32 %v379, %v380
  %v382 = vsel %vm270, %v70, 0.0
  %v383 = vadd.f32 %v381, %v382
  %v384 = vsel %vm270, %v71, 0.0
  %v385 = vadd.f32 %v383, %v384
  %v386 = vsel %vm270, %v72, 0.0
  %v387 = vadd.f32 %v385, %v386
  %v388 = vsel %vm270, %v73, 0.0
  %v389 = vadd.f32 %v387, %v388
  %v390 = vsel %vm270, %v74, 0.0
  %v391 = vadd.f32 %v389, %v390
  %v392 = vsel %vm270, %v75, 0.0
  %v393 = vadd.f32 %v391, %v392
  %v394 = vsel %vm270, %v76, 0.0
  %v395 = vadd.f32 %v393, %v394
  %v396 = vsel %vm270, %v77, 0.0
  %v397 = vadd.f32 %v395, %v396
  %v398 = vsel %vm270, %v78, 0.0
  %v399 = vadd.f32 %v397, %v398
  %v400 = vsel %vm270, %v79, 0.0
  %v401 = vadd.f32 %v399, %v400
  %v402 = vsel %vm270, %v80, 0.0
  %v403 = vadd.f32 %v401, %v402
  %v404 = vsel %vm270, %v81, 0.0
  %v405 = vadd.f32 %v403, %v404
  %v406 = vsel %vm270, %v82, 0.0
  %v407 = vadd.f32 %v405, %v406
  %v408 = vsel %vm270, %v83, 0.0
  %v409 = vadd.f32 %v407, %v408
  %v410 = vsel %vm270, %v84, 0.0
  %v411 = vadd.f32 %v409, %v410
  %v412 = vsel %vm270, %v85, 0.0
  %v413 = vadd.f32 %v411, %v412
  %v414 = vsel %vm270, %v86, 0.0
  %v415 = vadd.f32 %v413, %v414
  %v416 = vsel %vm270, %v87, 0.0
  %v417 = vadd.f32 %v415, %v416
  %v418 = vsel %vm270, %v88, 0.0
  %v419 = vadd.f32 %v417, %v418
  %v420 = vsel %vm270, %v89, 0.0
  %v421 = vadd.f32 %v419, %v420
  %v422 = vsel %vm270, %v90, 0.0
  %v423 = vadd.f32 %v421, %v422
  %v424 = vsel %vm270, %v91, 0.0
  %v425 = vadd.f32 %v423, %v424
  %v426 = vsel %vm270, %v92, 0.0
  %v427 = vadd.f32 %v425, %v426
  %v428 = vsel %vm270, %v93, 0.0
  %v429 = vadd.f32 %v427, %v428
  %v430 = vsel %vm270, %v94, 0.0
  %v431 = vadd.f32 %v429, %v430
  %v432 = vsel %vm270, %v95, 0.0
  %v433 = vadd.f32 %v431, %v432
  %v434 = vsel %vm270, %v96, 0.0
  %v435 = vadd.f32 %v433, %v434
  %v436 = vsel %vm270, %v97, 0.0
  %v437 = vadd.f32 %v435, %v436
  %v438 = vsel %vm270, %v98, 0.0
  %v439 = vadd.f32 %v437, %v438
  %v440 = vsel %vm270, %v99, 0.0
  %v441 = vadd.f32 %v439, %v440
  %v442 = vsel %vm270, %v100, 0.0
  %v443 = vadd.f32 %v441, %v442
  %v444 = vsel %vm270, %v101, 0.0
  %v445 = vadd.f32 %v443, %v444
  %v446 = vsel %vm270, %v102, 0.0
  %v447 = vadd.f32 %v445, %v446
  %v448 = vsel %vm270, %v103, 0.0
  %v449 = vadd.f32 %v447, %v448
  %v450 = vsel %vm270, %v104, 0.0
  %v451 = vadd.f32 %v449, %v450
  %v452 = vsel %vm270, %v105, 0.0
  %v453 = vadd.f32 %v451, %v452
  %v454 = vsel %vm270, %v106, 0.0
  %v455 = vadd.f32 %v453, %v454
  %v456 = vsel %vm270, %v107, 0.0
  %v457 = vadd.f32 %v455, %v456
  %v458 = vsel %vm270, %v108, 0.0
  %v459 = vadd.f32 %v457, %v458
  %v460 = vsel %vm270, %v109, 0.0
  %v461 = vadd.f32 %v459, %v460
  %v462 = vsel %vm270, %v110, 0.0
  %v463 = vadd.f32 %v461, %v462
  %v464 = vsel %vm270, %v111, 0.0
  %v465 = vadd.f32 %v463, %v464
  %v466 = vsel %vm270, %v112, 0.0
  %v467 = vadd.f32 %v465, %v466
  %v468 = vsel %vm270, %v113, 0.0
  %v469 = vadd.f32 %v467, %v468
  %v470 = vsel %vm270, %v114, 0.0
  %v471 = vadd.f32 %v469, %v470
  %v472 = vsel %vm270, %v115, 0.0
  %v473 = vadd.f32 %v471, %v472
  %v474 = vsel %vm270, %v116, 0.0
  %v475 = vadd.f32 %v473, %v474
  %v476 = vsel %vm270, %v117, 0.0
  %v477 = vadd.f32 %v475, %v476
  %v478 = vsel %vm270, %v118, 0.0
  %v479 = vadd.f32 %v477, %v478
  %v480 = vsel %vm270, %v119, 0.0
  %v481 = vadd.f32 %v479, %v480
  %v482 = vsel %vm270, %v120, 0.0
  %v483 = vadd.f32 %v481, %v482
  %v484 = vsel %vm270, %v121, 0.0
  %v485 = vadd.f32 %v483, %v484
  %v486 = vsel %vm270, %v122, 0.0
  %v487 = vadd.f32 %v485, %v486
  %v488 = vsel %vm270, %v123, 0.0
  %v489 = vadd.f32 %v487, %v488
  %v490 = vsel %vm270, %v124, 0.0
  %v491 = vadd.f32 %v489, %v490
  %v492 = vsel %vm270, %v125, 0.0
  %v493 = vadd.f32 %v491, %v492
  %v494 = vsel %vm270, %v126, 0.0
  %v495 = vadd.f32 %v493, %v494
  %v496 = vsel %vm270, %v127, 0.0
  %v497 = vadd.f32 %v495, %v496
  %v498 = vsel %vm270, %v128, 0.0
  %v499 = vadd.f32 %v497, %v498
  %v500 = vsel %vm270, %v129, 0.0
  %v501 = vadd.f32 %v499, %v500
  %v502 = vsel %vm270, %v130, 0.0
  %v503 = vadd.f32 %v501, %v502
  %v504 = vsel %vm270, %v131, 0.0
  %v505 = vadd.f32 %v503, %v504
  %v506 = vsel %vm270, %v132, 0.0
  %v507 = vadd.f32 %v505, %v506
  %v508 = vsel %vm270, %v133, 0.0
  %v509 = vadd.f32 %v507, %v508
  %v510 = vsel %vm270, %v134, 0.0
  %v511 = vadd.f32 %v509, %v510
  %v512 = vsel %vm270, %v135, 0.0
  %v513 = vadd.f32 %v511, %v512
  %v514 = vsel %vm270, %v136, 0.0
  %v515 = vadd.f32 %v513, %v514
  %v516 = vsel %vm270, %v137, 0.0
  %v517 = vadd.f32 %v515, %v516
  %v518 = vsel %vm270, %v138, 0.0
  %v519 = vadd.f32 %v517, %v518
  %v520 = vsel %vm270, %v139, 0.0
  %v521 = vadd.f32 %v519, %v520
  %v522 = vsel %vm270, %v140, 0.0
  %v523 = vadd.f32 %v521, %v522
  %v524 = vsel %vm270, %v141, 0.0
  %v525 = vadd.f32 %v523, %v524
  %v526 = vsel %vm270, %v142, 0.0
  %v527 = vadd.f32 %v525, %v526
  %v528 = vsel %vm270, %v143, 0.0
  %v529 = vadd.f32 %v527, %v528
  %v530 = vsel %vm270, %v144, 0.0
  %v531 = vadd.f32 %v529, %v530
  %v532 = vsel %vm270, %v145, 0.0
  %v533 = vadd.f32 %v531, %v532
  %v534 = vsel %vm270, %v146, 0.0
  %v535 = vadd.f32 %v533, %v534
  %v536 = vsel %vm270, %v147, 0.0
  %v537 = vadd.f32 %v535, %v536
  %v538 = vsel %vm270, %v148, 0.0
  %v539 = vadd.f32 %v537, %v538
  %v540 = vsel %vm270, %v149, 0.0
  %v541 = vadd.f32 %v539, %v540
  %v542 = vsel %vm270, %v150, 0.0
  %v543 = vadd.f32 %v541, %v542
  %v544 = vsel %vm270, %v151, 0.0
  %v545 = vadd.f32 %v543, %v544
  %v546 = vsel %vm270, %v152, 0.0
  %v547 = vadd.f32 %v545, %v546
  %v548 = vsel %vm270, %v153, 0.0
  %v549 = vadd.f32 %v547, %v548
  %v550 = vsel %vm270, %v154, 0.0
  %v551 = vadd.f32 %v549, %v550
  %v552 = vsel %vm270, %v155, 0.0
  %v553 = vadd.f32 %v551, %v552
  %v554 = vsel %vm270, %v156, 0.0
  %v555 = vadd.f32 %v553, %v554
  %v556 = vsel %vm270, %v157, 0.0
  %v557 = vadd.f32 %v555, %v556
  %v558 = vsel %vm270, %v158, 0.0
  %v559 = vadd.f32 %v557, %v558
  %v560 = vsel %vm270, %v159, 0.0
  %v561 = vadd.f32 %v559, %v560
  %v562 = vsel %vm270, %v160, 0.0
  %v563 = vadd.f32 %v561, %v562
  %v564 = vsel %vm270, %v161, 0.0
  %v565 = vadd.f32 %v563, %v564
  %v566 = vsel %vm270, %v162, 0.0
  %v567 = vadd.f32 %v565, %v566
  %v568 = vsel %vm270, %v163, 0.0
  %v569 = vadd.f32 %v567, %v568
  %v570 = vsel %vm270, %v164, 0.0
  %v571 = vadd.f32 %v569, %v570
  %v572 = vsel %vm270, %v165, 0.0
  %v573 = vadd.f32 %v571, %v572
  %v574 = vsel %vm270, %v166, 0.0
  %v575 = vadd.f32 %v573, %v574
  %v576 = vsel %vm270, %v167, 0.0
  %v577 = vadd.f32 %v575, %v576
  %v578 = vsel %vm270, %v168, 0.0
  %v579 = vadd.f32 %v577, %v578
  %v580 = vsel %vm270, %v169, 0.0
  %v581 = vadd.f32 %v579, %v580
  %v582 = vsel %vm270, %v170, 0.0
  %v583 = vadd.f32 %v581, %v582
  %v584 = vsel %vm270, %v171, 0.0
  %v585 = vadd.f32 %v583, %v584
  %v586 = vsel %vm270, %v172, 0.0
  %v587 = vadd.f32 %v585, %v586
  %v588 = vsel %vm270, %v173, 0.0
  %v589 = vadd.f32 %v587, %v588
  %v590 = vsel %vm270, %v174, 0.0
  %v591 = vadd.f32 %v589, %v590
  %v592 = vsel %vm270, %v175, 0.0
  %v593 = vadd.f32 %v591, %v592
  %v594 = vsel %vm270, %v176, 0.0
  %v595 = vadd.f32 %v593, %v594
  %v596 = vsel %vm270, %v177, 0.0
  %v597 = vadd.f32 %v595, %v596
  %v598 = vsel %vm270, %v178, 0.0
  %v599 = vadd.f32 %v597, %v598
  %v600 = vsel %vm270, %v179, 0.0
  %v601 = vadd.f32 %v599, %v600
  %v602 = vsel %vm270, %v180, 0.0
  %v603 = vadd.f32 %v601, %v602
  %v604 = vsel %vm270, %v181, 0.0
  %v605 = vadd.f32 %v603, %v604
  %v606 = vsel %vm270, %v182, 0.0
  %v607 = vadd.f32 %v605, %v606
  %v608 = vsel %vm270, %v183, 0.0
  %v609 = vadd.f32 %v607, %v608
  %v610 = vsel %vm270, %v184, 0.0
  %v611 = vadd.f32 %v609, %v610
  %v612 = vsel %vm270, %v185, 0.0
  %v613 = vadd.f32 %v611, %v612
  %v614 = vsel %vm270, %v186, 0.0
  %v615 = vadd.f32 %v613, %v614
  %v616 = vsel %vm270, %v187, 0.0
  %v617 = vadd.f32 %v615, %v616
  %v618 = vsel %vm270, %v188, 0.0
  %v619 = vadd.f32 %v617, %v618
  %v620 = vsel %vm270, %v189, 0.0
  %v621 = vadd.f32 %v619, %v620
  %v622 = vsel %vm270, %v190, 0.0
  %v623 = vadd.f32 %v621, %v622
  %v624 = vsel %vm270, %v191, 0.0
  %v625 = vadd.f32 %v623, %v624
  %v626 = vsel %vm270, %v192, 0.0
  %v627 = vadd.f32 %v625, %v626
  %v628 = vsel %vm270, %v193, 0.0
  %v629 = vadd.f32 %v627, %v628
  %v630 = vsel %vm270, %v194, 0.0
  %v631 = vadd.f32 %v629, %v630
  %v632 = vsel %vm270, %v195, 0.0
  %v633 = vadd.f32 %v631, %v632
  %v634 = vsel %vm270, %v196, 0.0
  %v635 = vadd.f32 %v633, %v634
  %v636 = vsel %vm270, %v197, 0.0
  %v637 = vadd.f32 %v635, %v636
  %v638 = vsel %vm270, %v198, 0.0
  %v639 = vadd.f32 %v637, %v638
  %v640 = vsel %vm270, %v199, 0.0
  %v641 = vadd.f32 %v639, %v640
  %v642 = vsel %vm270, %v200, 0.0
  %v643 = vadd.f32 %v641, %v642
  %v644 = vsel %vm270, %v201, 0.0
  %v645 = vadd.f32 %v643, %v644
  %v646 = vsel %vm270, %v202, 0.0
  %v647 = vadd.f32 %v645, %v646
  %v648 = vsel %vm270, %v203, 0.0
  %v649 = vadd.f32 %v647, %v648
  %v650 = vsel %vm270, %v204, 0.0
  %v651 = vadd.f32 %v649, %v650
  %v652 = vsel %vm270, %v205, 0.0
  %v653 = vadd.f32 %v651, %v652
  %v654 = vsel %vm270, %v206, 0.0
  %v655 = vadd.f32 %v653, %v654
  %v656 = vsel %vm270, %v207, 0.0
  %v657 = vadd.f32 %v655, %v656
  %v658 = vsel %vm270, %v208, 0.0
  %v659 = vadd.f32 %v657, %v658
  %v660 = vsel %vm270, %v209, 0.0
  %v661 = vadd.f32 %v659, %v660
  %v662 = vsel %vm270, %v210, 0.0
  %v663 = vadd.f32 %v661, %v662
  %v664 = vsel %vm270, %v211, 0.0
  %v665 = vadd.f32 %v663, %v664
  %v666 = vsel %vm270, %v212, 0.0
  %v667 = vadd.f32 %v665, %v666
  %v668 = vsel %vm270, %v213, 0.0
  %v669 = vadd.f32 %v667, %v668
  %v670 = vsel %vm270, %v214, 0.0
  %v671 = vadd.f32 %v669, %v670
  %v672 = vsel %vm270, %v215, 0.0
  %v673 = vadd.f32 %v671, %v672
  %v674 = vsel %vm270, %v216, 0.0
  %v675 = vadd.f32 %v673, %v674
  %v676 = vsel %vm270, %v217, 0.0
  %v677 = vadd.f32 %v675, %v676
  %v678 = vsel %vm270, %v218, 0.0
  %v679 = vadd.f32 %v677, %v678
  %v680 = vsel %vm270, %v219, 0.0
  %v681 = vadd.f32 %v679, %v680
  %v682 = vsel %vm270, %v220, 0.0
  %v683 = vadd.f32 %v681, %v682
  %v684 = vsel %vm270, %v221, 0.0
  %v685 = vadd.f32 %v683, %v684
  %v686 = vsel %vm270, %v222, 0.0
  %v687 = vadd.f32 %v685, %v686
  %v688 = vsel %vm270, %v223, 0.0
  %v689 = vadd.f32 %v687, %v688
  %v690 = vsel %vm270, %v224, 0.0
  %v691 = vadd.f32 %v689, %v690
  %v692 = vsel %vm270, %v225, 0.0
  %v693 = vadd.f32 %v691, %v692
  %v694 = vsel %vm270, %v226, 0.0
  %v695 = vadd.f32 %v693, %v694
  %v696 = vsel %vm270, %v227, 0.0
  %v697 = vadd.f32 %v695, %v696
  %v698 = vsel %vm270, %v228, 0.0
  %v699 = vadd.f32 %v697, %v698
  %v700 = vsel %vm270, %v229, 0.0
  %v701 = vadd.f32 %v699, %v700
  %v702 = vsel %vm270, %v230, 0.0
  %v703 = vadd.f32 %v701, %v702
  %v704 = vsel %vm270, %v231, 0.0
  %v705 = vadd.f32 %v703, %v704
  %v706 = vsel %vm270, %v232, 0.0
  %v707 = vadd.f32 %v705, %v706
  %v708 = vsel %vm270, %v233, 0.0
  %v709 = vadd.f32 %v707, %v708
  %v710 = vsel %vm270, %v234, 0.0
  %v711 = vadd.f32 %v709, %v710
  %v712 = vsel %vm270, %v235, 0.0
  %v713 = vadd.f32 %v711, %v712
  %v714 = vsel %vm270, %v236, 0.0
  %v715 = vadd.f32 %v713, %v714
  %v716 = vsel %vm270, %v237, 0.0
  %v717 = vadd.f32 %v715, %v716
  %v718 = vsel %vm270, %v238, 0.0
  %v719 = vadd.f32 %v717, %v718
  %v720 = vsel %vm270, %v239, 0.0
  %v721 = vadd.f32 %v719, %v720
  %v722 = vsel %vm270, %v240, 0.0
  %v723 = vadd.f32 %v721, %v722
  %v724 = vsel %vm270, %v241, 0.0
  %v725 = vadd.f32 %v723, %v724
  %v726 = vsel %vm270, %v242, 0.0
  %v727 = vadd.f32 %v725, %v726
  %v728 = vsel %vm270, %v243, 0.0
  %v729 = vadd.f32 %v727, %v728
  %v730 = vsel %vm270, %v244, 0.0
  %v731 = vadd.f32 %v729, %v730
  %v732 = vsel %vm270, %v245, 0.0
  %v733 = vadd.f32 %v731, %v732
  %v734 = vsel %vm270, %v246, 0.0
  %v735 = vadd.f32 %v733, %v734
  %v736 = vsel %vm270, %v247, 0.0
  %v737 = vadd.f32 %v735, %v736
  %v738 = vsel %vm270, %v248, 0.0
  %v739 = vadd.f32 %v737, %v738
  %v740 = vsel %vm270, %v249, 0.0
  %v741 = vadd.f32 %v739, %v740
  %v742 = vsel %vm270, %v250, 0.0
  %v743 = vadd.f32 %v741, %v742
  %v744 = vsel %vm270, %v251, 0.0
  %v745 = vadd.f32 %v743, %v744
  %v746 = vsel %vm270, %v252, 0.0
  %v747 = vadd.f32 %v745, %v746
  %v748 = vsel %vm270, %v253, 0.0
  %v749 = vadd.f32 %v747, %v748
  %v750 = vsel %vm270, %v254, 0.0
  %v751 = vadd.f32 %v749, %v750
  %v752 = vsel %vm270, %v255, 0.0
  %v753 = vadd.f32 %v751, %v752
  %v754 = vsel %vm270, %v256, 0.0
  %v755 = vadd.f32 %v753, %v754
  %v756 = vsel %vm270, %v257, 0.0
  %v757 = vadd.f32 %v755, %v756
  %v758 = vsel %vm270, %v258, 0.0
  %v759 = vadd.f32 %v757, %v758
  %v760 = vsel %vm270, %v259, 0.0
  %v761 = vadd.f32 %v759, %v760
  %v762 = vsel %vm270, %v260, 0.0
  %v763 = vadd.f32 %v761, %v762
  %v764 = vsel %vm270, %v261, 0.0
  %v765 = vadd.f32 %v763, %v764
  %v766 = vsel %vm270, %v262, 0.0
  %v767 = vadd.f32 %v765, %v766
  %v768 = vsel %vm270, %v263, 0.0
  %v769 = vadd.f32 %v767, %v768
  %v770 = vsel %vm270, %v264, 0.0
  %v771 = vadd.f32 %v769, %v770
  %v772 = vsel %vm270, %v265, 0.0
  %v773 = vadd.f32 %v771, %v772
  %v774 = vsel %vm270, %v266, 0.0
  %v775 = vadd.f32 %v773, %v774
  %v776 = vsel %vm270, %v267, 0.0
  %v777 = vadd.f32 %v775, %v776
  %v778 = vsel %vm270, %v268, 0.0
  %v779 = vadd.f32 %v777, %v778
  %v780 = vsel %vm270, %v269, 0.0
  %v781 = vadd.f32 %v779, %v780
  %v782 = vrot.slane %v781, 4
  %v783 = vadd.f32 %v781, %v782
  %v784 = vrot.slane %v783, 2
  %v785 = vadd.f32 %v783, %v784
  %v786 = vrot.slane %v785, 1
  %v787 = vadd.f32 %v785, %v786
  %v788 = vmul.f32 %v787, 0.00048828125
  %v789 = vsub.f32 %v14, %v788
  %v790 = vsub.f32 %v15, %v788
  %v791 = vsub.f32 %v16, %v788
  %v792 = vsub.f32 %v17, %v788
  %v793 = vsub.f32 %v18, %v788
  %v794 = vsub.f32 %v19, %v788
  %v795 = vsub.f32 %v20, %v788
  %v796 = vsub.f32 %v21, %v788
  %v797 = vsub.f32 %v22, %v788
  %v798 = vsub.f32 %v23, %v788
  %v799 = vsub.f32 %v24, %v788
  %v800 = vsub.f32 %v25, %v788
  %v801 = vsub.f32 %v26, %v788
  %v802 = vsub.f32 %v27, %v788
  %v803 = vsub.f32 %v28, %v788
  %v804 = vsub.f32 %v29, %v788
  %v805 = vsub.f32 %v30, %v788
  %v806 = vsub.f32 %v31, %v788
  %v807 = vsub.f32 %v32, %v788
  %v808 = vsub.f32 %v33, %v788
  %v809 = vsub.f32 %v34, %v788
  %v810 = vsub.f32 %v35, %v788
  %v811 = vsub.f32 %v36, %v788
  %v812 = vsub.f32 %v37, %v788
  %v813 = vsub.f32 %v38, %v788
  %v814 = vsub.f32 %v39, %v788
  %v815 = vsub.f32 %v40, %v788
  %v816 = vsub.f32 %v41, %v788
  %v817 = vsub.f32 %v42, %v788
  %v818 = vsub.f32 %v43, %v788
  %v819 = vsub.f32 %v44, %v788
  %v820 = vsub.f32 %v45, %v788
  %v821 = vsub.f32 %v46, %v788
  %v822 = vsub.f32 %v47, %v788
  %v823 = vsub.f32 %v48, %v788
  %v824 = vsub.f32 %v49, %v788
  %v825 = vsub.f32 %v50, %v788
  %v826 = vsub.f32 %v51, %v788
  %v827 = vsub.f32 %v52, %v788
  %v828 = vsub.f32 %v53, %v788
  %v829 = vsub.f32 %v54, %v788
  %v830 = vsub.f32 %v55, %v788
  %v831 = vsub.f32 %v56, %v788
  %v832 = vsub.f32 %v57, %v788
  %v833 = vsub.f32 %v58, %v788
  %v834 = vsub.f32 %v59, %v788
  %v835 = vsub.f32 %v60, %v788
  %v836 = vsub.f32 %v61, %v788
  %v837 = vsub.f32 %v62, %v788
  %v838 = vsub.f32 %v63, %v788
  %v839 = vsub.f32 %v64, %v788
  %v840 = vsub.f32 %v65, %v788
  %v841 = vsub.f32 %v66, %v788
  %v842 = vsub.f32 %v67, %v788
  %v843 = vsub.f32 %v68, %v788
  %v844 = vsub.f32 %v69, %v788
  %v845 = vsub.f32 %v70, %v788
  %v846 = vsub.f32 %v71, %v788
  %v847 = vsub.f32 %v72, %v788
  %v848 = vsub.f32 %v73, %v788
  %v849 = vsub.f32 %v74, %v788
  %v850 = vsub.f32 %v75, %v788
  %v851 = vsub.f32 %v76, %v788
  %v852 = vsub.f32 %v77, %v788
  %v853 = vsub.f32 %v78, %v788
  %v854 = vsub.f32 %v79, %v788
  %v855 = vsub.f32 %v80, %v788
  %v856 = vsub.f32 %v81, %v788
  %v857 = vsub.f32 %v82, %v788
  %v858 = vsub.f32 %v83, %v788
  %v859 = vsub.f32 %v84, %v788
  %v860 = vsub.f32 %v85, %v788
  %v861 = vsub.f32 %v86, %v788
  %v862 = vsub.f32 %v87, %v788
  %v863 = vsub.f32 %v88, %v788
  %v864 = vsub.f32 %v89, %v788
  %v865 = vsub.f32 %v90, %v788
  %v866 = vsub.f32 %v91, %v788
  %v867 = vsub.f32 %v92, %v788
  %v868 = vsub.f32 %v93, %v788
  %v869 = vsub.f32 %v94, %v788
  %v870 = vsub.f32 %v95, %v788
  %v871 = vsub.f32 %v96, %v788
  %v872 = vsub.f32 %v97, %v788
  %v873 = vsub.f32 %v98, %v788
  %v874 = vsub.f32 %v99, %v788
  %v875 = vsub.f32 %v100, %v788
  %v876 = vsub.f32 %v101, %v788
  %v877 = vsub.f32 %v102, %v788
  %v878 = vsub.f32 %v103, %v788
  %v879 = vsub.f32 %v104, %v788
  %v880 = vsub.f32 %v105, %v788
  %v881 = vsub.f32 %v106, %v788
  %v882 = vsub.f32 %v107, %v788
  %v883 = vsub.f32 %v108, %v788
  %v884 = vsub.f32 %v109, %v788
  %v885 = vsub.f32 %v110, %v788
  %v886 = vsub.f32 %v111, %v788
  %v887 = vsub.f32 %v112, %v788
  %v888 = vsub.f32 %v113, %v788
  %v889 = vsub.f32 %v114, %v788
  %v890 = vsub.f32 %v115, %v788
  %v891 = vsub.f32 %v116, %v788
  %v892 = vsub.f32 %v117, %v788
  %v893 = vsub.f32 %v118, %v788
  %v894 = vsub.f32 %v119, %v788
  %v895 = vsub.f32 %v120, %v788
  %v896 = vsub.f32 %v121, %v788
  %v897 = vsub.f32 %v122, %v788
  %v898 = vsub.f32 %v123, %v788
  %v899 = vsub.f32 %v124, %v788
  %v900 = vsub.f32 %v125, %v788
  %v901 = vsub.f32 %v126, %v788
  %v902 = vsub.f32 %v127, %v788
  %v903 = vsub.f32 %v128, %v788
  %v904 = vsub.f32 %v129, %v788
  %v905 = vsub.f32 %v130, %v788
  %v906 = vsub.f32 %v131, %v788
  %v907 = vsub.f32 %v132, %v788
  %v908 = vsub.f32 %v133, %v788
  %v909 = vsub.f32 %v134, %v788
  %v910 = vsub.f32 %v135, %v788
  %v911 = vsub.f32 %v136, %v788
  %v912 = vsub.f32 %v137, %v788
  %v913 = vsub.f32 %v138, %v788
  %v914 = vsub.f32 %v139, %v788
  %v915 = vsub.f32 %v140, %v788
  %v916 = vsub.f32 %v141, %v788
  %v917 = vsub.f32 %v142, %v788
  %v918 = vsub.f32 %v143, %v788
  %v919 = vsub.f32 %v144, %v788
  %v920 = vsub.f32 %v145, %v788
  %v921 = vsub.f32 %v146, %v788
  %v922 = vsub.f32 %v147, %v788
  %v923 = vsub.f32 %v148, %v788
  %v924 = vsub.f32 %v149, %v788
  %v925 = vsub.f32 %v150, %v788
  %v926 = vsub.f32 %v151, %v788
  %v927 = vsub.f32 %v152, %v788
  %v928 = vsub.f32 %v153, %v788
  %v929 = vsub.f32 %v154, %v788
  %v930 = vsub.f32 %v155, %v788
  %v931 = vsub.f32 %v156, %v788
  %v932 = vsub.f32 %v157, %v788
  %v933 = vsub.f32 %v158, %v788
  %v934 = vsub.f32 %v159, %v788
  %v935 = vsub.f32 %v160, %v788
  %v936 = vsub.f32 %v161, %v788
  %v937 = vsub.f32 %v162, %v788
  %v938 = vsub.f32 %v163, %v788
  %v939 = vsub.f32 %v164, %v788
  %v940 = vsub.f32 %v165, %v788
  %v941 = vsub.f32 %v166, %v788
  %v942 = vsub.f32 %v167, %v788
  %v943 = vsub.f32 %v168, %v788
  %v944 = vsub.f32 %v169, %v788
  %v945 = vsub.f32 %v170, %v788
  %v946 = vsub.f32 %v171, %v788
  %v947 = vsub.f32 %v172, %v788
  %v948 = vsub.f32 %v173, %v788
  %v949 = vsub.f32 %v174, %v788
  %v950 = vsub.f32 %v175, %v788
  %v951 = vsub.f32 %v176, %v788
  %v952 = vsub.f32 %v177, %v788
  %v953 = vsub.f32 %v178, %v788
  %v954 = vsub.f32 %v179, %v788
  %v955 = vsub.f32 %v180, %v788
  %v956 = vsub.f32 %v181, %v788
  %v957 = vsub.f32 %v182, %v788
  %v958 = vsub.f32 %v183, %v788
  %v959 = vsub.f32 %v184, %v788
  %v960 = vsub.f32 %v185, %v788
  %v961 = vsub.f32 %v186, %v788
  %v962 = vsub.f32 %v187, %v788
  %v963 = vsub.f32 %v188, %v788
  %v964 = vsub.f32 %v189, %v788
  %v965 = vsub.f32 %v190, %v788
  %v966 = vsub.f32 %v191, %v788
  %v967 = vsub.f32 %v192, %v788
  %v968 = vsub.f32 %v193, %v788
  %v969 = vsub.f32 %v194, %v788
  %v970 = vsub.f32 %v195, %v788
  %v971 = vsub.f32 %v196, %v788
  %v972 = vsub.f32 %v197, %v788
  %v973 = vsub.f32 %v198, %v788
  %v974 = vsub.f32 %v199, %v788
  %v975 = vsub.f32 %v200, %v788
  %v976 = vsub.f32 %v201, %v788
  %v977 = vsub.f32 %v202, %v788
  %v978 = vsub.f32 %v203, %v788
  %v979 = vsub.f32 %v204, %v788
  %v980 = vsub.f32 %v205, %v788
  %v981 = vsub.f32 %v206, %v788
  %v982 = vsub.f32 %v207, %v788
  %v983 = vsub.f32 %v208, %v788
  %v984 = vsub.f32 %v209, %v788
  %v985 = vsub.f32 %v210, %v788
  %v986 = vsub.f32 %v211, %v788
  %v987 = vsub.f32 %v212, %v788
  %v988 = vsub.f32 %v213, %v788
  %v989 = vsub.f32 %v214, %v788
  %v990 = vsub.f32 %v215, %v788
  %v991 = vsub.f32 %v216, %v788
  %v992 = vsub.f32 %v217, %v788
  %v993 = vsub.f32 %v218, %v788
  %v994 = vsub.f32 %v219, %v788
  %v995 = vsub.f32 %v220, %v788
  %v996 = vsub.f32 %v221, %v788
  %v997 = vsub.f32 %v222, %v788
  %v998 = vsub.f32 %v223, %v788
  %v999 = vsub.f32 %v224, %v788
  %v1000 = vsub.f32 %v225, %v788
  %v1001 = vsub.f32 %v226, %v788
  %v1002 = vsub.f32 %v227, %v788
  %v1003 = vsub.f32 %v228, %v788
  %v1004 = vsub.f32 %v229, %v788
  %v1005 = vsub.f32 %v230, %v788
  %v1006 = vsub.f32 %v231, %v788
  %v1007 = vsub.f32 %v232, %v788
  %v1008 = vsub.f32 %v233, %v788
  %v1009 = vsub.f32 %v234, %v788
  %v1010 = vsub.f32 %v235, %v788
  %v1011 = vsub.f32 %v236, %v788
  %v1012 = vsub.f32 %v237, %v788
  %v1013 = vsub.f32 %v238, %v788
  %v1014 = vsub.f32 %v239, %v788
  %v1015 = vsub.f32 %v240, %v788
  %v1016 = vsub.f32 %v241, %v788
  %v1017 = vsub.f32 %v242, %v788
  %v1018 = vsub.f32 %v243, %v788
  %v1019 = vsub.f32 %v244, %v788
  %v1020 = vsub.f32 %v245, %v788
  %v1021 = vsub.f32 %v246, %v788
  %v1022 = vsub.f32 %v247, %v788
  %v1023 = vsub.f32 %v248, %v788
  %v1024 = vsub.f32 %v249, %v788
  %v1025 = vsub.f32 %v250, %v788
  %v1026 = vsub.f32 %v251, %v788
  %v1027 = vsub.f32 %v252, %v788
  %v1028 = vsub.f32 %v253, %v788
  %v1029 = vsub.f32 %v254, %v788
  %v1030 = vsub.f32 %v255, %v788
  %v1031 = vsub.f32 %v256, %v788
  %v1032 = vsub.f32 %v257, %v788
  %v1033 = vsub.f32 %v258, %v788
  %v1034 = vsub.f32 %v259, %v788
  %v1035 = vsub.f32 %v260, %v788
  %v1036 = vsub.f32 %v261, %v788
  %v1037 = vsub.f32 %v262, %v788
  %v1038 = vsub.f32 %v263, %v788
  %v1039 = vsub.f32 %v264, %v788
  %v1040 = vsub.f32 %v265, %v788
  %v1041 = vsub.f32 %v266, %v788
  %v1042 = vsub.f32 %v267, %v788
  %v1043 = vsub.f32 %v268, %v788
  %v1044 = vsub.f32 %v269, %v788
  %v1045 = vmul.f32 %v789, %v789
  %v1046 = vmul.f32 %v790, %v790
  %v1047 = vmul.f32 %v791, %v791
  %v1048 = vmul.f32 %v792, %v792
  %v1049 = vmul.f32 %v793, %v793
  %v1050 = vmul.f32 %v794, %v794
  %v1051 = vmul.f32 %v795, %v795
  %v1052 = vmul.f32 %v796, %v796
  %v1053 = vmul.f32 %v797, %v797
  %v1054 = vmul.f32 %v798, %v798
  %v1055 = vmul.f32 %v799, %v799
  %v1056 = vmul.f32 %v800, %v800
  %v1057 = vmul.f32 %v801, %v801
  %v1058 = vmul.f32 %v802, %v802
  %v1059 = vmul.f32 %v803, %v803
  %v1060 = vmul.f32 %v804, %v804
  %v1061 = vmul.f32 %v805, %v805
  %v1062 = vmul.f32 %v806, %v806
  %v1063 = vmul.f32 %v807, %v807
  %v1064 = vmul.f32 %v808, %v808
  %v1065 = vmul.f32 %v809, %v809
  %v1066 = vmul.f32 %v810, %v810
  %v1067 = vmul.f32 %v811, %v811
  %v1068 = vmul.f32 %v812, %v812
  %v1069 = vmul.f32 %v813, %v813
  %v1070 = vmul.f32 %v814, %v814
  %v1071 = vmul.f32 %v815, %v815
  %v1072 = vmul.f32 %v816, %v816
  %v1073 = vmul.f32 %v817, %v817
  %v1074 = vmul.f32 %v818, %v818
  %v1075 = vmul.f32 %v819, %v819
  %v1076 = vmul.f32 %v820, %v820
  %v1077 = vmul.f32 %v821, %v821
  %v1078 = vmul.f32 %v822, %v822
  %v1079 = vmul.f32 %v823, %v823
  %v1080 = vmul.f32 %v824, %v824
  %v1081 = vmul.f32 %v825, %v825
  %v1082 = vmul.f32 %v826, %v826
  %v1083 = vmul.f32 %v827, %v827
  %v1084 = vmul.f32 %v828, %v828
  %v1085 = vmul.f32 %v829, %v829
  %v1086 = vmul.f32 %v830, %v830
  %v1087 = vmul.f32 %v831, %v831
  %v1088 = vmul.f32 %v832, %v832
  %v1089 = vmul.f32 %v833, %v833
  %v1090 = vmul.f32 %v834, %v834
  %v1091 = vmul.f32 %v835, %v835
  %v1092 = vmul.f32 %v836, %v836
  %v1093 = vmul.f32 %v837, %v837
  %v1094 = vmul.f32 %v838, %v838
  %v1095 = vmul.f32 %v839, %v839
  %v1096 = vmul.f32 %v840, %v840
  %v1097 = vmul.f32 %v841, %v841
  %v1098 = vmul.f32 %v842, %v842
  %v1099 = vmul.f32 %v843, %v843
  %v1100 = vmul.f32 %v844, %v844
  %v1101 = vmul.f32 %v845, %v845
  %v1102 = vmul.f32 %v846, %v846
  %v1103 = vmul.f32 %v847, %v847
  %v1104 = vmul.f32 %v848, %v848
  %v1105 = vmul.f32 %v849, %v849
  %v1106 = vmul.f32 %v850, %v850
  %v1107 = vmul.f32 %v851, %v851
  %v1108 = vmul.f32 %v852, %v852
  %v1109 = vmul.f32 %v853, %v853
  %v1110 = vmul.f32 %v854, %v854
  %v1111 = vmul.f32 %v855, %v855
  %v1112 = vmul.f32 %v856, %v856
  %v1113 = vmul.f32 %v857, %v857
  %v1114 = vmul.f32 %v858, %v858
  %v1115 = vmul.f32 %v859, %v859
  %v1116 = vmul.f32 %v860, %v860
  %v1117 = vmul.f32 %v861, %v861
  %v1118 = vmul.f32 %v862, %v862
  %v1119 = vmul.f32 %v863, %v863
  %v1120 = vmul.f32 %v864, %v864
  %v1121 = vmul.f32 %v865, %v865
  %v1122 = vmul.f32 %v866, %v866
  %v1123 = vmul.f32 %v867, %v867
  %v1124 = vmul.f32 %v868, %v868
  %v1125 = vmul.f32 %v869, %v869
  %v1126 = vmul.f32 %v870, %v870
  %v1127 = vmul.f32 %v871, %v871
  %v1128 = vmul.f32 %v872, %v872
  %v1129 = vmul.f32 %v873, %v873
  %v1130 = vmul.f32 %v874, %v874
  %v1131 = vmul.f32 %v875, %v875
  %v1132 = vmul.f32 %v876, %v876
  %v1133 = vmul.f32 %v877, %v877
  %v1134 = vmul.f32 %v878, %v878
  %v1135 = vmul.f32 %v879, %v879
  %v1136 = vmul.f32 %v880, %v880
  %v1137 = vmul.f32 %v881, %v881
  %v1138 = vmul.f32 %v882, %v882
  %v1139 = vmul.f32 %v883, %v883
  %v1140 = vmul.f32 %v884, %v884
  %v1141 = vmul.f32 %v885, %v885
  %v1142 = vmul.f32 %v886, %v886
  %v1143 = vmul.f32 %v887, %v887
  %v1144 = vmul.f32 %v888, %v888
  %v1145 = vmul.f32 %v889, %v889
  %v1146 = vmul.f32 %v890, %v890
  %v1147 = vmul.f32 %v891, %v891
  %v1148 = vmul.f32 %v892, %v892
  %v1149 = vmul.f32 %v893, %v893
  %v1150 = vmul.f32 %v894, %v894
  %v1151 = vmul.f32 %v895, %v895
  %v1152 = vmul.f32 %v896, %v896
  %v1153 = vmul.f32 %v897, %v897
  %v1154 = vmul.f32 %v898, %v898
  %v1155 = vmul.f32 %v899, %v899
  %v1156 = vmul.f32 %v900, %v900
  %v1157 = vmul.f32 %v901, %v901
  %v1158 = vmul.f32 %v902, %v902
  %v1159 = vmul.f32 %v903, %v903
  %v1160 = vmul.f32 %v904, %v904
  %v1161 = vmul.f32 %v905, %v905
  %v1162 = vmul.f32 %v906, %v906
  %v1163 = vmul.f32 %v907, %v907
  %v1164 = vmul.f32 %v908, %v908
  %v1165 = vmul.f32 %v909, %v909
  %v1166 = vmul.f32 %v910, %v910
  %v1167 = vmul.f32 %v911, %v911
  %v1168 = vmul.f32 %v912, %v912
  %v1169 = vmul.f32 %v913, %v913
  %v1170 = vmul.f32 %v914, %v914
  %v1171 = vmul.f32 %v915, %v915
  %v1172 = vmul.f32 %v916, %v916
  %v1173 = vmul.f32 %v917, %v917
  %v1174 = vmul.f32 %v918, %v918
  %v1175 = vmul.f32 %v919, %v919
  %v1176 = vmul.f32 %v920, %v920
  %v1177 = vmul.f32 %v921, %v921
  %v1178 = vmul.f32 %v922, %v922
  %v1179 = vmul.f32 %v923, %v923
  %v1180 = vmul.f32 %v924, %v924
  %v1181 = vmul.f32 %v925, %v925
  %v1182 = vmul.f32 %v926, %v926
  %v1183 = vmul.f32 %v927, %v927
  %v1184 = vmul.f32 %v928, %v928
  %v1185 = vmul.f32 %v929, %v929
  %v1186 = vmul.f32 %v930, %v930
  %v1187 = vmul.f32 %v931, %v931
  %v1188 = vmul.f32 %v932, %v932
  %v1189 = vmul.f32 %v933, %v933
  %v1190 = vmul.f32 %v934, %v934
  %v1191 = vmul.f32 %v935, %v935
  %v1192 = vmul.f32 %v936, %v936
  %v1193 = vmul.f32 %v937, %v937
  %v1194 = vmul.f32 %v938, %v938
  %v1195 = vmul.f32 %v939, %v939
  %v1196 = vmul.f32 %v940, %v940
  %v1197 = vmul.f32 %v941, %v941
  %v1198 = vmul.f32 %v942, %v942
  %v1199 = vmul.f32 %v943, %v943
  %v1200 = vmul.f32 %v944, %v944
  %v1201 = vmul.f32 %v945, %v945
  %v1202 = vmul.f32 %v946, %v946
  %v1203 = vmul.f32 %v947, %v947
  %v1204 = vmul.f32 %v948, %v948
  %v1205 = vmul.f32 %v949, %v949
  %v1206 = vmul.f32 %v950, %v950
  %v1207 = vmul.f32 %v951, %v951
  %v1208 = vmul.f32 %v952, %v952
  %v1209 = vmul.f32 %v953, %v953
  %v1210 = vmul.f32 %v954, %v954
  %v1211 = vmul.f32 %v955, %v955
  %v1212 = vmul.f32 %v956, %v956
  %v1213 = vmul.f32 %v957, %v957
  %v1214 = vmul.f32 %v958, %v958
  %v1215 = vmul.f32 %v959, %v959
  %v1216 = vmul.f32 %v960, %v960
  %v1217 = vmul.f32 %v961, %v961
  %v1218 = vmul.f32 %v962, %v962
  %v1219 = vmul.f32 %v963, %v963
  %v1220 = vmul.f32 %v964, %v964
  %v1221 = vmul.f32 %v965, %v965
  %v1222 = vmul.f32 %v966, %v966
  %v1223 = vmul.f32 %v967, %v967
  %v1224 = vmul.f32 %v968, %v968
  %v1225 = vmul.f32 %v969, %v969
  %v1226 = vmul.f32 %v970, %v970
  %v1227 = vmul.f32 %v971, %v971
  %v1228 = vmul.f32 %v972, %v972
  %v1229 = vmul.f32 %v973, %v973
  %v1230 = vmul.f32 %v974, %v974
  %v1231 = vmul.f32 %v975, %v975
  %v1232 = vmul.f32 %v976, %v976
  %v1233 = vmul.f32 %v977, %v977
  %v1234 = vmul.f32 %v978, %v978
  %v1235 = vmul.f32 %v979, %v979
  %v1236 = vmul.f32 %v980, %v980
  %v1237 = vmul.f32 %v981, %v981
  %v1238 = vmul.f32 %v982, %v982
  %v1239 = vmul.f32 %v983, %v983
  %v1240 = vmul.f32 %v984, %v984
  %v1241 = vmul.f32 %v985, %v985
  %v1242 = vmul.f32 %v986, %v986
  %v1243 = vmul.f32 %v987, %v987
  %v1244 = vmul.f32 %v988, %v988
  %v1245 = vmul.f32 %v989, %v989
  %v1246 = vmul.f32 %v990, %v990
  %v1247 = vmul.f32 %v991, %v991
  %v1248 = vmul.f32 %v992, %v992
  %v1249 = vmul.f32 %v993, %v993
  %v1250 = vmul.f32 %v994, %v994
  %v1251 = vmul.f32 %v995, %v995
  %v1252 = vmul.f32 %v996, %v996
  %v1253 = vmul.f32 %v997, %v997
  %v1254 = vmul.f32 %v998, %v998
  %v1255 = vmul.f32 %v999, %v999
  %v1256 = vmul.f32 %v1000, %v1000
  %v1257 = vmul.f32 %v1001, %v1001
  %v1258 = vmul.f32 %v1002, %v1002
  %v1259 = vmul.f32 %v1003, %v1003
  %v1260 = vmul.f32 %v1004, %v1004
  %v1261 = vmul.f32 %v1005, %v1005
  %v1262 = vmul.f32 %v1006, %v1006
  %v1263 = vmul.f32 %v1007, %v1007
  %v1264 = vmul.f32 %v1008, %v1008
  %v1265 = vmul.f32 %v1009, %v1009
  %v1266 = vmul.f32 %v1010, %v1010
  %v1267 = vmul.f32 %v1011, %v1011
  %v1268 = vmul.f32 %v1012, %v1012
  %v1269 = vmul.f32 %v1013, %v1013
  %v1270 = vmul.f32 %v1014, %v1014
  %v1271 = vmul.f32 %v1015, %v1015
  %v1272 = vmul.f32 %v1016, %v1016
  %v1273 = vmul.f32 %v1017, %v1017
  %v1274 = vmul.f32 %v1018, %v1018
  %v1275 = vmul.f32 %v1019, %v1019
  %v1276 = vmul.f32 %v1020, %v1020
  %v1277 = vmul.f32 %v1021, %v1021
  %v1278 = vmul.f32 %v1022, %v1022
  %v1279 = vmul.f32 %v1023, %v1023
  %v1280 = vmul.f32 %v1024, %v1024
  %v1281 = vmul.f32 %v1025, %v1025
  %v1282 = vmul.f32 %v1026, %v1026
  %v1283 = vmul.f32 %v1027, %v1027
  %v1284 = vmul.f32 %v1028, %v1028
  %v1285 = vmul.f32 %v1029, %v1029
  %v1286 = vmul.f32 %v1030, %v1030
  %v1287 = vmul.f32 %v1031, %v1031
  %v1288 = vmul.f32 %v1032, %v1032
  %v1289 = vmul.f32 %v1033, %v1033
  %v1290 = vmul.f32 %v1034, %v1034
  %v1291 = vmul.f32 %v1035, %v1035
  %v1292 = vmul.f32 %v1036, %v1036
  %v1293 = vmul.f32 %v1037, %v1037
  %v1294 = vmul.f32 %v1038, %v1038
  %v1295 = vmul.f32 %v1039, %v1039
  %v1296 = vmul.f32 %v1040, %v1040
  %v1297 = vmul.f32 %v1041, %v1041
  %v1298 = vmul.f32 %v1042, %v1042
  %v1299 = vmul.f32 %v1043, %v1043
  %v1300 = vmul.f32 %v1044, %v1044
  %v1301 = vsel %vm270, %v1045, 0.0
  %v1302 = vsel %vm270, %v1046, 0.0
  %v1303 = vadd.f32 %v1301, %v1302
  %v1304 = vsel %vm270, %v1047, 0.0
  %v1305 = vadd.f32 %v1303, %v1304
  %v1306 = vsel %vm270, %v1048, 0.0
  %v1307 = vadd.f32 %v1305, %v1306
  %v1308 = vsel %vm270, %v1049, 0.0
  %v1309 = vadd.f32 %v1307, %v1308
  %v1310 = vsel %vm270, %v1050, 0.0
  %v1311 = vadd.f32 %v1309, %v1310
  %v1312 = vsel %vm270, %v1051, 0.0
  %v1313 = vadd.f32 %v1311, %v1312
  %v1314 = vsel %vm270, %v1052, 0.0
  %v1315 = vadd.f32 %v1313, %v1314
  %v1316 = vsel %vm270, %v1053, 0.0
  %v1317 = vadd.f32 %v1315, %v1316
  %v1318 = vsel %vm270, %v1054, 0.0
  %v1319 = vadd.f32 %v1317, %v1318
  %v1320 = vsel %vm270, %v1055, 0.0
  %v1321 = vadd.f32 %v1319, %v1320
  %v1322 = vsel %vm270, %v1056, 0.0
  %v1323 = vadd.f32 %v1321, %v1322
  %v1324 = vsel %vm270, %v1057, 0.0
  %v1325 = vadd.f32 %v1323, %v1324
  %v1326 = vsel %vm270, %v1058, 0.0
  %v1327 = vadd.f32 %v1325, %v1326
  %v1328 = vsel %vm270, %v1059, 0.0
  %v1329 = vadd.f32 %v1327, %v1328
  %v1330 = vsel %vm270, %v1060, 0.0
  %v1331 = vadd.f32 %v1329, %v1330
  %v1332 = vsel %vm270, %v1061, 0.0
  %v1333 = vadd.f32 %v1331, %v1332
  %v1334 = vsel %vm270, %v1062, 0.0
  %v1335 = vadd.f32 %v1333, %v1334
  %v1336 = vsel %vm270, %v1063, 0.0
  %v1337 = vadd.f32 %v1335, %v1336
  %v1338 = vsel %vm270, %v1064, 0.0
  %v1339 = vadd.f32 %v1337, %v1338
  %v1340 = vsel %vm270, %v1065, 0.0
  %v1341 = vadd.f32 %v1339, %v1340
  %v1342 = vsel %vm270, %v1066, 0.0
  %v1343 = vadd.f32 %v1341, %v1342
  %v1344 = vsel %vm270, %v1067, 0.0
  %v1345 = vadd.f32 %v1343, %v1344
  %v1346 = vsel %vm270, %v1068, 0.0
  %v1347 = vadd.f32 %v1345, %v1346
  %v1348 = vsel %vm270, %v1069, 0.0
  %v1349 = vadd.f32 %v1347, %v1348
  %v1350 = vsel %vm270, %v1070, 0.0
  %v1351 = vadd.f32 %v1349, %v1350
  %v1352 = vsel %vm270, %v1071, 0.0
  %v1353 = vadd.f32 %v1351, %v1352
  %v1354 = vsel %vm270, %v1072, 0.0
  %v1355 = vadd.f32 %v1353, %v1354
  %v1356 = vsel %vm270, %v1073, 0.0
  %v1357 = vadd.f32 %v1355, %v1356
  %v1358 = vsel %vm270, %v1074, 0.0
  %v1359 = vadd.f32 %v1357, %v1358
  %v1360 = vsel %vm270, %v1075, 0.0
  %v1361 = vadd.f32 %v1359, %v1360
  %v1362 = vsel %vm270, %v1076, 0.0
  %v1363 = vadd.f32 %v1361, %v1362
  %v1364 = vsel %vm270, %v1077, 0.0
  %v1365 = vadd.f32 %v1363, %v1364
  %v1366 = vsel %vm270, %v1078, 0.0
  %v1367 = vadd.f32 %v1365, %v1366
  %v1368 = vsel %vm270, %v1079, 0.0
  %v1369 = vadd.f32 %v1367, %v1368
  %v1370 = vsel %vm270, %v1080, 0.0
  %v1371 = vadd.f32 %v1369, %v1370
  %v1372 = vsel %vm270, %v1081, 0.0
  %v1373 = vadd.f32 %v1371, %v1372
  %v1374 = vsel %vm270, %v1082, 0.0
  %v1375 = vadd.f32 %v1373, %v1374
  %v1376 = vsel %vm270, %v1083, 0.0
  %v1377 = vadd.f32 %v1375, %v1376
  %v1378 = vsel %vm270, %v1084, 0.0
  %v1379 = vadd.f32 %v1377, %v1378
  %v1380 = vsel %vm270, %v1085, 0.0
  %v1381 = vadd.f32 %v1379, %v1380
  %v1382 = vsel %vm270, %v1086, 0.0
  %v1383 = vadd.f32 %v1381, %v1382
  %v1384 = vsel %vm270, %v1087, 0.0
  %v1385 = vadd.f32 %v1383, %v1384
  %v1386 = vsel %vm270, %v1088, 0.0
  %v1387 = vadd.f32 %v1385, %v1386
  %v1388 = vsel %vm270, %v1089, 0.0
  %v1389 = vadd.f32 %v1387, %v1388
  %v1390 = vsel %vm270, %v1090, 0.0
  %v1391 = vadd.f32 %v1389, %v1390
  %v1392 = vsel %vm270, %v1091, 0.0
  %v1393 = vadd.f32 %v1391, %v1392
  %v1394 = vsel %vm270, %v1092, 0.0
  %v1395 = vadd.f32 %v1393, %v1394
  %v1396 = vsel %vm270, %v1093, 0.0
  %v1397 = vadd.f32 %v1395, %v1396
  %v1398 = vsel %vm270, %v1094, 0.0
  %v1399 = vadd.f32 %v1397, %v1398
  %v1400 = vsel %vm270, %v1095, 0.0
  %v1401 = vadd.f32 %v1399, %v1400
  %v1402 = vsel %vm270, %v1096, 0.0
  %v1403 = vadd.f32 %v1401, %v1402
  %v1404 = vsel %vm270, %v1097, 0.0
  %v1405 = vadd.f32 %v1403, %v1404
  %v1406 = vsel %vm270, %v1098, 0.0
  %v1407 = vadd.f32 %v1405, %v1406
  %v1408 = vsel %vm270, %v1099, 0.0
  %v1409 = vadd.f32 %v1407, %v1408
  %v1410 = vsel %vm270, %v1100, 0.0
  %v1411 = vadd.f32 %v1409, %v1410
  %v1412 = vsel %vm270, %v1101, 0.0
  %v1413 = vadd.f32 %v1411, %v1412
  %v1414 = vsel %vm270, %v1102, 0.0
  %v1415 = vadd.f32 %v1413, %v1414
  %v1416 = vsel %vm270, %v1103, 0.0
  %v1417 = vadd.f32 %v1415, %v1416
  %v1418 = vsel %vm270, %v1104, 0.0
  %v1419 = vadd.f32 %v1417, %v1418
  %v1420 = vsel %vm270, %v1105, 0.0
  %v1421 = vadd.f32 %v1419, %v1420
  %v1422 = vsel %vm270, %v1106, 0.0
  %v1423 = vadd.f32 %v1421, %v1422
  %v1424 = vsel %vm270, %v1107, 0.0
  %v1425 = vadd.f32 %v1423, %v1424
  %v1426 = vsel %vm270, %v1108, 0.0
  %v1427 = vadd.f32 %v1425, %v1426
  %v1428 = vsel %vm270, %v1109, 0.0
  %v1429 = vadd.f32 %v1427, %v1428
  %v1430 = vsel %vm270, %v1110, 0.0
  %v1431 = vadd.f32 %v1429, %v1430
  %v1432 = vsel %vm270, %v1111, 0.0
  %v1433 = vadd.f32 %v1431, %v1432
  %v1434 = vsel %vm270, %v1112, 0.0
  %v1435 = vadd.f32 %v1433, %v1434
  %v1436 = vsel %vm270, %v1113, 0.0
  %v1437 = vadd.f32 %v1435, %v1436
  %v1438 = vsel %vm270, %v1114, 0.0
  %v1439 = vadd.f32 %v1437, %v1438
  %v1440 = vsel %vm270, %v1115, 0.0
  %v1441 = vadd.f32 %v1439, %v1440
  %v1442 = vsel %vm270, %v1116, 0.0
  %v1443 = vadd.f32 %v1441, %v1442
  %v1444 = vsel %vm270, %v1117, 0.0
  %v1445 = vadd.f32 %v1443, %v1444
  %v1446 = vsel %vm270, %v1118, 0.0
  %v1447 = vadd.f32 %v1445, %v1446
  %v1448 = vsel %vm270, %v1119, 0.0
  %v1449 = vadd.f32 %v1447, %v1448
  %v1450 = vsel %vm270, %v1120, 0.0
  %v1451 = vadd.f32 %v1449, %v1450
  %v1452 = vsel %vm270, %v1121, 0.0
  %v1453 = vadd.f32 %v1451, %v1452
  %v1454 = vsel %vm270, %v1122, 0.0
  %v1455 = vadd.f32 %v1453, %v1454
  %v1456 = vsel %vm270, %v1123, 0.0
  %v1457 = vadd.f32 %v1455, %v1456
  %v1458 = vsel %vm270, %v1124, 0.0
  %v1459 = vadd.f32 %v1457, %v1458
  %v1460 = vsel %vm270, %v1125, 0.0
  %v1461 = vadd.f32 %v1459, %v1460
  %v1462 = vsel %vm270, %v1126, 0.0
  %v1463 = vadd.f32 %v1461, %v1462
  %v1464 = vsel %vm270, %v1127, 0.0
  %v1465 = vadd.f32 %v1463, %v1464
  %v1466 = vsel %vm270, %v1128, 0.0
  %v1467 = vadd.f32 %v1465, %v1466
  %v1468 = vsel %vm270, %v1129, 0.0
  %v1469 = vadd.f32 %v1467, %v1468
  %v1470 = vsel %vm270, %v1130, 0.0
  %v1471 = vadd.f32 %v1469, %v1470
  %v1472 = vsel %vm270, %v1131, 0.0
  %v1473 = vadd.f32 %v1471, %v1472
  %v1474 = vsel %vm270, %v1132, 0.0
  %v1475 = vadd.f32 %v1473, %v1474
  %v1476 = vsel %vm270, %v1133, 0.0
  %v1477 = vadd.f32 %v1475, %v1476
  %v1478 = vsel %vm270, %v1134, 0.0
  %v1479 = vadd.f32 %v1477, %v1478
  %v1480 = vsel %vm270, %v1135, 0.0
  %v1481 = vadd.f32 %v1479, %v1480
  %v1482 = vsel %vm270, %v1136, 0.0
  %v1483 = vadd.f32 %v1481, %v1482
  %v1484 = vsel %vm270, %v1137, 0.0
  %v1485 = vadd.f32 %v1483, %v1484
  %v1486 = vsel %vm270, %v1138, 0.0
  %v1487 = vadd.f32 %v1485, %v1486
  %v1488 = vsel %vm270, %v1139, 0.0
  %v1489 = vadd.f32 %v1487, %v1488
  %v1490 = vsel %vm270, %v1140, 0.0
  %v1491 = vadd.f32 %v1489, %v1490
  %v1492 = vsel %vm270, %v1141, 0.0
  %v1493 = vadd.f32 %v1491, %v1492
  %v1494 = vsel %vm270, %v1142, 0.0
  %v1495 = vadd.f32 %v1493, %v1494
  %v1496 = vsel %vm270, %v1143, 0.0
  %v1497 = vadd.f32 %v1495, %v1496
  %v1498 = vsel %vm270, %v1144, 0.0
  %v1499 = vadd.f32 %v1497, %v1498
  %v1500 = vsel %vm270, %v1145, 0.0
  %v1501 = vadd.f32 %v1499, %v1500
  %v1502 = vsel %vm270, %v1146, 0.0
  %v1503 = vadd.f32 %v1501, %v1502
  %v1504 = vsel %vm270, %v1147, 0.0
  %v1505 = vadd.f32 %v1503, %v1504
  %v1506 = vsel %vm270, %v1148, 0.0
  %v1507 = vadd.f32 %v1505, %v1506
  %v1508 = vsel %vm270, %v1149, 0.0
  %v1509 = vadd.f32 %v1507, %v1508
  %v1510 = vsel %vm270, %v1150, 0.0
  %v1511 = vadd.f32 %v1509, %v1510
  %v1512 = vsel %vm270, %v1151, 0.0
  %v1513 = vadd.f32 %v1511, %v1512
  %v1514 = vsel %vm270, %v1152, 0.0
  %v1515 = vadd.f32 %v1513, %v1514
  %v1516 = vsel %vm270, %v1153, 0.0
  %v1517 = vadd.f32 %v1515, %v1516
  %v1518 = vsel %vm270, %v1154, 0.0
  %v1519 = vadd.f32 %v1517, %v1518
  %v1520 = vsel %vm270, %v1155, 0.0
  %v1521 = vadd.f32 %v1519, %v1520
  %v1522 = vsel %vm270, %v1156, 0.0
  %v1523 = vadd.f32 %v1521, %v1522
  %v1524 = vsel %vm270, %v1157, 0.0
  %v1525 = vadd.f32 %v1523, %v1524
  %v1526 = vsel %vm270, %v1158, 0.0
  %v1527 = vadd.f32 %v1525, %v1526
  %v1528 = vsel %vm270, %v1159, 0.0
  %v1529 = vadd.f32 %v1527, %v1528
  %v1530 = vsel %vm270, %v1160, 0.0
  %v1531 = vadd.f32 %v1529, %v1530
  %v1532 = vsel %vm270, %v1161, 0.0
  %v1533 = vadd.f32 %v1531, %v1532
  %v1534 = vsel %vm270, %v1162, 0.0
  %v1535 = vadd.f32 %v1533, %v1534
  %v1536 = vsel %vm270, %v1163, 0.0
  %v1537 = vadd.f32 %v1535, %v1536
  %v1538 = vsel %vm270, %v1164, 0.0
  %v1539 = vadd.f32 %v1537, %v1538
  %v1540 = vsel %vm270, %v1165, 0.0
  %v1541 = vadd.f32 %v1539, %v1540
  %v1542 = vsel %vm270, %v1166, 0.0
  %v1543 = vadd.f32 %v1541, %v1542
  %v1544 = vsel %vm270, %v1167, 0.0
  %v1545 = vadd.f32 %v1543, %v1544
  %v1546 = vsel %vm270, %v1168, 0.0
  %v1547 = vadd.f32 %v1545, %v1546
  %v1548 = vsel %vm270, %v1169, 0.0
  %v1549 = vadd.f32 %v1547, %v1548
  %v1550 = vsel %vm270, %v1170, 0.0
  %v1551 = vadd.f32 %v1549, %v1550
  %v1552 = vsel %vm270, %v1171, 0.0
  %v1553 = vadd.f32 %v1551, %v1552
  %v1554 = vsel %vm270, %v1172, 0.0
  %v1555 = vadd.f32 %v1553, %v1554
  %v1556 = vsel %vm270, %v1173, 0.0
  %v1557 = vadd.f32 %v1555, %v1556
  %v1558 = vsel %vm270, %v1174, 0.0
  %v1559 = vadd.f32 %v1557, %v1558
  %v1560 = vsel %vm270, %v1175, 0.0
  %v1561 = vadd.f32 %v1559, %v1560
  %v1562 = vsel %vm270, %v1176, 0.0
  %v1563 = vadd.f32 %v1561, %v1562
  %v1564 = vsel %vm270, %v1177, 0.0
  %v1565 = vadd.f32 %v1563, %v1564
  %v1566 = vsel %vm270, %v1178, 0.0
  %v1567 = vadd.f32 %v1565, %v1566
  %v1568 = vsel %vm270, %v1179, 0.0
  %v1569 = vadd.f32 %v1567, %v1568
  %v1570 = vsel %vm270, %v1180, 0.0
  %v1571 = vadd.f32 %v1569, %v1570
  %v1572 = vsel %vm270, %v1181, 0.0
  %v1573 = vadd.f32 %v1571, %v1572
  %v1574 = vsel %vm270, %v1182, 0.0
  %v1575 = vadd.f32 %v1573, %v1574
  %v1576 = vsel %vm270, %v1183, 0.0
  %v1577 = vadd.f32 %v1575, %v1576
  %v1578 = vsel %vm270, %v1184, 0.0
  %v1579 = vadd.f32 %v1577, %v1578
  %v1580 = vsel %vm270, %v1185, 0.0
  %v1581 = vadd.f32 %v1579, %v1580
  %v1582 = vsel %vm270, %v1186, 0.0
  %v1583 = vadd.f32 %v1581, %v1582
  %v1584 = vsel %vm270, %v1187, 0.0
  %v1585 = vadd.f32 %v1583, %v1584
  %v1586 = vsel %vm270, %v1188, 0.0
  %v1587 = vadd.f32 %v1585, %v1586
  %v1588 = vsel %vm270, %v1189, 0.0
  %v1589 = vadd.f32 %v1587, %v1588
  %v1590 = vsel %vm270, %v1190, 0.0
  %v1591 = vadd.f32 %v1589, %v1590
  %v1592 = vsel %vm270, %v1191, 0.0
  %v1593 = vadd.f32 %v1591, %v1592
  %v1594 = vsel %vm270, %v1192, 0.0
  %v1595 = vadd.f32 %v1593, %v1594
  %v1596 = vsel %vm270, %v1193, 0.0
  %v1597 = vadd.f32 %v1595, %v1596
  %v1598 = vsel %vm270, %v1194, 0.0
  %v1599 = vadd.f32 %v1597, %v1598
  %v1600 = vsel %vm270, %v1195, 0.0
  %v1601 = vadd.f32 %v1599, %v1600
  %v1602 = vsel %vm270, %v1196, 0.0
  %v1603 = vadd.f32 %v1601, %v1602
  %v1604 = vsel %vm270, %v1197, 0.0
  %v1605 = vadd.f32 %v1603, %v1604
  %v1606 = vsel %vm270, %v1198, 0.0
  %v1607 = vadd.f32 %v1605, %v1606
  %v1608 = vsel %vm270, %v1199, 0.0
  %v1609 = vadd.f32 %v1607, %v1608
  %v1610 = vsel %vm270, %v1200, 0.0
  %v1611 = vadd.f32 %v1609, %v1610
  %v1612 = vsel %vm270, %v1201, 0.0
  %v1613 = vadd.f32 %v1611, %v1612
  %v1614 = vsel %vm270, %v1202, 0.0
  %v1615 = vadd.f32 %v1613, %v1614
  %v1616 = vsel %vm270, %v1203, 0.0
  %v1617 = vadd.f32 %v1615, %v1616
  %v1618 = vsel %vm270, %v1204, 0.0
  %v1619 = vadd.f32 %v1617, %v1618
  %v1620 = vsel %vm270, %v1205, 0.0
  %v1621 = vadd.f32 %v1619, %v1620
  %v1622 = vsel %vm270, %v1206, 0.0
  %v1623 = vadd.f32 %v1621, %v1622
  %v1624 = vsel %vm270, %v1207, 0.0
  %v1625 = vadd.f32 %v1623, %v1624
  %v1626 = vsel %vm270, %v1208, 0.0
  %v1627 = vadd.f32 %v1625, %v1626
  %v1628 = vsel %vm270, %v1209, 0.0
  %v1629 = vadd.f32 %v1627, %v1628
  %v1630 = vsel %vm270, %v1210, 0.0
  %v1631 = vadd.f32 %v1629, %v1630
  %v1632 = vsel %vm270, %v1211, 0.0
  %v1633 = vadd.f32 %v1631, %v1632
  %v1634 = vsel %vm270, %v1212, 0.0
  %v1635 = vadd.f32 %v1633, %v1634
  %v1636 = vsel %vm270, %v1213, 0.0
  %v1637 = vadd.f32 %v1635, %v1636
  %v1638 = vsel %vm270, %v1214, 0.0
  %v1639 = vadd.f32 %v1637, %v1638
  %v1640 = vsel %vm270, %v1215, 0.0
  %v1641 = vadd.f32 %v1639, %v1640
  %v1642 = vsel %vm270, %v1216, 0.0
  %v1643 = vadd.f32 %v1641, %v1642
  %v1644 = vsel %vm270, %v1217, 0.0
  %v1645 = vadd.f32 %v1643, %v1644
  %v1646 = vsel %vm270, %v1218, 0.0
  %v1647 = vadd.f32 %v1645, %v1646
  %v1648 = vsel %vm270, %v1219, 0.0
  %v1649 = vadd.f32 %v1647, %v1648
  %v1650 = vsel %vm270, %v1220, 0.0
  %v1651 = vadd.f32 %v1649, %v1650
  %v1652 = vsel %vm270, %v1221, 0.0
  %v1653 = vadd.f32 %v1651, %v1652
  %v1654 = vsel %vm270, %v1222, 0.0
  %v1655 = vadd.f32 %v1653, %v1654
  %v1656 = vsel %vm270, %v1223, 0.0
  %v1657 = vadd.f32 %v1655, %v1656
  %v1658 = vsel %vm270, %v1224, 0.0
  %v1659 = vadd.f32 %v1657, %v1658
  %v1660 = vsel %vm270, %v1225, 0.0
  %v1661 = vadd.f32 %v1659, %v1660
  %v1662 = vsel %vm270, %v1226, 0.0
  %v1663 = vadd.f32 %v1661, %v1662
  %v1664 = vsel %vm270, %v1227, 0.0
  %v1665 = vadd.f32 %v1663, %v1664
  %v1666 = vsel %vm270, %v1228, 0.0
  %v1667 = vadd.f32 %v1665, %v1666
  %v1668 = vsel %vm270, %v1229, 0.0
  %v1669 = vadd.f32 %v1667, %v1668
  %v1670 = vsel %vm270, %v1230, 0.0
  %v1671 = vadd.f32 %v1669, %v1670
  %v1672 = vsel %vm270, %v1231, 0.0
  %v1673 = vadd.f32 %v1671, %v1672
  %v1674 = vsel %vm270, %v1232, 0.0
  %v1675 = vadd.f32 %v1673, %v1674
  %v1676 = vsel %vm270, %v1233, 0.0
  %v1677 = vadd.f32 %v1675, %v1676
  %v1678 = vsel %vm270, %v1234, 0.0
  %v1679 = vadd.f32 %v1677, %v1678
  %v1680 = vsel %vm270, %v1235, 0.0
  %v1681 = vadd.f32 %v1679, %v1680
  %v1682 = vsel %vm270, %v1236, 0.0
  %v1683 = vadd.f32 %v1681, %v1682
  %v1684 = vsel %vm270, %v1237, 0.0
  %v1685 = vadd.f32 %v1683, %v1684
  %v1686 = vsel %vm270, %v1238, 0.0
  %v1687 = vadd.f32 %v1685, %v1686
  %v1688 = vsel %vm270, %v1239, 0.0
  %v1689 = vadd.f32 %v1687, %v1688
  %v1690 = vsel %vm270, %v1240, 0.0
  %v1691 = vadd.f32 %v1689, %v1690
  %v1692 = vsel %vm270, %v1241, 0.0
  %v1693 = vadd.f32 %v1691, %v1692
  %v1694 = vsel %vm270, %v1242, 0.0
  %v1695 = vadd.f32 %v1693, %v1694
  %v1696 = vsel %vm270, %v1243, 0.0
  %v1697 = vadd.f32 %v1695, %v1696
  %v1698 = vsel %vm270, %v1244, 0.0
  %v1699 = vadd.f32 %v1697, %v1698
  %v1700 = vsel %vm270, %v1245, 0.0
  %v1701 = vadd.f32 %v1699, %v1700
  %v1702 = vsel %vm270, %v1246, 0.0
  %v1703 = vadd.f32 %v1701, %v1702
  %v1704 = vsel %vm270, %v1247, 0.0
  %v1705 = vadd.f32 %v1703, %v1704
  %v1706 = vsel %vm270, %v1248, 0.0
  %v1707 = vadd.f32 %v1705, %v1706
  %v1708 = vsel %vm270, %v1249, 0.0
  %v1709 = vadd.f32 %v1707, %v1708
  %v1710 = vsel %vm270, %v1250, 0.0
  %v1711 = vadd.f32 %v1709, %v1710
  %v1712 = vsel %vm270, %v1251, 0.0
  %v1713 = vadd.f32 %v1711, %v1712
  %v1714 = vsel %vm270, %v1252, 0.0
  %v1715 = vadd.f32 %v1713, %v1714
  %v1716 = vsel %vm270, %v1253, 0.0
  %v1717 = vadd.f32 %v1715, %v1716
  %v1718 = vsel %vm270, %v1254, 0.0
  %v1719 = vadd.f32 %v1717, %v1718
  %v1720 = vsel %vm270, %v1255, 0.0
  %v1721 = vadd.f32 %v1719, %v1720
  %v1722 = vsel %vm270, %v1256, 0.0
  %v1723 = vadd.f32 %v1721, %v1722
  %v1724 = vsel %vm270, %v1257, 0.0
  %v1725 = vadd.f32 %v1723, %v1724
  %v1726 = vsel %vm270, %v1258, 0.0
  %v1727 = vadd.f32 %v1725, %v1726
  %v1728 = vsel %vm270, %v1259, 0.0
  %v1729 = vadd.f32 %v1727, %v1728
  %v1730 = vsel %vm270, %v1260, 0.0
  %v1731 = vadd.f32 %v1729, %v1730
  %v1732 = vsel %vm270, %v1261, 0.0
  %v1733 = vadd.f32 %v1731, %v1732
  %v1734 = vsel %vm270, %v1262, 0.0
  %v1735 = vadd.f32 %v1733, %v1734
  %v1736 = vsel %vm270, %v1263, 0.0
  %v1737 = vadd.f32 %v1735, %v1736
  %v1738 = vsel %vm270, %v1264, 0.0
  %v1739 = vadd.f32 %v1737, %v1738
  %v1740 = vsel %vm270, %v1265, 0.0
  %v1741 = vadd.f32 %v1739, %v1740
  %v1742 = vsel %vm270, %v1266, 0.0
  %v1743 = vadd.f32 %v1741, %v1742
  %v1744 = vsel %vm270, %v1267, 0.0
  %v1745 = vadd.f32 %v1743, %v1744
  %v1746 = vsel %vm270, %v1268, 0.0
  %v1747 = vadd.f32 %v1745, %v1746
  %v1748 = vsel %vm270, %v1269, 0.0
  %v1749 = vadd.f32 %v1747, %v1748
  %v1750 = vsel %vm270, %v1270, 0.0
  %v1751 = vadd.f32 %v1749, %v1750
  %v1752 = vsel %vm270, %v1271, 0.0
  %v1753 = vadd.f32 %v1751, %v1752
  %v1754 = vsel %vm270, %v1272, 0.0
  %v1755 = vadd.f32 %v1753, %v1754
  %v1756 = vsel %vm270, %v1273, 0.0
  %v1757 = vadd.f32 %v1755, %v1756
  %v1758 = vsel %vm270, %v1274, 0.0
  %v1759 = vadd.f32 %v1757, %v1758
  %v1760 = vsel %vm270, %v1275, 0.0
  %v1761 = vadd.f32 %v1759, %v1760
  %v1762 = vsel %vm270, %v1276, 0.0
  %v1763 = vadd.f32 %v1761, %v1762
  %v1764 = vsel %vm270, %v1277, 0.0
  %v1765 = vadd.f32 %v1763, %v1764
  %v1766 = vsel %vm270, %v1278, 0.0
  %v1767 = vadd.f32 %v1765, %v1766
  %v1768 = vsel %vm270, %v1279, 0.0
  %v1769 = vadd.f32 %v1767, %v1768
  %v1770 = vsel %vm270, %v1280, 0.0
  %v1771 = vadd.f32 %v1769, %v1770
  %v1772 = vsel %vm270, %v1281, 0.0
  %v1773 = vadd.f32 %v1771, %v1772
  %v1774 = vsel %vm270, %v1282, 0.0
  %v1775 = vadd.f32 %v1773, %v1774
  %v1776 = vsel %vm270, %v1283, 0.0
  %v1777 = vadd.f32 %v1775, %v1776
  %v1778 = vsel %vm270, %v1284, 0.0
  %v1779 = vadd.f32 %v1777, %v1778
  %v1780 = vsel %vm270, %v1285, 0.0
  %v1781 = vadd.f32 %v1779, %v1780
  %v1782 = vsel %vm270, %v1286, 0.0
  %v1783 = vadd.f32 %v1781, %v1782
  %v1784 = vsel %vm270, %v1287, 0.0
  %v1785 = vadd.f32 %v1783, %v1784
  %v1786 = vsel %vm270, %v1288, 0.0
  %v1787 = vadd.f32 %v1785, %v1786
  %v1788 = vsel %vm270, %v1289, 0.0
  %v1789 = vadd.f32 %v1787, %v1788
  %v1790 = vsel %vm270, %v1290, 0.0
  %v1791 = vadd.f32 %v1789, %v1790
  %v1792 = vsel %vm270, %v1291, 0.0
  %v1793 = vadd.f32 %v1791, %v1792
  %v1794 = vsel %vm270, %v1292, 0.0
  %v1795 = vadd.f32 %v1793, %v1794
  %v1796 = vsel %vm270, %v1293, 0.0
  %v1797 = vadd.f32 %v1795, %v1796
  %v1798 = vsel %vm270, %v1294, 0.0
  %v1799 = vadd.f32 %v1797, %v1798
  %v1800 = vsel %vm270, %v1295, 0.0
  %v1801 = vadd.f32 %v1799, %v1800
  %v1802 = vsel %vm270, %v1296, 0.0
  %v1803 = vadd.f32 %v1801, %v1802
  %v1804 = vsel %vm270, %v1297, 0.0
  %v1805 = vadd.f32 %v1803, %v1804
  %v1806 = vsel %vm270, %v1298, 0.0
  %v1807 = vadd.f32 %v1805, %v1806
  %v1808 = vsel %vm270, %v1299, 0.0
  %v1809 = vadd.f32 %v1807, %v1808
  %v1810 = vsel %vm270, %v1300, 0.0
  %v1811 = vadd.f32 %v1809, %v1810
  %v1812 = vrot.slane %v1811, 4
  %v1813 = vadd.f32 %v1811, %v1812
  %v1814 = vrot.slane %v1813, 2
  %v1815 = vadd.f32 %v1813, %v1814
  %v1816 = vrot.slane %v1815, 1
  %v1817 = vadd.f32 %v1815, %v1816
  %v1818 = vmul.f32 %v1817, 0.00048828125
  %v1819 = vadd.f32 %v1818, 1e-05
  %v1820 = vrsqrt.pop %v1819
  %v1821 = vld [vmem:[%s1] sm:$0x1]
  %v1822 = vmul.f32 %v1820, %v1821
  %v1823 = vlaneseq
  %v1824 = vshrl.u32 %v1823, 7
  %v1825 = vsub.s32 0, %v1824
  %v1826 = vrot.slane %v1822, %v1825
  %v1827 = vmul.f32 %v789, %v1826
  %v1828 = vmul.f32 %v790, %v1826
  %v1829 = vmul.f32 %v791, %v1826
  %v1830 = vmul.f32 %v792, %v1826
  %v1831 = vmul.f32 %v793, %v1826
  %v1832 = vmul.f32 %v794, %v1826
  %v1833 = vmul.f32 %v795, %v1826
  %v1834 = vmul.f32 %v796, %v1826
  %v1835 = vmul.f32 %v797, %v1826
  %v1836 = vmul.f32 %v798, %v1826
  %v1837 = vmul.f32 %v799, %v1826
  %v1838 = vmul.f32 %v800, %v1826
  %v1839 = vmul.f32 %v801, %v1826
  %v1840 = vmul.f32 %v802, %v1826
  %v1841 = vmul.f32 %v803, %v1826
  %v1842 = vmul.f32 %v804, %v1826
  %v1843 = vmul.f32 %v805, %v1826
  %v1844 = vmul.f32 %v806, %v1826
  %v1845 = vmul.f32 %v807, %v1826
  %v1846 = vmul.f32 %v808, %v1826
  %v1847 = vmul.f32 %v809, %v1826
  %v1848 = vmul.f32 %v810, %v1826
  %v1849 = vmul.f32 %v811, %v1826
  %v1850 = vmul.f32 %v812, %v1826
  %v1851 = vmul.f32 %v813, %v1826
  %v1852 = vmul.f32 %v814, %v1826
  %v1853 = vmul.f32 %v815, %v1826
  %v1854 = vmul.f32 %v816, %v1826
  %v1855 = vmul.f32 %v817, %v1826
  %v1856 = vmul.f32 %v818, %v1826
  %v1857 = vmul.f32 %v819, %v1826
  %v1858 = vmul.f32 %v820, %v1826
  %v1859 = vmul.f32 %v821, %v1826
  %v1860 = vmul.f32 %v822, %v1826
  %v1861 = vmul.f32 %v823, %v1826
  %v1862 = vmul.f32 %v824, %v1826
  %v1863 = vmul.f32 %v825, %v1826
  %v1864 = vmul.f32 %v826, %v1826
  %v1865 = vmul.f32 %v827, %v1826
  %v1866 = vmul.f32 %v828, %v1826
  %v1867 = vmul.f32 %v829, %v1826
  %v1868 = vmul.f32 %v830, %v1826
  %v1869 = vmul.f32 %v831, %v1826
  %v1870 = vmul.f32 %v832, %v1826
  %v1871 = vmul.f32 %v833, %v1826
  %v1872 = vmul.f32 %v834, %v1826
  %v1873 = vmul.f32 %v835, %v1826
  %v1874 = vmul.f32 %v836, %v1826
  %v1875 = vmul.f32 %v837, %v1826
  %v1876 = vmul.f32 %v838, %v1826
  %v1877 = vmul.f32 %v839, %v1826
  %v1878 = vmul.f32 %v840, %v1826
  %v1879 = vmul.f32 %v841, %v1826
  %v1880 = vmul.f32 %v842, %v1826
  %v1881 = vmul.f32 %v843, %v1826
  %v1882 = vmul.f32 %v844, %v1826
  %v1883 = vmul.f32 %v845, %v1826
  %v1884 = vmul.f32 %v846, %v1826
  %v1885 = vmul.f32 %v847, %v1826
  %v1886 = vmul.f32 %v848, %v1826
  %v1887 = vmul.f32 %v849, %v1826
  %v1888 = vmul.f32 %v850, %v1826
  %v1889 = vmul.f32 %v851, %v1826
  %v1890 = vmul.f32 %v852, %v1826
  %v1891 = vmul.f32 %v853, %v1826
  %v1892 = vmul.f32 %v854, %v1826
  %v1893 = vmul.f32 %v855, %v1826
  %v1894 = vmul.f32 %v856, %v1826
  %v1895 = vmul.f32 %v857, %v1826
  %v1896 = vmul.f32 %v858, %v1826
  %v1897 = vmul.f32 %v859, %v1826
  %v1898 = vmul.f32 %v860, %v1826
  %v1899 = vmul.f32 %v861, %v1826
  %v1900 = vmul.f32 %v862, %v1826
  %v1901 = vmul.f32 %v863, %v1826
  %v1902 = vmul.f32 %v864, %v1826
  %v1903 = vmul.f32 %v865, %v1826
  %v1904 = vmul.f32 %v866, %v1826
  %v1905 = vmul.f32 %v867, %v1826
  %v1906 = vmul.f32 %v868, %v1826
  %v1907 = vmul.f32 %v869, %v1826
  %v1908 = vmul.f32 %v870, %v1826
  %v1909 = vmul.f32 %v871, %v1826
  %v1910 = vmul.f32 %v872, %v1826
  %v1911 = vmul.f32 %v873, %v1826
  %v1912 = vmul.f32 %v874, %v1826
  %v1913 = vmul.f32 %v875, %v1826
  %v1914 = vmul.f32 %v876, %v1826
  %v1915 = vmul.f32 %v877, %v1826
  %v1916 = vmul.f32 %v878, %v1826
  %v1917 = vmul.f32 %v879, %v1826
  %v1918 = vmul.f32 %v880, %v1826
  %v1919 = vmul.f32 %v881, %v1826
  %v1920 = vmul.f32 %v882, %v1826
  %v1921 = vmul.f32 %v883, %v1826
  %v1922 = vmul.f32 %v884, %v1826
  %v1923 = vmul.f32 %v885, %v1826
  %v1924 = vmul.f32 %v886, %v1826
  %v1925 = vmul.f32 %v887, %v1826
  %v1926 = vmul.f32 %v888, %v1826
  %v1927 = vmul.f32 %v889, %v1826
  %v1928 = vmul.f32 %v890, %v1826
  %v1929 = vmul.f32 %v891, %v1826
  %v1930 = vmul.f32 %v892, %v1826
  %v1931 = vmul.f32 %v893, %v1826
  %v1932 = vmul.f32 %v894, %v1826
  %v1933 = vmul.f32 %v895, %v1826
  %v1934 = vmul.f32 %v896, %v1826
  %v1935 = vmul.f32 %v897, %v1826
  %v1936 = vmul.f32 %v898, %v1826
  %v1937 = vmul.f32 %v899, %v1826
  %v1938 = vmul.f32 %v900, %v1826
  %v1939 = vmul.f32 %v901, %v1826
  %v1940 = vmul.f32 %v902, %v1826
  %v1941 = vmul.f32 %v903, %v1826
  %v1942 = vmul.f32 %v904, %v1826
  %v1943 = vmul.f32 %v905, %v1826
  %v1944 = vmul.f32 %v906, %v1826
  %v1945 = vmul.f32 %v907, %v1826
  %v1946 = vmul.f32 %v908, %v1826
  %v1947 = vmul.f32 %v909, %v1826
  %v1948 = vmul.f32 %v910, %v1826
  %v1949 = vmul.f32 %v911, %v1826
  %v1950 = vmul.f32 %v912, %v1826
  %v1951 = vmul.f32 %v913, %v1826
  %v1952 = vmul.f32 %v914, %v1826
  %v1953 = vmul.f32 %v915, %v1826
  %v1954 = vmul.f32 %v916, %v1826
  %v1955 = vmul.f32 %v917, %v1826
  %v1956 = vmul.f32 %v918, %v1826
  %v1957 = vmul.f32 %v919, %v1826
  %v1958 = vmul.f32 %v920, %v1826
  %v1959 = vmul.f32 %v921, %v1826
  %v1960 = vmul.f32 %v922, %v1826
  %v1961 = vmul.f32 %v923, %v1826
  %v1962 = vmul.f32 %v924, %v1826
  %v1963 = vmul.f32 %v925, %v1826
  %v1964 = vmul.f32 %v926, %v1826
  %v1965 = vmul.f32 %v927, %v1826
  %v1966 = vmul.f32 %v928, %v1826
  %v1967 = vmul.f32 %v929, %v1826
  %v1968 = vmul.f32 %v930, %v1826
  %v1969 = vmul.f32 %v931, %v1826
  %v1970 = vmul.f32 %v932, %v1826
  %v1971 = vmul.f32 %v933, %v1826
  %v1972 = vmul.f32 %v934, %v1826
  %v1973 = vmul.f32 %v935, %v1826
  %v1974 = vmul.f32 %v936, %v1826
  %v1975 = vmul.f32 %v937, %v1826
  %v1976 = vmul.f32 %v938, %v1826
  %v1977 = vmul.f32 %v939, %v1826
  %v1978 = vmul.f32 %v940, %v1826
  %v1979 = vmul.f32 %v941, %v1826
  %v1980 = vmul.f32 %v942, %v1826
  %v1981 = vmul.f32 %v943, %v1826
  %v1982 = vmul.f32 %v944, %v1826
  %v1983 = vmul.f32 %v945, %v1826
  %v1984 = vmul.f32 %v946, %v1826
  %v1985 = vmul.f32 %v947, %v1826
  %v1986 = vmul.f32 %v948, %v1826
  %v1987 = vmul.f32 %v949, %v1826
  %v1988 = vmul.f32 %v950, %v1826
  %v1989 = vmul.f32 %v951, %v1826
  %v1990 = vmul.f32 %v952, %v1826
  %v1991 = vmul.f32 %v953, %v1826
  %v1992 = vmul.f32 %v954, %v1826
  %v1993 = vmul.f32 %v955, %v1826
  %v1994 = vmul.f32 %v956, %v1826
  %v1995 = vmul.f32 %v957, %v1826
  %v1996 = vmul.f32 %v958, %v1826
  %v1997 = vmul.f32 %v959, %v1826
  %v1998 = vmul.f32 %v960, %v1826
  %v1999 = vmul.f32 %v961, %v1826
  %v2000 = vmul.f32 %v962, %v1826
  %v2001 = vmul.f32 %v963, %v1826
  %v2002 = vmul.f32 %v964, %v1826
  %v2003 = vmul.f32 %v965, %v1826
  %v2004 = vmul.f32 %v966, %v1826
  %v2005 = vmul.f32 %v967, %v1826
  %v2006 = vmul.f32 %v968, %v1826
  %v2007 = vmul.f32 %v969, %v1826
  %v2008 = vmul.f32 %v970, %v1826
  %v2009 = vmul.f32 %v971, %v1826
  %v2010 = vmul.f32 %v972, %v1826
  %v2011 = vmul.f32 %v973, %v1826
  %v2012 = vmul.f32 %v974, %v1826
  %v2013 = vmul.f32 %v975, %v1826
  %v2014 = vmul.f32 %v976, %v1826
  %v2015 = vmul.f32 %v977, %v1826
  %v2016 = vmul.f32 %v978, %v1826
  %v2017 = vmul.f32 %v979, %v1826
  %v2018 = vmul.f32 %v980, %v1826
  %v2019 = vmul.f32 %v981, %v1826
  %v2020 = vmul.f32 %v982, %v1826
  %v2021 = vmul.f32 %v983, %v1826
  %v2022 = vmul.f32 %v984, %v1826
  %v2023 = vmul.f32 %v985, %v1826
  %v2024 = vmul.f32 %v986, %v1826
  %v2025 = vmul.f32 %v987, %v1826
  %v2026 = vmul.f32 %v988, %v1826
  %v2027 = vmul.f32 %v989, %v1826
  %v2028 = vmul.f32 %v990, %v1826
  %v2029 = vmul.f32 %v991, %v1826
  %v2030 = vmul.f32 %v992, %v1826
  %v2031 = vmul.f32 %v993, %v1826
  %v2032 = vmul.f32 %v994, %v1826
  %v2033 = vmul.f32 %v995, %v1826
  %v2034 = vmul.f32 %v996, %v1826
  %v2035 = vmul.f32 %v997, %v1826
  %v2036 = vmul.f32 %v998, %v1826
  %v2037 = vmul.f32 %v999, %v1826
  %v2038 = vmul.f32 %v1000, %v1826
  %v2039 = vmul.f32 %v1001, %v1826
  %v2040 = vmul.f32 %v1002, %v1826
  %v2041 = vmul.f32 %v1003, %v1826
  %v2042 = vmul.f32 %v1004, %v1826
  %v2043 = vmul.f32 %v1005, %v1826
  %v2044 = vmul.f32 %v1006, %v1826
  %v2045 = vmul.f32 %v1007, %v1826
  %v2046 = vmul.f32 %v1008, %v1826
  %v2047 = vmul.f32 %v1009, %v1826
  %v2048 = vmul.f32 %v1010, %v1826
  %v2049 = vmul.f32 %v1011, %v1826
  %v2050 = vmul.f32 %v1012, %v1826
  %v2051 = vmul.f32 %v1013, %v1826
  %v2052 = vmul.f32 %v1014, %v1826
  %v2053 = vmul.f32 %v1015, %v1826
  %v2054 = vmul.f32 %v1016, %v1826
  %v2055 = vmul.f32 %v1017, %v1826
  %v2056 = vmul.f32 %v1018, %v1826
  %v2057 = vmul.f32 %v1019, %v1826
  %v2058 = vmul.f32 %v1020, %v1826
  %v2059 = vmul.f32 %v1021, %v1826
  %v2060 = vmul.f32 %v1022, %v1826
  %v2061 = vmul.f32 %v1023, %v1826
  %v2062 = vmul.f32 %v1024, %v1826
  %v2063 = vmul.f32 %v1025, %v1826
  %v2064 = vmul.f32 %v1026, %v1826
  %v2065 = vmul.f32 %v1027, %v1826
  %v2066 = vmul.f32 %v1028, %v1826
  %v2067 = vmul.f32 %v1029, %v1826
  %v2068 = vmul.f32 %v1030, %v1826
  %v2069 = vmul.f32 %v1031, %v1826
  %v2070 = vmul.f32 %v1032, %v1826
  %v2071 = vmul.f32 %v1033, %v1826
  %v2072 = vmul.f32 %v1034, %v1826
  %v2073 = vmul.f32 %v1035, %v1826
  %v2074 = vmul.f32 %v1036, %v1826
  %v2075 = vmul.f32 %v1037, %v1826
  %v2076 = vmul.f32 %v1038, %v1826
  %v2077 = vmul.f32 %v1039, %v1826
  %v2078 = vmul.f32 %v1040, %v1826
  %v2079 = vmul.f32 %v1041, %v1826
  %v2080 = vmul.f32 %v1042, %v1826
  %v2081 = vmul.f32 %v1043, %v1826
  %v2082 = vmul.f32 %v1044, %v1826
  %v2083 = vld [vmem:[%s2] sm:$0x1]
  %v2085 = vlaneseq
  %v2086 = vshrl.u32 %v2085, 7
  %v2087 = vsub.s32 0, %v2086
  %v2088 = vrot.slane %v2083, %v2087
  %v2090 = vadd.f32 %v1827, %v2088
  %v2091 = vadd.f32 %v1828, %v2088
  %v2092 = vadd.f32 %v1829, %v2088
  %v2093 = vadd.f32 %v1830, %v2088
  %v2094 = vadd.f32 %v1831, %v2088
  %v2095 = vadd.f32 %v1832, %v2088
  %v2096 = vadd.f32 %v1833, %v2088
  %v2097 = vadd.f32 %v1834, %v2088
  %v2098 = vadd.f32 %v1835, %v2088
  %v2099 = vadd.f32 %v1836, %v2088
  %v2100 = vadd.f32 %v1837, %v2088
  %v2101 = vadd.f32 %v1838, %v2088
  %v2102 = vadd.f32 %v1839, %v2088
  %v2103 = vadd.f32 %v1840, %v2088
  %v2104 = vadd.f32 %v1841, %v2088
  %v2105 = vadd.f32 %v1842, %v2088
  %v2106 = vadd.f32 %v1843, %v2088
  %v2107 = vadd.f32 %v1844, %v2088
  %v2108 = vadd.f32 %v1845, %v2088
  %v2109 = vadd.f32 %v1846, %v2088
  %v2110 = vadd.f32 %v1847, %v2088
  %v2111 = vadd.f32 %v1848, %v2088
  %v2112 = vadd.f32 %v1849, %v2088
  %v2113 = vadd.f32 %v1850, %v2088
  %v2114 = vadd.f32 %v1851, %v2088
  %v2115 = vadd.f32 %v1852, %v2088
  %v2116 = vadd.f32 %v1853, %v2088
  %v2117 = vadd.f32 %v1854, %v2088
  %v2118 = vadd.f32 %v1855, %v2088
  %v2119 = vadd.f32 %v1856, %v2088
  %v2120 = vadd.f32 %v1857, %v2088
  %v2121 = vadd.f32 %v1858, %v2088
  %v2122 = vadd.f32 %v1859, %v2088
  %v2123 = vadd.f32 %v1860, %v2088
  %v2124 = vadd.f32 %v1861, %v2088
  %v2125 = vadd.f32 %v1862, %v2088
  %v2126 = vadd.f32 %v1863, %v2088
  %v2127 = vadd.f32 %v1864, %v2088
  %v2128 = vadd.f32 %v1865, %v2088
  %v2129 = vadd.f32 %v1866, %v2088
  %v2130 = vadd.f32 %v1867, %v2088
  %v2131 = vadd.f32 %v1868, %v2088
  %v2132 = vadd.f32 %v1869, %v2088
  %v2133 = vadd.f32 %v1870, %v2088
  %v2134 = vadd.f32 %v1871, %v2088
  %v2135 = vadd.f32 %v1872, %v2088
  %v2136 = vadd.f32 %v1873, %v2088
  %v2137 = vadd.f32 %v1874, %v2088
  %v2138 = vadd.f32 %v1875, %v2088
  %v2139 = vadd.f32 %v1876, %v2088
  %v2140 = vadd.f32 %v1877, %v2088
  %v2141 = vadd.f32 %v1878, %v2088
  %v2142 = vadd.f32 %v1879, %v2088
  %v2143 = vadd.f32 %v1880, %v2088
  %v2144 = vadd.f32 %v1881, %v2088
  %v2145 = vadd.f32 %v1882, %v2088
  %v2146 = vadd.f32 %v1883, %v2088
  %v2147 = vadd.f32 %v1884, %v2088
  %v2148 = vadd.f32 %v1885, %v2088
  %v2149 = vadd.f32 %v1886, %v2088
  %v2150 = vadd.f32 %v1887, %v2088
  %v2151 = vadd.f32 %v1888, %v2088
  %v2152 = vadd.f32 %v1889, %v2088
  %v2153 = vadd.f32 %v1890, %v2088
  %v2154 = vadd.f32 %v1891, %v2088
  %v2155 = vadd.f32 %v1892, %v2088
  %v2156 = vadd.f32 %v1893, %v2088
  %v2157 = vadd.f32 %v1894, %v2088
  %v2158 = vadd.f32 %v1895, %v2088
  %v2159 = vadd.f32 %v1896, %v2088
  %v2160 = vadd.f32 %v1897, %v2088
  %v2161 = vadd.f32 %v1898, %v2088
  %v2162 = vadd.f32 %v1899, %v2088
  %v2163 = vadd.f32 %v1900, %v2088
  %v2164 = vadd.f32 %v1901, %v2088
  %v2165 = vadd.f32 %v1902, %v2088
  %v2166 = vadd.f32 %v1903, %v2088
  %v2167 = vadd.f32 %v1904, %v2088
  %v2168 = vadd.f32 %v1905, %v2088
  %v2169 = vadd.f32 %v1906, %v2088
  %v2170 = vadd.f32 %v1907, %v2088
  %v2171 = vadd.f32 %v1908, %v2088
  %v2172 = vadd.f32 %v1909, %v2088
  %v2173 = vadd.f32 %v1910, %v2088
  %v2174 = vadd.f32 %v1911, %v2088
  %v2175 = vadd.f32 %v1912, %v2088
  %v2176 = vadd.f32 %v1913, %v2088
  %v2177 = vadd.f32 %v1914, %v2088
  %v2178 = vadd.f32 %v1915, %v2088
  %v2179 = vadd.f32 %v1916, %v2088
  %v2180 = vadd.f32 %v1917, %v2088
  %v2181 = vadd.f32 %v1918, %v2088
  %v2182 = vadd.f32 %v1919, %v2088
  %v2183 = vadd.f32 %v1920, %v2088
  %v2184 = vadd.f32 %v1921, %v2088
  %v2185 = vadd.f32 %v1922, %v2088
  %v2186 = vadd.f32 %v1923, %v2088
  %v2187 = vadd.f32 %v1924, %v2088
  %v2188 = vadd.f32 %v1925, %v2088
  %v2189 = vadd.f32 %v1926, %v2088
  %v2190 = vadd.f32 %v1927, %v2088
  %v2191 = vadd.f32 %v1928, %v2088
  %v2192 = vadd.f32 %v1929, %v2088
  %v2193 = vadd.f32 %v1930, %v2088
  %v2194 = vadd.f32 %v1931, %v2088
  %v2195 = vadd.f32 %v1932, %v2088
  %v2196 = vadd.f32 %v1933, %v2088
  %v2197 = vadd.f32 %v1934, %v2088
  %v2198 = vadd.f32 %v1935, %v2088
  %v2199 = vadd.f32 %v1936, %v2088
  %v2200 = vadd.f32 %v1937, %v2088
  %v2201 = vadd.f32 %v1938, %v2088
  %v2202 = vadd.f32 %v1939, %v2088
  %v2203 = vadd.f32 %v1940, %v2088
  %v2204 = vadd.f32 %v1941, %v2088
  %v2205 = vadd.f32 %v1942, %v2088
  %v2206 = vadd.f32 %v1943, %v2088
  %v2207 = vadd.f32 %v1944, %v2088
  %v2208 = vadd.f32 %v1945, %v2088
  %v2209 = vadd.f32 %v1946, %v2088
  %v2210 = vadd.f32 %v1947, %v2088
  %v2211 = vadd.f32 %v1948, %v2088
  %v2212 = vadd.f32 %v1949, %v2088
  %v2213 = vadd.f32 %v1950, %v2088
  %v2214 = vadd.f32 %v1951, %v2088
  %v2215 = vadd.f32 %v1952, %v2088
  %v2216 = vadd.f32 %v1953, %v2088
  %v2217 = vadd.f32 %v1954, %v2088
  %v2218 = vadd.f32 %v1955, %v2088
  %v2219 = vadd.f32 %v1956, %v2088
  %v2220 = vadd.f32 %v1957, %v2088
  %v2221 = vadd.f32 %v1958, %v2088
  %v2222 = vadd.f32 %v1959, %v2088
  %v2223 = vadd.f32 %v1960, %v2088
  %v2224 = vadd.f32 %v1961, %v2088
  %v2225 = vadd.f32 %v1962, %v2088
  %v2226 = vadd.f32 %v1963, %v2088
  %v2227 = vadd.f32 %v1964, %v2088
  %v2228 = vadd.f32 %v1965, %v2088
  %v2229 = vadd.f32 %v1966, %v2088
  %v2230 = vadd.f32 %v1967, %v2088
  %v2231 = vadd.f32 %v1968, %v2088
  %v2232 = vadd.f32 %v1969, %v2088
  %v2233 = vadd.f32 %v1970, %v2088
  %v2234 = vadd.f32 %v1971, %v2088
  %v2235 = vadd.f32 %v1972, %v2088
  %v2236 = vadd.f32 %v1973, %v2088
  %v2237 = vadd.f32 %v1974, %v2088
  %v2238 = vadd.f32 %v1975, %v2088
  %v2239 = vadd.f32 %v1976, %v2088
  %v2240 = vadd.f32 %v1977, %v2088
  %v2241 = vadd.f32 %v1978, %v2088
  %v2242 = vadd.f32 %v1979, %v2088
  %v2243 = vadd.f32 %v1980, %v2088
  %v2244 = vadd.f32 %v1981, %v2088
  %v2245 = vadd.f32 %v1982, %v2088
  %v2246 = vadd.f32 %v1983, %v2088
  %v2247 = vadd.f32 %v1984, %v2088
  %v2248 = vadd.f32 %v1985, %v2088
  %v2249 = vadd.f32 %v1986, %v2088
  %v2250 = vadd.f32 %v1987, %v2088
  %v2251 = vadd.f32 %v1988, %v2088
  %v2252 = vadd.f32 %v1989, %v2088
  %v2253 = vadd.f32 %v1990, %v2088
  %v2254 = vadd.f32 %v1991, %v2088
  %v2255 = vadd.f32 %v1992, %v2088
  %v2256 = vadd.f32 %v1993, %v2088
  %v2257 = vadd.f32 %v1994, %v2088
  %v2258 = vadd.f32 %v1995, %v2088
  %v2259 = vadd.f32 %v1996, %v2088
  %v2260 = vadd.f32 %v1997, %v2088
  %v2261 = vadd.f32 %v1998, %v2088
  %v2262 = vadd.f32 %v1999, %v2088
  %v2263 = vadd.f32 %v2000, %v2088
  %v2264 = vadd.f32 %v2001, %v2088
  %v2265 = vadd.f32 %v2002, %v2088
  %v2266 = vadd.f32 %v2003, %v2088
  %v2267 = vadd.f32 %v2004, %v2088
  %v2268 = vadd.f32 %v2005, %v2088
  %v2269 = vadd.f32 %v2006, %v2088
  %v2270 = vadd.f32 %v2007, %v2088
  %v2271 = vadd.f32 %v2008, %v2088
  %v2272 = vadd.f32 %v2009, %v2088
  %v2273 = vadd.f32 %v2010, %v2088
  %v2274 = vadd.f32 %v2011, %v2088
  %v2275 = vadd.f32 %v2012, %v2088
  %v2276 = vadd.f32 %v2013, %v2088
  %v2277 = vadd.f32 %v2014, %v2088
  %v2278 = vadd.f32 %v2015, %v2088
  %v2279 = vadd.f32 %v2016, %v2088
  %v2280 = vadd.f32 %v2017, %v2088
  %v2281 = vadd.f32 %v2018, %v2088
  %v2282 = vadd.f32 %v2019, %v2088
  %v2283 = vadd.f32 %v2020, %v2088
  %v2284 = vadd.f32 %v2021, %v2088
  %v2285 = vadd.f32 %v2022, %v2088
  %v2286 = vadd.f32 %v2023, %v2088
  %v2287 = vadd.f32 %v2024, %v2088
  %v2288 = vadd.f32 %v2025, %v2088
  %v2289 = vadd.f32 %v2026, %v2088
  %v2290 = vadd.f32 %v2027, %v2088
  %v2291 = vadd.f32 %v2028, %v2088
  %v2292 = vadd.f32 %v2029, %v2088
  %v2293 = vadd.f32 %v2030, %v2088
  %v2294 = vadd.f32 %v2031, %v2088
  %v2295 = vadd.f32 %v2032, %v2088
  %v2296 = vadd.f32 %v2033, %v2088
  %v2297 = vadd.f32 %v2034, %v2088
  %v2298 = vadd.f32 %v2035, %v2088
  %v2299 = vadd.f32 %v2036, %v2088
  %v2300 = vadd.f32 %v2037, %v2088
  %v2301 = vadd.f32 %v2038, %v2088
  %v2302 = vadd.f32 %v2039, %v2088
  %v2303 = vadd.f32 %v2040, %v2088
  %v2304 = vadd.f32 %v2041, %v2088
  %v2305 = vadd.f32 %v2042, %v2088
  %v2306 = vadd.f32 %v2043, %v2088
  %v2307 = vadd.f32 %v2044, %v2088
  %v2308 = vadd.f32 %v2045, %v2088
  %v2309 = vadd.f32 %v2046, %v2088
  %v2310 = vadd.f32 %v2047, %v2088
  %v2311 = vadd.f32 %v2048, %v2088
  %v2312 = vadd.f32 %v2049, %v2088
  %v2313 = vadd.f32 %v2050, %v2088
  %v2314 = vadd.f32 %v2051, %v2088
  %v2315 = vadd.f32 %v2052, %v2088
  %v2316 = vadd.f32 %v2053, %v2088
  %v2317 = vadd.f32 %v2054, %v2088
  %v2318 = vadd.f32 %v2055, %v2088
  %v2319 = vadd.f32 %v2056, %v2088
  %v2320 = vadd.f32 %v2057, %v2088
  %v2321 = vadd.f32 %v2058, %v2088
  %v2322 = vadd.f32 %v2059, %v2088
  %v2323 = vadd.f32 %v2060, %v2088
  %v2324 = vadd.f32 %v2061, %v2088
  %v2325 = vadd.f32 %v2062, %v2088
  %v2326 = vadd.f32 %v2063, %v2088
  %v2327 = vadd.f32 %v2064, %v2088
  %v2328 = vadd.f32 %v2065, %v2088
  %v2329 = vadd.f32 %v2066, %v2088
  %v2330 = vadd.f32 %v2067, %v2088
  %v2331 = vadd.f32 %v2068, %v2088
  %v2332 = vadd.f32 %v2069, %v2088
  %v2333 = vadd.f32 %v2070, %v2088
  %v2334 = vadd.f32 %v2071, %v2088
  %v2335 = vadd.f32 %v2072, %v2088
  %v2336 = vadd.f32 %v2073, %v2088
  %v2337 = vadd.f32 %v2074, %v2088
  %v2338 = vadd.f32 %v2075, %v2088
  %v2339 = vadd.f32 %v2076, %v2088
  %v2340 = vadd.f32 %v2077, %v2088
  %v2341 = vadd.f32 %v2078, %v2088
  %v2342 = vadd.f32 %v2079, %v2088
  %v2343 = vadd.f32 %v2080, %v2088
  %v2344 = vadd.f32 %v2081, %v2088
  %v2345 = vadd.f32 %v2082, %v2088
  %v2346 = vmax.f32 %v2090, 0.0
  %v2347 = vmax.f32 %v2091, 0.0
  %v2348 = vmax.f32 %v2092, 0.0
  %v2349 = vmax.f32 %v2093, 0.0
  %v2350 = vmax.f32 %v2094, 0.0
  %v2351 = vmax.f32 %v2095, 0.0
  %v2352 = vmax.f32 %v2096, 0.0
  %v2353 = vmax.f32 %v2097, 0.0
  %v2354 = vmax.f32 %v2098, 0.0
  %v2355 = vmax.f32 %v2099, 0.0
  %v2356 = vmax.f32 %v2100, 0.0
  %v2357 = vmax.f32 %v2101, 0.0
  %v2358 = vmax.f32 %v2102, 0.0
  %v2359 = vmax.f32 %v2103, 0.0
  %v2360 = vmax.f32 %v2104, 0.0
  %v2361 = vmax.f32 %v2105, 0.0
  %v2362 = vmax.f32 %v2106, 0.0
  %v2363 = vmax.f32 %v2107, 0.0
  %v2364 = vmax.f32 %v2108, 0.0
  %v2365 = vmax.f32 %v2109, 0.0
  %v2366 = vmax.f32 %v2110, 0.0
  %v2367 = vmax.f32 %v2111, 0.0
  %v2368 = vmax.f32 %v2112, 0.0
  %v2369 = vmax.f32 %v2113, 0.0
  %v2370 = vmax.f32 %v2114, 0.0
  %v2371 = vmax.f32 %v2115, 0.0
  %v2372 = vmax.f32 %v2116, 0.0
  %v2373 = vmax.f32 %v2117, 0.0
  %v2374 = vmax.f32 %v2118, 0.0
  %v2375 = vmax.f32 %v2119, 0.0
  %v2376 = vmax.f32 %v2120, 0.0
  %v2377 = vmax.f32 %v2121, 0.0
  %v2378 = vmax.f32 %v2122, 0.0
  %v2379 = vmax.f32 %v2123, 0.0
  %v2380 = vmax.f32 %v2124, 0.0
  %v2381 = vmax.f32 %v2125, 0.0
  %v2382 = vmax.f32 %v2126, 0.0
  %v2383 = vmax.f32 %v2127, 0.0
  %v2384 = vmax.f32 %v2128, 0.0
  %v2385 = vmax.f32 %v2129, 0.0
  %v2386 = vmax.f32 %v2130, 0.0
  %v2387 = vmax.f32 %v2131, 0.0
  %v2388 = vmax.f32 %v2132, 0.0
  %v2389 = vmax.f32 %v2133, 0.0
  %v2390 = vmax.f32 %v2134, 0.0
  %v2391 = vmax.f32 %v2135, 0.0
  %v2392 = vmax.f32 %v2136, 0.0
  %v2393 = vmax.f32 %v2137, 0.0
  %v2394 = vmax.f32 %v2138, 0.0
  %v2395 = vmax.f32 %v2139, 0.0
  %v2396 = vmax.f32 %v2140, 0.0
  %v2397 = vmax.f32 %v2141, 0.0
  %v2398 = vmax.f32 %v2142, 0.0
  %v2399 = vmax.f32 %v2143, 0.0
  %v2400 = vmax.f32 %v2144, 0.0
  %v2401 = vmax.f32 %v2145, 0.0
  %v2402 = vmax.f32 %v2146, 0.0
  %v2403 = vmax.f32 %v2147, 0.0
  %v2404 = vmax.f32 %v2148, 0.0
  %v2405 = vmax.f32 %v2149, 0.0
  %v2406 = vmax.f32 %v2150, 0.0
  %v2407 = vmax.f32 %v2151, 0.0
  %v2408 = vmax.f32 %v2152, 0.0
  %v2409 = vmax.f32 %v2153, 0.0
  %v2410 = vmax.f32 %v2154, 0.0
  %v2411 = vmax.f32 %v2155, 0.0
  %v2412 = vmax.f32 %v2156, 0.0
  %v2413 = vmax.f32 %v2157, 0.0
  %v2414 = vmax.f32 %v2158, 0.0
  %v2415 = vmax.f32 %v2159, 0.0
  %v2416 = vmax.f32 %v2160, 0.0
  %v2417 = vmax.f32 %v2161, 0.0
  %v2418 = vmax.f32 %v2162, 0.0
  %v2419 = vmax.f32 %v2163, 0.0
  %v2420 = vmax.f32 %v2164, 0.0
  %v2421 = vmax.f32 %v2165, 0.0
  %v2422 = vmax.f32 %v2166, 0.0
  %v2423 = vmax.f32 %v2167, 0.0
  %v2424 = vmax.f32 %v2168, 0.0
  %v2425 = vmax.f32 %v2169, 0.0
  %v2426 = vmax.f32 %v2170, 0.0
  %v2427 = vmax.f32 %v2171, 0.0
  %v2428 = vmax.f32 %v2172, 0.0
  %v2429 = vmax.f32 %v2173, 0.0
  %v2430 = vmax.f32 %v2174, 0.0
  %v2431 = vmax.f32 %v2175, 0.0
  %v2432 = vmax.f32 %v2176, 0.0
  %v2433 = vmax.f32 %v2177, 0.0
  %v2434 = vmax.f32 %v2178, 0.0
  %v2435 = vmax.f32 %v2179, 0.0
  %v2436 = vmax.f32 %v2180, 0.0
  %v2437 = vmax.f32 %v2181, 0.0
  %v2438 = vmax.f32 %v2182, 0.0
  %v2439 = vmax.f32 %v2183, 0.0
  %v2440 = vmax.f32 %v2184, 0.0
  %v2441 = vmax.f32 %v2185, 0.0
  %v2442 = vmax.f32 %v2186, 0.0
  %v2443 = vmax.f32 %v2187, 0.0
  %v2444 = vmax.f32 %v2188, 0.0
  %v2445 = vmax.f32 %v2189, 0.0
  %v2446 = vmax.f32 %v2190, 0.0
  %v2447 = vmax.f32 %v2191, 0.0
  %v2448 = vmax.f32 %v2192, 0.0
  %v2449 = vmax.f32 %v2193, 0.0
  %v2450 = vmax.f32 %v2194, 0.0
  %v2451 = vmax.f32 %v2195, 0.0
  %v2452 = vmax.f32 %v2196, 0.0
  %v2453 = vmax.f32 %v2197, 0.0
  %v2454 = vmax.f32 %v2198, 0.0
  %v2455 = vmax.f32 %v2199, 0.0
  %v2456 = vmax.f32 %v2200, 0.0
  %v2457 = vmax.f32 %v2201, 0.0
  %v2458 = vmax.f32 %v2202, 0.0
  %v2459 = vmax.f32 %v2203, 0.0
  %v2460 = vmax.f32 %v2204, 0.0
  %v2461 = vmax.f32 %v2205, 0.0
  %v2462 = vmax.f32 %v2206, 0.0
  %v2463 = vmax.f32 %v2207, 0.0
  %v2464 = vmax.f32 %v2208, 0.0
  %v2465 = vmax.f32 %v2209, 0.0
  %v2466 = vmax.f32 %v2210, 0.0
  %v2467 = vmax.f32 %v2211, 0.0
  %v2468 = vmax.f32 %v2212, 0.0
  %v2469 = vmax.f32 %v2213, 0.0
  %v2470 = vmax.f32 %v2214, 0.0
  %v2471 = vmax.f32 %v2215, 0.0
  %v2472 = vmax.f32 %v2216, 0.0
  %v2473 = vmax.f32 %v2217, 0.0
  %v2474 = vmax.f32 %v2218, 0.0
  %v2475 = vmax.f32 %v2219, 0.0
  %v2476 = vmax.f32 %v2220, 0.0
  %v2477 = vmax.f32 %v2221, 0.0
  %v2478 = vmax.f32 %v2222, 0.0
  %v2479 = vmax.f32 %v2223, 0.0
  %v2480 = vmax.f32 %v2224, 0.0
  %v2481 = vmax.f32 %v2225, 0.0
  %v2482 = vmax.f32 %v2226, 0.0
  %v2483 = vmax.f32 %v2227, 0.0
  %v2484 = vmax.f32 %v2228, 0.0
  %v2485 = vmax.f32 %v2229, 0.0
  %v2486 = vmax.f32 %v2230, 0.0
  %v2487 = vmax.f32 %v2231, 0.0
  %v2488 = vmax.f32 %v2232, 0.0
  %v2489 = vmax.f32 %v2233, 0.0
  %v2490 = vmax.f32 %v2234, 0.0
  %v2491 = vmax.f32 %v2235, 0.0
  %v2492 = vmax.f32 %v2236, 0.0
  %v2493 = vmax.f32 %v2237, 0.0
  %v2494 = vmax.f32 %v2238, 0.0
  %v2495 = vmax.f32 %v2239, 0.0
  %v2496 = vmax.f32 %v2240, 0.0
  %v2497 = vmax.f32 %v2241, 0.0
  %v2498 = vmax.f32 %v2242, 0.0
  %v2499 = vmax.f32 %v2243, 0.0
  %v2500 = vmax.f32 %v2244, 0.0
  %v2501 = vmax.f32 %v2245, 0.0
  %v2502 = vmax.f32 %v2246, 0.0
  %v2503 = vmax.f32 %v2247, 0.0
  %v2504 = vmax.f32 %v2248, 0.0
  %v2505 = vmax.f32 %v2249, 0.0
  %v2506 = vmax.f32 %v2250, 0.0
  %v2507 = vmax.f32 %v2251, 0.0
  %v2508 = vmax.f32 %v2252, 0.0
  %v2509 = vmax.f32 %v2253, 0.0
  %v2510 = vmax.f32 %v2254, 0.0
  %v2511 = vmax.f32 %v2255, 0.0
  %v2512 = vmax.f32 %v2256, 0.0
  %v2513 = vmax.f32 %v2257, 0.0
  %v2514 = vmax.f32 %v2258, 0.0
  %v2515 = vmax.f32 %v2259, 0.0
  %v2516 = vmax.f32 %v2260, 0.0
  %v2517 = vmax.f32 %v2261, 0.0
  %v2518 = vmax.f32 %v2262, 0.0
  %v2519 = vmax.f32 %v2263, 0.0
  %v2520 = vmax.f32 %v2264, 0.0
  %v2521 = vmax.f32 %v2265, 0.0
  %v2522 = vmax.f32 %v2266, 0.0
  %v2523 = vmax.f32 %v2267, 0.0
  %v2524 = vmax.f32 %v2268, 0.0
  %v2525 = vmax.f32 %v2269, 0.0
  %v2526 = vmax.f32 %v2270, 0.0
  %v2527 = vmax.f32 %v2271, 0.0
  %v2528 = vmax.f32 %v2272, 0.0
  %v2529 = vmax.f32 %v2273, 0.0
  %v2530 = vmax.f32 %v2274, 0.0
  %v2531 = vmax.f32 %v2275, 0.0
  %v2532 = vmax.f32 %v2276, 0.0
  %v2533 = vmax.f32 %v2277, 0.0
  %v2534 = vmax.f32 %v2278, 0.0
  %v2535 = vmax.f32 %v2279, 0.0
  %v2536 = vmax.f32 %v2280, 0.0
  %v2537 = vmax.f32 %v2281, 0.0
  %v2538 = vmax.f32 %v2282, 0.0
  %v2539 = vmax.f32 %v2283, 0.0
  %v2540 = vmax.f32 %v2284, 0.0
  %v2541 = vmax.f32 %v2285, 0.0
  %v2542 = vmax.f32 %v2286, 0.0
  %v2543 = vmax.f32 %v2287, 0.0
  %v2544 = vmax.f32 %v2288, 0.0
  %v2545 = vmax.f32 %v2289, 0.0
  %v2546 = vmax.f32 %v2290, 0.0
  %v2547 = vmax.f32 %v2291, 0.0
  %v2548 = vmax.f32 %v2292, 0.0
  %v2549 = vmax.f32 %v2293, 0.0
  %v2550 = vmax.f32 %v2294, 0.0
  %v2551 = vmax.f32 %v2295, 0.0
  %v2552 = vmax.f32 %v2296, 0.0
  %v2553 = vmax.f32 %v2297, 0.0
  %v2554 = vmax.f32 %v2298, 0.0
  %v2555 = vmax.f32 %v2299, 0.0
  %v2556 = vmax.f32 %v2300, 0.0
  %v2557 = vmax.f32 %v2301, 0.0
  %v2558 = vmax.f32 %v2302, 0.0
  %v2559 = vmax.f32 %v2303, 0.0
  %v2560 = vmax.f32 %v2304, 0.0
  %v2561 = vmax.f32 %v2305, 0.0
  %v2562 = vmax.f32 %v2306, 0.0
  %v2563 = vmax.f32 %v2307, 0.0
  %v2564 = vmax.f32 %v2308, 0.0
  %v2565 = vmax.f32 %v2309, 0.0
  %v2566 = vmax.f32 %v2310, 0.0
  %v2567 = vmax.f32 %v2311, 0.0
  %v2568 = vmax.f32 %v2312, 0.0
  %v2569 = vmax.f32 %v2313, 0.0
  %v2570 = vmax.f32 %v2314, 0.0
  %v2571 = vmax.f32 %v2315, 0.0
  %v2572 = vmax.f32 %v2316, 0.0
  %v2573 = vmax.f32 %v2317, 0.0
  %v2574 = vmax.f32 %v2318, 0.0
  %v2575 = vmax.f32 %v2319, 0.0
  %v2576 = vmax.f32 %v2320, 0.0
  %v2577 = vmax.f32 %v2321, 0.0
  %v2578 = vmax.f32 %v2322, 0.0
  %v2579 = vmax.f32 %v2323, 0.0
  %v2580 = vmax.f32 %v2324, 0.0
  %v2581 = vmax.f32 %v2325, 0.0
  %v2582 = vmax.f32 %v2326, 0.0
  %v2583 = vmax.f32 %v2327, 0.0
  %v2584 = vmax.f32 %v2328, 0.0
  %v2585 = vmax.f32 %v2329, 0.0
  %v2586 = vmax.f32 %v2330, 0.0
  %v2587 = vmax.f32 %v2331, 0.0
  %v2588 = vmax.f32 %v2332, 0.0
  %v2589 = vmax.f32 %v2333, 0.0
  %v2590 = vmax.f32 %v2334, 0.0
  %v2591 = vmax.f32 %v2335, 0.0
  %v2592 = vmax.f32 %v2336, 0.0
  %v2593 = vmax.f32 %v2337, 0.0
  %v2594 = vmax.f32 %v2338, 0.0
  %v2595 = vmax.f32 %v2339, 0.0
  %v2596 = vmax.f32 %v2340, 0.0
  %v2597 = vmax.f32 %v2341, 0.0
  %v2598 = vmax.f32 %v2342, 0.0
  %v2599 = vmax.f32 %v2343, 0.0
  %v2600 = vmax.f32 %v2344, 0.0
  %v2601 = vmax.f32 %v2345, 0.0
  %v2602 = vpack.c.bf16 %v2347, %v2346
  %v2603 = vpack.c.bf16 %v2349, %v2348
  %v2604 = vpack.c.bf16 %v2351, %v2350
  %v2605 = vpack.c.bf16 %v2353, %v2352
  %v2606 = vpack.c.bf16 %v2355, %v2354
  %v2607 = vpack.c.bf16 %v2357, %v2356
  %v2608 = vpack.c.bf16 %v2359, %v2358
  %v2609 = vpack.c.bf16 %v2361, %v2360
  %v2610 = vpack.c.bf16 %v2363, %v2362
  %v2611 = vpack.c.bf16 %v2365, %v2364
  %v2612 = vpack.c.bf16 %v2367, %v2366
  %v2613 = vpack.c.bf16 %v2369, %v2368
  %v2614 = vpack.c.bf16 %v2371, %v2370
  %v2615 = vpack.c.bf16 %v2373, %v2372
  %v2616 = vpack.c.bf16 %v2375, %v2374
  %v2617 = vpack.c.bf16 %v2377, %v2376
  %v2618 = vpack.c.bf16 %v2379, %v2378
  %v2619 = vpack.c.bf16 %v2381, %v2380
  %v2620 = vpack.c.bf16 %v2383, %v2382
  %v2621 = vpack.c.bf16 %v2385, %v2384
  %v2622 = vpack.c.bf16 %v2387, %v2386
  %v2623 = vpack.c.bf16 %v2389, %v2388
  %v2624 = vpack.c.bf16 %v2391, %v2390
  %v2625 = vpack.c.bf16 %v2393, %v2392
  %v2626 = vpack.c.bf16 %v2395, %v2394
  %v2627 = vpack.c.bf16 %v2397, %v2396
  %v2628 = vpack.c.bf16 %v2399, %v2398
  %v2629 = vpack.c.bf16 %v2401, %v2400
  %v2630 = vpack.c.bf16 %v2403, %v2402
  %v2631 = vpack.c.bf16 %v2405, %v2404
  %v2632 = vpack.c.bf16 %v2407, %v2406
  %v2633 = vpack.c.bf16 %v2409, %v2408
  %v2634 = vpack.c.bf16 %v2411, %v2410
  %v2635 = vpack.c.bf16 %v2413, %v2412
  %v2636 = vpack.c.bf16 %v2415, %v2414
  %v2637 = vpack.c.bf16 %v2417, %v2416
  %v2638 = vpack.c.bf16 %v2419, %v2418
  %v2639 = vpack.c.bf16 %v2421, %v2420
  %v2640 = vpack.c.bf16 %v2423, %v2422
  %v2641 = vpack.c.bf16 %v2425, %v2424
  %v2642 = vpack.c.bf16 %v2427, %v2426
  %v2643 = vpack.c.bf16 %v2429, %v2428
  %v2644 = vpack.c.bf16 %v2431, %v2430
  %v2645 = vpack.c.bf16 %v2433, %v2432
  %v2646 = vpack.c.bf16 %v2435, %v2434
  %v2647 = vpack.c.bf16 %v2437, %v2436
  %v2648 = vpack.c.bf16 %v2439, %v2438
  %v2649 = vpack.c.bf16 %v2441, %v2440
  %v2650 = vpack.c.bf16 %v2443, %v2442
  %v2651 = vpack.c.bf16 %v2445, %v2444
  %v2652 = vpack.c.bf16 %v2447, %v2446
  %v2653 = vpack.c.bf16 %v2449, %v2448
  %v2654 = vpack.c.bf16 %v2451, %v2450
  %v2655 = vpack.c.bf16 %v2453, %v2452
  %v2656 = vpack.c.bf16 %v2455, %v2454
  %v2657 = vpack.c.bf16 %v2457, %v2456
  %v2658 = vpack.c.bf16 %v2459, %v2458
  %v2659 = vpack.c.bf16 %v2461, %v2460
  %v2660 = vpack.c.bf16 %v2463, %v2462
  %v2661 = vpack.c.bf16 %v2465, %v2464
  %v2662 = vpack.c.bf16 %v2467, %v2466
  %v2663 = vpack.c.bf16 %v2469, %v2468
  %v2664 = vpack.c.bf16 %v2471, %v2470
  %v2665 = vpack.c.bf16 %v2473, %v2472
  %v2666 = vpack.c.bf16 %v2475, %v2474
  %v2667 = vpack.c.bf16 %v2477, %v2476
  %v2668 = vpack.c.bf16 %v2479, %v2478
  %v2669 = vpack.c.bf16 %v2481, %v2480
  %v2670 = vpack.c.bf16 %v2483, %v2482
  %v2671 = vpack.c.bf16 %v2485, %v2484
  %v2672 = vpack.c.bf16 %v2487, %v2486
  %v2673 = vpack.c.bf16 %v2489, %v2488
  %v2674 = vpack.c.bf16 %v2491, %v2490
  %v2675 = vpack.c.bf16 %v2493, %v2492
  %v2676 = vpack.c.bf16 %v2495, %v2494
  %v2677 = vpack.c.bf16 %v2497, %v2496
  %v2678 = vpack.c.bf16 %v2499, %v2498
  %v2679 = vpack.c.bf16 %v2501, %v2500
  %v2680 = vpack.c.bf16 %v2503, %v2502
  %v2681 = vpack.c.bf16 %v2505, %v2504
  %v2682 = vpack.c.bf16 %v2507, %v2506
  %v2683 = vpack.c.bf16 %v2509, %v2508
  %v2684 = vpack.c.bf16 %v2511, %v2510
  %v2685 = vpack.c.bf16 %v2513, %v2512
  %v2686 = vpack.c.bf16 %v2515, %v2514
  %v2687 = vpack.c.bf16 %v2517, %v2516
  %v2688 = vpack.c.bf16 %v2519, %v2518
  %v2689 = vpack.c.bf16 %v2521, %v2520
  %v2690 = vpack.c.bf16 %v2523, %v2522
  %v2691 = vpack.c.bf16 %v2525, %v2524
  %v2692 = vpack.c.bf16 %v2527, %v2526
  %v2693 = vpack.c.bf16 %v2529, %v2528
  %v2694 = vpack.c.bf16 %v2531, %v2530
  %v2695 = vpack.c.bf16 %v2533, %v2532
  %v2696 = vpack.c.bf16 %v2535, %v2534
  %v2697 = vpack.c.bf16 %v2537, %v2536
  %v2698 = vpack.c.bf16 %v2539, %v2538
  %v2699 = vpack.c.bf16 %v2541, %v2540
  %v2700 = vpack.c.bf16 %v2543, %v2542
  %v2701 = vpack.c.bf16 %v2545, %v2544
  %v2702 = vpack.c.bf16 %v2547, %v2546
  %v2703 = vpack.c.bf16 %v2549, %v2548
  %v2704 = vpack.c.bf16 %v2551, %v2550
  %v2705 = vpack.c.bf16 %v2553, %v2552
  %v2706 = vpack.c.bf16 %v2555, %v2554
  %v2707 = vpack.c.bf16 %v2557, %v2556
  %v2708 = vpack.c.bf16 %v2559, %v2558
  %v2709 = vpack.c.bf16 %v2561, %v2560
  %v2710 = vpack.c.bf16 %v2563, %v2562
  %v2711 = vpack.c.bf16 %v2565, %v2564
  %v2712 = vpack.c.bf16 %v2567, %v2566
  %v2713 = vpack.c.bf16 %v2569, %v2568
  %v2714 = vpack.c.bf16 %v2571, %v2570
  %v2715 = vpack.c.bf16 %v2573, %v2572
  %v2716 = vpack.c.bf16 %v2575, %v2574
  %v2717 = vpack.c.bf16 %v2577, %v2576
  %v2718 = vpack.c.bf16 %v2579, %v2578
  %v2719 = vpack.c.bf16 %v2581, %v2580
  %v2720 = vpack.c.bf16 %v2583, %v2582
  %v2721 = vpack.c.bf16 %v2585, %v2584
  %v2722 = vpack.c.bf16 %v2587, %v2586
  %v2723 = vpack.c.bf16 %v2589, %v2588
  %v2724 = vpack.c.bf16 %v2591, %v2590
  %v2725 = vpack.c.bf16 %v2593, %v2592
  %v2726 = vpack.c.bf16 %v2595, %v2594
  %v2727 = vpack.c.bf16 %v2597, %v2596
  %v2728 = vpack.c.bf16 %v2599, %v2598
  %v2729 = vpack.c.bf16 %v2601, %v2600
  %v2858 = vunpack.c.l.b16 %v2602
  %v2859 = vunpack.c.h.b16 %v2602
  %v2860 = vunpack.c.l.b16 %v2603
  %v2861 = vunpack.c.h.b16 %v2603
  %v2862 = vunpack.c.l.b16 %v2604
  %v2863 = vunpack.c.h.b16 %v2604
  %v2864 = vunpack.c.l.b16 %v2605
  %v2865 = vunpack.c.h.b16 %v2605
  %v2866 = vunpack.c.l.b16 %v2606
  %v2867 = vunpack.c.h.b16 %v2606
  %v2868 = vunpack.c.l.b16 %v2607
  %v2869 = vunpack.c.h.b16 %v2607
  %v2870 = vunpack.c.l.b16 %v2608
  %v2871 = vunpack.c.h.b16 %v2608
  %v2872 = vunpack.c.l.b16 %v2609
  %v2873 = vunpack.c.h.b16 %v2609
  %v2874 = vunpack.c.l.b16 %v2610
  %v2875 = vunpack.c.h.b16 %v2610
  %v2876 = vunpack.c.l.b16 %v2611
  %v2877 = vunpack.c.h.b16 %v2611
  %v2878 = vunpack.c.l.b16 %v2612
  %v2879 = vunpack.c.h.b16 %v2612
  %v2880 = vunpack.c.l.b16 %v2613
  %v2881 = vunpack.c.h.b16 %v2613
  %v2882 = vunpack.c.l.b16 %v2614
  %v2883 = vunpack.c.h.b16 %v2614
  %v2884 = vunpack.c.l.b16 %v2615
  %v2885 = vunpack.c.h.b16 %v2615
  %v2886 = vunpack.c.l.b16 %v2616
  %v2887 = vunpack.c.h.b16 %v2616
  %v2888 = vunpack.c.l.b16 %v2617
  %v2889 = vunpack.c.h.b16 %v2617
  %v2890 = vunpack.c.l.b16 %v2618
  %v2891 = vunpack.c.h.b16 %v2618
  %v2892 = vunpack.c.l.b16 %v2619
  %v2893 = vunpack.c.h.b16 %v2619
  %v2894 = vunpack.c.l.b16 %v2620
  %v2895 = vunpack.c.h.b16 %v2620
  %v2896 = vunpack.c.l.b16 %v2621
  %v2897 = vunpack.c.h.b16 %v2621
  %v2898 = vunpack.c.l.b16 %v2622
  %v2899 = vunpack.c.h.b16 %v2622
  %v2900 = vunpack.c.l.b16 %v2623
  %v2901 = vunpack.c.h.b16 %v2623
  %v2902 = vunpack.c.l.b16 %v2624
  %v2903 = vunpack.c.h.b16 %v2624
  %v2904 = vunpack.c.l.b16 %v2625
  %v2905 = vunpack.c.h.b16 %v2625
  %v2906 = vunpack.c.l.b16 %v2626
  %v2907 = vunpack.c.h.b16 %v2626
  %v2908 = vunpack.c.l.b16 %v2627
  %v2909 = vunpack.c.h.b16 %v2627
  %v2910 = vunpack.c.l.b16 %v2628
  %v2911 = vunpack.c.h.b16 %v2628
  %v2912 = vunpack.c.l.b16 %v2629
  %v2913 = vunpack.c.h.b16 %v2629
  %v2914 = vunpack.c.l.b16 %v2630
  %v2915 = vunpack.c.h.b16 %v2630
  %v2916 = vunpack.c.l.b16 %v2631
  %v2917 = vunpack.c.h.b16 %v2631
  %v2918 = vunpack.c.l.b16 %v2632
  %v2919 = vunpack.c.h.b16 %v2632
  %v2920 = vunpack.c.l.b16 %v2633
  %v2921 = vunpack.c.h.b16 %v2633
  %v2922 = vunpack.c.l.b16 %v2634
  %v2923 = vunpack.c.h.b16 %v2634
  %v2924 = vunpack.c.l.b16 %v2635
  %v2925 = vunpack.c.h.b16 %v2635
  %v2926 = vunpack.c.l.b16 %v2636
  %v2927 = vunpack.c.h.b16 %v2636
  %v2928 = vunpack.c.l.b16 %v2637
  %v2929 = vunpack.c.h.b16 %v2637
  %v2930 = vunpack.c.l.b16 %v2638
  %v2931 = vunpack.c.h.b16 %v2638
  %v2932 = vunpack.c.l.b16 %v2639
  %v2933 = vunpack.c.h.b16 %v2639
  %v2934 = vunpack.c.l.b16 %v2640
  %v2935 = vunpack.c.h.b16 %v2640
  %v2936 = vunpack.c.l.b16 %v2641
  %v2937 = vunpack.c.h.b16 %v2641
  %v2938 = vunpack.c.l.b16 %v2642
  %v2939 = vunpack.c.h.b16 %v2642
  %v2940 = vunpack.c.l.b16 %v2643
  %v2941 = vunpack.c.h.b16 %v2643
  %v2942 = vunpack.c.l.b16 %v2644
  %v2943 = vunpack.c.h.b16 %v2644
  %v2944 = vunpack.c.l.b16 %v2645
  %v2945 = vunpack.c.h.b16 %v2645
  %v2946 = vunpack.c.l.b16 %v2646
  %v2947 = vunpack.c.h.b16 %v2646
  %v2948 = vunpack.c.l.b16 %v2647
  %v2949 = vunpack.c.h.b16 %v2647
  %v2950 = vunpack.c.l.b16 %v2648
  %v2951 = vunpack.c.h.b16 %v2648
  %v2952 = vunpack.c.l.b16 %v2649
  %v2953 = vunpack.c.h.b16 %v2649
  %v2954 = vunpack.c.l.b16 %v2650
  %v2955 = vunpack.c.h.b16 %v2650
  %v2956 = vunpack.c.l.b16 %v2651
  %v2957 = vunpack.c.h.b16 %v2651
  %v2958 = vunpack.c.l.b16 %v2652
  %v2959 = vunpack.c.h.b16 %v2652
  %v2960 = vunpack.c.l.b16 %v2653
  %v2961 = vunpack.c.h.b16 %v2653
  %v2962 = vunpack.c.l.b16 %v2654
  %v2963 = vunpack.c.h.b16 %v2654
  %v2964 = vunpack.c.l.b16 %v2655
  %v2965 = vunpack.c.h.b16 %v2655
  %v2966 = vunpack.c.l.b16 %v2656
  %v2967 = vunpack.c.h.b16 %v2656
  %v2968 = vunpack.c.l.b16 %v2657
  %v2969 = vunpack.c.h.b16 %v2657
  %v2970 = vunpack.c.l.b16 %v2658
  %v2971 = vunpack.c.h.b16 %v2658
  %v2972 = vunpack.c.l.b16 %v2659
  %v2973 = vunpack.c.h.b16 %v2659
  %v2974 = vunpack.c.l.b16 %v2660
  %v2975 = vunpack.c.h.b16 %v2660
  %v2976 = vunpack.c.l.b16 %v2661
  %v2977 = vunpack.c.h.b16 %v2661
  %v2978 = vunpack.c.l.b16 %v2662
  %v2979 = vunpack.c.h.b16 %v2662
  %v2980 = vunpack.c.l.b16 %v2663
  %v2981 = vunpack.c.h.b16 %v2663
  %v2982 = vunpack.c.l.b16 %v2664
  %v2983 = vunpack.c.h.b16 %v2664
  %v2984 = vunpack.c.l.b16 %v2665
  %v2985 = vunpack.c.h.b16 %v2665
  %v2986 = vunpack.c.l.b16 %v2666
  %v2987 = vunpack.c.h.b16 %v2666
  %v2988 = vunpack.c.l.b16 %v2667
  %v2989 = vunpack.c.h.b16 %v2667
  %v2990 = vunpack.c.l.b16 %v2668
  %v2991 = vunpack.c.h.b16 %v2668
  %v2992 = vunpack.c.l.b16 %v2669
  %v2993 = vunpack.c.h.b16 %v2669
  %v2994 = vunpack.c.l.b16 %v2670
  %v2995 = vunpack.c.h.b16 %v2670
  %v2996 = vunpack.c.l.b16 %v2671
  %v2997 = vunpack.c.h.b16 %v2671
  %v2998 = vunpack.c.l.b16 %v2672
  %v2999 = vunpack.c.h.b16 %v2672
  %v3000 = vunpack.c.l.b16 %v2673
  %v3001 = vunpack.c.h.b16 %v2673
  %v3002 = vunpack.c.l.b16 %v2674
  %v3003 = vunpack.c.h.b16 %v2674
  %v3004 = vunpack.c.l.b16 %v2675
  %v3005 = vunpack.c.h.b16 %v2675
  %v3006 = vunpack.c.l.b16 %v2676
  %v3007 = vunpack.c.h.b16 %v2676
  %v3008 = vunpack.c.l.b16 %v2677
  %v3009 = vunpack.c.h.b16 %v2677
  %v3010 = vunpack.c.l.b16 %v2678
  %v3011 = vunpack.c.h.b16 %v2678
  %v3012 = vunpack.c.l.b16 %v2679
  %v3013 = vunpack.c.h.b16 %v2679
  %v3014 = vunpack.c.l.b16 %v2680
  %v3015 = vunpack.c.h.b16 %v2680
  %v3016 = vunpack.c.l.b16 %v2681
  %v3017 = vunpack.c.h.b16 %v2681
  %v3018 = vunpack.c.l.b16 %v2682
  %v3019 = vunpack.c.h.b16 %v2682
  %v3020 = vunpack.c.l.b16 %v2683
  %v3021 = vunpack.c.h.b16 %v2683
  %v3022 = vunpack.c.l.b16 %v2684
  %v3023 = vunpack.c.h.b16 %v2684
  %v3024 = vunpack.c.l.b16 %v2685
  %v3025 = vunpack.c.h.b16 %v2685
  %v3026 = vunpack.c.l.b16 %v2686
  %v3027 = vunpack.c.h.b16 %v2686
  %v3028 = vunpack.c.l.b16 %v2687
  %v3029 = vunpack.c.h.b16 %v2687
  %v3030 = vunpack.c.l.b16 %v2688
  %v3031 = vunpack.c.h.b16 %v2688
  %v3032 = vunpack.c.l.b16 %v2689
  %v3033 = vunpack.c.h.b16 %v2689
  %v3034 = vunpack.c.l.b16 %v2690
  %v3035 = vunpack.c.h.b16 %v2690
  %v3036 = vunpack.c.l.b16 %v2691
  %v3037 = vunpack.c.h.b16 %v2691
  %v3038 = vunpack.c.l.b16 %v2692
  %v3039 = vunpack.c.h.b16 %v2692
  %v3040 = vunpack.c.l.b16 %v2693
  %v3041 = vunpack.c.h.b16 %v2693
  %v3042 = vunpack.c.l.b16 %v2694
  %v3043 = vunpack.c.h.b16 %v2694
  %v3044 = vunpack.c.l.b16 %v2695
  %v3045 = vunpack.c.h.b16 %v2695
  %v3046 = vunpack.c.l.b16 %v2696
  %v3047 = vunpack.c.h.b16 %v2696
  %v3048 = vunpack.c.l.b16 %v2697
  %v3049 = vunpack.c.h.b16 %v2697
  %v3050 = vunpack.c.l.b16 %v2698
  %v3051 = vunpack.c.h.b16 %v2698
  %v3052 = vunpack.c.l.b16 %v2699
  %v3053 = vunpack.c.h.b16 %v2699
  %v3054 = vunpack.c.l.b16 %v2700
  %v3055 = vunpack.c.h.b16 %v2700
  %v3056 = vunpack.c.l.b16 %v2701
  %v3057 = vunpack.c.h.b16 %v2701
  %v3058 = vunpack.c.l.b16 %v2702
  %v3059 = vunpack.c.h.b16 %v2702
  %v3060 = vunpack.c.l.b16 %v2703
  %v3061 = vunpack.c.h.b16 %v2703
  %v3062 = vunpack.c.l.b16 %v2704
  %v3063 = vunpack.c.h.b16 %v2704
  %v3064 = vunpack.c.l.b16 %v2705
  %v3065 = vunpack.c.h.b16 %v2705
  %v3066 = vunpack.c.l.b16 %v2706
  %v3067 = vunpack.c.h.b16 %v2706
  %v3068 = vunpack.c.l.b16 %v2707
  %v3069 = vunpack.c.h.b16 %v2707
  %v3070 = vunpack.c.l.b16 %v2708
  %v3071 = vunpack.c.h.b16 %v2708
  %v3072 = vunpack.c.l.b16 %v2709
  %v3073 = vunpack.c.h.b16 %v2709
  %v3074 = vunpack.c.l.b16 %v2710
  %v3075 = vunpack.c.h.b16 %v2710
  %v3076 = vunpack.c.l.b16 %v2711
  %v3077 = vunpack.c.h.b16 %v2711
  %v3078 = vunpack.c.l.b16 %v2712
  %v3079 = vunpack.c.h.b16 %v2712
  %v3080 = vunpack.c.l.b16 %v2713
  %v3081 = vunpack.c.h.b16 %v2713
  %v3082 = vunpack.c.l.b16 %v2714
  %v3083 = vunpack.c.h.b16 %v2714
  %v3084 = vunpack.c.l.b16 %v2715
  %v3085 = vunpack.c.h.b16 %v2715
  %v3086 = vunpack.c.l.b16 %v2716
  %v3087 = vunpack.c.h.b16 %v2716
  %v3088 = vunpack.c.l.b16 %v2717
  %v3089 = vunpack.c.h.b16 %v2717
  %v3090 = vunpack.c.l.b16 %v2718
  %v3091 = vunpack.c.h.b16 %v2718
  %v3092 = vunpack.c.l.b16 %v2719
  %v3093 = vunpack.c.h.b16 %v2719
  %v3094 = vunpack.c.l.b16 %v2720
  %v3095 = vunpack.c.h.b16 %v2720
  %v3096 = vunpack.c.l.b16 %v2721
  %v3097 = vunpack.c.h.b16 %v2721
  %v3098 = vunpack.c.l.b16 %v2722
  %v3099 = vunpack.c.h.b16 %v2722
  %v3100 = vunpack.c.l.b16 %v2723
  %v3101 = vunpack.c.h.b16 %v2723
  %v3102 = vunpack.c.l.b16 %v2724
  %v3103 = vunpack.c.h.b16 %v2724
  %v3104 = vunpack.c.l.b16 %v2725
  %v3105 = vunpack.c.h.b16 %v2725
  %v3106 = vunpack.c.l.b16 %v2726
  %v3107 = vunpack.c.h.b16 %v2726
  %v3108 = vunpack.c.l.b16 %v2727
  %v3109 = vunpack.c.h.b16 %v2727
  %v3110 = vunpack.c.l.b16 %v2728
  %v3111 = vunpack.c.h.b16 %v2728
  %v3112 = vunpack.c.l.b16 %v2729
  %v3113 = vunpack.c.h.b16 %v2729
  %v3114 = vpack.c.b16 %v2858, %v2858
  %v3115 = vpack.c.b16 %v2859, %v2859
  %v3116 = vpack.c.b16 %v2860, %v2860
  %v3117 = vpack.c.b16 %v2861, %v2861
  %v3118 = vpack.c.b16 %v2862, %v2862
  %v3119 = vpack.c.b16 %v2863, %v2863
  %v3120 = vpack.c.b16 %v2864, %v2864
  %v3121 = vpack.c.b16 %v2865, %v2865
  %v3122 = vpack.c.b16 %v2866, %v2866
  %v3123 = vpack.c.b16 %v2867, %v2867
  %v3124 = vpack.c.b16 %v2868, %v2868
  %v3125 = vpack.c.b16 %v2869, %v2869
  %v3126 = vpack.c.b16 %v2870, %v2870
  %v3127 = vpack.c.b16 %v2871, %v2871
  %v3128 = vpack.c.b16 %v2872, %v2872
  %v3129 = vpack.c.b16 %v2873, %v2873
  %v3130 = vpack.c.b16 %v2874, %v2874
  %v3131 = vpack.c.b16 %v2875, %v2875
  %v3132 = vpack.c.b16 %v2876, %v2876
  %v3133 = vpack.c.b16 %v2877, %v2877
  %v3134 = vpack.c.b16 %v2878, %v2878
  %v3135 = vpack.c.b16 %v2879, %v2879
  %v3136 = vpack.c.b16 %v2880, %v2880
  %v3137 = vpack.c.b16 %v2881, %v2881
  %v3138 = vpack.c.b16 %v2882, %v2882
  %v3139 = vpack.c.b16 %v2883, %v2883
  %v3140 = vpack.c.b16 %v2884, %v2884
  %v3141 = vpack.c.b16 %v2885, %v2885
  %v3142 = vpack.c.b16 %v2886, %v2886
  %v3143 = vpack.c.b16 %v2887, %v2887
  %v3144 = vpack.c.b16 %v2888, %v2888
  %v3145 = vpack.c.b16 %v2889, %v2889
  %v3146 = vpack.c.b16 %v2890, %v2890
  %v3147 = vpack.c.b16 %v2891, %v2891
  %v3148 = vpack.c.b16 %v2892, %v2892
  %v3149 = vpack.c.b16 %v2893, %v2893
  %v3150 = vpack.c.b16 %v2894, %v2894
  %v3151 = vpack.c.b16 %v2895, %v2895
  %v3152 = vpack.c.b16 %v2896, %v2896
  %v3153 = vpack.c.b16 %v2897, %v2897
  %v3154 = vpack.c.b16 %v2898, %v2898
  %v3155 = vpack.c.b16 %v2899, %v2899
  %v3156 = vpack.c.b16 %v2900, %v2900
  %v3157 = vpack.c.b16 %v2901, %v2901
  %v3158 = vpack.c.b16 %v2902, %v2902
  %v3159 = vpack.c.b16 %v2903, %v2903
  %v3160 = vpack.c.b16 %v2904, %v2904
  %v3161 = vpack.c.b16 %v2905, %v2905
  %v3162 = vpack.c.b16 %v2906, %v2906
  %v3163 = vpack.c.b16 %v2907, %v2907
  %v3164 = vpack.c.b16 %v2908, %v2908
  %v3165 = vpack.c.b16 %v2909, %v2909
  %v3166 = vpack.c.b16 %v2910, %v2910
  %v3167 = vpack.c.b16 %v2911, %v2911
  %v3168 = vpack.c.b16 %v2912, %v2912
  %v3169 = vpack.c.b16 %v2913, %v2913
  %v3170 = vpack.c.b16 %v2914, %v2914
  %v3171 = vpack.c.b16 %v2915, %v2915
  %v3172 = vpack.c.b16 %v2916, %v2916
  %v3173 = vpack.c.b16 %v2917, %v2917
  %v3174 = vpack.c.b16 %v2918, %v2918
  %v3175 = vpack.c.b16 %v2919, %v2919
  %v3176 = vpack.c.b16 %v2920, %v2920
  %v3177 = vpack.c.b16 %v2921, %v2921
  %v3178 = vpack.c.b16 %v2922, %v2922
  %v3179 = vpack.c.b16 %v2923, %v2923
  %v3180 = vpack.c.b16 %v2924, %v2924
  %v3181 = vpack.c.b16 %v2925, %v2925
  %v3182 = vpack.c.b16 %v2926, %v2926
  %v3183 = vpack.c.b16 %v2927, %v2927
  %v3184 = vpack.c.b16 %v2928, %v2928
  %v3185 = vpack.c.b16 %v2929, %v2929
  %v3186 = vpack.c.b16 %v2930, %v2930
  %v3187 = vpack.c.b16 %v2931, %v2931
  %v3188 = vpack.c.b16 %v2932, %v2932
  %v3189 = vpack.c.b16 %v2933, %v2933
  %v3190 = vpack.c.b16 %v2934, %v2934
  %v3191 = vpack.c.b16 %v2935, %v2935
  %v3192 = vpack.c.b16 %v2936, %v2936
  %v3193 = vpack.c.b16 %v2937, %v2937
  %v3194 = vpack.c.b16 %v2938, %v2938
  %v3195 = vpack.c.b16 %v2939, %v2939
  %v3196 = vpack.c.b16 %v2940, %v2940
  %v3197 = vpack.c.b16 %v2941, %v2941
  %v3198 = vpack.c.b16 %v2942, %v2942
  %v3199 = vpack.c.b16 %v2943, %v2943
  %v3200 = vpack.c.b16 %v2944, %v2944
  %v3201 = vpack.c.b16 %v2945, %v2945
  %v3202 = vpack.c.b16 %v2946, %v2946
  %v3203 = vpack.c.b16 %v2947, %v2947
  %v3204 = vpack.c.b16 %v2948, %v2948
  %v3205 = vpack.c.b16 %v2949, %v2949
  %v3206 = vpack.c.b16 %v2950, %v2950
  %v3207 = vpack.c.b16 %v2951, %v2951
  %v3208 = vpack.c.b16 %v2952, %v2952
  %v3209 = vpack.c.b16 %v2953, %v2953
  %v3210 = vpack.c.b16 %v2954, %v2954
  %v3211 = vpack.c.b16 %v2955, %v2955
  %v3212 = vpack.c.b16 %v2956, %v2956
  %v3213 = vpack.c.b16 %v2957, %v2957
  %v3214 = vpack.c.b16 %v2958, %v2958
  %v3215 = vpack.c.b16 %v2959, %v2959
  %v3216 = vpack.c.b16 %v2960, %v2960
  %v3217 = vpack.c.b16 %v2961, %v2961
  %v3218 = vpack.c.b16 %v2962, %v2962
  %v3219 = vpack.c.b16 %v2963, %v2963
  %v3220 = vpack.c.b16 %v2964, %v2964
  %v3221 = vpack.c.b16 %v2965, %v2965
  %v3222 = vpack.c.b16 %v2966, %v2966
  %v3223 = vpack.c.b16 %v2967, %v2967
  %v3224 = vpack.c.b16 %v2968, %v2968
  %v3225 = vpack.c.b16 %v2969, %v2969
  %v3226 = vpack.c.b16 %v2970, %v2970
  %v3227 = vpack.c.b16 %v2971, %v2971
  %v3228 = vpack.c.b16 %v2972, %v2972
  %v3229 = vpack.c.b16 %v2973, %v2973
  %v3230 = vpack.c.b16 %v2974, %v2974
  %v3231 = vpack.c.b16 %v2975, %v2975
  %v3232 = vpack.c.b16 %v2976, %v2976
  %v3233 = vpack.c.b16 %v2977, %v2977
  %v3234 = vpack.c.b16 %v2978, %v2978
  %v3235 = vpack.c.b16 %v2979, %v2979
  %v3236 = vpack.c.b16 %v2980, %v2980
  %v3237 = vpack.c.b16 %v2981, %v2981
  %v3238 = vpack.c.b16 %v2982, %v2982
  %v3239 = vpack.c.b16 %v2983, %v2983
  %v3240 = vpack.c.b16 %v2984, %v2984
  %v3241 = vpack.c.b16 %v2985, %v2985
  %v3242 = vpack.c.b16 %v2986, %v2986
  %v3243 = vpack.c.b16 %v2987, %v2987
  %v3244 = vpack.c.b16 %v2988, %v2988
  %v3245 = vpack.c.b16 %v2989, %v2989
  %v3246 = vpack.c.b16 %v2990, %v2990
  %v3247 = vpack.c.b16 %v2991, %v2991
  %v3248 = vpack.c.b16 %v2992, %v2992
  %v3249 = vpack.c.b16 %v2993, %v2993
  %v3250 = vpack.c.b16 %v2994, %v2994
  %v3251 = vpack.c.b16 %v2995, %v2995
  %v3252 = vpack.c.b16 %v2996, %v2996
  %v3253 = vpack.c.b16 %v2997, %v2997
  %v3254 = vpack.c.b16 %v2998, %v2998
  %v3255 = vpack.c.b16 %v2999, %v2999
  %v3256 = vpack.c.b16 %v3000, %v3000
  %v3257 = vpack.c.b16 %v3001, %v3001
  %v3258 = vpack.c.b16 %v3002, %v3002
  %v3259 = vpack.c.b16 %v3003, %v3003
  %v3260 = vpack.c.b16 %v3004, %v3004
  %v3261 = vpack.c.b16 %v3005, %v3005
  %v3262 = vpack.c.b16 %v3006, %v3006
  %v3263 = vpack.c.b16 %v3007, %v3007
  %v3264 = vpack.c.b16 %v3008, %v3008
  %v3265 = vpack.c.b16 %v3009, %v3009
  %v3266 = vpack.c.b16 %v3010, %v3010
  %v3267 = vpack.c.b16 %v3011, %v3011
  %v3268 = vpack.c.b16 %v3012, %v3012
  %v3269 = vpack.c.b16 %v3013, %v3013
  %v3270 = vpack.c.b16 %v3014, %v3014
  %v3271 = vpack.c.b16 %v3015, %v3015
  %v3272 = vpack.c.b16 %v3016, %v3016
  %v3273 = vpack.c.b16 %v3017, %v3017
  %v3274 = vpack.c.b16 %v3018, %v3018
  %v3275 = vpack.c.b16 %v3019, %v3019
  %v3276 = vpack.c.b16 %v3020, %v3020
  %v3277 = vpack.c.b16 %v3021, %v3021
  %v3278 = vpack.c.b16 %v3022, %v3022
  %v3279 = vpack.c.b16 %v3023, %v3023
  %v3280 = vpack.c.b16 %v3024, %v3024
  %v3281 = vpack.c.b16 %v3025, %v3025
  %v3282 = vpack.c.b16 %v3026, %v3026
  %v3283 = vpack.c.b16 %v3027, %v3027
  %v3284 = vpack.c.b16 %v3028, %v3028
  %v3285 = vpack.c.b16 %v3029, %v3029
  %v3286 = vpack.c.b16 %v3030, %v3030
  %v3287 = vpack.c.b16 %v3031, %v3031
  %v3288 = vpack.c.b16 %v3032, %v3032
  %v3289 = vpack.c.b16 %v3033, %v3033
  %v3290 = vpack.c.b16 %v3034, %v3034
  %v3291 = vpack.c.b16 %v3035, %v3035
  %v3292 = vpack.c.b16 %v3036, %v3036
  %v3293 = vpack.c.b16 %v3037, %v3037
  %v3294 = vpack.c.b16 %v3038, %v3038
  %v3295 = vpack.c.b16 %v3039, %v3039
  %v3296 = vpack.c.b16 %v3040, %v3040
  %v3297 = vpack.c.b16 %v3041, %v3041
  %v3298 = vpack.c.b16 %v3042, %v3042
  %v3299 = vpack.c.b16 %v3043, %v3043
  %v3300 = vpack.c.b16 %v3044, %v3044
  %v3301 = vpack.c.b16 %v3045, %v3045
  %v3302 = vpack.c.b16 %v3046, %v3046
  %v3303 = vpack.c.b16 %v3047, %v3047
  %v3304 = vpack.c.b16 %v3048, %v3048
  %v3305 = vpack.c.b16 %v3049, %v3049
  %v3306 = vpack.c.b16 %v3050, %v3050
  %v3307 = vpack.c.b16 %v3051, %v3051
  %v3308 = vpack.c.b16 %v3052, %v3052
  %v3309 = vpack.c.b16 %v3053, %v3053
  %v3310 = vpack.c.b16 %v3054, %v3054
  %v3311 = vpack.c.b16 %v3055, %v3055
  %v3312 = vpack.c.b16 %v3056, %v3056
  %v3313 = vpack.c.b16 %v3057, %v3057
  %v3314 = vpack.c.b16 %v3058, %v3058
  %v3315 = vpack.c.b16 %v3059, %v3059
  %v3316 = vpack.c.b16 %v3060, %v3060
  %v3317 = vpack.c.b16 %v3061, %v3061
  %v3318 = vpack.c.b16 %v3062, %v3062
  %v3319 = vpack.c.b16 %v3063, %v3063
  %v3320 = vpack.c.b16 %v3064, %v3064
  %v3321 = vpack.c.b16 %v3065, %v3065
  %v3322 = vpack.c.b16 %v3066, %v3066
  %v3323 = vpack.c.b16 %v3067, %v3067
  %v3324 = vpack.c.b16 %v3068, %v3068
  %v3325 = vpack.c.b16 %v3069, %v3069
  %v3326 = vpack.c.b16 %v3070, %v3070
  %v3327 = vpack.c.b16 %v3071, %v3071
  %v3328 = vpack.c.b16 %v3072, %v3072
  %v3329 = vpack.c.b16 %v3073, %v3073
  %v3330 = vpack.c.b16 %v3074, %v3074
  %v3331 = vpack.c.b16 %v3075, %v3075
  %v3332 = vpack.c.b16 %v3076, %v3076
  %v3333 = vpack.c.b16 %v3077, %v3077
  %v3334 = vpack.c.b16 %v3078, %v3078
  %v3335 = vpack.c.b16 %v3079, %v3079
  %v3336 = vpack.c.b16 %v3080, %v3080
  %v3337 = vpack.c.b16 %v3081, %v3081
  %v3338 = vpack.c.b16 %v3082, %v3082
  %v3339 = vpack.c.b16 %v3083, %v3083
  %v3340 = vpack.c.b16 %v3084, %v3084
  %v3341 = vpack.c.b16 %v3085, %v3085
  %v3342 = vpack.c.b16 %v3086, %v3086
  %v3343 = vpack.c.b16 %v3087, %v3087
  %v3344 = vpack.c.b16 %v3088, %v3088
  %v3345 = vpack.c.b16 %v3089, %v3089
  %v3346 = vpack.c.b16 %v3090, %v3090
  %v3347 = vpack.c.b16 %v3091, %v3091
  %v3348 = vpack.c.b16 %v3092, %v3092
  %v3349 = vpack.c.b16 %v3093, %v3093
  %v3350 = vpack.c.b16 %v3094, %v3094
  %v3351 = vpack.c.b16 %v3095, %v3095
  %v3352 = vpack.c.b16 %v3096, %v3096
  %v3353 = vpack.c.b16 %v3097, %v3097
  %v3354 = vpack.c.b16 %v3098, %v3098
  %v3355 = vpack.c.b16 %v3099, %v3099
  %v3356 = vpack.c.b16 %v3100, %v3100
  %v3357 = vpack.c.b16 %v3101, %v3101
  %v3358 = vpack.c.b16 %v3102, %v3102
  %v3359 = vpack.c.b16 %v3103, %v3103
  %v3360 = vpack.c.b16 %v3104, %v3104
  %v3361 = vpack.c.b16 %v3105, %v3105
  %v3362 = vpack.c.b16 %v3106, %v3106
  %v3363 = vpack.c.b16 %v3107, %v3107
  %v3364 = vpack.c.b16 %v3108, %v3108
  %v3365 = vpack.c.b16 %v3109, %v3109
  %v3366 = vpack.c.b16 %v3110, %v3110
  %v3367 = vpack.c.b16 %v3111, %v3111
  %v3368 = vpack.c.b16 %v3112, %v3112
  %v3369 = vpack.c.b16 %v3113, %v3113
  %vm3626 = vcmask 125952
  %3627 = vst.msk [vmem:[%s3] sm:$0xf] %vm3626, %v3114
  %3628 = vst.msk [vmem:[%s3 + $0x4] sm:$0xf] %vm3626, %v3115
  %3629 = vst.msk [vmem:[%s3 + $0x8] sm:$0xf] %vm3626, %v3116
  %3630 = vst.msk [vmem:[%s3 + $0xc] sm:$0xf] %vm3626, %v3117
  %3631 = vst.msk [vmem:[%s3 + $0x10] sm:$0xf] %vm3626, %v3118
  %3632 = vst.msk [vmem:[%s3 + $0x14] sm:$0xf] %vm3626, %v3119
  %3633 = vst.msk [vmem:[%s3 + $0x18] sm:$0xf] %vm3626, %v3120
  %3634 = vst.msk [vmem:[%s3 + $0x1c] sm:$0xf] %vm3626, %v3121
  %3635 = vst.msk [vmem:[%s3 + $0x20] sm:$0xf] %vm3626, %v3122
  %3636 = vst.msk [vmem:[%s3 + $0x24] sm:$0xf] %vm3626, %v3123
  %3637 = vst.msk [vmem:[%s3 + $0x28] sm:$0xf] %vm3626, %v3124
  %3638 = vst.msk [vmem:[%s3 + $0x2c] sm:$0xf] %vm3626, %v3125
  %3639 = vst.msk [vmem:[%s3 + $0x30] sm:$0xf] %vm3626, %v3126
  %3640 = vst.msk [vmem:[%s3 + $0x34] sm:$0xf] %vm3626, %v3127
  %3641 = vst.msk [vmem:[%s3 + $0x38] sm:$0xf] %vm3626, %v3128
  %3642 = vst.msk [vmem:[%s3 + $0x3c] sm:$0xf] %vm3626, %v3129
  %3643 = vst.msk [vmem:[%s3 + $0x40] sm:$0xf] %vm3626, %v3130
  %3644 = vst.msk [vmem:[%s3 + $0x44] sm:$0xf] %vm3626, %v3131
  %3645 = vst.msk [vmem:[%s3 + $0x48] sm:$0xf] %vm3626, %v3132
  %3646 = vst.msk [vmem:[%s3 + $0x4c] sm:$0xf] %vm3626, %v3133
  %3647 = vst.msk [vmem:[%s3 + $0x50] sm:$0xf] %vm3626, %v3134
  %3648 = vst.msk [vmem:[%s3 + $0x54] sm:$0xf] %vm3626, %v3135
  %3649 = vst.msk [vmem:[%s3 + $0x58] sm:$0xf] %vm3626, %v3136
  %3650 = vst.msk [vmem:[%s3 + $0x5c] sm:$0xf] %vm3626, %v3137
  %3651 = vst.msk [vmem:[%s3 + $0x60] sm:$0xf] %vm3626, %v3138
  %3652 = vst.msk [vmem:[%s3 + $0x64] sm:$0xf] %vm3626, %v3139
  %3653 = vst.msk [vmem:[%s3 + $0x68] sm:$0xf] %vm3626, %v3140
  %3654 = vst.msk [vmem:[%s3 + $0x6c] sm:$0xf] %vm3626, %v3141
  %3655 = vst.msk [vmem:[%s3 + $0x70] sm:$0xf] %vm3626, %v3142
  %3656 = vst.msk [vmem:[%s3 + $0x74] sm:$0xf] %vm3626, %v3143
  %3657 = vst.msk [vmem:[%s3 + $0x78] sm:$0xf] %vm3626, %v3144
  %3658 = vst.msk [vmem:[%s3 + $0x7c] sm:$0xf] %vm3626, %v3145
  %3659 = vst.msk [vmem:[%s3 + $0x80] sm:$0xf] %vm3626, %v3146
  %3660 = vst.msk [vmem:[%s3 + $0x84] sm:$0xf] %vm3626, %v3147
  %3661 = vst.msk [vmem:[%s3 + $0x88] sm:$0xf] %vm3626, %v3148
  %3662 = vst.msk [vmem:[%s3 + $0x8c] sm:$0xf] %vm3626, %v3149
  %3663 = vst.msk [vmem:[%s3 + $0x90] sm:$0xf] %vm3626, %v3150
  %3664 = vst.msk [vmem:[%s3 + $0x94] sm:$0xf] %vm3626, %v3151
  %3665 = vst.msk [vmem:[%s3 + $0x98] sm:$0xf] %vm3626, %v3152
  %3666 = vst.msk [vmem:[%s3 + $0x9c] sm:$0xf] %vm3626, %v3153
  %3667 = vst.msk [vmem:[%s3 + $0xa0] sm:$0xf] %vm3626, %v3154
  %3668 = vst.msk [vmem:[%s3 + $0xa4] sm:$0xf] %vm3626, %v3155
  %3669 = vst.msk [vmem:[%s3 + $0xa8] sm:$0xf] %vm3626, %v3156
  %3670 = vst.msk [vmem:[%s3 + $0xac] sm:$0xf] %vm3626, %v3157
  %3671 = vst.msk [vmem:[%s3 + $0xb0] sm:$0xf] %vm3626, %v3158
  %3672 = vst.msk [vmem:[%s3 + $0xb4] sm:$0xf] %vm3626, %v3159
  %3673 = vst.msk [vmem:[%s3 + $0xb8] sm:$0xf] %vm3626, %v3160
  %3674 = vst.msk [vmem:[%s3 + $0xbc] sm:$0xf] %vm3626, %v3161
  %3675 = vst.msk [vmem:[%s3 + $0xc0] sm:$0xf] %vm3626, %v3162
  %3676 = vst.msk [vmem:[%s3 + $0xc4] sm:$0xf] %vm3626, %v3163
  %3677 = vst.msk [vmem:[%s3 + $0xc8] sm:$0xf] %vm3626, %v3164
  %3678 = vst.msk [vmem:[%s3 + $0xcc] sm:$0xf] %vm3626, %v3165
  %3679 = vst.msk [vmem:[%s3 + $0xd0] sm:$0xf] %vm3626, %v3166
  %3680 = vst.msk [vmem:[%s3 + $0xd4] sm:$0xf] %vm3626, %v3167
  %3681 = vst.msk [vmem:[%s3 + $0xd8] sm:$0xf] %vm3626, %v3168
  %3682 = vst.msk [vmem:[%s3 + $0xdc] sm:$0xf] %vm3626, %v3169
  %3683 = vst.msk [vmem:[%s3 + $0xe0] sm:$0xf] %vm3626, %v3170
  %3684 = vst.msk [vmem:[%s3 + $0xe4] sm:$0xf] %vm3626, %v3171
  %3685 = vst.msk [vmem:[%s3 + $0xe8] sm:$0xf] %vm3626, %v3172
  %3686 = vst.msk [vmem:[%s3 + $0xec] sm:$0xf] %vm3626, %v3173
  %3687 = vst.msk [vmem:[%s3 + $0xf0] sm:$0xf] %vm3626, %v3174
  %3688 = vst.msk [vmem:[%s3 + $0xf4] sm:$0xf] %vm3626, %v3175
  %3689 = vst.msk [vmem:[%s3 + $0xf8] sm:$0xf] %vm3626, %v3176
  %3690 = vst.msk [vmem:[%s3 + $0xfc] sm:$0xf] %vm3626, %v3177
  %3691 = vst.msk [vmem:[%s3 + $0x100] sm:$0xf] %vm3626, %v3178
  %3692 = vst.msk [vmem:[%s3 + $0x104] sm:$0xf] %vm3626, %v3179
  %3693 = vst.msk [vmem:[%s3 + $0x108] sm:$0xf] %vm3626, %v3180
  %3694 = vst.msk [vmem:[%s3 + $0x10c] sm:$0xf] %vm3626, %v3181
  %3695 = vst.msk [vmem:[%s3 + $0x110] sm:$0xf] %vm3626, %v3182
  %3696 = vst.msk [vmem:[%s3 + $0x114] sm:$0xf] %vm3626, %v3183
  %3697 = vst.msk [vmem:[%s3 + $0x118] sm:$0xf] %vm3626, %v3184
  %3698 = vst.msk [vmem:[%s3 + $0x11c] sm:$0xf] %vm3626, %v3185
  %3699 = vst.msk [vmem:[%s3 + $0x120] sm:$0xf] %vm3626, %v3186
  %3700 = vst.msk [vmem:[%s3 + $0x124] sm:$0xf] %vm3626, %v3187
  %3701 = vst.msk [vmem:[%s3 + $0x128] sm:$0xf] %vm3626, %v3188
  %3702 = vst.msk [vmem:[%s3 + $0x12c] sm:$0xf] %vm3626, %v3189
  %3703 = vst.msk [vmem:[%s3 + $0x130] sm:$0xf] %vm3626, %v3190
  %3704 = vst.msk [vmem:[%s3 + $0x134] sm:$0xf] %vm3626, %v3191
  %3705 = vst.msk [vmem:[%s3 + $0x138] sm:$0xf] %vm3626, %v3192
  %3706 = vst.msk [vmem:[%s3 + $0x13c] sm:$0xf] %vm3626, %v3193
  %3707 = vst.msk [vmem:[%s3 + $0x140] sm:$0xf] %vm3626, %v3194
  %3708 = vst.msk [vmem:[%s3 + $0x144] sm:$0xf] %vm3626, %v3195
  %3709 = vst.msk [vmem:[%s3 + $0x148] sm:$0xf] %vm3626, %v3196
  %3710 = vst.msk [vmem:[%s3 + $0x14c] sm:$0xf] %vm3626, %v3197
  %3711 = vst.msk [vmem:[%s3 + $0x150] sm:$0xf] %vm3626, %v3198
  %3712 = vst.msk [vmem:[%s3 + $0x154] sm:$0xf] %vm3626, %v3199
  %3713 = vst.msk [vmem:[%s3 + $0x158] sm:$0xf] %vm3626, %v3200
  %3714 = vst.msk [vmem:[%s3 + $0x15c] sm:$0xf] %vm3626, %v3201
  %3715 = vst.msk [vmem:[%s3 + $0x160] sm:$0xf] %vm3626, %v3202
  %3716 = vst.msk [vmem:[%s3 + $0x164] sm:$0xf] %vm3626, %v3203
  %3717 = vst.msk [vmem:[%s3 + $0x168] sm:$0xf] %vm3626, %v3204
  %3718 = vst.msk [vmem:[%s3 + $0x16c] sm:$0xf] %vm3626, %v3205
  %3719 = vst.msk [vmem:[%s3 + $0x170] sm:$0xf] %vm3626, %v3206
  %3720 = vst.msk [vmem:[%s3 + $0x174] sm:$0xf] %vm3626, %v3207
  %3721 = vst.msk [vmem:[%s3 + $0x178] sm:$0xf] %vm3626, %v3208
  %3722 = vst.msk [vmem:[%s3 + $0x17c] sm:$0xf] %vm3626, %v3209
  %3723 = vst.msk [vmem:[%s3 + $0x180] sm:$0xf] %vm3626, %v3210
  %3724 = vst.msk [vmem:[%s3 + $0x184] sm:$0xf] %vm3626, %v3211
  %3725 = vst.msk [vmem:[%s3 + $0x188] sm:$0xf] %vm3626, %v3212
  %3726 = vst.msk [vmem:[%s3 + $0x18c] sm:$0xf] %vm3626, %v3213
  %3727 = vst.msk [vmem:[%s3 + $0x190] sm:$0xf] %vm3626, %v3214
  %3728 = vst.msk [vmem:[%s3 + $0x194] sm:$0xf] %vm3626, %v3215
  %3729 = vst.msk [vmem:[%s3 + $0x198] sm:$0xf] %vm3626, %v3216
  %3730 = vst.msk [vmem:[%s3 + $0x19c] sm:$0xf] %vm3626, %v3217
  %3731 = vst.msk [vmem:[%s3 + $0x1a0] sm:$0xf] %vm3626, %v3218
  %3732 = vst.msk [vmem:[%s3 + $0x1a4] sm:$0xf] %vm3626, %v3219
  %3733 = vst.msk [vmem:[%s3 + $0x1a8] sm:$0xf] %vm3626, %v3220
  %3734 = vst.msk [vmem:[%s3 + $0x1ac] sm:$0xf] %vm3626, %v3221
  %3735 = vst.msk [vmem:[%s3 + $0x1b0] sm:$0xf] %vm3626, %v3222
  %3736 = vst.msk [vmem:[%s3 + $0x1b4] sm:$0xf] %vm3626, %v3223
  %3737 = vst.msk [vmem:[%s3 + $0x1b8] sm:$0xf] %vm3626, %v3224
  %3738 = vst.msk [vmem:[%s3 + $0x1bc] sm:$0xf] %vm3626, %v3225
  %3739 = vst.msk [vmem:[%s3 + $0x1c0] sm:$0xf] %vm3626, %v3226
  %3740 = vst.msk [vmem:[%s3 + $0x1c4] sm:$0xf] %vm3626, %v3227
  %3741 = vst.msk [vmem:[%s3 + $0x1c8] sm:$0xf] %vm3626, %v3228
  %3742 = vst.msk [vmem:[%s3 + $0x1cc] sm:$0xf] %vm3626, %v3229
  %3743 = vst.msk [vmem:[%s3 + $0x1d0] sm:$0xf] %vm3626, %v3230
  %3744 = vst.msk [vmem:[%s3 + $0x1d4] sm:$0xf] %vm3626, %v3231
  %3745 = vst.msk [vmem:[%s3 + $0x1d8] sm:$0xf] %vm3626, %v3232
  %3746 = vst.msk [vmem:[%s3 + $0x1dc] sm:$0xf] %vm3626, %v3233
  %3747 = vst.msk [vmem:[%s3 + $0x1e0] sm:$0xf] %vm3626, %v3234
  %3748 = vst.msk [vmem:[%s3 + $0x1e4] sm:$0xf] %vm3626, %v3235
  %3749 = vst.msk [vmem:[%s3 + $0x1e8] sm:$0xf] %vm3626, %v3236
  %3750 = vst.msk [vmem:[%s3 + $0x1ec] sm:$0xf] %vm3626, %v3237
  %3751 = vst.msk [vmem:[%s3 + $0x1f0] sm:$0xf] %vm3626, %v3238
  %3752 = vst.msk [vmem:[%s3 + $0x1f4] sm:$0xf] %vm3626, %v3239
  %3753 = vst.msk [vmem:[%s3 + $0x1f8] sm:$0xf] %vm3626, %v3240
  %3754 = vst.msk [vmem:[%s3 + $0x1fc] sm:$0xf] %vm3626, %v3241
  %3755 = vst.msk [vmem:[%s3 + $0x200] sm:$0xf] %vm3626, %v3242
  %3756 = vst.msk [vmem:[%s3 + $0x204] sm:$0xf] %vm3626, %v3243
  %3757 = vst.msk [vmem:[%s3 + $0x208] sm:$0xf] %vm3626, %v3244
  %3758 = vst.msk [vmem:[%s3 + $0x20c] sm:$0xf] %vm3626, %v3245
  %3759 = vst.msk [vmem:[%s3 + $0x210] sm:$0xf] %vm3626, %v3246
  %3760 = vst.msk [vmem:[%s3 + $0x214] sm:$0xf] %vm3626, %v3247
  %3761 = vst.msk [vmem:[%s3 + $0x218] sm:$0xf] %vm3626, %v3248
  %3762 = vst.msk [vmem:[%s3 + $0x21c] sm:$0xf] %vm3626, %v3249
  %3763 = vst.msk [vmem:[%s3 + $0x220] sm:$0xf] %vm3626, %v3250
  %3764 = vst.msk [vmem:[%s3 + $0x224] sm:$0xf] %vm3626, %v3251
  %3765 = vst.msk [vmem:[%s3 + $0x228] sm:$0xf] %vm3626, %v3252
  %3766 = vst.msk [vmem:[%s3 + $0x22c] sm:$0xf] %vm3626, %v3253
  %3767 = vst.msk [vmem:[%s3 + $0x230] sm:$0xf] %vm3626, %v3254
  %3768 = vst.msk [vmem:[%s3 + $0x234] sm:$0xf] %vm3626, %v3255
  %3769 = vst.msk [vmem:[%s3 + $0x238] sm:$0xf] %vm3626, %v3256
  %3770 = vst.msk [vmem:[%s3 + $0x23c] sm:$0xf] %vm3626, %v3257
  %3771 = vst.msk [vmem:[%s3 + $0x240] sm:$0xf] %vm3626, %v3258
  %3772 = vst.msk [vmem:[%s3 + $0x244] sm:$0xf] %vm3626, %v3259
  %3773 = vst.msk [vmem:[%s3 + $0x248] sm:$0xf] %vm3626, %v3260
  %3774 = vst.msk [vmem:[%s3 + $0x24c] sm:$0xf] %vm3626, %v3261
  %3775 = vst.msk [vmem:[%s3 + $0x250] sm:$0xf] %vm3626, %v3262
  %3776 = vst.msk [vmem:[%s3 + $0x254] sm:$0xf] %vm3626, %v3263
  %3777 = vst.msk [vmem:[%s3 + $0x258] sm:$0xf] %vm3626, %v3264
  %3778 = vst.msk [vmem:[%s3 + $0x25c] sm:$0xf] %vm3626, %v3265
  %3779 = vst.msk [vmem:[%s3 + $0x260] sm:$0xf] %vm3626, %v3266
  %3780 = vst.msk [vmem:[%s3 + $0x264] sm:$0xf] %vm3626, %v3267
  %3781 = vst.msk [vmem:[%s3 + $0x268] sm:$0xf] %vm3626, %v3268
  %3782 = vst.msk [vmem:[%s3 + $0x26c] sm:$0xf] %vm3626, %v3269
  %3783 = vst.msk [vmem:[%s3 + $0x270] sm:$0xf] %vm3626, %v3270
  %3784 = vst.msk [vmem:[%s3 + $0x274] sm:$0xf] %vm3626, %v3271
  %3785 = vst.msk [vmem:[%s3 + $0x278] sm:$0xf] %vm3626, %v3272
  %3786 = vst.msk [vmem:[%s3 + $0x27c] sm:$0xf] %vm3626, %v3273
  %3787 = vst.msk [vmem:[%s3 + $0x280] sm:$0xf] %vm3626, %v3274
  %3788 = vst.msk [vmem:[%s3 + $0x284] sm:$0xf] %vm3626, %v3275
  %3789 = vst.msk [vmem:[%s3 + $0x288] sm:$0xf] %vm3626, %v3276
  %3790 = vst.msk [vmem:[%s3 + $0x28c] sm:$0xf] %vm3626, %v3277
  %3791 = vst.msk [vmem:[%s3 + $0x290] sm:$0xf] %vm3626, %v3278
  %3792 = vst.msk [vmem:[%s3 + $0x294] sm:$0xf] %vm3626, %v3279
  %3793 = vst.msk [vmem:[%s3 + $0x298] sm:$0xf] %vm3626, %v3280
  %3794 = vst.msk [vmem:[%s3 + $0x29c] sm:$0xf] %vm3626, %v3281
  %3795 = vst.msk [vmem:[%s3 + $0x2a0] sm:$0xf] %vm3626, %v3282
  %3796 = vst.msk [vmem:[%s3 + $0x2a4] sm:$0xf] %vm3626, %v3283
  %3797 = vst.msk [vmem:[%s3 + $0x2a8] sm:$0xf] %vm3626, %v3284
  %3798 = vst.msk [vmem:[%s3 + $0x2ac] sm:$0xf] %vm3626, %v3285
  %3799 = vst.msk [vmem:[%s3 + $0x2b0] sm:$0xf] %vm3626, %v3286
  %3800 = vst.msk [vmem:[%s3 + $0x2b4] sm:$0xf] %vm3626, %v3287
  %3801 = vst.msk [vmem:[%s3 + $0x2b8] sm:$0xf] %vm3626, %v3288
  %3802 = vst.msk [vmem:[%s3 + $0x2bc] sm:$0xf] %vm3626, %v3289
  %3803 = vst.msk [vmem:[%s3 + $0x2c0] sm:$0xf] %vm3626, %v3290
  %3804 = vst.msk [vmem:[%s3 + $0x2c4] sm:$0xf] %vm3626, %v3291
  %3805 = vst.msk [vmem:[%s3 + $0x2c8] sm:$0xf] %vm3626, %v3292
  %3806 = vst.msk [vmem:[%s3 + $0x2cc] sm:$0xf] %vm3626, %v3293
  %3807 = vst.msk [vmem:[%s3 + $0x2d0] sm:$0xf] %vm3626, %v3294
  %3808 = vst.msk [vmem:[%s3 + $0x2d4] sm:$0xf] %vm3626, %v3295
  %3809 = vst.msk [vmem:[%s3 + $0x2d8] sm:$0xf] %vm3626, %v3296
  %3810 = vst.msk [vmem:[%s3 + $0x2dc] sm:$0xf] %vm3626, %v3297
  %3811 = vst.msk [vmem:[%s3 + $0x2e0] sm:$0xf] %vm3626, %v3298
  %3812 = vst.msk [vmem:[%s3 + $0x2e4] sm:$0xf] %vm3626, %v3299
  %3813 = vst.msk [vmem:[%s3 + $0x2e8] sm:$0xf] %vm3626, %v3300
  %3814 = vst.msk [vmem:[%s3 + $0x2ec] sm:$0xf] %vm3626, %v3301
  %3815 = vst.msk [vmem:[%s3 + $0x2f0] sm:$0xf] %vm3626, %v3302
  %3816 = vst.msk [vmem:[%s3 + $0x2f4] sm:$0xf] %vm3626, %v3303
  %3817 = vst.msk [vmem:[%s3 + $0x2f8] sm:$0xf] %vm3626, %v3304
  %3818 = vst.msk [vmem:[%s3 + $0x2fc] sm:$0xf] %vm3626, %v3305
  %3819 = vst.msk [vmem:[%s3 + $0x300] sm:$0xf] %vm3626, %v3306
  %3820 = vst.msk [vmem:[%s3 + $0x304] sm:$0xf] %vm3626, %v3307
  %3821 = vst.msk [vmem:[%s3 + $0x308] sm:$0xf] %vm3626, %v3308
  %3822 = vst.msk [vmem:[%s3 + $0x30c] sm:$0xf] %vm3626, %v3309
  %3823 = vst.msk [vmem:[%s3 + $0x310] sm:$0xf] %vm3626, %v3310
  %3824 = vst.msk [vmem:[%s3 + $0x314] sm:$0xf] %vm3626, %v3311
  %3825 = vst.msk [vmem:[%s3 + $0x318] sm:$0xf] %vm3626, %v3312
  %3826 = vst.msk [vmem:[%s3 + $0x31c] sm:$0xf] %vm3626, %v3313
  %3827 = vst.msk [vmem:[%s3 + $0x320] sm:$0xf] %vm3626, %v3314
  %3828 = vst.msk [vmem:[%s3 + $0x324] sm:$0xf] %vm3626, %v3315
  %3829 = vst.msk [vmem:[%s3 + $0x328] sm:$0xf] %vm3626, %v3316
  %3830 = vst.msk [vmem:[%s3 + $0x32c] sm:$0xf] %vm3626, %v3317
  %3831 = vst.msk [vmem:[%s3 + $0x330] sm:$0xf] %vm3626, %v3318
  %3832 = vst.msk [vmem:[%s3 + $0x334] sm:$0xf] %vm3626, %v3319
  %3833 = vst.msk [vmem:[%s3 + $0x338] sm:$0xf] %vm3626, %v3320
  %3834 = vst.msk [vmem:[%s3 + $0x33c] sm:$0xf] %vm3626, %v3321
  %3835 = vst.msk [vmem:[%s3 + $0x340] sm:$0xf] %vm3626, %v3322
  %3836 = vst.msk [vmem:[%s3 + $0x344] sm:$0xf] %vm3626, %v3323
  %3837 = vst.msk [vmem:[%s3 + $0x348] sm:$0xf] %vm3626, %v3324
  %3838 = vst.msk [vmem:[%s3 + $0x34c] sm:$0xf] %vm3626, %v3325
  %3839 = vst.msk [vmem:[%s3 + $0x350] sm:$0xf] %vm3626, %v3326
  %3840 = vst.msk [vmem:[%s3 + $0x354] sm:$0xf] %vm3626, %v3327
  %3841 = vst.msk [vmem:[%s3 + $0x358] sm:$0xf] %vm3626, %v3328
  %3842 = vst.msk [vmem:[%s3 + $0x35c] sm:$0xf] %vm3626, %v3329
  %3843 = vst.msk [vmem:[%s3 + $0x360] sm:$0xf] %vm3626, %v3330
  %3844 = vst.msk [vmem:[%s3 + $0x364] sm:$0xf] %vm3626, %v3331
  %3845 = vst.msk [vmem:[%s3 + $0x368] sm:$0xf] %vm3626, %v3332
  %3846 = vst.msk [vmem:[%s3 + $0x36c] sm:$0xf] %vm3626, %v3333
  %3847 = vst.msk [vmem:[%s3 + $0x370] sm:$0xf] %vm3626, %v3334
  %3848 = vst.msk [vmem:[%s3 + $0x374] sm:$0xf] %vm3626, %v3335
  %3849 = vst.msk [vmem:[%s3 + $0x378] sm:$0xf] %vm3626, %v3336
  %3850 = vst.msk [vmem:[%s3 + $0x37c] sm:$0xf] %vm3626, %v3337
  %3851 = vst.msk [vmem:[%s3 + $0x380] sm:$0xf] %vm3626, %v3338
  %3852 = vst.msk [vmem:[%s3 + $0x384] sm:$0xf] %vm3626, %v3339
  %3853 = vst.msk [vmem:[%s3 + $0x388] sm:$0xf] %vm3626, %v3340
  %3854 = vst.msk [vmem:[%s3 + $0x38c] sm:$0xf] %vm3626, %v3341
  %3855 = vst.msk [vmem:[%s3 + $0x390] sm:$0xf] %vm3626, %v3342
  %3856 = vst.msk [vmem:[%s3 + $0x394] sm:$0xf] %vm3626, %v3343
  %3857 = vst.msk [vmem:[%s3 + $0x398] sm:$0xf] %vm3626, %v3344
  %3858 = vst.msk [vmem:[%s3 + $0x39c] sm:$0xf] %vm3626, %v3345
  %3859 = vst.msk [vmem:[%s3 + $0x3a0] sm:$0xf] %vm3626, %v3346
  %3860 = vst.msk [vmem:[%s3 + $0x3a4] sm:$0xf] %vm3626, %v3347
  %3861 = vst.msk [vmem:[%s3 + $0x3a8] sm:$0xf] %vm3626, %v3348
  %3862 = vst.msk [vmem:[%s3 + $0x3ac] sm:$0xf] %vm3626, %v3349
  %3863 = vst.msk [vmem:[%s3 + $0x3b0] sm:$0xf] %vm3626, %v3350
  %3864 = vst.msk [vmem:[%s3 + $0x3b4] sm:$0xf] %vm3626, %v3351
  %3865 = vst.msk [vmem:[%s3 + $0x3b8] sm:$0xf] %vm3626, %v3352
  %3866 = vst.msk [vmem:[%s3 + $0x3bc] sm:$0xf] %vm3626, %v3353
  %3867 = vst.msk [vmem:[%s3 + $0x3c0] sm:$0xf] %vm3626, %v3354
  %3868 = vst.msk [vmem:[%s3 + $0x3c4] sm:$0xf] %vm3626, %v3355
  %3869 = vst.msk [vmem:[%s3 + $0x3c8] sm:$0xf] %vm3626, %v3356
  %3870 = vst.msk [vmem:[%s3 + $0x3cc] sm:$0xf] %vm3626, %v3357
  %3871 = vst.msk [vmem:[%s3 + $0x3d0] sm:$0xf] %vm3626, %v3358
  %3872 = vst.msk [vmem:[%s3 + $0x3d4] sm:$0xf] %vm3626, %v3359
  %3873 = vst.msk [vmem:[%s3 + $0x3d8] sm:$0xf] %vm3626, %v3360
  %3874 = vst.msk [vmem:[%s3 + $0x3dc] sm:$0xf] %vm3626, %v3361
  %3875 = vst.msk [vmem:[%s3 + $0x3e0] sm:$0xf] %vm3626, %v3362
  %3876 = vst.msk [vmem:[%s3 + $0x3e4] sm:$0xf] %vm3626, %v3363
  %3877 = vst.msk [vmem:[%s3 + $0x3e8] sm:$0xf] %vm3626, %v3364
  %3878 = vst.msk [vmem:[%s3 + $0x3ec] sm:$0xf] %vm3626, %v3365
  %3879 = vst.msk [vmem:[%s3 + $0x3f0] sm:$0xf] %vm3626, %v3366
  %3880 = vst.msk [vmem:[%s3 + $0x3f4] sm:$0xf] %vm3626, %v3367
  %3881 = vst.msk [vmem:[%s3 + $0x3f8] sm:$0xf] %vm3626, %v3368
  %3882 = vst.msk [vmem:[%s3 + $0x3fc] sm:$0xf] %vm3626, %v3369
  // Predicated region
  $region14: #{generator_forward.17} parent=0 // pred_check
    _
  $region15: #{generator_forward.17} parent=0 // pred_check_branch
    %3884 = sbr.rel (0) target = $region17
  $region16: #{generator_forward.17} parent=0 // pred_region
    _
  $region17: #{generator_forward.17} parent=0 // pred_fallthru
    _
  // Predicated region
  $region18: #{generator_forward.17} parent=0 // pred_check
    _
  $region19: #{generator_forward.17} parent=0 // pred_check_branch
    %3886 = sbr.rel (0) target = $region21
  $region20: #{generator_forward.17} parent=0 // pred_region
    _
  $region21: #{generator_forward.17} parent=0 // pred_fallthru
    _

// kernel: generator_forward.19
$region0: #{generator_forward.19}
  #allocation0 [shape = 'u32[]', space=smem, size = 0x4, offset = 0x4, fixed_abs, tag = 'smem constant byte address 0x4 - core index']
  #allocation1 [shape = 'u32[144,128]{1,0:T(1,128)}', space=vmem, size = 0x12000, scoped, tag = 'internal scratch']
  %s0 = inlined_call_operand.vmem [shape: f32[128,512], index: 0, kind: input, shape index: {}]
  %s1 = inlined_call_operand.vmem [shape: f32[128,512], index: 1, kind: output, shape index: {}]
  %s2 = sld [smem:[#allocation0]]
  $region37: #{generator_forward.19} parent=0
    _
  %s4 = ssub.s32 1, %s2
  %s5 = scalar_select 0, %s4, %s2
  loop: start=0, step=1, limit=4
  $region2: #{generator_forward.19} parent=0 // loop_pre_header
    _
  $region3: #{generator_forward.19} parent=0 // loop_header
    %s7 = sphi 0, %s11
    %p8 = scmp.ge.s32.totalorder %s7, 4
    %s17 = sphi 0, %s19
    %s20 = sphi 0, %s17
    %s21 = sphi 0, %s20
    %s37 = sphi 0, %s21
    %s43 = sphi 0, %s45
    %s46 = sphi 0, %s43
    %s47 = sphi 0, %s46
    %s63 = sphi 0, %s47
  $region4: #{generator_forward.19} parent=0 // loop_header_branch
    %10 = sbr.rel (%p8) target = $region8
  $region5: #{generator_forward.19} parent=0 // loop_body
    %s12 = ssub.s32 %s7, 1
    %s13 = ssub.s32 %s7, 2
    %s14 = sadd.s32 %s7, 1
    %s15 = ssub.s32 %s7, %s14
    %p16 = scmp.eq.s32.totalorder %s15, 0
    %s18 = sadd.s32 %s17, 1
    %s19 = scalar_select %p16, %s17, %s18
    %p22 = pneg %p16
    %p23 = scmp.eq.s32.totalorder %s7, 1
    %p24 = por %p22, %p23
    %p25 = scmp.ne.s32.totalorder %s17, %s20
    %p26 = scmp.eq.s32.totalorder %s7, 0
    %p27 = por %p25, %p26
    %p28 = scmp.ne.s32.totalorder %s17, %s20
    %p29 = scmp.eq.s32.totalorder %s12, 1
    %p30 = por %p28, %p29
    %p31 = scmp.ne.s32.totalorder %s20, %s21
    %p32 = scmp.eq.s32.totalorder %s12, 0
    %p33 = por %p31, %p32
    %p34 = scmp.ne.s32.totalorder %s20, %s21
    %p35 = scmp.eq.s32.totalorder %s13, 1
    %p36 = por %p34, %p35
    %p38 = scmp.ne.s32.totalorder %s21, %s37
    %p39 = scmp.eq.s32.totalorder %s13, 0
    %p40 = por %p38, %p39
    %s41 = ssub.s32 %s7, %s14
    %p42 = scmp.eq.s32.totalorder %s41, 0
    %s44 = sadd.s32 %s43, 1
    %s45 = scalar_select %p42, %s43, %s44
    %p48 = pneg %p42
    %p49 = scmp.eq.s32.totalorder %s7, 1
    %p50 = por %p48, %p49
    %p51 = scmp.ne.s32.totalorder %s43, %s46
    %p52 = scmp.eq.s32.totalorder %s7, 0
    %p53 = por %p51, %p52
    %p54 = scmp.ne.s32.totalorder %s43, %s46
    %p55 = scmp.eq.s32.totalorder %s12, 1
    %p56 = por %p54, %p55
    %p57 = scmp.ne.s32.totalorder %s46, %s47
    %p58 = scmp.eq.s32.totalorder %s12, 0
    %p59 = por %p57, %p58
    %p60 = scmp.ne.s32.totalorder %s46, %s47
    %p61 = scmp.eq.s32.totalorder %s13, 1
    %p62 = por %p60, %p61
    %p64 = scmp.ne.s32.totalorder %s47, %s63
    %p65 = scmp.eq.s32.totalorder %s13, 0
    %p66 = por %p64, %p65
    %p67 = scmp.le.s32.totalorder 1, %s7
    %p68 = scmp.lt.s32.totalorder %s7, 3
    %p69 = pnand %p67, %p68
    %p70 = pneg %p69
    // Predicated region
    $region9: #{generator_forward.19} parent=5 // pred_check
      _
    $region10: #{generator_forward.19} parent=5 // pred_check_branch
      %72 = sbr.rel (%p69) target = $region12
    $region11: #{generator_forward.19} parent=5 // pred_region
      %s73 = ssub.s32 %s7, 1
    $region12: #{generator_forward.19} parent=5 // pred_fallthru
      _
    %p74 = scmp.lt.s32.totalorder %s7, 2
    // Predicated region
    $region13: #{generator_forward.19} parent=5 // pred_check
      %p75 = pneg %p74
    $region14: #{generator_forward.19} parent=5 // pred_check_branch
      %77 = sbr.rel (%p75) target = $region16
    $region15: #{generator_forward.19} parent=5 // pred_region
      // Predicated region
      $region17: #{generator_forward.19} parent=15 // pred_check
        %p78 = pneg %p27
      $region18: #{generator_forward.19} parent=15 // pred_check_branch
        %80 = sbr.rel (%p78) target = $region20
      $region19: #{generator_forward.19} parent=15 // pred_region
        %s81 = smul.u32 8, %s7
        %p82 = scmp.lt.s32.totalorder %s81, 15
        %s83 = scalar_select %p82, %s81, 15
        %s84 = smul.addr %s83, 4
        %s85 = smul.addr %s84, 8
        %s86 = scalar_lea.vmem %s0, %s85
        %s87 = smul.u32 8, %s7
      $region20: #{generator_forward.19} parent=15 // pred_fallthru
        _
    $region16: #{generator_forward.19} parent=5 // pred_fallthru
      _
    %p88 = scmp.le.s32.totalorder 1, %s7
    %p89 = scmp.lt.s32.totalorder %s7, 3
    %p90 = pnand %p88, %p89
    %p91 = pneg %p90
    // Predicated region
    $region21: #{generator_forward.19} parent=5 // pred_check
      _
    $region22: #{generator_forward.19} parent=5 // pred_check_branch
      %93 = sbr.rel (%p90) target = $region24
    $region23: #{generator_forward.19} parent=5 // pred_region
      %s94 = ssub.s32 %s7, 1
      %s95 = smul.u32 8, %s12
      %p96 = scmp.lt.s32.totalorder %s95, 15
      %s97 = scalar_select %p96, %s95, 15
      %s98 = smul.addr %s97, 4
      %s99 = smul.addr %s98, 8
      %s100 = scalar_lea.vmem %s0, %s99
      %p101 = pneg %p33
      %p102 = pneg %p30
      %p103 = pneg %p59
      %p104 = pneg %p56
      %s105 = smul.u32 8, %s12
      %p106 = scmp.lt.s32.totalorder %s105, 15
      %s107 = scalar_select %p106, %s105, 15
      %s108 = smul.addr %s107, 4
      %s109 = smul.addr %s108, 8
      %s110 = scalar_lea.vmem %s1, %s109
      %s111 = smul.u32 8, %s12
      %p112 = scmp.lt.s32.totalorder %s111, 15
      %s113 = scalar_select %p112, %s111, 15
      %s114 = smul.addr %s113, 4
      %s115 = smul.addr %s114, 8
      %s116 = scalar_lea.vmem %s0, %s115
      %s117 = smul.u32 8, %s12
      %s118 = smul.u32 8, %s12
      %p119 = scmp.lt.s32.totalorder %s118, 15
      %s120 = scalar_select %p119, %s118, 15
      %s121 = smul.addr %s120, 4
      %s122 = smul.addr %s121, 8
      %s123 = scalar_lea.vmem %s1, %s122
      %s124 = smul.u32 8, %s12
      %v125 = vld [vmem:[%s116] sm:$0xff]
      %v126 = vld [vmem:[%s116 + $0x8] sm:$0xff]
      %v127 = vld [vmem:[%s116 + $0x10] sm:$0xff]
      %v128 = vld [vmem:[%s116 + $0x18] sm:$0xff]
      %v129 = vld [vmem:[%s116 + $0x20] sm:$0xff]
      %v130 = vld [vmem:[%s116 + $0x28] sm:$0xff]
      %v131 = vld [vmem:[%s116 + $0x30] sm:$0xff]
      %v132 = vld [vmem:[%s116 + $0x38] sm:$0xff]
      %v133 = vld [vmem:[%s116 + $0x40] sm:$0xff]
      %v134 = vld [vmem:[%s116 + $0x48] sm:$0xff]
      %v135 = vld [vmem:[%s116 + $0x50] sm:$0xff]
      %v136 = vld [vmem:[%s116 + $0x58] sm:$0xff]
      %v137 = vld [vmem:[%s116 + $0x60] sm:$0xff]
      %v138 = vld [vmem:[%s116 + $0x68] sm:$0xff]
      %v139 = vld [vmem:[%s116 + $0x70] sm:$0xff]
      %v140 = vld [vmem:[%s116 + $0x78] sm:$0xff]
      %v141 = vld [vmem:[%s116 + $0x80] sm:$0xff]
      %v142 = vld [vmem:[%s116 + $0x88] sm:$0xff]
      %v143 = vld [vmem:[%s116 + $0x90] sm:$0xff]
      %v144 = vld [vmem:[%s116 + $0x98] sm:$0xff]
      %v145 = vld [vmem:[%s116 + $0xa0] sm:$0xff]
      %v146 = vld [vmem:[%s116 + $0xa8] sm:$0xff]
      %v147 = vld [vmem:[%s116 + $0xb0] sm:$0xff]
      %v148 = vld [vmem:[%s116 + $0xb8] sm:$0xff]
      %v149 = vld [vmem:[%s116 + $0xc0] sm:$0xff]
      %v150 = vld [vmem:[%s116 + $0xc8] sm:$0xff]
      %v151 = vld [vmem:[%s116 + $0xd0] sm:$0xff]
      %v152 = vld [vmem:[%s116 + $0xd8] sm:$0xff]
      %v153 = vld [vmem:[%s116 + $0xe0] sm:$0xff]
      %v154 = vld [vmem:[%s116 + $0xe8] sm:$0xff]
      %v155 = vld [vmem:[%s116 + $0xf0] sm:$0xff]
      %v156 = vld [vmem:[%s116 + $0xf8] sm:$0xff]
      %v157 = vtanh.pop %v125
      %v158 = vtanh.pop %v126
      %v159 = vtanh.pop %v127
      %v160 = vtanh.pop %v128
      %v161 = vtanh.pop %v129
      %v162 = vtanh.pop %v130
      %v163 = vtanh.pop %v131
      %v164 = vtanh.pop %v132
      %v165 = vtanh.pop %v133
      %v166 = vtanh.pop %v134
      %v167 = vtanh.pop %v135
      %v168 = vtanh.pop %v136
      %v169 = vtanh.pop %v137
      %v170 = vtanh.pop %v138
      %v171 = vtanh.pop %v139
      %v172 = vtanh.pop %v140
      %v173 = vtanh.pop %v141
      %v174 = vtanh.pop %v142
      %v175 = vtanh.pop %v143
      %v176 = vtanh.pop %v144
      %v177 = vtanh.pop %v145
      %v178 = vtanh.pop %v146
      %v179 = vtanh.pop %v147
      %v180 = vtanh.pop %v148
      %v181 = vtanh.pop %v149
      %v182 = vtanh.pop %v150
      %v183 = vtanh.pop %v151
      %v184 = vtanh.pop %v152
      %v185 = vtanh.pop %v153
      %v186 = vtanh.pop %v154
      %v187 = vtanh.pop %v155
      %v188 = vtanh.pop %v156
      %189 = vst [vmem:[%s123] sm:$0xff] %v157
      %190 = vst [vmem:[%s123 + $0x8] sm:$0xff] %v158
      %191 = vst [vmem:[%s123 + $0x10] sm:$0xff] %v159
      %192 = vst [vmem:[%s123 + $0x18] sm:$0xff] %v160
      %193 = vst [vmem:[%s123 + $0x20] sm:$0xff] %v161
      %194 = vst [vmem:[%s123 + $0x28] sm:$0xff] %v162
      %195 = vst [vmem:[%s123 + $0x30] sm:$0xff] %v163
      %196 = vst [vmem:[%s123 + $0x38] sm:$0xff] %v164
      %197 = vst [vmem:[%s123 + $0x40] sm:$0xff] %v165
      %198 = vst [vmem:[%s123 + $0x48] sm:$0xff] %v166
      %199 = vst [vmem:[%s123 + $0x50] sm:$0xff] %v167
      %200 = vst [vmem:[%s123 + $0x58] sm:$0xff] %v168
      %201 = vst [vmem:[%s123 + $0x60] sm:$0xff] %v169
      %202 = vst [vmem:[%s123 + $0x68] sm:$0xff] %v170
      %203 = vst [vmem:[%s123 + $0x70] sm:$0xff] %v171
      %204 = vst [vmem:[%s123 + $0x78] sm:$0xff] %v172
      %205 = vst [vmem:[%s123 + $0x80] sm:$0xff] %v173
      %206 = vst [vmem:[%s123 + $0x88] sm:$0xff] %v174
      %207 = vst [vmem:[%s123 + $0x90] sm:$0xff] %v175
      %208 = vst [vmem:[%s123 + $0x98] sm:$0xff] %v176
      %209 = vst [vmem:[%s123 + $0xa0] sm:$0xff] %v177
      %210 = vst [vmem:[%s123 + $0xa8] sm:$0xff] %v178
      %211 = vst [vmem:[%s123 + $0xb0] sm:$0xff] %v179
      %212 = vst [vmem:[%s123 + $0xb8] sm:$0xff] %v180
      %213 = vst [vmem:[%s123 + $0xc0] sm:$0xff] %v181
      %214 = vst [vmem:[%s123 + $0xc8] sm:$0xff] %v182
      %215 = vst [vmem:[%s123 + $0xd0] sm:$0xff] %v183
      %216 = vst [vmem:[%s123 + $0xd8] sm:$0xff] %v184
      %217 = vst [vmem:[%s123 + $0xe0] sm:$0xff] %v185
      %218 = vst [vmem:[%s123 + $0xe8] sm:$0xff] %v186
      %219 = vst [vmem:[%s123 + $0xf0] sm:$0xff] %v187
      %220 = vst [vmem:[%s123 + $0xf8] sm:$0xff] %v188
      %s221 = smul.u32 8, %s12
      %p222 = scmp.lt.s32.totalorder %s221, 15
      %s223 = scalar_select %p222, %s221, 15
      %s224 = smul.addr %s223, 4
      %s225 = smul.addr %s224, 8
      %s226 = scalar_lea.vmem %s1, %s225
      // Predicated region
      $region25: #{generator_forward.19} parent=23 // pred_check
        %p227 = pneg %p56
      $region26: #{generator_forward.19} parent=23 // pred_check_branch
        %229 = sbr.rel (%p227) target = $region28
      $region27: #{generator_forward.19} parent=23 // pred_region
        %s230 = smul.u32 8, %s12
      $region28: #{generator_forward.19} parent=23 // pred_fallthru
        _
    $region24: #{generator_forward.19} parent=5 // pred_fallthru
      _
    %p231 = scmp.le.s32.totalorder 2, %s7
    // Predicated region
    $region29: #{generator_forward.19} parent=5 // pred_check
      %p232 = pneg %p231
    $region30: #{generator_forward.19} parent=5 // pred_check_branch
      %234 = sbr.rel (%p232) target = $region32
    $region31: #{generator_forward.19} parent=5 // pred_region
      %s235 = ssub.s32 %s7, 2
      // Predicated region
      $region33: #{generator_forward.19} parent=31 // pred_check
        %p236 = pneg %p62
      $region34: #{generator_forward.19} parent=31 // pred_check_branch
        %238 = sbr.rel (%p236) target = $region36
      $region35: #{generator_forward.19} parent=31 // pred_region
        %s239 = smul.u32 8, %s13
        %p240 = scmp.lt.s32.totalorder %s239, 15
        %s241 = scalar_select %p240, %s239, 15
        %s242 = smul.addr %s241, 4
        %s243 = smul.addr %s242, 8
        %s244 = scalar_lea.vmem %s1, %s243
      $region36: #{generator_forward.19} parent=31 // pred_fallthru
        _
    $region32: #{generator_forward.19} parent=5 // pred_fallthru
      _
  $region6: #{generator_forward.19} parent=0 // loop_footer
    %s11 = sadd.s32 1, %s7
  $region7: #{generator_forward.19} parent=0 // loop_footer_branch
    %6 = sbr.rel target = $region3
  $region8: #{generator_forward.19} parent=0 // loop_exit
    _

</llo_original>
